<compile_context>
chip_gen: v5e
topology: v5e:2x2
jax: 0.10.0
libtpu: 0.0.40
codegen_flags: <defaults>
</compile_context>

<pallas_src>
import math

import jax
import jax.numpy as jnp
import numpy as np
from jax.experimental import pallas as pl
from jax.experimental.pallas import tpu as pltpu

# ---- model hyper-parameters (from the PyTorch module) ----
d_k = d_v = 64
d_model = 512
n_heads = 4
d_ff = 2048
src_len = 4
n_layers = 6
src_vocab = {"P": 0, "我": 1, "喜欢": 2, "机器": 3, "学习": 4}
src_vocab_size = len(src_vocab)

_SCALE = 1.0 / math.sqrt(d_k)          # 0.125 — exactly representable in bf16
_MASK_FILL = -1000000000.0
_LN_EPS = 1e-5

COMPUTE_DTYPE = jnp.bfloat16           # HBM-streamed activation / weight dtype


# ----------------------------------------------------------------------------
# helpers shared by kernels and the pure-JAX reference
# ----------------------------------------------------------------------------
def _layernorm_f32(z, gamma, beta):
    mu = jnp.mean(z, axis=-1, keepdims=True)
    zc = z - mu
    var = jnp.mean(zc * zc, axis=-1, keepdims=True)
    return zc * jax.lax.rsqrt(var + _LN_EPS) * gamma + beta


def positional_encoding(n_position, dm):
    pos = np.arange(n_position, dtype=np.float64)[:, None]
    hid = np.arange(dm, dtype=np.float64)[None, :]
    table = pos / np.power(10000.0, hid / dm)
    table[:, 0::2] = np.sin(table[:, 0::2])
    table[:, 1::2] = np.cos(table[:, 1::2])
    return jnp.asarray(table, dtype=jnp.float32)


def get_attn_pad_mask(seq_q, seq_k):
    B, Lq = seq_q.shape
    Lk = seq_k.shape[1]
    pad = (seq_k == 0)[:, None, :]                  # (B, 1, Lk)
    return jnp.broadcast_to(pad, (B, Lq, Lk))       # (B, Lq, Lk) bool


# ----------------------------------------------------------------------------
# Pallas kernels
# ----------------------------------------------------------------------------
def _qkv_proj_kernel(x_ref, w_ref, b_ref, o_ref):
    y = jnp.dot(x_ref[...], w_ref[...], preferred_element_type=jnp.float32) + b_ref[...]
    o_ref[...] = y.astype(o_ref.dtype)


def fused_qkv_projection(x2, w_qkv, b_qkv):
    n, din = x2.shape
    dout = w_qkv.shape[1]
    return pl.pallas_call(
        _qkv_proj_kernel,
        out_shape=jax.ShapeDtypeStruct((n, dout), x2.dtype),
        grid=(1,),
        in_specs=[
            pl.BlockSpec((n, din), lambda i: (0, 0)),
            pl.BlockSpec((din, dout), lambda i: (0, 0)),
            pl.BlockSpec((1, dout), lambda i: (0, 0)),
        ],
        out_specs=pl.BlockSpec((n, dout), lambda i: (0, 0)),
        compiler_params=pltpu.CompilerParams(dimension_semantics=("arbitrary",)),
    )(x2, w_qkv, b_qkv)


def _mha_attention_kernel(q_ref, k_ref, v_ref, m_ref, ctx_ref, attn_ref):
    """One block = `tb` batch elements == tb * n_heads attention heads per grid step."""
    tb, h, l, dk = q_ref.shape
    dv = v_ref.shape[-1]

    # fold 1/sqrt(d_k) into q (exact in bf16: 1/8 is a power of two)
    q = q_ref[...].reshape(tb * h, l, dk) * _SCALE
    k = k_ref[...].reshape(tb * h, l, dk)
    v = v_ref[...].reshape(tb * h, l, dv)

    # scores = q @ k^T, batched over heads; contraction on the last dims avoids
    # materializing a transposed copy of K.  f32 accumulation on the MXU.
    s = jnp.einsum("bqd,bkd->bqk", q, k, preferred_element_type=jnp.float32)
    s = s.reshape(tb, h, l, l)

    # masked_fill_(attn_mask, -1e9); pad mask is per batch element (int8 0/1) and is
    # broadcast over heads in-kernel (keeps HBM mask traffic at 1 byte/element).
    s = jnp.where(m_ref[...][:, None, :, :] != 0, _MASK_FILL, s)

    # numerically stable softmax in f32; reciprocal goes to the otherwise-idle EUP.
    smax = jnp.max(s, axis=-1, keepdims=True)
    p = jnp.exp(s - smax)
    denom = jnp.sum(p, axis=-1, keepdims=True)
    attn = p * pl.reciprocal(denom, approx=True)        # (tb, h, l, l) f32

    attn_ref[...] = attn.astype(attn_ref.dtype)

    # context = attn @ V, emitted directly in the lane-dense "concatenated heads"
    # layout (tb, l, h*dv)  ==  torch context.transpose(1, 2).reshape(B, L, n_heads*d_v).
    ctx = jnp.einsum("bqk,bkd->bqd",
                     attn.reshape(tb * h, l, l).astype(v.dtype), v,
                     preferred_element_type=jnp.float32)
    ctx = ctx.reshape(tb, h, l, dv)
    ctx_cat = jnp.concatenate([ctx[:, hh] for hh in range(h)], axis=-1)   # (tb, l, h*dv)
    ctx_ref[...] = ctx_cat.astype(ctx_ref.dtype)


def _pick_block_b(B, H):
    # target ~8-32 heads per grid step to amortize the ~0.35us per-step overhead
    target = max(1, 32 // H)
    bb = min(B, target)
    while B % bb:
        bb -= 1
    return bb


def multi_head_attention_context(q_s, k_s, v_s, mask_i8):
    """q_s/k_s/v_s: (B, H, L, d) bf16, mask_i8: (B, L, L) int8.

    Returns (context (B, L, H*d_v) bf16, attn (B, H, L, L) bf16)."""
    B, H, L, dk = q_s.shape
    dv = v_s.shape[-1]
    bb = _pick_block_b(B, H)
    return pl.pallas_call(
        _mha_attention_kernel,
        out_shape=(
            jax.ShapeDtypeStruct((B, L, H * dv), q_s.dtype),
            jax.ShapeDtypeStruct((B, H, L, L), q_s.dtype),
        ),
        grid=(B // bb,),
        in_specs=[
            pl.BlockSpec((bb, H, L, dk), lambda i: (i, 0, 0, 0)),
            pl.BlockSpec((bb, H, L, dk), lambda i: (i, 0, 0, 0)),
            pl.BlockSpec((bb, H, L, dv), lambda i: (i, 0, 0, 0)),
            pl.BlockSpec((bb, L, L), lambda i: (i, 0, 0)),
        ],
        out_specs=(
            pl.BlockSpec((bb, L, H * dv), lambda i: (i, 0, 0)),
            pl.BlockSpec((bb, H, L, L), lambda i: (i, 0, 0, 0)),
        ),
        compiler_params=pltpu.CompilerParams(dimension_semantics=("parallel",)),
    )(q_s, k_s, v_s, mask_i8)


def _proj_residual_ln_kernel(ctx_ref, w_ref, b_ref, res_ref, g_ref, bta_ref, o_ref):
    y = jnp.dot(ctx_ref[...], w_ref[...], preferred_element_type=jnp.float32) + b_ref[...]
    z = y + res_ref[...].astype(jnp.float32)
    o_ref[...] = _layernorm_f32(z, g_ref[...], bta_ref[...]).astype(o_ref.dtype)


def output_proj_residual_layernorm(ctx2, w_o, b_o, residual2, gamma, beta):
    n, dctx = ctx2.shape
    dm = w_o.shape[1]
    return pl.pallas_call(
        _proj_residual_ln_kernel,
        out_shape=jax.ShapeDtypeStruct((n, dm), residual2.dtype),
        grid=(1,),
        in_specs=[
            pl.BlockSpec((n, dctx), lambda i: (0, 0)),
            pl.BlockSpec((dctx, dm), lambda i: (0, 0)),
            pl.BlockSpec((1, dm), lambda i: (0, 0)),
            pl.BlockSpec((n, dm), lambda i: (0, 0)),
            pl.BlockSpec((1, dm), lambda i: (0, 0)),
            pl.BlockSpec((1, dm), lambda i: (0, 0)),
        ],
        out_specs=pl.BlockSpec((n, dm), lambda i: (0, 0)),
        compiler_params=pltpu.CompilerParams(dimension_semantics=("arbitrary",)),
    )(ctx2, w_o, b_o, residual2, gamma, beta)


def _ffn_residual_ln_kernel(x_ref, w1_ref, b1_ref, w2_ref, b2_ref, g_ref, bta_ref, o_ref):
    x = x_ref[...]
    h = jnp.dot(x, w1_ref[...], preferred_element_type=jnp.float32) + b1_ref[...]
    h = jnp.maximum(h, 0.0)                                   # ReLU (conv1d k=1 == linear)
    y = jnp.dot(h.astype(x.dtype), w2_ref[...], preferred_element_type=jnp.float32) + b2_ref[...]
    z = y + x.astype(jnp.float32)
    o_ref[...] = _layernorm_f32(z, g_ref[...], bta_ref[...]).astype(o_ref.dtype)


def ffn_residual_layernorm(x2, w1, b1, w2, b2, gamma, beta):
    n, dm = x2.shape
    dff = w1.shape[1]
    return pl.pallas_call(
        _ffn_residual_ln_kernel,
        out_shape=jax.ShapeDtypeStruct((n, dm), x2.dtype),
        grid=(1,),
        in_specs=[
            pl.BlockSpec((n, dm), lambda i: (0, 0)),
            pl.BlockSpec((dm, dff), lambda i: (0, 0)),
            pl.BlockSpec((1, dff), lambda i: (0, 0)),
            pl.BlockSpec((dff, dm), lambda i: (0, 0)),
            pl.BlockSpec((1, dm), lambda i: (0, 0)),
            pl.BlockSpec((1, dm), lambda i: (0, 0)),
            pl.BlockSpec((1, dm), lambda i: (0, 0)),
        ],
        out_specs=pl.BlockSpec((n, dm), lambda i: (0, 0)),
        compiler_params=pltpu.CompilerParams(dimension_semantics=("arbitrary",)),
    )(x2, w1, b1, w2, b2, gamma, beta)


# ----------------------------------------------------------------------------
# Encoder forward (Pallas path)
# ----------------------------------------------------------------------------
def _encoder_layer(lp, x, mask_i8):
    B, L, dm = x.shape
    n = B * L
    x2 = x.reshape(n, dm)

    hdk = n_heads * d_k
    qkv = fused_qkv_projection(x2, lp["w_qkv"], lp["b_qkv"])            # (n, 3*hdk) bf16
    # Faithful to the PyTorch module: W_Q(x).view(B, n_heads, L, d_k) (row-major view).
    q_s = qkv[:, 0 * hdk:1 * hdk].reshape(B, n_heads, L, d_k)
    k_s = qkv[:, 1 * hdk:2 * hdk].reshape(B, n_heads, L, d_k)
    v_s = qkv[:, 2 * hdk:3 * hdk].reshape(B, n_heads, L, d_v)

    ctx, attn = multi_head_attention_context(q_s, k_s, v_s, mask_i8)    # (B,L,H*dv), (B,H,L,L)

    out1 = output_proj_residual_layernorm(
        ctx.reshape(n, n_heads * d_v), lp["w_o"], lp["b_o"], x2, lp["ln1_g"], lp["ln1_b"])
    out2 = ffn_residual_layernorm(
        out1, lp["w1"], lp["b1"], lp["w2"], lp["b2"], lp["ln2_g"], lp["ln2_b"])
    return out2.reshape(B, L, dm), attn


@jax.jit
def encoder_forward(params, enc_inputs, enc_self_attn_mask):
    B, L = enc_inputs.shape
    # TODO(synk): embedding gathers stay in plain XLA (jnp.take); a Pallas scalar-prefetch
    # gather adds nothing at vocab=5, seq=4.
    x = jnp.take(params["src_emb"], enc_inputs, axis=0) + params["pos_table"][:L][None, :, :]
    x = x.astype(COMPUTE_DTYPE)
    mask_i8 = enc_self_attn_mask.astype(jnp.int8)

    def step(carry, lp):
        y, attn = _encoder_layer(lp, carry, mask_i8)
        return y, attn

    x, attns = jax.lax.scan(step, x, params["layers"])
    return x, attns                                   # (B, L, d_model), (n_layers, B, H, L, L)


# ----------------------------------------------------------------------------
# parameter initialization
# ----------------------------------------------------------------------------
def _uniform(key, shape, bound, dtype):
    return jax.random.uniform(key, shape, jnp.float32, -bound, bound).astype(dtype)


def init_layer_params(key):
    ks = jax.random.split(key, 12)
    bd = 1.0 / math.sqrt(d_model)
    w_q = _uniform(ks[0], (d_model, n_heads * d_k), bd, COMPUTE_DTYPE)
    w_k = _uniform(ks[1], (d_model, n_heads * d_k), bd, COMPUTE_DTYPE)
    w_v = _uniform(ks[2], (d_model, n_heads * d_v), bd, COMPUTE_DTYPE)
    b_q = _uniform(ks[3], (1, n_heads * d_k), bd, jnp.float32)
    b_k = _uniform(ks[4], (1, n_heads * d_k), bd, jnp.float32)
    b_v = _uniform(ks[5], (1, n_heads * d_v), bd, jnp.float32)
    bo = 1.0 / math.sqrt(n_heads * d_v)
    b1b = 1.0 / math.sqrt(d_model)
    b2b = 1.0 / math.sqrt(d_ff)
    return dict(
        w_qkv=jnp.concatenate([w_q, w_k, w_v], axis=1),       # (d_model, 3*H*d_k) bf16
        b_qkv=jnp.concatenate([b_q, b_k, b_v], axis=1),       # (1, 3*H*d_k) f32
        w_o=_uniform(ks[6], (n_heads * d_v, d_model), bo, COMPUTE_DTYPE),
        b_o=_uniform(ks[7], (1, d_model), bo, jnp.float32),
        w1=_uniform(ks[8], (d_model, d_ff), b1b, COMPUTE_DTYPE),
        b1=_uniform(ks[9], (1, d_ff), b1b, jnp.float32),
        w2=_uniform(ks[10], (d_ff, d_model), b2b, COMPUTE_DTYPE),
        b2=_uniform(ks[11], (1, d_model), b2b, jnp.float32),
        ln1_g=jnp.ones((1, d_model), jnp.float32), ln1_b=jnp.zeros((1, d_model), jnp.float32),
        ln2_g=jnp.ones((1, d_model), jnp.float32), ln2_b=jnp.zeros((1, d_model), jnp.float32),
    )


def init_encoder_params(key):
    k_emb, *k_layers = jax.random.split(key, 1 + n_layers)
    layer_list = [init_layer_params(k) for k in k_layers]
    layers = jax.tree_util.tree_map(lambda *xs: jnp.stack(xs, axis=0), *layer_list)
    return {
        "src_emb": jax.random.normal(k_emb, (src_vocab_size, d_model), jnp.float32),
        "pos_table": positional_encoding(src_len, d_model),
        "layers": layers,
    }


# ----------------------------------------------------------------------------
# pure-JAX reference (mirrors the kernel's dtype policy exactly)
# ----------------------------------------------------------------------------
def _reference_layer(lp, x, mask_bool):
    B, L, dm = x.shape
    n = B * L
    x2 = x.reshape(n, dm)
    qkv = (jnp.dot(x2, lp["w_qkv"], preferred_element_type=jnp.float32)
           + lp["b_qkv"]).astype(COMPUTE_DTYPE)
    hdk = n_heads * d_k
    q_s = qkv[:, 0 * hdk:1 * hdk].reshape(B, n_heads, L, d_k) * _SCALE
    k_s = qkv[:, 1 * hdk:2 * hdk].reshape(B, n_heads, L, d_k)
    v_s = qkv[:, 2 * hdk:3 * hdk].reshape(B, n_heads, L, d_v)
    s = jnp.einsum("bhqd,bhkd->bhqk", q_s, k_s, preferred_element_type=jnp.float32)
    s = jnp.where(mask_bool[:, None, :, :], _MASK_FILL, s)
    attn = jax.nn.softmax(s, axis=-1)
    attn_b = attn.astype(COMPUTE_DTYPE)
    ctx = jnp.einsum("bhqk,bhkd->bhqd", attn_b, v_s, preferred_element_type=jnp.float32)
    ctx_cat = jnp.transpose(ctx, (0, 2, 1, 3)).reshape(n, n_heads * d_v).astype(COMPUTE_DTYPE)
    y1 = (jnp.dot(ctx_cat, lp["w_o"], preferred_element_type=jnp.float32) + lp["b_o"]
          + x2.astype(jnp.float32))
    out1 = _layernorm_f32(y1, lp["ln1_g"], lp["ln1_b"]).astype(COMPUTE_DTYPE)
    h = jnp.maximum(jnp.dot(out1, lp["w1"], preferred_element_type=jnp.float32) + lp["b1"], 0.0)
    y2 = (jnp.dot(h.astype(COMPUTE_DTYPE), lp["w2"], preferred_element_type=jnp.float32)
          + lp["b2"] + out1.astype(jnp.float32))
    out2 = _layernorm_f32(y2, lp["ln2_g"], lp["ln2_b"]).astype(COMPUTE_DTYPE)
    return out2.reshape(B, L, dm), attn_b


def reference_encoder(params, enc_inputs, enc_self_attn_mask):
    B, L = enc_inputs.shape
    x = jnp.take(params["src_emb"], enc_inputs, axis=0) + params["pos_table"][:L][None, :, :]
    x = x.astype(COMPUTE_DTYPE)
    attns = []
    for i in range(n_layers):
        lp = jax.tree_util.tree_map(lambda a, i=i: a[i], params["layers"])
        x, attn = _reference_layer(lp, x, enc_self_attn_mask)
        attns.append(attn)
    return x, jnp.stack(attns, axis=0)


# ----------------------------------------------------------------------------
if __name__ == "__main__":
    key = jax.random.PRNGKey(0)
    params = init_encoder_params(key)

    # B=2 sentences of length src_len=4; token 0 ('P') is padding.
    enc_inputs = jnp.array([[1, 2, 3, 4],
                            [1, 4, 0, 0]], dtype=jnp.int32)
    enc_self_attn_mask = get_attn_pad_mask(enc_inputs, enc_inputs)       # (B, L, L) bool

    enc_out, attns = encoder_forward(params, enc_inputs, enc_self_attn_mask)
    jax.block_until_ready((enc_out, attns))

    ref_out, ref_attns = reference_encoder(params, enc_inputs, enc_self_attn_mask)

    assert enc_out.shape == (2, src_len, d_model)
    assert attns.shape == (n_layers, 2, n_heads, src_len, src_len)
    assert bool(jnp.all(jnp.isfinite(enc_out.astype(jnp.float32))))
    # layer-0 attention: the only kernel/reference divergence is the approximate
    # reciprocal in the softmax plus bf16 output rounding.
    assert jnp.allclose(attns[0].astype(jnp.float32), ref_attns[0].astype(jnp.float32),
                        atol=2e-2, rtol=2e-2)
    # end-to-end over 6 layers of bf16-stored activations + approx-reciprocal softmax:
    # loose tolerance to absorb accumulated mixed-precision differences.
    assert jnp.allclose(enc_out.astype(jnp.float32), ref_out.astype(jnp.float32),
                        atol=1e-1, rtol=1e-1)

    print("KERNEL_OK")
</pallas_src>

<mosaic_0001>
module attributes {stable_mosaic.version = 11 : i64} {
  func.func @_qkv_proj_kernel(%arg0: i32, %arg1: memref<8x512xbf16, #tpu.memory_space<vmem>>, %arg2: memref<512x768xbf16, #tpu.memory_space<vmem>>, %arg3: memref<1x768xf32, #tpu.memory_space<vmem>>, %arg4: memref<8x768xbf16, #tpu.memory_space<vmem>>) attributes {dimension_semantics = [#tpu.dimension_semantics<arbitrary>], iteration_bounds = array<i64: 1>, scalar_prefetch = 0 : i64, scratch_operands = 0 : i64, tpu.core_type = #tpu.core_type<tc>, window_params = [{pipeline_mode = #tpu.pipeline_mode<synchronous>, transform_indices = @transform_0, window_bounds = array<i64: 8, 512>}, {pipeline_mode = #tpu.pipeline_mode<synchronous>, transform_indices = @transform_1, window_bounds = array<i64: 512, 768>}, {pipeline_mode = #tpu.pipeline_mode<synchronous>, transform_indices = @transform_2, window_bounds = array<i64: 1, 768>}, {pipeline_mode = #tpu.pipeline_mode<synchronous>, transform_indices = @transform_3, window_bounds = array<i64: 8, 768>}]} {
    %c0 = arith.constant 0 : index
    %c0_0 = arith.constant 0 : index
    %0 = vector.load %arg1[%c0, %c0_0] : memref<8x512xbf16, #tpu.memory_space<vmem>>, vector<8x512xbf16>
    %c0_1 = arith.constant 0 : index
    %c0_2 = arith.constant 0 : index
    %1 = vector.load %arg2[%c0_1, %c0_2] : memref<512x768xbf16, #tpu.memory_space<vmem>>, vector<512x768xbf16>
    %cst = arith.constant dense<0.000000e+00> : vector<8x768xf32>
    %2 = tpu.matmul %0, %1, %cst {dimension_numbers = #tpu.dot_dimension_numbers<[1], [0], [0], [1], [0, 0, 1, 1], [], []>} : vector<8x512xbf16>, vector<512x768xbf16>, vector<8x768xf32> -> vector<8x768xf32>
    %c0_3 = arith.constant 0 : index
    %c0_4 = arith.constant 0 : index
    %3 = vector.load %arg3[%c0_3, %c0_4] : memref<1x768xf32, #tpu.memory_space<vmem>>, vector<1x768xf32>
    %4 = vector.broadcast %3 : vector<1x768xf32> to vector<8x768xf32>
    %5 = arith.addf %2, %4 : vector<8x768xf32>
    %6 = arith.truncf %5 : vector<8x768xf32> to vector<8x768xbf16>
    %c0_5 = arith.constant 0 : index
    %c0_6 = arith.constant 0 : index
    %7 = vector.load %arg4[%c0_5, %c0_6] : memref<8x768xbf16, #tpu.memory_space<vmem>>, vector<8x768xbf16>
    tpu.vector_store %arg4[%c0_5, %c0_6], %6 {strides = array<i32>} : memref<8x768xbf16, #tpu.memory_space<vmem>>, vector<8x768xbf16>,
    return
  }
  func.func @transform_0(%arg0: i32) -> (i32, i32) {
    %c0_i32 = arith.constant 0 : i32
    %c0_i32_0 = arith.constant 0 : i32
    %c0_i32_1 = arith.constant 0 : i32
    return %c0_i32, %c0_i32_0 : i32, i32
  }
  func.func @transform_1(%arg0: i32) -> (i32, i32) {
    %c0_i32 = arith.constant 0 : i32
    %c0_i32_0 = arith.constant 0 : i32
    %c0_i32_1 = arith.constant 0 : i32
    return %c0_i32, %c0_i32_0 : i32, i32
  }
  func.func @transform_2(%arg0: i32) -> (i32, i32) {
    %c0_i32 = arith.constant 0 : i32
    %c0_i32_0 = arith.constant 0 : i32
    %c0_i32_1 = arith.constant 0 : i32
    return %c0_i32, %c0_i32_0 : i32, i32
  }
  func.func @transform_3(%arg0: i32) -> (i32, i32) {
    %c0_i32 = arith.constant 0 : i32
    %c0_i32_0 = arith.constant 0 : i32
    %c0_i32_1 = arith.constant 0 : i32
    return %c0_i32, %c0_i32_0 : i32, i32
  }
}

module attributes {stable_mosaic.version = 11 : i64} {
  func.func @_mha_attention_kernel(%arg0: i32, %arg1: memref<2x4x4x64xbf16, #tpu.memory_space<vmem>>, %arg2: memref<2x4x4x64xbf16, #tpu.memory_space<vmem>>, %arg3: memref<2x4x4x64xbf16, #tpu.memory_space<vmem>>, %arg4: memref<2x4x4xi8, #tpu.memory_space<vmem>>, %arg5: memref<2x4x256xbf16, #tpu.memory_space<vmem>>, %arg6: memref<2x4x4x4xbf16, #tpu.memory_space<vmem>>) attributes {dimension_semantics = [#tpu.dimension_semantics<parallel>], iteration_bounds = array<i64: 1>, scalar_prefetch = 0 : i64, scratch_operands = 0 : i64, tpu.core_type = #tpu.core_type<tc>, window_params = [{transform_indices = @transform_0, window_bounds = array<i64: 2, 4, 4, 64>}, {transform_indices = @transform_1, window_bounds = array<i64: 2, 4, 4, 64>}, {transform_indices = @transform_2, window_bounds = array<i64: 2, 4, 4, 64>}, {transform_indices = @transform_3, window_bounds = array<i64: 2, 4, 4>}, {transform_indices = @transform_4, window_bounds = array<i64: 2, 4, 256>}, {transform_indices = @transform_5, window_bounds = array<i64: 2, 4, 4, 4>}]} {
    %c0 = arith.constant 0 : index
    %c0_0 = arith.constant 0 : index
    %c0_1 = arith.constant 0 : index
    %c0_2 = arith.constant 0 : index
    %0 = vector.load %arg1[%c0, %c0_0, %c0_1, %c0_2] : memref<2x4x4x64xbf16, #tpu.memory_space<vmem>>, vector<2x4x4x64xbf16>
    %1 = vector.shape_cast %0 : vector<2x4x4x64xbf16> to vector<8x4x64xbf16>
    %cst = arith.constant 1.250000e-01 : bf16
    %2 = vector.broadcast %cst : bf16 to vector<8x4x64xbf16>
    %3 = arith.mulf %1, %2 : vector<8x4x64xbf16>
    %c0_3 = arith.constant 0 : index
    %c0_4 = arith.constant 0 : index
    %c0_5 = arith.constant 0 : index
    %c0_6 = arith.constant 0 : index
    %4 = vector.load %arg2[%c0_3, %c0_4, %c0_5, %c0_6] : memref<2x4x4x64xbf16, #tpu.memory_space<vmem>>, vector<2x4x4x64xbf16>
    %5 = vector.shape_cast %4 : vector<2x4x4x64xbf16> to vector<8x4x64xbf16>
    %c0_7 = arith.constant 0 : index
    %c0_8 = arith.constant 0 : index
    %c0_9 = arith.constant 0 : index
    %c0_10 = arith.constant 0 : index
    %6 = vector.load %arg3[%c0_7, %c0_8, %c0_9, %c0_10] : memref<2x4x4x64xbf16, #tpu.memory_space<vmem>>, vector<2x4x4x64xbf16>
    %7 = vector.shape_cast %6 : vector<2x4x4x64xbf16> to vector<8x4x64xbf16>
    "tpu.trace_start"() <{level = 10 : i32, message = "bqd,bkd->bqk"}> : () -> ()
    %cst_11 = arith.constant dense<0.000000e+00> : vector<8x4x4xf32>
    %8 = tpu.matmul %3, %5, %cst_11 {dimension_numbers = #tpu.dot_dimension_numbers<[2], [2], [1], [1], [0, 0, 0, 1, 1, 1], [0], [0]>} : vector<8x4x64xbf16>, vector<8x4x64xbf16>, vector<8x4x4xf32> -> vector<8x4x4xf32>
    "tpu.trace_stop"() : () -> ()
    %9 = vector.shape_cast %8 : vector<8x4x4xf32> to vector<2x4x4x4xf32>
    %c0_12 = arith.constant 0 : index
    %c0_13 = arith.constant 0 : index
    %c0_14 = arith.constant 0 : index
    %10 = vector.load %arg4[%c0_12, %c0_13, %c0_14] : memref<2x4x4xi8, #tpu.memory_space<vmem>>, vector<2x4x4xi8>
    %11 = vector.shape_cast %10 : vector<2x4x4xi8> to vector<2x1x4x4xi8>
    %c0_i8 = arith.constant 0 : i8
    %12 = vector.broadcast %c0_i8 : i8 to vector<2x1x4x4xi8>
    %13 = arith.cmpi ne, %11, %12 : vector<2x1x4x4xi8>
    %cst_15 = arith.constant -1.000000e+09 : f32
    %14 = vector.shape_cast %13 : vector<2x1x4x4xi1> to vector<2x1x4x4xi1>
    %15 = vector.broadcast %14 : vector<2x1x4x4xi1> to vector<2x4x4x4xi1>
    %16 = vector.broadcast %cst_15 : f32 to vector<2x4x4x4xf32>
    %17 = arith.select %15, %16, %9 : vector<2x4x4x4xi1>, vector<2x4x4x4xf32>
    %cst_16 = arith.constant dense<0xFF800000> : vector<2x4x4xf32>
    %18 = vector.multi_reduction <maximumf>, %17, %cst_16 [3] : vector<2x4x4x4xf32> to vector<2x4x4xf32>
    %19 = vector.shape_cast %18 : vector<2x4x4xf32> to vector<2x4x4x1xf32>
    %20 = vector.broadcast %19 : vector<2x4x4x1xf32> to vector<2x4x4x4xf32>
    %21 = arith.subf %17, %20 : vector<2x4x4x4xf32>
    %22 = math.exp %21 : vector<2x4x4x4xf32>
    %cst_17 = arith.constant dense<0.000000e+00> : vector<2x4x4xf32>
    %23 = vector.multi_reduction <add>, %22, %cst_17 [3] : vector<2x4x4x4xf32> to vector<2x4x4xf32>
    %24 = vector.shape_cast %23 : vector<2x4x4xf32> to vector<2x4x4x1xf32>
    %25 = tpu.reciprocal %24 {approx = true} : vector<2x4x4x1xf32> -> vector<2x4x4x1xf32>
    %26 = vector.broadcast %25 : vector<2x4x4x1xf32> to vector<2x4x4x4xf32>
    %27 = arith.mulf %22, %26 : vector<2x4x4x4xf32>
    %28 = arith.truncf %27 : vector<2x4x4x4xf32> to vector<2x4x4x4xbf16>
    %c0_18 = arith.constant 0 : index
    %c0_19 = arith.constant 0 : index
    %c0_20 = arith.constant 0 : index
    %c0_21 = arith.constant 0 : index
    %29 = vector.load %arg6[%c0_18, %c0_19, %c0_20, %c0_21] : memref<2x4x4x4xbf16, #tpu.memory_space<vmem>>, vector<2x4x4x4xbf16>
    tpu.vector_store %arg6[%c0_18, %c0_19, %c0_20, %c0_21], %28 {strides = array<i32>} : memref<2x4x4x4xbf16, #tpu.memory_space<vmem>>, vector<2x4x4x4xbf16>,
    %30 = vector.shape_cast %27 : vector<2x4x4x4xf32> to vector<8x4x4xf32>
    %31 = arith.truncf %30 : vector<8x4x4xf32> to vector<8x4x4xbf16>
    "tpu.trace_start"() <{level = 10 : i32, message = "bqk,bkd->bqd"}> : () -> ()
    %cst_22 = arith.constant dense<0.000000e+00> : vector<8x4x64xf32>
    %32 = tpu.matmul %31, %7, %cst_22 {dimension_numbers = #tpu.dot_dimension_numbers<[2], [1], [1], [2], [0, 0, 0, 1, 1, 2], [0], [0]>} : vector<8x4x4xbf16>, vector<8x4x64xbf16>, vector<8x4x64xf32> -> vector<8x4x64xf32>
    "tpu.trace_stop"() : () -> ()
    %33 = vector.shape_cast %32 : vector<8x4x64xf32> to vector<2x4x4x64xf32>
    %34 = vector.extract_strided_slice %33 {offsets = [0, 0, 0, 0], sizes = [2, 1, 4, 64], strides = [1, 1, 1, 1]} : vector<2x4x4x64xf32> to vector<2x1x4x64xf32>
    %35 = vector.shape_cast %34 : vector<2x1x4x64xf32> to vector<2x4x64xf32>
    %36 = vector.extract_strided_slice %33 {offsets = [0, 1, 0, 0], sizes = [2, 1, 4, 64], strides = [1, 1, 1, 1]} : vector<2x4x4x64xf32> to vector<2x1x4x64xf32>
    %37 = vector.shape_cast %36 : vector<2x1x4x64xf32> to vector<2x4x64xf32>
    %38 = vector.extract_strided_slice %33 {offsets = [0, 2, 0, 0], sizes = [2, 1, 4, 64], strides = [1, 1, 1, 1]} : vector<2x4x4x64xf32> to vector<2x1x4x64xf32>
    %39 = vector.shape_cast %38 : vector<2x1x4x64xf32> to vector<2x4x64xf32>
    %40 = vector.extract_strided_slice %33 {offsets = [0, 3, 0, 0], sizes = [2, 1, 4, 64], strides = [1, 1, 1, 1]} : vector<2x4x4x64xf32> to vector<2x1x4x64xf32>
    %41 = vector.shape_cast %40 : vector<2x1x4x64xf32> to vector<2x4x64xf32>
    %42 = tpu.concatenate %35, %37, %39, %41 in 2 : vector<2x4x64xf32>, vector<2x4x64xf32>, vector<2x4x64xf32>, vector<2x4x64xf32> -> vector<2x4x256xf32>
    %43 = arith.truncf %42 : vector<2x4x256xf32> to vector<2x4x256xbf16>
    %c0_23 = arith.constant 0 : index
    %c0_24 = arith.constant 0 : index
    %c0_25 = arith.constant 0 : index
    %44 = vector.load %arg5[%c0_23, %c0_24, %c0_25] : memref<2x4x256xbf16, #tpu.memory_space<vmem>>, vector<2x4x256xbf16>
    tpu.vector_store %arg5[%c0_23, %c0_24, %c0_25], %43 {strides = array<i32>} : memref<2x4x256xbf16, #tpu.memory_space<vmem>>, vector<2x4x256xbf16>,
    return
  }
  func.func @transform_0(%arg0: i32) -> (i32, i32, i32, i32) {
    %c0_i32 = arith.constant 0 : i32
    %c0_i32_0 = arith.constant 0 : i32
    %c0_i32_1 = arith.constant 0 : i32
    %c0_i32_2 = arith.constant 0 : i32
    return %arg0, %c0_i32, %c0_i32_0, %c0_i32_1 : i32, i32, i32, i32
  }
  func.func @transform_1(%arg0: i32) -> (i32, i32, i32, i32) {
    %c0_i32 = arith.constant 0 : i32
    %c0_i32_0 = arith.constant 0 : i32
    %c0_i32_1 = arith.constant 0 : i32
    %c0_i32_2 = arith.constant 0 : i32
    return %arg0, %c0_i32, %c0_i32_0, %c0_i32_1 : i32, i32, i32, i32
  }
  func.func @transform_2(%arg0: i32) -> (i32, i32, i32, i32) {
    %c0_i32 = arith.constant 0 : i32
    %c0_i32_0 = arith.constant 0 : i32
    %c0_i32_1 = arith.constant 0 : i32
    %c0_i32_2 = arith.constant 0 : i32
    return %arg0, %c0_i32, %c0_i32_0, %c0_i32_1 : i32, i32, i32, i32
  }
  func.func @transform_3(%arg0: i32) -> (i32, i32, i32) {
    %c0_i32 = arith.constant 0 : i32
    %c0_i32_0 = arith.constant 0 : i32
    %c0_i32_1 = arith.constant 0 : i32
    return %arg0, %c0_i32, %c0_i32_0 : i32, i32, i32
  }
  func.func @transform_4(%arg0: i32) -> (i32, i32, i32) {
    %c0_i32 = arith.constant 0 : i32
    %c0_i32_0 = arith.constant 0 : i32
    %c0_i32_1 = arith.constant 0 : i32
    return %arg0, %c0_i32, %c0_i32_0 : i32, i32, i32
  }
  func.func @transform_5(%arg0: i32) -> (i32, i32, i32, i32) {
    %c0_i32 = arith.constant 0 : i32
    %c0_i32_0 = arith.constant 0 : i32
    %c0_i32_1 = arith.constant 0 : i32
    %c0_i32_2 = arith.constant 0 : i32
    return %arg0, %c0_i32, %c0_i32_0, %c0_i32_1 : i32, i32, i32, i32
  }
}

module attributes {stable_mosaic.version = 11 : i64} {
  func.func @_proj_residual_ln_kernel(%arg0: i32, %arg1: memref<8x256xbf16, #tpu.memory_space<vmem>>, %arg2: memref<256x512xbf16, #tpu.memory_space<vmem>>, %arg3: memref<1x512xf32, #tpu.memory_space<vmem>>, %arg4: memref<8x512xbf16, #tpu.memory_space<vmem>>, %arg5: memref<1x512xf32, #tpu.memory_space<vmem>>, %arg6: memref<1x512xf32, #tpu.memory_space<vmem>>, %arg7: memref<8x512xbf16, #tpu.memory_space<vmem>>) attributes {dimension_semantics = [#tpu.dimension_semantics<arbitrary>], iteration_bounds = array<i64: 1>, scalar_prefetch = 0 : i64, scratch_operands = 0 : i64, tpu.core_type = #tpu.core_type<tc>, window_params = [{pipeline_mode = #tpu.pipeline_mode<synchronous>, transform_indices = @transform_0, window_bounds = array<i64: 8, 256>}, {pipeline_mode = #tpu.pipeline_mode<synchronous>, transform_indices = @transform_1, window_bounds = array<i64: 256, 512>}, {pipeline_mode = #tpu.pipeline_mode<synchronous>, transform_indices = @transform_2, window_bounds = array<i64: 1, 512>}, {pipeline_mode = #tpu.pipeline_mode<synchronous>, transform_indices = @transform_3, window_bounds = array<i64: 8, 512>}, {pipeline_mode = #tpu.pipeline_mode<synchronous>, transform_indices = @transform_4, window_bounds = array<i64: 1, 512>}, {pipeline_mode = #tpu.pipeline_mode<synchronous>, transform_indices = @transform_5, window_bounds = array<i64: 1, 512>}, {pipeline_mode = #tpu.pipeline_mode<synchronous>, transform_indices = @transform_6, window_bounds = array<i64: 8, 512>}]} {
    %c0 = arith.constant 0 : index
    %c0_0 = arith.constant 0 : index
    %0 = vector.load %arg1[%c0, %c0_0] : memref<8x256xbf16, #tpu.memory_space<vmem>>, vector<8x256xbf16>
    %c0_1 = arith.constant 0 : index
    %c0_2 = arith.constant 0 : index
    %1 = vector.load %arg2[%c0_1, %c0_2] : memref<256x512xbf16, #tpu.memory_space<vmem>>, vector<256x512xbf16>
    %cst = arith.constant dense<0.000000e+00> : vector<8x512xf32>
    %2 = tpu.matmul %0, %1, %cst {dimension_numbers = #tpu.dot_dimension_numbers<[1], [0], [0], [1], [0, 0, 1, 1], [], []>} : vector<8x256xbf16>, vector<256x512xbf16>, vector<8x512xf32> -> vector<8x512xf32>
    %c0_3 = arith.constant 0 : index
    %c0_4 = arith.constant 0 : index
    %3 = vector.load %arg3[%c0_3, %c0_4] : memref<1x512xf32, #tpu.memory_space<vmem>>, vector<1x512xf32>
    %4 = vector.broadcast %3 : vector<1x512xf32> to vector<8x512xf32>
    %5 = arith.addf %2, %4 : vector<8x512xf32>
    %c0_5 = arith.constant 0 : index
    %c0_6 = arith.constant 0 : index
    %6 = vector.load %arg4[%c0_5, %c0_6] : memref<8x512xbf16, #tpu.memory_space<vmem>>, vector<8x512xbf16>
    %7 = arith.extf %6 : vector<8x512xbf16> to vector<8x512xf32>
    %8 = arith.addf %5, %7 : vector<8x512xf32>
    %c0_7 = arith.constant 0 : index
    %c0_8 = arith.constant 0 : index
    %9 = vector.load %arg5[%c0_7, %c0_8] : memref<1x512xf32, #tpu.memory_space<vmem>>, vector<1x512xf32>
    %c0_9 = arith.constant 0 : index
    %c0_10 = arith.constant 0 : index
    %10 = vector.load %arg6[%c0_9, %c0_10] : memref<1x512xf32, #tpu.memory_space<vmem>>, vector<1x512xf32>
    %cst_11 = arith.constant dense<0.000000e+00> : vector<8xf32>
    %11 = vector.multi_reduction <add>, %8, %cst_11 [1] : vector<8x512xf32> to vector<8xf32>
    %12 = vector.shape_cast %11 : vector<8xf32> to vector<8x1xf32>
    %cst_12 = arith.constant 5.120000e+02 : f32
    %13 = vector.broadcast %cst_12 : f32 to vector<8x1xf32>
    %14 = arith.divf %12, %13 : vector<8x1xf32>
    %15 = vector.broadcast %14 : vector<8x1xf32> to vector<8x512xf32>
    %16 = arith.subf %8, %15 : vector<8x512xf32>
    %17 = arith.mulf %16, %16 : vector<8x512xf32>
    %cst_13 = arith.constant dense<0.000000e+00> : vector<8xf32>
    %18 = vector.multi_reduction <add>, %17, %cst_13 [1] : vector<8x512xf32> to vector<8xf32>
    %19 = vector.shape_cast %18 : vector<8xf32> to vector<8x1xf32>
    %cst_14 = arith.constant 5.120000e+02 : f32
    %20 = vector.broadcast %cst_14 : f32 to vector<8x1xf32>
    %21 = arith.divf %19, %20 : vector<8x1xf32>
    %cst_15 = arith.constant 9.99999974E-6 : f32
    %22 = vector.broadcast %cst_15 : f32 to vector<8x1xf32>
    %23 = arith.addf %21, %22 : vector<8x1xf32>
    %24 = math.rsqrt %23 : vector<8x1xf32>
    %25 = vector.broadcast %24 : vector<8x1xf32> to vector<8x512xf32>
    %26 = arith.mulf %16, %25 : vector<8x512xf32>
    %27 = vector.broadcast %9 : vector<1x512xf32> to vector<8x512xf32>
    %28 = arith.mulf %26, %27 : vector<8x512xf32>
    %29 = vector.broadcast %10 : vector<1x512xf32> to vector<8x512xf32>
    %30 = arith.addf %28, %29 : vector<8x512xf32>
    %31 = arith.truncf %30 : vector<8x512xf32> to vector<8x512xbf16>
    %c0_16 = arith.constant 0 : index
    %c0_17 = arith.constant 0 : index
    %32 = vector.load %arg7[%c0_16, %c0_17] : memref<8x512xbf16, #tpu.memory_space<vmem>>, vector<8x512xbf16>
    tpu.vector_store %arg7[%c0_16, %c0_17], %31 {strides = array<i32>} : memref<8x512xbf16, #tpu.memory_space<vmem>>, vector<8x512xbf16>,
    return
  }
  func.func @transform_0(%arg0: i32) -> (i32, i32) {
    %c0_i32 = arith.constant 0 : i32
    %c0_i32_0 = arith.constant 0 : i32
    %c0_i32_1 = arith.constant 0 : i32
    return %c0_i32, %c0_i32_0 : i32, i32
  }
  func.func @transform_1(%arg0: i32) -> (i32, i32) {
    %c0_i32 = arith.constant 0 : i32
    %c0_i32_0 = arith.constant 0 : i32
    %c0_i32_1 = arith.constant 0 : i32
    return %c0_i32, %c0_i32_0 : i32, i32
  }
  func.func @transform_2(%arg0: i32) -> (i32, i32) {
    %c0_i32 = arith.constant 0 : i32
    %c0_i32_0 = arith.constant 0 : i32
    %c0_i32_1 = arith.constant 0 : i32
    return %c0_i32, %c0_i32_0 : i32, i32
  }
  func.func @transform_3(%arg0: i32) -> (i32, i32) {
    %c0_i32 = arith.constant 0 : i32
    %c0_i32_0 = arith.constant 0 : i32
    %c0_i32_1 = arith.constant 0 : i32
    return %c0_i32, %c0_i32_0 : i32, i32
  }
  func.func @transform_4(%arg0: i32) -> (i32, i32) {
    %c0_i32 = arith.constant 0 : i32
    %c0_i32_0 = arith.constant 0 : i32
    %c0_i32_1 = arith.constant 0 : i32
    return %c0_i32, %c0_i32_0 : i32, i32
  }
  func.func @transform_5(%arg0: i32) -> (i32, i32) {
    %c0_i32 = arith.constant 0 : i32
    %c0_i32_0 = arith.constant 0 : i32
    %c0_i32_1 = arith.constant 0 : i32
    return %c0_i32, %c0_i32_0 : i32, i32
  }
  func.func @transform_6(%arg0: i32) -> (i32, i32) {
    %c0_i32 = arith.constant 0 : i32
    %c0_i32_0 = arith.constant 0 : i32
    %c0_i32_1 = arith.constant 0 : i32
    return %c0_i32, %c0_i32_0 : i32, i32
  }
}

module attributes {stable_mosaic.version = 11 : i64} {
  func.func @_ffn_residual_ln_kernel(%arg0: i32, %arg1: memref<8x512xbf16, #tpu.memory_space<vmem>>, %arg2: memref<512x2048xbf16, #tpu.memory_space<vmem>>, %arg3: memref<1x2048xf32, #tpu.memory_space<vmem>>, %arg4: memref<2048x512xbf16, #tpu.memory_space<vmem>>, %arg5: memref<1x512xf32, #tpu.memory_space<vmem>>, %arg6: memref<1x512xf32, #tpu.memory_space<vmem>>, %arg7: memref<1x512xf32, #tpu.memory_space<vmem>>, %arg8: memref<8x512xbf16, #tpu.memory_space<vmem>>) attributes {dimension_semantics = [#tpu.dimension_semantics<arbitrary>], iteration_bounds = array<i64: 1>, scalar_prefetch = 0 : i64, scratch_operands = 0 : i64, tpu.core_type = #tpu.core_type<tc>, window_params = [{pipeline_mode = #tpu.pipeline_mode<synchronous>, transform_indices = @transform_0, window_bounds = array<i64: 8, 512>}, {pipeline_mode = #tpu.pipeline_mode<synchronous>, transform_indices = @transform_1, window_bounds = array<i64: 512, 2048>}, {pipeline_mode = #tpu.pipeline_mode<synchronous>, transform_indices = @transform_2, window_bounds = array<i64: 1, 2048>}, {pipeline_mode = #tpu.pipeline_mode<synchronous>, transform_indices = @transform_3, window_bounds = array<i64: 2048, 512>}, {pipeline_mode = #tpu.pipeline_mode<synchronous>, transform_indices = @transform_4, window_bounds = array<i64: 1, 512>}, {pipeline_mode = #tpu.pipeline_mode<synchronous>, transform_indices = @transform_5, window_bounds = array<i64: 1, 512>}, {pipeline_mode = #tpu.pipeline_mode<synchronous>, transform_indices = @transform_6, window_bounds = array<i64: 1, 512>}, {pipeline_mode = #tpu.pipeline_mode<synchronous>, transform_indices = @transform_7, window_bounds = array<i64: 8, 512>}]} {
    %c0 = arith.constant 0 : index
    %c0_0 = arith.constant 0 : index
    %0 = vector.load %arg1[%c0, %c0_0] : memref<8x512xbf16, #tpu.memory_space<vmem>>, vector<8x512xbf16>
    %c0_1 = arith.constant 0 : index
    %c0_2 = arith.constant 0 : index
    %1 = vector.load %arg2[%c0_1, %c0_2] : memref<512x2048xbf16, #tpu.memory_space<vmem>>, vector<512x2048xbf16>
    %cst = arith.constant dense<0.000000e+00> : vector<8x2048xf32>
    %2 = tpu.matmul %0, %1, %cst {dimension_numbers = #tpu.dot_dimension_numbers<[1], [0], [0], [1], [0, 0, 1, 1], [], []>} : vector<8x512xbf16>, vector<512x2048xbf16>, vector<8x2048xf32> -> vector<8x2048xf32>
    %c0_3 = arith.constant 0 : index
    %c0_4 = arith.constant 0 : index
    %3 = vector.load %arg3[%c0_3, %c0_4] : memref<1x2048xf32, #tpu.memory_space<vmem>>, vector<1x2048xf32>
    %4 = vector.broadcast %3 : vector<1x2048xf32> to vector<8x2048xf32>
    %5 = arith.addf %2, %4 : vector<8x2048xf32>
    %cst_5 = arith.constant 0.000000e+00 : f32
    %6 = vector.broadcast %cst_5 : f32 to vector<8x2048xf32>
    %7 = arith.maximumf %5, %6 : vector<8x2048xf32>
    %8 = arith.truncf %7 : vector<8x2048xf32> to vector<8x2048xbf16>
    %c0_6 = arith.constant 0 : index
    %c0_7 = arith.constant 0 : index
    %9 = vector.load %arg4[%c0_6, %c0_7] : memref<2048x512xbf16, #tpu.memory_space<vmem>>, vector<2048x512xbf16>
    %cst_8 = arith.constant dense<0.000000e+00> : vector<8x512xf32>
    %10 = tpu.matmul %8, %9, %cst_8 {dimension_numbers = #tpu.dot_dimension_numbers<[1], [0], [0], [1], [0, 0, 1, 1], [], []>} : vector<8x2048xbf16>, vector<2048x512xbf16>, vector<8x512xf32> -> vector<8x512xf32>
    %c0_9 = arith.constant 0 : index
    %c0_10 = arith.constant 0 : index
    %11 = vector.load %arg5[%c0_9, %c0_10] : memref<1x512xf32, #tpu.memory_space<vmem>>, vector<1x512xf32>
    %12 = vector.broadcast %11 : vector<1x512xf32> to vector<8x512xf32>
    %13 = arith.addf %10, %12 : vector<8x512xf32>
    %14 = arith.extf %0 : vector<8x512xbf16> to vector<8x512xf32>
    %15 = arith.addf %13, %14 : vector<8x512xf32>
    %c0_11 = arith.constant 0 : index
    %c0_12 = arith.constant 0 : index
    %16 = vector.load %arg6[%c0_11, %c0_12] : memref<1x512xf32, #tpu.memory_space<vmem>>, vector<1x512xf32>
    %c0_13 = arith.constant 0 : index
    %c0_14 = arith.constant 0 : index
    %17 = vector.load %arg7[%c0_13, %c0_14] : memref<1x512xf32, #tpu.memory_space<vmem>>, vector<1x512xf32>
    %cst_15 = arith.constant dense<0.000000e+00> : vector<8xf32>
    %18 = vector.multi_reduction <add>, %15, %cst_15 [1] : vector<8x512xf32> to vector<8xf32>
    %19 = vector.shape_cast %18 : vector<8xf32> to vector<8x1xf32>
    %cst_16 = arith.constant 5.120000e+02 : f32
    %20 = vector.broadcast %cst_16 : f32 to vector<8x1xf32>
    %21 = arith.divf %19, %20 : vector<8x1xf32>
    %22 = vector.broadcast %21 : vector<8x1xf32> to vector<8x512xf32>
    %23 = arith.subf %15, %22 : vector<8x512xf32>
    %24 = arith.mulf %23, %23 : vector<8x512xf32>
    %cst_17 = arith.constant dense<0.000000e+00> : vector<8xf32>
    %25 = vector.multi_reduction <add>, %24, %cst_17 [1] : vector<8x512xf32> to vector<8xf32>
    %26 = vector.shape_cast %25 : vector<8xf32> to vector<8x1xf32>
    %cst_18 = arith.constant 5.120000e+02 : f32
    %27 = vector.broadcast %cst_18 : f32 to vector<8x1xf32>
    %28 = arith.divf %26, %27 : vector<8x1xf32>
    %cst_19 = arith.constant 9.99999974E-6 : f32
    %29 = vector.broadcast %cst_19 : f32 to vector<8x1xf32>
    %30 = arith.addf %28, %29 : vector<8x1xf32>
    %31 = math.rsqrt %30 : vector<8x1xf32>
    %32 = vector.broadcast %31 : vector<8x1xf32> to vector<8x512xf32>
    %33 = arith.mulf %23, %32 : vector<8x512xf32>
    %34 = vector.broadcast %16 : vector<1x512xf32> to vector<8x512xf32>
    %35 = arith.mulf %33, %34 : vector<8x512xf32>
    %36 = vector.broadcast %17 : vector<1x512xf32> to vector<8x512xf32>
    %37 = arith.addf %35, %36 : vector<8x512xf32>
    %38 = arith.truncf %37 : vector<8x512xf32> to vector<8x512xbf16>
    %c0_20 = arith.constant 0 : index
    %c0_21 = arith.constant 0 : index
    %39 = vector.load %arg8[%c0_20, %c0_21] : memref<8x512xbf16, #tpu.memory_space<vmem>>, vector<8x512xbf16>
    tpu.vector_store %arg8[%c0_20, %c0_21], %38 {strides = array<i32>} : memref<8x512xbf16, #tpu.memory_space<vmem>>, vector<8x512xbf16>,
    return
  }
  func.func @transform_0(%arg0: i32) -> (i32, i32) {
    %c0_i32 = arith.constant 0 : i32
    %c0_i32_0 = arith.constant 0 : i32
    %c0_i32_1 = arith.constant 0 : i32
    return %c0_i32, %c0_i32_0 : i32, i32
  }
  func.func @transform_1(%arg0: i32) -> (i32, i32) {
    %c0_i32 = arith.constant 0 : i32
    %c0_i32_0 = arith.constant 0 : i32
    %c0_i32_1 = arith.constant 0 : i32
    return %c0_i32, %c0_i32_0 : i32, i32
  }
  func.func @transform_2(%arg0: i32) -> (i32, i32) {
    %c0_i32 = arith.constant 0 : i32
    %c0_i32_0 = arith.constant 0 : i32
    %c0_i32_1 = arith.constant 0 : i32
    return %c0_i32, %c0_i32_0 : i32, i32
  }
  func.func @transform_3(%arg0: i32) -> (i32, i32) {
    %c0_i32 = arith.constant 0 : i32
    %c0_i32_0 = arith.constant 0 : i32
    %c0_i32_1 = arith.constant 0 : i32
    return %c0_i32, %c0_i32_0 : i32, i32
  }
  func.func @transform_4(%arg0: i32) -> (i32, i32) {
    %c0_i32 = arith.constant 0 : i32
    %c0_i32_0 = arith.constant 0 : i32
    %c0_i32_1 = arith.constant 0 : i32
    return %c0_i32, %c0_i32_0 : i32, i32
  }
  func.func @transform_5(%arg0: i32) -> (i32, i32) {
    %c0_i32 = arith.constant 0 : i32
    %c0_i32_0 = arith.constant 0 : i32
    %c0_i32_1 = arith.constant 0 : i32
    return %c0_i32, %c0_i32_0 : i32, i32
  }
  func.func @transform_6(%arg0: i32) -> (i32, i32) {
    %c0_i32 = arith.constant 0 : i32
    %c0_i32_0 = arith.constant 0 : i32
    %c0_i32_1 = arith.constant 0 : i32
    return %c0_i32, %c0_i32_0 : i32, i32
  }
  func.func @transform_7(%arg0: i32) -> (i32, i32) {
    %c0_i32 = arith.constant 0 : i32
    %c0_i32_0 = arith.constant 0 : i32
    %c0_i32_1 = arith.constant 0 : i32
    return %c0_i32, %c0_i32_0 : i32, i32
  }
}

</mosaic_0001>

<llo_original>
// kernel: custom-call.2
$region0: #{custom-call.2}
  %s0 = inlined_call_operand.vmem [shape: bf16[6,2,4,4,4], index: 0, kind: output, shape index: {}]

// kernel: closed_call.17
$region0: #{closed_call.17}
  #allocation0 [shape = 'u32[]', space=smem, size = 0x4, offset = 0x4, fixed_abs, tag = 'smem constant byte address 0x4 - core index']
  #allocation1 [shape = 'u32[72,128]{1,0:T(1,128)}', space=vmem, size = 0x9000, scoped, tag = 'internal scratch']
  %s0 = inlined_call_operand.vmem [shape: bf16[8,512], index: 0, kind: input, shape index: {}]
  %s1 = inlined_call_operand.vmem [shape: bf16[512,768], index: 1, kind: input, shape index: {}]
  %s2 = inlined_call_operand.vmem [shape: f32[1,768], index: 2, kind: input, shape index: {}]
  %s3 = inlined_call_operand.vmem [shape: bf16[8,768], index: 3, kind: output, shape index: {}]
  %s4 = sld [smem:[#allocation0]]
  $region22: #{closed_call.17} parent=0
    _
  %s6 = ssub.s32 1, %s4
  %s7 = scalar_select 0, %s6, %s4
  // Predicated region
  $region2: #{closed_call.17} parent=0 // pred_check
    _
  $region3: #{closed_call.17} parent=0 // pred_check_branch
    %9 = sbr.rel (0) target = $region5
  $region4: #{closed_call.17} parent=0 // pred_region
    _
  $region5: #{closed_call.17} parent=0 // pred_fallthru
    _
  // Predicated region
  $region6: #{closed_call.17} parent=0 // pred_check
    _
  $region7: #{closed_call.17} parent=0 // pred_check_branch
    %11 = sbr.rel (0) target = $region9
  $region8: #{closed_call.17} parent=0 // pred_region
    _
  $region9: #{closed_call.17} parent=0 // pred_fallthru
    _
  // Predicated region
  $region10: #{closed_call.17} parent=0 // pred_check
    _
  $region11: #{closed_call.17} parent=0 // pred_check_branch
    %13 = sbr.rel (0) target = $region13
  $region12: #{closed_call.17} parent=0 // pred_region
    _
  $region13: #{closed_call.17} parent=0 // pred_fallthru
    _
  %v14 = vld [vmem:[%s0] sm:$0xff]
  %v15 = vld [vmem:[%s0 + $0x8] sm:$0xff]
  %v16 = vld [vmem:[%s1] sm:$0xff]
  %v17 = vld [vmem:[%s1 + $0x8] sm:$0xff]
  %v18 = vld [vmem:[%s1 + $0x10] sm:$0xff]
  %v19 = vld [vmem:[%s1 + $0x18] sm:$0xff]
  %v20 = vld [vmem:[%s1 + $0x20] sm:$0xff]
  %v21 = vld [vmem:[%s1 + $0x28] sm:$0xff]
  %v22 = vld [vmem:[%s1 + $0x30] sm:$0xff]
  %v23 = vld [vmem:[%s1 + $0x38] sm:$0xff]
  %v24 = vld [vmem:[%s1 + $0x40] sm:$0xff]
  %v25 = vld [vmem:[%s1 + $0x48] sm:$0xff]
  %v26 = vld [vmem:[%s1 + $0x50] sm:$0xff]
  %v27 = vld [vmem:[%s1 + $0x58] sm:$0xff]
  %v28 = vld [vmem:[%s1 + $0x60] sm:$0xff]
  %v29 = vld [vmem:[%s1 + $0x68] sm:$0xff]
  %v30 = vld [vmem:[%s1 + $0x70] sm:$0xff]
  %v31 = vld [vmem:[%s1 + $0x78] sm:$0xff]
  %v32 = vld [vmem:[%s1 + $0x80] sm:$0xff]
  %v33 = vld [vmem:[%s1 + $0x88] sm:$0xff]
  %v34 = vld [vmem:[%s1 + $0x90] sm:$0xff]
  %v35 = vld [vmem:[%s1 + $0x98] sm:$0xff]
  %v36 = vld [vmem:[%s1 + $0xa0] sm:$0xff]
  %v37 = vld [vmem:[%s1 + $0xa8] sm:$0xff]
  %v38 = vld [vmem:[%s1 + $0xb0] sm:$0xff]
  %v39 = vld [vmem:[%s1 + $0xb8] sm:$0xff]
  %v40 = vld [vmem:[%s1 + $0xc0] sm:$0xff]
  %v41 = vld [vmem:[%s1 + $0xc8] sm:$0xff]
  %v42 = vld [vmem:[%s1 + $0xd0] sm:$0xff]
  %v43 = vld [vmem:[%s1 + $0xd8] sm:$0xff]
  %v44 = vld [vmem:[%s1 + $0xe0] sm:$0xff]
  %v45 = vld [vmem:[%s1 + $0xe8] sm:$0xff]
  %v46 = vld [vmem:[%s1 + $0xf0] sm:$0xff]
  %v47 = vld [vmem:[%s1 + $0xf8] sm:$0xff]
  %v48 = vld [vmem:[%s1 + $0x100] sm:$0xff]
  %v49 = vld [vmem:[%s1 + $0x108] sm:$0xff]
  %v50 = vld [vmem:[%s1 + $0x110] sm:$0xff]
  %v51 = vld [vmem:[%s1 + $0x118] sm:$0xff]
  %v52 = vld [vmem:[%s1 + $0x120] sm:$0xff]
  %v53 = vld [vmem:[%s1 + $0x128] sm:$0xff]
  %v54 = vld [vmem:[%s1 + $0x130] sm:$0xff]
  %v55 = vld [vmem:[%s1 + $0x138] sm:$0xff]
  %v56 = vld [vmem:[%s1 + $0x140] sm:$0xff]
  %v57 = vld [vmem:[%s1 + $0x148] sm:$0xff]
  %v58 = vld [vmem:[%s1 + $0x150] sm:$0xff]
  %v59 = vld [vmem:[%s1 + $0x158] sm:$0xff]
  %v60 = vld [vmem:[%s1 + $0x160] sm:$0xff]
  %v61 = vld [vmem:[%s1 + $0x168] sm:$0xff]
  %v62 = vld [vmem:[%s1 + $0x170] sm:$0xff]
  %v63 = vld [vmem:[%s1 + $0x178] sm:$0xff]
  %v64 = vld [vmem:[%s1 + $0x180] sm:$0xff]
  %v65 = vld [vmem:[%s1 + $0x188] sm:$0xff]
  %v66 = vld [vmem:[%s1 + $0x190] sm:$0xff]
  %v67 = vld [vmem:[%s1 + $0x198] sm:$0xff]
  %v68 = vld [vmem:[%s1 + $0x1a0] sm:$0xff]
  %v69 = vld [vmem:[%s1 + $0x1a8] sm:$0xff]
  %v70 = vld [vmem:[%s1 + $0x1b0] sm:$0xff]
  %v71 = vld [vmem:[%s1 + $0x1b8] sm:$0xff]
  %v72 = vld [vmem:[%s1 + $0x1c0] sm:$0xff]
  %v73 = vld [vmem:[%s1 + $0x1c8] sm:$0xff]
  %v74 = vld [vmem:[%s1 + $0x1d0] sm:$0xff]
  %v75 = vld [vmem:[%s1 + $0x1d8] sm:$0xff]
  %v76 = vld [vmem:[%s1 + $0x1e0] sm:$0xff]
  %v77 = vld [vmem:[%s1 + $0x1e8] sm:$0xff]
  %v78 = vld [vmem:[%s1 + $0x1f0] sm:$0xff]
  %v79 = vld [vmem:[%s1 + $0x1f8] sm:$0xff]
  %v80 = vld [vmem:[%s1 + $0x200] sm:$0xff]
  %v81 = vld [vmem:[%s1 + $0x208] sm:$0xff]
  %v82 = vld [vmem:[%s1 + $0x210] sm:$0xff]
  %v83 = vld [vmem:[%s1 + $0x218] sm:$0xff]
  %v84 = vld [vmem:[%s1 + $0x220] sm:$0xff]
  %v85 = vld [vmem:[%s1 + $0x228] sm:$0xff]
  %v86 = vld [vmem:[%s1 + $0x230] sm:$0xff]
  %v87 = vld [vmem:[%s1 + $0x238] sm:$0xff]
  %v88 = vld [vmem:[%s1 + $0x240] sm:$0xff]
  %v89 = vld [vmem:[%s1 + $0x248] sm:$0xff]
  %v90 = vld [vmem:[%s1 + $0x250] sm:$0xff]
  %v91 = vld [vmem:[%s1 + $0x258] sm:$0xff]
  %v92 = vld [vmem:[%s1 + $0x260] sm:$0xff]
  %v93 = vld [vmem:[%s1 + $0x268] sm:$0xff]
  %v94 = vld [vmem:[%s1 + $0x270] sm:$0xff]
  %v95 = vld [vmem:[%s1 + $0x278] sm:$0xff]
  %v96 = vld [vmem:[%s1 + $0x280] sm:$0xff]
  %v97 = vld [vmem:[%s1 + $0x288] sm:$0xff]
  %v98 = vld [vmem:[%s1 + $0x290] sm:$0xff]
  %v99 = vld [vmem:[%s1 + $0x298] sm:$0xff]
  %v100 = vld [vmem:[%s1 + $0x2a0] sm:$0xff]
  %v101 = vld [vmem:[%s1 + $0x2a8] sm:$0xff]
  %v102 = vld [vmem:[%s1 + $0x2b0] sm:$0xff]
  %v103 = vld [vmem:[%s1 + $0x2b8] sm:$0xff]
  %v104 = vld [vmem:[%s1 + $0x2c0] sm:$0xff]
  %v105 = vld [vmem:[%s1 + $0x2c8] sm:$0xff]
  %v106 = vld [vmem:[%s1 + $0x2d0] sm:$0xff]
  %v107 = vld [vmem:[%s1 + $0x2d8] sm:$0xff]
  %v108 = vld [vmem:[%s1 + $0x2e0] sm:$0xff]
  %v109 = vld [vmem:[%s1 + $0x2e8] sm:$0xff]
  %v110 = vld [vmem:[%s1 + $0x2f0] sm:$0xff]
  %v111 = vld [vmem:[%s1 + $0x2f8] sm:$0xff]
  %v112 = vld [vmem:[%s1 + $0x300] sm:$0xff]
  %v113 = vld [vmem:[%s1 + $0x308] sm:$0xff]
  %v114 = vld [vmem:[%s1 + $0x310] sm:$0xff]
  %v115 = vld [vmem:[%s1 + $0x318] sm:$0xff]
  %v116 = vld [vmem:[%s1 + $0x320] sm:$0xff]
  %v117 = vld [vmem:[%s1 + $0x328] sm:$0xff]
  %v118 = vld [vmem:[%s1 + $0x330] sm:$0xff]
  %v119 = vld [vmem:[%s1 + $0x338] sm:$0xff]
  %v120 = vld [vmem:[%s1 + $0x340] sm:$0xff]
  %v121 = vld [vmem:[%s1 + $0x348] sm:$0xff]
  %v122 = vld [vmem:[%s1 + $0x350] sm:$0xff]
  %v123 = vld [vmem:[%s1 + $0x358] sm:$0xff]
  %v124 = vld [vmem:[%s1 + $0x360] sm:$0xff]
  %v125 = vld [vmem:[%s1 + $0x368] sm:$0xff]
  %v126 = vld [vmem:[%s1 + $0x370] sm:$0xff]
  %v127 = vld [vmem:[%s1 + $0x378] sm:$0xff]
  %v128 = vld [vmem:[%s1 + $0x380] sm:$0xff]
  %v129 = vld [vmem:[%s1 + $0x388] sm:$0xff]
  %v130 = vld [vmem:[%s1 + $0x390] sm:$0xff]
  %v131 = vld [vmem:[%s1 + $0x398] sm:$0xff]
  %v132 = vld [vmem:[%s1 + $0x3a0] sm:$0xff]
  %v133 = vld [vmem:[%s1 + $0x3a8] sm:$0xff]
  %v134 = vld [vmem:[%s1 + $0x3b0] sm:$0xff]
  %v135 = vld [vmem:[%s1 + $0x3b8] sm:$0xff]
  %v136 = vld [vmem:[%s1 + $0x3c0] sm:$0xff]
  %v137 = vld [vmem:[%s1 + $0x3c8] sm:$0xff]
  %v138 = vld [vmem:[%s1 + $0x3d0] sm:$0xff]
  %v139 = vld [vmem:[%s1 + $0x3d8] sm:$0xff]
  %v140 = vld [vmem:[%s1 + $0x3e0] sm:$0xff]
  %v141 = vld [vmem:[%s1 + $0x3e8] sm:$0xff]
  %v142 = vld [vmem:[%s1 + $0x3f0] sm:$0xff]
  %v143 = vld [vmem:[%s1 + $0x3f8] sm:$0xff]
  %v144 = vld [vmem:[%s1 + $0x400] sm:$0xff]
  %v145 = vld [vmem:[%s1 + $0x408] sm:$0xff]
  %v146 = vld [vmem:[%s1 + $0x410] sm:$0xff]
  %v147 = vld [vmem:[%s1 + $0x418] sm:$0xff]
  %v148 = vld [vmem:[%s1 + $0x420] sm:$0xff]
  %v149 = vld [vmem:[%s1 + $0x428] sm:$0xff]
  %v150 = vld [vmem:[%s1 + $0x430] sm:$0xff]
  %v151 = vld [vmem:[%s1 + $0x438] sm:$0xff]
  %v152 = vld [vmem:[%s1 + $0x440] sm:$0xff]
  %v153 = vld [vmem:[%s1 + $0x448] sm:$0xff]
  %v154 = vld [vmem:[%s1 + $0x450] sm:$0xff]
  %v155 = vld [vmem:[%s1 + $0x458] sm:$0xff]
  %v156 = vld [vmem:[%s1 + $0x460] sm:$0xff]
  %v157 = vld [vmem:[%s1 + $0x468] sm:$0xff]
  %v158 = vld [vmem:[%s1 + $0x470] sm:$0xff]
  %v159 = vld [vmem:[%s1 + $0x478] sm:$0xff]
  %v160 = vld [vmem:[%s1 + $0x480] sm:$0xff]
  %v161 = vld [vmem:[%s1 + $0x488] sm:$0xff]
  %v162 = vld [vmem:[%s1 + $0x490] sm:$0xff]
  %v163 = vld [vmem:[%s1 + $0x498] sm:$0xff]
  %v164 = vld [vmem:[%s1 + $0x4a0] sm:$0xff]
  %v165 = vld [vmem:[%s1 + $0x4a8] sm:$0xff]
  %v166 = vld [vmem:[%s1 + $0x4b0] sm:$0xff]
  %v167 = vld [vmem:[%s1 + $0x4b8] sm:$0xff]
  %v168 = vld [vmem:[%s1 + $0x4c0] sm:$0xff]
  %v169 = vld [vmem:[%s1 + $0x4c8] sm:$0xff]
  %v170 = vld [vmem:[%s1 + $0x4d0] sm:$0xff]
  %v171 = vld [vmem:[%s1 + $0x4d8] sm:$0xff]
  %v172 = vld [vmem:[%s1 + $0x4e0] sm:$0xff]
  %v173 = vld [vmem:[%s1 + $0x4e8] sm:$0xff]
  %v174 = vld [vmem:[%s1 + $0x4f0] sm:$0xff]
  %v175 = vld [vmem:[%s1 + $0x4f8] sm:$0xff]
  %v176 = vld [vmem:[%s1 + $0x500] sm:$0xff]
  %v177 = vld [vmem:[%s1 + $0x508] sm:$0xff]
  %v178 = vld [vmem:[%s1 + $0x510] sm:$0xff]
  %v179 = vld [vmem:[%s1 + $0x518] sm:$0xff]
  %v180 = vld [vmem:[%s1 + $0x520] sm:$0xff]
  %v181 = vld [vmem:[%s1 + $0x528] sm:$0xff]
  %v182 = vld [vmem:[%s1 + $0x530] sm:$0xff]
  %v183 = vld [vmem:[%s1 + $0x538] sm:$0xff]
  %v184 = vld [vmem:[%s1 + $0x540] sm:$0xff]
  %v185 = vld [vmem:[%s1 + $0x548] sm:$0xff]
  %v186 = vld [vmem:[%s1 + $0x550] sm:$0xff]
  %v187 = vld [vmem:[%s1 + $0x558] sm:$0xff]
  %v188 = vld [vmem:[%s1 + $0x560] sm:$0xff]
  %v189 = vld [vmem:[%s1 + $0x568] sm:$0xff]
  %v190 = vld [vmem:[%s1 + $0x570] sm:$0xff]
  %v191 = vld [vmem:[%s1 + $0x578] sm:$0xff]
  %v192 = vld [vmem:[%s1 + $0x580] sm:$0xff]
  %v193 = vld [vmem:[%s1 + $0x588] sm:$0xff]
  %v194 = vld [vmem:[%s1 + $0x590] sm:$0xff]
  %v195 = vld [vmem:[%s1 + $0x598] sm:$0xff]
  %v196 = vld [vmem:[%s1 + $0x5a0] sm:$0xff]
  %v197 = vld [vmem:[%s1 + $0x5a8] sm:$0xff]
  %v198 = vld [vmem:[%s1 + $0x5b0] sm:$0xff]
  %v199 = vld [vmem:[%s1 + $0x5b8] sm:$0xff]
  %v200 = vld [vmem:[%s1 + $0x5c0] sm:$0xff]
  %v201 = vld [vmem:[%s1 + $0x5c8] sm:$0xff]
  %v202 = vld [vmem:[%s1 + $0x5d0] sm:$0xff]
  %v203 = vld [vmem:[%s1 + $0x5d8] sm:$0xff]
  %v204 = vld [vmem:[%s1 + $0x5e0] sm:$0xff]
  %v205 = vld [vmem:[%s1 + $0x5e8] sm:$0xff]
  %v206 = vld [vmem:[%s1 + $0x5f0] sm:$0xff]
  %v207 = vld [vmem:[%s1 + $0x5f8] sm:$0xff]
  %v208 = vld [vmem:[%s2] sm:$0x3f]
  %v210 = vperm.slane %v208, 0
  %v211 = vperm.slane %v208, 1
  %v212 = vperm.slane %v208, 2
  %v213 = vperm.slane %v208, 3
  %v214 = vperm.slane %v208, 4
  %v215 = vperm.slane %v208, 5
  %v224 = vunpack.c.l.b16 %v14
  %v225 = vunpack.c.h.b16 %v14
  %v226 = vunpack.c.l.b16 %v15
  %v227 = vunpack.c.h.b16 %v15
  %v228 = vpack.c.b16 %v224, %v224
  %v229 = vpack.c.b16 %v225, %v225
  %v230 = vpack.c.b16 %v226, %v226
  %v231 = vpack.c.b16 %v227, %v227
  %v428 = vunpack.c.l.b16 %v16
  %v429 = vunpack.c.h.b16 %v16
  %v430 = vunpack.c.l.b16 %v17
  %v431 = vunpack.c.h.b16 %v17
  %v432 = vunpack.c.l.b16 %v18
  %v433 = vunpack.c.h.b16 %v18
  %v434 = vunpack.c.l.b16 %v19
  %v435 = vunpack.c.h.b16 %v19
  %v436 = vunpack.c.l.b16 %v20
  %v437 = vunpack.c.h.b16 %v20
  %v438 = vunpack.c.l.b16 %v21
  %v439 = vunpack.c.h.b16 %v21
  %v440 = vunpack.c.l.b16 %v22
  %v441 = vunpack.c.h.b16 %v22
  %v442 = vunpack.c.l.b16 %v23
  %v443 = vunpack.c.h.b16 %v23
  %v444 = vunpack.c.l.b16 %v24
  %v445 = vunpack.c.h.b16 %v24
  %v446 = vunpack.c.l.b16 %v25
  %v447 = vunpack.c.h.b16 %v25
  %v448 = vunpack.c.l.b16 %v26
  %v449 = vunpack.c.h.b16 %v26
  %v450 = vunpack.c.l.b16 %v27
  %v451 = vunpack.c.h.b16 %v27
  %v452 = vunpack.c.l.b16 %v28
  %v453 = vunpack.c.h.b16 %v28
  %v454 = vunpack.c.l.b16 %v29
  %v455 = vunpack.c.h.b16 %v29
  %v456 = vunpack.c.l.b16 %v30
  %v457 = vunpack.c.h.b16 %v30
  %v458 = vunpack.c.l.b16 %v31
  %v459 = vunpack.c.h.b16 %v31
  %v460 = vunpack.c.l.b16 %v32
  %v461 = vunpack.c.h.b16 %v32
  %v462 = vunpack.c.l.b16 %v33
  %v463 = vunpack.c.h.b16 %v33
  %v464 = vunpack.c.l.b16 %v34
  %v465 = vunpack.c.h.b16 %v34
  %v466 = vunpack.c.l.b16 %v35
  %v467 = vunpack.c.h.b16 %v35
  %v468 = vunpack.c.l.b16 %v36
  %v469 = vunpack.c.h.b16 %v36
  %v470 = vunpack.c.l.b16 %v37
  %v471 = vunpack.c.h.b16 %v37
  %v472 = vunpack.c.l.b16 %v38
  %v473 = vunpack.c.h.b16 %v38
  %v474 = vunpack.c.l.b16 %v39
  %v475 = vunpack.c.h.b16 %v39
  %v476 = vunpack.c.l.b16 %v40
  %v477 = vunpack.c.h.b16 %v40
  %v478 = vunpack.c.l.b16 %v41
  %v479 = vunpack.c.h.b16 %v41
  %v480 = vunpack.c.l.b16 %v42
  %v481 = vunpack.c.h.b16 %v42
  %v482 = vunpack.c.l.b16 %v43
  %v483 = vunpack.c.h.b16 %v43
  %v484 = vunpack.c.l.b16 %v44
  %v485 = vunpack.c.h.b16 %v44
  %v486 = vunpack.c.l.b16 %v45
  %v487 = vunpack.c.h.b16 %v45
  %v488 = vunpack.c.l.b16 %v46
  %v489 = vunpack.c.h.b16 %v46
  %v490 = vunpack.c.l.b16 %v47
  %v491 = vunpack.c.h.b16 %v47
  %v492 = vunpack.c.l.b16 %v48
  %v493 = vunpack.c.h.b16 %v48
  %v494 = vunpack.c.l.b16 %v49
  %v495 = vunpack.c.h.b16 %v49
  %v496 = vunpack.c.l.b16 %v50
  %v497 = vunpack.c.h.b16 %v50
  %v498 = vunpack.c.l.b16 %v51
  %v499 = vunpack.c.h.b16 %v51
  %v500 = vunpack.c.l.b16 %v52
  %v501 = vunpack.c.h.b16 %v52
  %v502 = vunpack.c.l.b16 %v53
  %v503 = vunpack.c.h.b16 %v53
  %v504 = vunpack.c.l.b16 %v54
  %v505 = vunpack.c.h.b16 %v54
  %v506 = vunpack.c.l.b16 %v55
  %v507 = vunpack.c.h.b16 %v55
  %v508 = vunpack.c.l.b16 %v56
  %v509 = vunpack.c.h.b16 %v56
  %v510 = vunpack.c.l.b16 %v57
  %v511 = vunpack.c.h.b16 %v57
  %v512 = vunpack.c.l.b16 %v58
  %v513 = vunpack.c.h.b16 %v58
  %v514 = vunpack.c.l.b16 %v59
  %v515 = vunpack.c.h.b16 %v59
  %v516 = vunpack.c.l.b16 %v60
  %v517 = vunpack.c.h.b16 %v60
  %v518 = vunpack.c.l.b16 %v61
  %v519 = vunpack.c.h.b16 %v61
  %v520 = vunpack.c.l.b16 %v62
  %v521 = vunpack.c.h.b16 %v62
  %v522 = vunpack.c.l.b16 %v63
  %v523 = vunpack.c.h.b16 %v63
  %v524 = vunpack.c.l.b16 %v64
  %v525 = vunpack.c.h.b16 %v64
  %v526 = vunpack.c.l.b16 %v65
  %v527 = vunpack.c.h.b16 %v65
  %v528 = vunpack.c.l.b16 %v66
  %v529 = vunpack.c.h.b16 %v66
  %v530 = vunpack.c.l.b16 %v67
  %v531 = vunpack.c.h.b16 %v67
  %v532 = vunpack.c.l.b16 %v68
  %v533 = vunpack.c.h.b16 %v68
  %v534 = vunpack.c.l.b16 %v69
  %v535 = vunpack.c.h.b16 %v69
  %v536 = vunpack.c.l.b16 %v70
  %v537 = vunpack.c.h.b16 %v70
  %v538 = vunpack.c.l.b16 %v71
  %v539 = vunpack.c.h.b16 %v71
  %v540 = vunpack.c.l.b16 %v72
  %v541 = vunpack.c.h.b16 %v72
  %v542 = vunpack.c.l.b16 %v73
  %v543 = vunpack.c.h.b16 %v73
  %v544 = vunpack.c.l.b16 %v74
  %v545 = vunpack.c.h.b16 %v74
  %v546 = vunpack.c.l.b16 %v75
  %v547 = vunpack.c.h.b16 %v75
  %v548 = vunpack.c.l.b16 %v76
  %v549 = vunpack.c.h.b16 %v76
  %v550 = vunpack.c.l.b16 %v77
  %v551 = vunpack.c.h.b16 %v77
  %v552 = vunpack.c.l.b16 %v78
  %v553 = vunpack.c.h.b16 %v78
  %v554 = vunpack.c.l.b16 %v79
  %v555 = vunpack.c.h.b16 %v79
  %v556 = vunpack.c.l.b16 %v80
  %v557 = vunpack.c.h.b16 %v80
  %v558 = vunpack.c.l.b16 %v81
  %v559 = vunpack.c.h.b16 %v81
  %v560 = vunpack.c.l.b16 %v82
  %v561 = vunpack.c.h.b16 %v82
  %v562 = vunpack.c.l.b16 %v83
  %v563 = vunpack.c.h.b16 %v83
  %v564 = vunpack.c.l.b16 %v84
  %v565 = vunpack.c.h.b16 %v84
  %v566 = vunpack.c.l.b16 %v85
  %v567 = vunpack.c.h.b16 %v85
  %v568 = vunpack.c.l.b16 %v86
  %v569 = vunpack.c.h.b16 %v86
  %v570 = vunpack.c.l.b16 %v87
  %v571 = vunpack.c.h.b16 %v87
  %v572 = vunpack.c.l.b16 %v88
  %v573 = vunpack.c.h.b16 %v88
  %v574 = vunpack.c.l.b16 %v89
  %v575 = vunpack.c.h.b16 %v89
  %v576 = vunpack.c.l.b16 %v90
  %v577 = vunpack.c.h.b16 %v90
  %v578 = vunpack.c.l.b16 %v91
  %v579 = vunpack.c.h.b16 %v91
  %v580 = vunpack.c.l.b16 %v92
  %v581 = vunpack.c.h.b16 %v92
  %v582 = vunpack.c.l.b16 %v93
  %v583 = vunpack.c.h.b16 %v93
  %v584 = vunpack.c.l.b16 %v94
  %v585 = vunpack.c.h.b16 %v94
  %v586 = vunpack.c.l.b16 %v95
  %v587 = vunpack.c.h.b16 %v95
  %v588 = vunpack.c.l.b16 %v96
  %v589 = vunpack.c.h.b16 %v96
  %v590 = vunpack.c.l.b16 %v97
  %v591 = vunpack.c.h.b16 %v97
  %v592 = vunpack.c.l.b16 %v98
  %v593 = vunpack.c.h.b16 %v98
  %v594 = vunpack.c.l.b16 %v99
  %v595 = vunpack.c.h.b16 %v99
  %v596 = vunpack.c.l.b16 %v100
  %v597 = vunpack.c.h.b16 %v100
  %v598 = vunpack.c.l.b16 %v101
  %v599 = vunpack.c.h.b16 %v101
  %v600 = vunpack.c.l.b16 %v102
  %v601 = vunpack.c.h.b16 %v102
  %v602 = vunpack.c.l.b16 %v103
  %v603 = vunpack.c.h.b16 %v103
  %v604 = vunpack.c.l.b16 %v104
  %v605 = vunpack.c.h.b16 %v104
  %v606 = vunpack.c.l.b16 %v105
  %v607 = vunpack.c.h.b16 %v105
  %v608 = vunpack.c.l.b16 %v106
  %v609 = vunpack.c.h.b16 %v106
  %v610 = vunpack.c.l.b16 %v107
  %v611 = vunpack.c.h.b16 %v107
  %v612 = vunpack.c.l.b16 %v108
  %v613 = vunpack.c.h.b16 %v108
  %v614 = vunpack.c.l.b16 %v109
  %v615 = vunpack.c.h.b16 %v109
  %v616 = vunpack.c.l.b16 %v110
  %v617 = vunpack.c.h.b16 %v110
  %v618 = vunpack.c.l.b16 %v111
  %v619 = vunpack.c.h.b16 %v111
  %v620 = vunpack.c.l.b16 %v112
  %v621 = vunpack.c.h.b16 %v112
  %v622 = vunpack.c.l.b16 %v113
  %v623 = vunpack.c.h.b16 %v113
  %v624 = vunpack.c.l.b16 %v114
  %v625 = vunpack.c.h.b16 %v114
  %v626 = vunpack.c.l.b16 %v115
  %v627 = vunpack.c.h.b16 %v115
  %v628 = vunpack.c.l.b16 %v116
  %v629 = vunpack.c.h.b16 %v116
  %v630 = vunpack.c.l.b16 %v117
  %v631 = vunpack.c.h.b16 %v117
  %v632 = vunpack.c.l.b16 %v118
  %v633 = vunpack.c.h.b16 %v118
  %v634 = vunpack.c.l.b16 %v119
  %v635 = vunpack.c.h.b16 %v119
  %v636 = vunpack.c.l.b16 %v120
  %v637 = vunpack.c.h.b16 %v120
  %v638 = vunpack.c.l.b16 %v121
  %v639 = vunpack.c.h.b16 %v121
  %v640 = vunpack.c.l.b16 %v122
  %v641 = vunpack.c.h.b16 %v122
  %v642 = vunpack.c.l.b16 %v123
  %v643 = vunpack.c.h.b16 %v123
  %v644 = vunpack.c.l.b16 %v124
  %v645 = vunpack.c.h.b16 %v124
  %v646 = vunpack.c.l.b16 %v125
  %v647 = vunpack.c.h.b16 %v125
  %v648 = vunpack.c.l.b16 %v126
  %v649 = vunpack.c.h.b16 %v126
  %v650 = vunpack.c.l.b16 %v127
  %v651 = vunpack.c.h.b16 %v127
  %v652 = vunpack.c.l.b16 %v128
  %v653 = vunpack.c.h.b16 %v128
  %v654 = vunpack.c.l.b16 %v129
  %v655 = vunpack.c.h.b16 %v129
  %v656 = vunpack.c.l.b16 %v130
  %v657 = vunpack.c.h.b16 %v130
  %v658 = vunpack.c.l.b16 %v131
  %v659 = vunpack.c.h.b16 %v131
  %v660 = vunpack.c.l.b16 %v132
  %v661 = vunpack.c.h.b16 %v132
  %v662 = vunpack.c.l.b16 %v133
  %v663 = vunpack.c.h.b16 %v133
  %v664 = vunpack.c.l.b16 %v134
  %v665 = vunpack.c.h.b16 %v134
  %v666 = vunpack.c.l.b16 %v135
  %v667 = vunpack.c.h.b16 %v135
  %v668 = vunpack.c.l.b16 %v136
  %v669 = vunpack.c.h.b16 %v136
  %v670 = vunpack.c.l.b16 %v137
  %v671 = vunpack.c.h.b16 %v137
  %v672 = vunpack.c.l.b16 %v138
  %v673 = vunpack.c.h.b16 %v138
  %v674 = vunpack.c.l.b16 %v139
  %v675 = vunpack.c.h.b16 %v139
  %v676 = vunpack.c.l.b16 %v140
  %v677 = vunpack.c.h.b16 %v140
  %v678 = vunpack.c.l.b16 %v141
  %v679 = vunpack.c.h.b16 %v141
  %v680 = vunpack.c.l.b16 %v142
  %v681 = vunpack.c.h.b16 %v142
  %v682 = vunpack.c.l.b16 %v143
  %v683 = vunpack.c.h.b16 %v143
  %v684 = vunpack.c.l.b16 %v144
  %v685 = vunpack.c.h.b16 %v144
  %v686 = vunpack.c.l.b16 %v145
  %v687 = vunpack.c.h.b16 %v145
  %v688 = vunpack.c.l.b16 %v146
  %v689 = vunpack.c.h.b16 %v146
  %v690 = vunpack.c.l.b16 %v147
  %v691 = vunpack.c.h.b16 %v147
  %v692 = vunpack.c.l.b16 %v148
  %v693 = vunpack.c.h.b16 %v148
  %v694 = vunpack.c.l.b16 %v149
  %v695 = vunpack.c.h.b16 %v149
  %v696 = vunpack.c.l.b16 %v150
  %v697 = vunpack.c.h.b16 %v150
  %v698 = vunpack.c.l.b16 %v151
  %v699 = vunpack.c.h.b16 %v151
  %v700 = vunpack.c.l.b16 %v152
  %v701 = vunpack.c.h.b16 %v152
  %v702 = vunpack.c.l.b16 %v153
  %v703 = vunpack.c.h.b16 %v153
  %v704 = vunpack.c.l.b16 %v154
  %v705 = vunpack.c.h.b16 %v154
  %v706 = vunpack.c.l.b16 %v155
  %v707 = vunpack.c.h.b16 %v155
  %v708 = vunpack.c.l.b16 %v156
  %v709 = vunpack.c.h.b16 %v156
  %v710 = vunpack.c.l.b16 %v157
  %v711 = vunpack.c.h.b16 %v157
  %v712 = vunpack.c.l.b16 %v158
  %v713 = vunpack.c.h.b16 %v158
  %v714 = vunpack.c.l.b16 %v159
  %v715 = vunpack.c.h.b16 %v159
  %v716 = vunpack.c.l.b16 %v160
  %v717 = vunpack.c.h.b16 %v160
  %v718 = vunpack.c.l.b16 %v161
  %v719 = vunpack.c.h.b16 %v161
  %v720 = vunpack.c.l.b16 %v162
  %v721 = vunpack.c.h.b16 %v162
  %v722 = vunpack.c.l.b16 %v163
  %v723 = vunpack.c.h.b16 %v163
  %v724 = vunpack.c.l.b16 %v164
  %v725 = vunpack.c.h.b16 %v164
  %v726 = vunpack.c.l.b16 %v165
  %v727 = vunpack.c.h.b16 %v165
  %v728 = vunpack.c.l.b16 %v166
  %v729 = vunpack.c.h.b16 %v166
  %v730 = vunpack.c.l.b16 %v167
  %v731 = vunpack.c.h.b16 %v167
  %v732 = vunpack.c.l.b16 %v168
  %v733 = vunpack.c.h.b16 %v168
  %v734 = vunpack.c.l.b16 %v169
  %v735 = vunpack.c.h.b16 %v169
  %v736 = vunpack.c.l.b16 %v170
  %v737 = vunpack.c.h.b16 %v170
  %v738 = vunpack.c.l.b16 %v171
  %v739 = vunpack.c.h.b16 %v171
  %v740 = vunpack.c.l.b16 %v172
  %v741 = vunpack.c.h.b16 %v172
  %v742 = vunpack.c.l.b16 %v173
  %v743 = vunpack.c.h.b16 %v173
  %v744 = vunpack.c.l.b16 %v174
  %v745 = vunpack.c.h.b16 %v174
  %v746 = vunpack.c.l.b16 %v175
  %v747 = vunpack.c.h.b16 %v175
  %v748 = vunpack.c.l.b16 %v176
  %v749 = vunpack.c.h.b16 %v176
  %v750 = vunpack.c.l.b16 %v177
  %v751 = vunpack.c.h.b16 %v177
  %v752 = vunpack.c.l.b16 %v178
  %v753 = vunpack.c.h.b16 %v178
  %v754 = vunpack.c.l.b16 %v179
  %v755 = vunpack.c.h.b16 %v179
  %v756 = vunpack.c.l.b16 %v180
  %v757 = vunpack.c.h.b16 %v180
  %v758 = vunpack.c.l.b16 %v181
  %v759 = vunpack.c.h.b16 %v181
  %v760 = vunpack.c.l.b16 %v182
  %v761 = vunpack.c.h.b16 %v182
  %v762 = vunpack.c.l.b16 %v183
  %v763 = vunpack.c.h.b16 %v183
  %v764 = vunpack.c.l.b16 %v184
  %v765 = vunpack.c.h.b16 %v184
  %v766 = vunpack.c.l.b16 %v185
  %v767 = vunpack.c.h.b16 %v185
  %v768 = vunpack.c.l.b16 %v186
  %v769 = vunpack.c.h.b16 %v186
  %v770 = vunpack.c.l.b16 %v187
  %v771 = vunpack.c.h.b16 %v187
  %v772 = vunpack.c.l.b16 %v188
  %v773 = vunpack.c.h.b16 %v188
  %v774 = vunpack.c.l.b16 %v189
  %v775 = vunpack.c.h.b16 %v189
  %v776 = vunpack.c.l.b16 %v190
  %v777 = vunpack.c.h.b16 %v190
  %v778 = vunpack.c.l.b16 %v191
  %v779 = vunpack.c.h.b16 %v191
  %v780 = vunpack.c.l.b16 %v192
  %v781 = vunpack.c.h.b16 %v192
  %v782 = vunpack.c.l.b16 %v193
  %v783 = vunpack.c.h.b16 %v193
  %v784 = vunpack.c.l.b16 %v194
  %v785 = vunpack.c.h.b16 %v194
  %v786 = vunpack.c.l.b16 %v195
  %v787 = vunpack.c.h.b16 %v195
  %v788 = vunpack.c.l.b16 %v196
  %v789 = vunpack.c.h.b16 %v196
  %v790 = vunpack.c.l.b16 %v197
  %v791 = vunpack.c.h.b16 %v197
  %v792 = vunpack.c.l.b16 %v198
  %v793 = vunpack.c.h.b16 %v198
  %v794 = vunpack.c.l.b16 %v199
  %v795 = vunpack.c.h.b16 %v199
  %v796 = vunpack.c.l.b16 %v200
  %v797 = vunpack.c.h.b16 %v200
  %v798 = vunpack.c.l.b16 %v201
  %v799 = vunpack.c.h.b16 %v201
  %v800 = vunpack.c.l.b16 %v202
  %v801 = vunpack.c.h.b16 %v202
  %v802 = vunpack.c.l.b16 %v203
  %v803 = vunpack.c.h.b16 %v203
  %v804 = vunpack.c.l.b16 %v204
  %v805 = vunpack.c.h.b16 %v204
  %v806 = vunpack.c.l.b16 %v205
  %v807 = vunpack.c.h.b16 %v205
  %v808 = vunpack.c.l.b16 %v206
  %v809 = vunpack.c.h.b16 %v206
  %v810 = vunpack.c.l.b16 %v207
  %v811 = vunpack.c.h.b16 %v207
  %v812 = vpack.c.b16 %v434, %v428
  %v813 = vpack.c.b16 %v435, %v429
  %v814 = vpack.c.b16 %v436, %v430
  %v815 = vpack.c.b16 %v437, %v431
  %v816 = vpack.c.b16 %v438, %v432
  %v817 = vpack.c.b16 %v439, %v433
  %v818 = vpack.c.b16 %v446, %v440
  %v819 = vpack.c.b16 %v447, %v441
  %v820 = vpack.c.b16 %v448, %v442
  %v821 = vpack.c.b16 %v449, %v443
  %v822 = vpack.c.b16 %v450, %v444
  %v823 = vpack.c.b16 %v451, %v445
  %v824 = vpack.c.b16 %v458, %v452
  %v825 = vpack.c.b16 %v459, %v453
  %v826 = vpack.c.b16 %v460, %v454
  %v827 = vpack.c.b16 %v461, %v455
  %v828 = vpack.c.b16 %v462, %v456
  %v829 = vpack.c.b16 %v463, %v457
  %v830 = vpack.c.b16 %v470, %v464
  %v831 = vpack.c.b16 %v471, %v465
  %v832 = vpack.c.b16 %v472, %v466
  %v833 = vpack.c.b16 %v473, %v467
  %v834 = vpack.c.b16 %v474, %v468
  %v835 = vpack.c.b16 %v475, %v469
  %v836 = vpack.c.b16 %v482, %v476
  %v837 = vpack.c.b16 %v483, %v477
  %v838 = vpack.c.b16 %v484, %v478
  %v839 = vpack.c.b16 %v485, %v479
  %v840 = vpack.c.b16 %v486, %v480
  %v841 = vpack.c.b16 %v487, %v481
  %v842 = vpack.c.b16 %v494, %v488
  %v843 = vpack.c.b16 %v495, %v489
  %v844 = vpack.c.b16 %v496, %v490
  %v845 = vpack.c.b16 %v497, %v491
  %v846 = vpack.c.b16 %v498, %v492
  %v847 = vpack.c.b16 %v499, %v493
  %v848 = vpack.c.b16 %v506, %v500
  %v849 = vpack.c.b16 %v507, %v501
  %v850 = vpack.c.b16 %v508, %v502
  %v851 = vpack.c.b16 %v509, %v503
  %v852 = vpack.c.b16 %v510, %v504
  %v853 = vpack.c.b16 %v511, %v505
  %v854 = vpack.c.b16 %v518, %v512
  %v855 = vpack.c.b16 %v519, %v513
  %v856 = vpack.c.b16 %v520, %v514
  %v857 = vpack.c.b16 %v521, %v515
  %v858 = vpack.c.b16 %v522, %v516
  %v859 = vpack.c.b16 %v523, %v517
  %v860 = vpack.c.b16 %v530, %v524
  %v861 = vpack.c.b16 %v531, %v525
  %v862 = vpack.c.b16 %v532, %v526
  %v863 = vpack.c.b16 %v533, %v527
  %v864 = vpack.c.b16 %v534, %v528
  %v865 = vpack.c.b16 %v535, %v529
  %v866 = vpack.c.b16 %v542, %v536
  %v867 = vpack.c.b16 %v543, %v537
  %v868 = vpack.c.b16 %v544, %v538
  %v869 = vpack.c.b16 %v545, %v539
  %v870 = vpack.c.b16 %v546, %v540
  %v871 = vpack.c.b16 %v547, %v541
  %v872 = vpack.c.b16 %v554, %v548
  %v873 = vpack.c.b16 %v555, %v549
  %v874 = vpack.c.b16 %v556, %v550
  %v875 = vpack.c.b16 %v557, %v551
  %v876 = vpack.c.b16 %v558, %v552
  %v877 = vpack.c.b16 %v559, %v553
  %v878 = vpack.c.b16 %v566, %v560
  %v879 = vpack.c.b16 %v567, %v561
  %v880 = vpack.c.b16 %v568, %v562
  %v881 = vpack.c.b16 %v569, %v563
  %v882 = vpack.c.b16 %v570, %v564
  %v883 = vpack.c.b16 %v571, %v565
  %v884 = vpack.c.b16 %v578, %v572
  %v885 = vpack.c.b16 %v579, %v573
  %v886 = vpack.c.b16 %v580, %v574
  %v887 = vpack.c.b16 %v581, %v575
  %v888 = vpack.c.b16 %v582, %v576
  %v889 = vpack.c.b16 %v583, %v577
  %v890 = vpack.c.b16 %v590, %v584
  %v891 = vpack.c.b16 %v591, %v585
  %v892 = vpack.c.b16 %v592, %v586
  %v893 = vpack.c.b16 %v593, %v587
  %v894 = vpack.c.b16 %v594, %v588
  %v895 = vpack.c.b16 %v595, %v589
  %v896 = vpack.c.b16 %v602, %v596
  %v897 = vpack.c.b16 %v603, %v597
  %v898 = vpack.c.b16 %v604, %v598
  %v899 = vpack.c.b16 %v605, %v599
  %v900 = vpack.c.b16 %v606, %v600
  %v901 = vpack.c.b16 %v607, %v601
  %v902 = vpack.c.b16 %v614, %v608
  %v903 = vpack.c.b16 %v615, %v609
  %v904 = vpack.c.b16 %v616, %v610
  %v905 = vpack.c.b16 %v617, %v611
  %v906 = vpack.c.b16 %v618, %v612
  %v907 = vpack.c.b16 %v619, %v613
  %v908 = vpack.c.b16 %v626, %v620
  %v909 = vpack.c.b16 %v627, %v621
  %v910 = vpack.c.b16 %v628, %v622
  %v911 = vpack.c.b16 %v629, %v623
  %v912 = vpack.c.b16 %v630, %v624
  %v913 = vpack.c.b16 %v631, %v625
  %v914 = vpack.c.b16 %v638, %v632
  %v915 = vpack.c.b16 %v639, %v633
  %v916 = vpack.c.b16 %v640, %v634
  %v917 = vpack.c.b16 %v641, %v635
  %v918 = vpack.c.b16 %v642, %v636
  %v919 = vpack.c.b16 %v643, %v637
  %v920 = vpack.c.b16 %v650, %v644
  %v921 = vpack.c.b16 %v651, %v645
  %v922 = vpack.c.b16 %v652, %v646
  %v923 = vpack.c.b16 %v653, %v647
  %v924 = vpack.c.b16 %v654, %v648
  %v925 = vpack.c.b16 %v655, %v649
  %v926 = vpack.c.b16 %v662, %v656
  %v927 = vpack.c.b16 %v663, %v657
  %v928 = vpack.c.b16 %v664, %v658
  %v929 = vpack.c.b16 %v665, %v659
  %v930 = vpack.c.b16 %v666, %v660
  %v931 = vpack.c.b16 %v667, %v661
  %v932 = vpack.c.b16 %v674, %v668
  %v933 = vpack.c.b16 %v675, %v669
  %v934 = vpack.c.b16 %v676, %v670
  %v935 = vpack.c.b16 %v677, %v671
  %v936 = vpack.c.b16 %v678, %v672
  %v937 = vpack.c.b16 %v679, %v673
  %v938 = vpack.c.b16 %v686, %v680
  %v939 = vpack.c.b16 %v687, %v681
  %v940 = vpack.c.b16 %v688, %v682
  %v941 = vpack.c.b16 %v689, %v683
  %v942 = vpack.c.b16 %v690, %v684
  %v943 = vpack.c.b16 %v691, %v685
  %v944 = vpack.c.b16 %v698, %v692
  %v945 = vpack.c.b16 %v699, %v693
  %v946 = vpack.c.b16 %v700, %v694
  %v947 = vpack.c.b16 %v701, %v695
  %v948 = vpack.c.b16 %v702, %v696
  %v949 = vpack.c.b16 %v703, %v697
  %v950 = vpack.c.b16 %v710, %v704
  %v951 = vpack.c.b16 %v711, %v705
  %v952 = vpack.c.b16 %v712, %v706
  %v953 = vpack.c.b16 %v713, %v707
  %v954 = vpack.c.b16 %v714, %v708
  %v955 = vpack.c.b16 %v715, %v709
  %v956 = vpack.c.b16 %v722, %v716
  %v957 = vpack.c.b16 %v723, %v717
  %v958 = vpack.c.b16 %v724, %v718
  %v959 = vpack.c.b16 %v725, %v719
  %v960 = vpack.c.b16 %v726, %v720
  %v961 = vpack.c.b16 %v727, %v721
  %v962 = vpack.c.b16 %v734, %v728
  %v963 = vpack.c.b16 %v735, %v729
  %v964 = vpack.c.b16 %v736, %v730
  %v965 = vpack.c.b16 %v737, %v731
  %v966 = vpack.c.b16 %v738, %v732
  %v967 = vpack.c.b16 %v739, %v733
  %v968 = vpack.c.b16 %v746, %v740
  %v969 = vpack.c.b16 %v747, %v741
  %v970 = vpack.c.b16 %v748, %v742
  %v971 = vpack.c.b16 %v749, %v743
  %v972 = vpack.c.b16 %v750, %v744
  %v973 = vpack.c.b16 %v751, %v745
  %v974 = vpack.c.b16 %v758, %v752
  %v975 = vpack.c.b16 %v759, %v753
  %v976 = vpack.c.b16 %v760, %v754
  %v977 = vpack.c.b16 %v761, %v755
  %v978 = vpack.c.b16 %v762, %v756
  %v979 = vpack.c.b16 %v763, %v757
  %v980 = vpack.c.b16 %v770, %v764
  %v981 = vpack.c.b16 %v771, %v765
  %v982 = vpack.c.b16 %v772, %v766
  %v983 = vpack.c.b16 %v773, %v767
  %v984 = vpack.c.b16 %v774, %v768
  %v985 = vpack.c.b16 %v775, %v769
  %v986 = vpack.c.b16 %v782, %v776
  %v987 = vpack.c.b16 %v783, %v777
  %v988 = vpack.c.b16 %v784, %v778
  %v989 = vpack.c.b16 %v785, %v779
  %v990 = vpack.c.b16 %v786, %v780
  %v991 = vpack.c.b16 %v787, %v781
  %v992 = vpack.c.b16 %v794, %v788
  %v993 = vpack.c.b16 %v795, %v789
  %v994 = vpack.c.b16 %v796, %v790
  %v995 = vpack.c.b16 %v797, %v791
  %v996 = vpack.c.b16 %v798, %v792
  %v997 = vpack.c.b16 %v799, %v793
  %v998 = vpack.c.b16 %v806, %v800
  %v999 = vpack.c.b16 %v807, %v801
  %v1000 = vpack.c.b16 %v808, %v802
  %v1001 = vpack.c.b16 %v809, %v803
  %v1002 = vpack.c.b16 %v810, %v804
  %v1003 = vpack.c.b16 %v811, %v805
  %1196 = vmatpush.bf16.msra.mxu0 %v854
  %1197 = vmatpush.bf16.msra.mxu0 %v848
  %1198 = vmatpush.bf16.msra.mxu0 %v842
  %1199 = vmatpush.bf16.msra.mxu0 %v836
  %1200 = vmatpush.bf16.msra.mxu0 %v830
  %1201 = vmatpush.bf16.msra.mxu0 %v824
  %1202 = vmatpush.bf16.msra.mxu0 %v818
  %1203 = vmatpush.bf16.msra.mxu0 %v812
  %1204 = vmatmul.bf16.gmra.mxu0 %v228
  %v1205 = vpop.f32.mrf.mxu0
  %v1206 = vadd.f32 %v210, %v1205
  %v1207 = vpop.f32.mrf.mxu0
  %1208 = vdwg.mxu0
  %1209 = vmatpush.bf16.msra.mxu0 %v902
  %1210 = vmatpush.bf16.msra.mxu0 %v896
  %1211 = vmatpush.bf16.msra.mxu0 %v890
  %1212 = vmatpush.bf16.msra.mxu0 %v884
  %1213 = vmatpush.bf16.msra.mxu0 %v878
  %1214 = vmatpush.bf16.msra.mxu0 %v872
  %1215 = vmatpush.bf16.msra.mxu0 %v866
  %1216 = vmatpush.bf16.msra.mxu0 %v860
  %1217 = vmatmul.bf16.gmra.mxu0 %v229
  %v1218 = vpop.f32.mrf.mxu0
  %v1219 = vadd.f32 %v1206, %v1218
  %v1220 = vpop.f32.mrf.mxu0
  %1221 = vdwg.mxu0
  %1222 = vmatpush.bf16.msra.mxu0 %v950
  %1223 = vmatpush.bf16.msra.mxu0 %v944
  %1224 = vmatpush.bf16.msra.mxu0 %v938
  %1225 = vmatpush.bf16.msra.mxu0 %v932
  %1226 = vmatpush.bf16.msra.mxu0 %v926
  %1227 = vmatpush.bf16.msra.mxu0 %v920
  %1228 = vmatpush.bf16.msra.mxu0 %v914
  %1229 = vmatpush.bf16.msra.mxu0 %v908
  %1230 = vmatmul.bf16.gmra.mxu0 %v230
  %v1231 = vpop.f32.mrf.mxu0
  %v1232 = vadd.f32 %v1219, %v1231
  %v1233 = vpop.f32.mrf.mxu0
  %1234 = vdwg.mxu0
  %1235 = vmatpush.bf16.msra.mxu0 %v998
  %1236 = vmatpush.bf16.msra.mxu0 %v992
  %1237 = vmatpush.bf16.msra.mxu0 %v986
  %1238 = vmatpush.bf16.msra.mxu0 %v980
  %1239 = vmatpush.bf16.msra.mxu0 %v974
  %1240 = vmatpush.bf16.msra.mxu0 %v968
  %1241 = vmatpush.bf16.msra.mxu0 %v962
  %1242 = vmatpush.bf16.msra.mxu0 %v956
  %1243 = vmatmul.bf16.gmra.mxu0 %v231
  %v1244 = vpop.f32.mrf.mxu0
  %v1245 = vadd.f32 %v1232, %v1244
  %v1246 = vpop.f32.mrf.mxu0
  %1247 = vdwg.mxu0
  %1248 = vmatpush.bf16.msra.mxu0 %v855
  %1249 = vmatpush.bf16.msra.mxu0 %v849
  %1250 = vmatpush.bf16.msra.mxu0 %v843
  %1251 = vmatpush.bf16.msra.mxu0 %v837
  %1252 = vmatpush.bf16.msra.mxu0 %v831
  %1253 = vmatpush.bf16.msra.mxu0 %v825
  %1254 = vmatpush.bf16.msra.mxu0 %v819
  %1255 = vmatpush.bf16.msra.mxu0 %v813
  %1256 = vmatmul.bf16.gmra.mxu0 %v228
  %v1257 = vpop.f32.mrf.mxu0
  %v1258 = vadd.f32 %v211, %v1257
  %v1259 = vpop.f32.mrf.mxu0
  %1260 = vdwg.mxu0
  %1261 = vmatpush.bf16.msra.mxu0 %v903
  %1262 = vmatpush.bf16.msra.mxu0 %v897
  %1263 = vmatpush.bf16.msra.mxu0 %v891
  %1264 = vmatpush.bf16.msra.mxu0 %v885
  %1265 = vmatpush.bf16.msra.mxu0 %v879
  %1266 = vmatpush.bf16.msra.mxu0 %v873
  %1267 = vmatpush.bf16.msra.mxu0 %v867
  %1268 = vmatpush.bf16.msra.mxu0 %v861
  %1269 = vmatmul.bf16.gmra.mxu0 %v229
  %v1270 = vpop.f32.mrf.mxu0
  %v1271 = vadd.f32 %v1258, %v1270
  %v1272 = vpop.f32.mrf.mxu0
  %1273 = vdwg.mxu0
  %1274 = vmatpush.bf16.msra.mxu0 %v951
  %1275 = vmatpush.bf16.msra.mxu0 %v945
  %1276 = vmatpush.bf16.msra.mxu0 %v939
  %1277 = vmatpush.bf16.msra.mxu0 %v933
  %1278 = vmatpush.bf16.msra.mxu0 %v927
  %1279 = vmatpush.bf16.msra.mxu0 %v921
  %1280 = vmatpush.bf16.msra.mxu0 %v915
  %1281 = vmatpush.bf16.msra.mxu0 %v909
  %1282 = vmatmul.bf16.gmra.mxu0 %v230
  %v1283 = vpop.f32.mrf.mxu0
  %v1284 = vadd.f32 %v1271, %v1283
  %v1285 = vpop.f32.mrf.mxu0
  %1286 = vdwg.mxu0
  %1287 = vmatpush.bf16.msra.mxu0 %v999
  %1288 = vmatpush.bf16.msra.mxu0 %v993
  %1289 = vmatpush.bf16.msra.mxu0 %v987
  %1290 = vmatpush.bf16.msra.mxu0 %v981
  %1291 = vmatpush.bf16.msra.mxu0 %v975
  %1292 = vmatpush.bf16.msra.mxu0 %v969
  %1293 = vmatpush.bf16.msra.mxu0 %v963
  %1294 = vmatpush.bf16.msra.mxu0 %v957
  %1295 = vmatmul.bf16.gmra.mxu0 %v231
  %v1296 = vpop.f32.mrf.mxu0
  %v1297 = vadd.f32 %v1284, %v1296
  %v1298 = vpop.f32.mrf.mxu0
  %1299 = vdwg.mxu0
  %1300 = vmatpush.bf16.msra.mxu0 %v856
  %1301 = vmatpush.bf16.msra.mxu0 %v850
  %1302 = vmatpush.bf16.msra.mxu0 %v844
  %1303 = vmatpush.bf16.msra.mxu0 %v838
  %1304 = vmatpush.bf16.msra.mxu0 %v832
  %1305 = vmatpush.bf16.msra.mxu0 %v826
  %1306 = vmatpush.bf16.msra.mxu0 %v820
  %1307 = vmatpush.bf16.msra.mxu0 %v814
  %1308 = vmatmul.bf16.gmra.mxu0 %v228
  %v1309 = vpop.f32.mrf.mxu0
  %v1310 = vadd.f32 %v212, %v1309
  %v1311 = vpop.f32.mrf.mxu0
  %1312 = vdwg.mxu0
  %1313 = vmatpush.bf16.msra.mxu0 %v904
  %1314 = vmatpush.bf16.msra.mxu0 %v898
  %1315 = vmatpush.bf16.msra.mxu0 %v892
  %1316 = vmatpush.bf16.msra.mxu0 %v886
  %1317 = vmatpush.bf16.msra.mxu0 %v880
  %1318 = vmatpush.bf16.msra.mxu0 %v874
  %1319 = vmatpush.bf16.msra.mxu0 %v868
  %1320 = vmatpush.bf16.msra.mxu0 %v862
  %1321 = vmatmul.bf16.gmra.mxu0 %v229
  %v1322 = vpop.f32.mrf.mxu0
  %v1323 = vadd.f32 %v1310, %v1322
  %v1324 = vpop.f32.mrf.mxu0
  %1325 = vdwg.mxu0
  %1326 = vmatpush.bf16.msra.mxu0 %v952
  %1327 = vmatpush.bf16.msra.mxu0 %v946
  %1328 = vmatpush.bf16.msra.mxu0 %v940
  %1329 = vmatpush.bf16.msra.mxu0 %v934
  %1330 = vmatpush.bf16.msra.mxu0 %v928
  %1331 = vmatpush.bf16.msra.mxu0 %v922
  %1332 = vmatpush.bf16.msra.mxu0 %v916
  %1333 = vmatpush.bf16.msra.mxu0 %v910
  %1334 = vmatmul.bf16.gmra.mxu0 %v230
  %v1335 = vpop.f32.mrf.mxu0
  %v1336 = vadd.f32 %v1323, %v1335
  %v1337 = vpop.f32.mrf.mxu0
  %1338 = vdwg.mxu0
  %1339 = vmatpush.bf16.msra.mxu0 %v1000
  %1340 = vmatpush.bf16.msra.mxu0 %v994
  %1341 = vmatpush.bf16.msra.mxu0 %v988
  %1342 = vmatpush.bf16.msra.mxu0 %v982
  %1343 = vmatpush.bf16.msra.mxu0 %v976
  %1344 = vmatpush.bf16.msra.mxu0 %v970
  %1345 = vmatpush.bf16.msra.mxu0 %v964
  %1346 = vmatpush.bf16.msra.mxu0 %v958
  %1347 = vmatmul.bf16.gmra.mxu0 %v231
  %v1348 = vpop.f32.mrf.mxu0
  %v1349 = vadd.f32 %v1336, %v1348
  %v1350 = vpop.f32.mrf.mxu0
  %1351 = vdwg.mxu0
  %1352 = vmatpush.bf16.msra.mxu0 %v857
  %1353 = vmatpush.bf16.msra.mxu0 %v851
  %1354 = vmatpush.bf16.msra.mxu0 %v845
  %1355 = vmatpush.bf16.msra.mxu0 %v839
  %1356 = vmatpush.bf16.msra.mxu0 %v833
  %1357 = vmatpush.bf16.msra.mxu0 %v827
  %1358 = vmatpush.bf16.msra.mxu0 %v821
  %1359 = vmatpush.bf16.msra.mxu0 %v815
  %1360 = vmatmul.bf16.gmra.mxu0 %v228
  %v1361 = vpop.f32.mrf.mxu0
  %v1362 = vadd.f32 %v213, %v1361
  %v1363 = vpop.f32.mrf.mxu0
  %1364 = vdwg.mxu0
  %1365 = vmatpush.bf16.msra.mxu0 %v905
  %1366 = vmatpush.bf16.msra.mxu0 %v899
  %1367 = vmatpush.bf16.msra.mxu0 %v893
  %1368 = vmatpush.bf16.msra.mxu0 %v887
  %1369 = vmatpush.bf16.msra.mxu0 %v881
  %1370 = vmatpush.bf16.msra.mxu0 %v875
  %1371 = vmatpush.bf16.msra.mxu0 %v869
  %1372 = vmatpush.bf16.msra.mxu0 %v863
  %1373 = vmatmul.bf16.gmra.mxu0 %v229
  %v1374 = vpop.f32.mrf.mxu0
  %v1375 = vadd.f32 %v1362, %v1374
  %v1376 = vpop.f32.mrf.mxu0
  %1377 = vdwg.mxu0
  %1378 = vmatpush.bf16.msra.mxu0 %v953
  %1379 = vmatpush.bf16.msra.mxu0 %v947
  %1380 = vmatpush.bf16.msra.mxu0 %v941
  %1381 = vmatpush.bf16.msra.mxu0 %v935
  %1382 = vmatpush.bf16.msra.mxu0 %v929
  %1383 = vmatpush.bf16.msra.mxu0 %v923
  %1384 = vmatpush.bf16.msra.mxu0 %v917
  %1385 = vmatpush.bf16.msra.mxu0 %v911
  %1386 = vmatmul.bf16.gmra.mxu0 %v230
  %v1387 = vpop.f32.mrf.mxu0
  %v1388 = vadd.f32 %v1375, %v1387
  %v1389 = vpop.f32.mrf.mxu0
  %1390 = vdwg.mxu0
  %1391 = vmatpush.bf16.msra.mxu0 %v1001
  %1392 = vmatpush.bf16.msra.mxu0 %v995
  %1393 = vmatpush.bf16.msra.mxu0 %v989
  %1394 = vmatpush.bf16.msra.mxu0 %v983
  %1395 = vmatpush.bf16.msra.mxu0 %v977
  %1396 = vmatpush.bf16.msra.mxu0 %v971
  %1397 = vmatpush.bf16.msra.mxu0 %v965
  %1398 = vmatpush.bf16.msra.mxu0 %v959
  %1399 = vmatmul.bf16.gmra.mxu0 %v231
  %v1400 = vpop.f32.mrf.mxu0
  %v1401 = vadd.f32 %v1388, %v1400
  %v1402 = vpop.f32.mrf.mxu0
  %1403 = vdwg.mxu0
  %1404 = vmatpush.bf16.msra.mxu0 %v858
  %1405 = vmatpush.bf16.msra.mxu0 %v852
  %1406 = vmatpush.bf16.msra.mxu0 %v846
  %1407 = vmatpush.bf16.msra.mxu0 %v840
  %1408 = vmatpush.bf16.msra.mxu0 %v834
  %1409 = vmatpush.bf16.msra.mxu0 %v828
  %1410 = vmatpush.bf16.msra.mxu0 %v822
  %1411 = vmatpush.bf16.msra.mxu0 %v816
  %1412 = vmatmul.bf16.gmra.mxu0 %v228
  %v1413 = vpop.f32.mrf.mxu0
  %v1414 = vadd.f32 %v214, %v1413
  %v1415 = vpop.f32.mrf.mxu0
  %1416 = vdwg.mxu0
  %1417 = vmatpush.bf16.msra.mxu0 %v906
  %1418 = vmatpush.bf16.msra.mxu0 %v900
  %1419 = vmatpush.bf16.msra.mxu0 %v894
  %1420 = vmatpush.bf16.msra.mxu0 %v888
  %1421 = vmatpush.bf16.msra.mxu0 %v882
  %1422 = vmatpush.bf16.msra.mxu0 %v876
  %1423 = vmatpush.bf16.msra.mxu0 %v870
  %1424 = vmatpush.bf16.msra.mxu0 %v864
  %1425 = vmatmul.bf16.gmra.mxu0 %v229
  %v1426 = vpop.f32.mrf.mxu0
  %v1427 = vadd.f32 %v1414, %v1426
  %v1428 = vpop.f32.mrf.mxu0
  %1429 = vdwg.mxu0
  %1430 = vmatpush.bf16.msra.mxu0 %v954
  %1431 = vmatpush.bf16.msra.mxu0 %v948
  %1432 = vmatpush.bf16.msra.mxu0 %v942
  %1433 = vmatpush.bf16.msra.mxu0 %v936
  %1434 = vmatpush.bf16.msra.mxu0 %v930
  %1435 = vmatpush.bf16.msra.mxu0 %v924
  %1436 = vmatpush.bf16.msra.mxu0 %v918
  %1437 = vmatpush.bf16.msra.mxu0 %v912
  %1438 = vmatmul.bf16.gmra.mxu0 %v230
  %v1439 = vpop.f32.mrf.mxu0
  %v1440 = vadd.f32 %v1427, %v1439
  %v1441 = vpop.f32.mrf.mxu0
  %1442 = vdwg.mxu0
  %1443 = vmatpush.bf16.msra.mxu0 %v1002
  %1444 = vmatpush.bf16.msra.mxu0 %v996
  %1445 = vmatpush.bf16.msra.mxu0 %v990
  %1446 = vmatpush.bf16.msra.mxu0 %v984
  %1447 = vmatpush.bf16.msra.mxu0 %v978
  %1448 = vmatpush.bf16.msra.mxu0 %v972
  %1449 = vmatpush.bf16.msra.mxu0 %v966
  %1450 = vmatpush.bf16.msra.mxu0 %v960
  %1451 = vmatmul.bf16.gmra.mxu0 %v231
  %v1452 = vpop.f32.mrf.mxu0
  %v1453 = vadd.f32 %v1440, %v1452
  %v1454 = vpop.f32.mrf.mxu0
  %1455 = vdwg.mxu0
  %1456 = vmatpush.bf16.msra.mxu0 %v859
  %1457 = vmatpush.bf16.msra.mxu0 %v853
  %1458 = vmatpush.bf16.msra.mxu0 %v847
  %1459 = vmatpush.bf16.msra.mxu0 %v841
  %1460 = vmatpush.bf16.msra.mxu0 %v835
  %1461 = vmatpush.bf16.msra.mxu0 %v829
  %1462 = vmatpush.bf16.msra.mxu0 %v823
  %1463 = vmatpush.bf16.msra.mxu0 %v817
  %1464 = vmatmul.bf16.gmra.mxu0 %v228
  %v1465 = vpop.f32.mrf.mxu0
  %v1466 = vadd.f32 %v215, %v1465
  %v1467 = vpop.f32.mrf.mxu0
  %1468 = vdwg.mxu0
  %1469 = vmatpush.bf16.msra.mxu0 %v907
  %1470 = vmatpush.bf16.msra.mxu0 %v901
  %1471 = vmatpush.bf16.msra.mxu0 %v895
  %1472 = vmatpush.bf16.msra.mxu0 %v889
  %1473 = vmatpush.bf16.msra.mxu0 %v883
  %1474 = vmatpush.bf16.msra.mxu0 %v877
  %1475 = vmatpush.bf16.msra.mxu0 %v871
  %1476 = vmatpush.bf16.msra.mxu0 %v865
  %1477 = vmatmul.bf16.gmra.mxu0 %v229
  %v1478 = vpop.f32.mrf.mxu0
  %v1479 = vadd.f32 %v1466, %v1478
  %v1480 = vpop.f32.mrf.mxu0
  %1481 = vdwg.mxu0
  %1482 = vmatpush.bf16.msra.mxu0 %v955
  %1483 = vmatpush.bf16.msra.mxu0 %v949
  %1484 = vmatpush.bf16.msra.mxu0 %v943
  %1485 = vmatpush.bf16.msra.mxu0 %v937
  %1486 = vmatpush.bf16.msra.mxu0 %v931
  %1487 = vmatpush.bf16.msra.mxu0 %v925
  %1488 = vmatpush.bf16.msra.mxu0 %v919
  %1489 = vmatpush.bf16.msra.mxu0 %v913
  %1490 = vmatmul.bf16.gmra.mxu0 %v230
  %v1491 = vpop.f32.mrf.mxu0
  %v1492 = vadd.f32 %v1479, %v1491
  %v1493 = vpop.f32.mrf.mxu0
  %1494 = vdwg.mxu0
  %1495 = vmatpush.bf16.msra.mxu0 %v1003
  %1496 = vmatpush.bf16.msra.mxu0 %v997
  %1497 = vmatpush.bf16.msra.mxu0 %v991
  %1498 = vmatpush.bf16.msra.mxu0 %v985
  %1499 = vmatpush.bf16.msra.mxu0 %v979
  %1500 = vmatpush.bf16.msra.mxu0 %v973
  %1501 = vmatpush.bf16.msra.mxu0 %v967
  %1502 = vmatpush.bf16.msra.mxu0 %v961
  %1503 = vmatmul.bf16.gmra.mxu0 %v231
  %v1504 = vpop.f32.mrf.mxu0
  %v1505 = vadd.f32 %v1492, %v1504
  %v1506 = vpop.f32.mrf.mxu0
  %1507 = vdwg.mxu0
  %v1508 = vpack.c.bf16 %v1297, %v1245
  %v1509 = vpack.c.bf16 %v1401, %v1349
  %v1510 = vpack.c.bf16 %v1505, %v1453
  %1511 = vst [vmem:[%s3] sm:$0xff] %v1508
  %1512 = vst [vmem:[%s3 + $0x8] sm:$0xff] %v1509
  %1513 = vst [vmem:[%s3 + $0x10] sm:$0xff] %v1510
  // Predicated region
  $region14: #{closed_call.17} parent=0 // pred_check
    _
  $region15: #{closed_call.17} parent=0 // pred_check_branch
    %1515 = sbr.rel (0) target = $region17
  $region16: #{closed_call.17} parent=0 // pred_region
    _
  $region17: #{closed_call.17} parent=0 // pred_fallthru
    _
  // Predicated region
  $region18: #{closed_call.17} parent=0 // pred_check
    _
  $region19: #{closed_call.17} parent=0 // pred_check_branch
    %1517 = sbr.rel (0) target = $region21
  $region20: #{closed_call.17} parent=0 // pred_region
    _
  $region21: #{closed_call.17} parent=0 // pred_fallthru
    _

// kernel: closed_call.18
$region0: #{closed_call.18}
  #allocation0 [shape = 'u32[]', space=smem, size = 0x4, offset = 0x4, fixed_abs, tag = 'smem constant byte address 0x4 - core index']
  #allocation1 [shape = 'u32[72,128]{1,0:T(1,128)}', space=vmem, size = 0x9000, scoped, tag = 'internal scratch']
  %s0 = inlined_call_operand.vmem [shape: bf16[2,4,4,64], index: 0, kind: input, shape index: {}]
  %s1 = inlined_call_operand.vmem [shape: bf16[2,4,4,64], index: 1, kind: input, shape index: {}]
  %s2 = inlined_call_operand.vmem [shape: bf16[2,4,4,64], index: 2, kind: input, shape index: {}]
  %s3 = inlined_call_operand.vmem [shape: s8[2,4,4], index: 3, kind: input, shape index: {}]
  %s4 = inlined_call_operand.vmem [shape: bf16[2,4,256], index: 4, kind: output, shape index: {0}]
  %s5 = inlined_call_operand.vmem [shape: bf16[2,4,4,4], index: 5, kind: output, shape index: {1}]
  %6 = xla_tuple %s4, %s5
  %s7 = sld [smem:[#allocation0]]
  $region34: #{closed_call.18} parent=0
    _
  %s9 = ssub.s32 1, %s7
  %s10 = scalar_select 0, %s9, %s7
  // Predicated region
  $region2: #{closed_call.18} parent=0 // pred_check
    _
  $region3: #{closed_call.18} parent=0 // pred_check_branch
    %12 = sbr.rel (0) target = $region5
  $region4: #{closed_call.18} parent=0 // pred_region
    _
  $region5: #{closed_call.18} parent=0 // pred_fallthru
    _
  // Predicated region
  $region6: #{closed_call.18} parent=0 // pred_check
    _
  $region7: #{closed_call.18} parent=0 // pred_check_branch
    %14 = sbr.rel (0) target = $region9
  $region8: #{closed_call.18} parent=0 // pred_region
    _
  $region9: #{closed_call.18} parent=0 // pred_fallthru
    _
  // Predicated region
  $region10: #{closed_call.18} parent=0 // pred_check
    _
  $region11: #{closed_call.18} parent=0 // pred_check_branch
    %16 = sbr.rel (0) target = $region13
  $region12: #{closed_call.18} parent=0 // pred_region
    _
  $region13: #{closed_call.18} parent=0 // pred_fallthru
    _
  // Predicated region
  $region14: #{closed_call.18} parent=0 // pred_check
    _
  $region15: #{closed_call.18} parent=0 // pred_check_branch
    %18 = sbr.rel (0) target = $region17
  $region16: #{closed_call.18} parent=0 // pred_region
    _
  $region17: #{closed_call.18} parent=0 // pred_fallthru
    _
  %v22 = vld [vmem:[%s0] sm:$0x3]
  %v23 = vld [vmem:[%s0 + $0x2] sm:$0x3]
  %v24 = vld [vmem:[%s0 + $0x4] sm:$0x3]
  %v25 = vld [vmem:[%s0 + $0x6] sm:$0x3]
  %v26 = vld [vmem:[%s0 + $0x8] sm:$0x3]
  %v27 = vld [vmem:[%s0 + $0xa] sm:$0x3]
  %v28 = vld [vmem:[%s0 + $0xc] sm:$0x3]
  %v29 = vld [vmem:[%s0 + $0xe] sm:$0x3]
  %v30 = vunpack.c.l.bf16 %v22
  %v31 = vunpack.c.l.bf16 %v23
  %v32 = vunpack.c.l.bf16 %v24
  %v33 = vunpack.c.l.bf16 %v25
  %v34 = vunpack.c.l.bf16 %v26
  %v35 = vunpack.c.l.bf16 %v27
  %v36 = vunpack.c.l.bf16 %v28
  %v37 = vunpack.c.l.bf16 %v29
  %v38 = vmul.f32 %v30, 0.125
  %v39 = vmul.f32 %v31, 0.125
  %v40 = vmul.f32 %v32, 0.125
  %v41 = vmul.f32 %v33, 0.125
  %v42 = vmul.f32 %v34, 0.125
  %v43 = vmul.f32 %v35, 0.125
  %v44 = vmul.f32 %v36, 0.125
  %v45 = vmul.f32 %v37, 0.125
  %v46 = vpack.c.bf16 %v38, %v38
  %v47 = vpack.c.bf16 %v39, %v39
  %v48 = vpack.c.bf16 %v40, %v40
  %v49 = vpack.c.bf16 %v41, %v41
  %v50 = vpack.c.bf16 %v42, %v42
  %v51 = vpack.c.bf16 %v43, %v43
  %v52 = vpack.c.bf16 %v44, %v44
  %v53 = vpack.c.bf16 %v45, %v45
  %v54 = vld [vmem:[%s1] sm:$0x3]
  %v55 = vld [vmem:[%s1 + $0x2] sm:$0x3]
  %v56 = vld [vmem:[%s1 + $0x4] sm:$0x3]
  %v57 = vld [vmem:[%s1 + $0x6] sm:$0x3]
  %v58 = vld [vmem:[%s1 + $0x8] sm:$0x3]
  %v59 = vld [vmem:[%s1 + $0xa] sm:$0x3]
  %v60 = vld [vmem:[%s1 + $0xc] sm:$0x3]
  %v61 = vld [vmem:[%s1 + $0xe] sm:$0x3]
  %v62 = vld [vmem:[%s2] sm:$0x3]
  %v63 = vld [vmem:[%s2 + $0x2] sm:$0x3]
  %v64 = vld [vmem:[%s2 + $0x4] sm:$0x3]
  %v65 = vld [vmem:[%s2 + $0x6] sm:$0x3]
  %v66 = vld [vmem:[%s2 + $0x8] sm:$0x3]
  %v67 = vld [vmem:[%s2 + $0xa] sm:$0x3]
  %v68 = vld [vmem:[%s2 + $0xc] sm:$0x3]
  %v69 = vld [vmem:[%s2 + $0xe] sm:$0x3]
  %vm70 = vcmask 523264
  %v72 = vsel %vm70, %v46, 0
  %v75 = vsel %vm70, %v54, 0
  %77 = vmatpush.bf16.xpose.msra.mxu0 0
  %78 = vmatpush.bf16.xpose.msra.mxu0 0
  %79 = vmatpush.bf16.xpose.msra.mxu0 0
  %80 = vmatpush.bf16.xpose.msra.mxu0 0
  %81 = vmatpush.bf16.xpose.msra.mxu0 0
  %82 = vmatpush.bf16.xpose.msra.mxu0 0
  %83 = vmatpush.bf16.xpose.msra.mxu0 0
  %84 = vmatpush.bf16.xpose.msra.mxu0 %v75
  %85 = vmatmul.bf16.gmra.mxu0 %v72
  %v86 = vpop.f32.mrf.mxu0
  %v87 = vadd.f32 0.0, %v86
  %v88 = vpop.f32.mrf.mxu0
  %89 = vdwg.mxu0
  %v91 = vsel %vm70, %v47, 0
  %v94 = vsel %vm70, %v55, 0
  %96 = vmatpush.bf16.xpose.msra.mxu0 0
  %97 = vmatpush.bf16.xpose.msra.mxu0 0
  %98 = vmatpush.bf16.xpose.msra.mxu0 0
  %99 = vmatpush.bf16.xpose.msra.mxu0 0
  %100 = vmatpush.bf16.xpose.msra.mxu0 0
  %101 = vmatpush.bf16.xpose.msra.mxu0 0
  %102 = vmatpush.bf16.xpose.msra.mxu0 0
  %103 = vmatpush.bf16.xpose.msra.mxu0 %v94
  %104 = vmatmul.bf16.gmra.mxu0 %v91
  %v105 = vpop.f32.mrf.mxu0
  %v106 = vadd.f32 0.0, %v105
  %v107 = vpop.f32.mrf.mxu0
  %108 = vdwg.mxu0
  %v110 = vsel %vm70, %v48, 0
  %v113 = vsel %vm70, %v56, 0
  %115 = vmatpush.bf16.xpose.msra.mxu0 0
  %116 = vmatpush.bf16.xpose.msra.mxu0 0
  %117 = vmatpush.bf16.xpose.msra.mxu0 0
  %118 = vmatpush.bf16.xpose.msra.mxu0 0
  %119 = vmatpush.bf16.xpose.msra.mxu0 0
  %120 = vmatpush.bf16.xpose.msra.mxu0 0
  %121 = vmatpush.bf16.xpose.msra.mxu0 0
  %122 = vmatpush.bf16.xpose.msra.mxu0 %v113
  %123 = vmatmul.bf16.gmra.mxu0 %v110
  %v124 = vpop.f32.mrf.mxu0
  %v125 = vadd.f32 0.0, %v124
  %v126 = vpop.f32.mrf.mxu0
  %127 = vdwg.mxu0
  %v129 = vsel %vm70, %v49, 0
  %v132 = vsel %vm70, %v57, 0
  %134 = vmatpush.bf16.xpose.msra.mxu0 0
  %135 = vmatpush.bf16.xpose.msra.mxu0 0
  %136 = vmatpush.bf16.xpose.msra.mxu0 0
  %137 = vmatpush.bf16.xpose.msra.mxu0 0
  %138 = vmatpush.bf16.xpose.msra.mxu0 0
  %139 = vmatpush.bf16.xpose.msra.mxu0 0
  %140 = vmatpush.bf16.xpose.msra.mxu0 0
  %141 = vmatpush.bf16.xpose.msra.mxu0 %v132
  %142 = vmatmul.bf16.gmra.mxu0 %v129
  %v143 = vpop.f32.mrf.mxu0
  %v144 = vadd.f32 0.0, %v143
  %v145 = vpop.f32.mrf.mxu0
  %146 = vdwg.mxu0
  %v148 = vsel %vm70, %v50, 0
  %v151 = vsel %vm70, %v58, 0
  %153 = vmatpush.bf16.xpose.msra.mxu0 0
  %154 = vmatpush.bf16.xpose.msra.mxu0 0
  %155 = vmatpush.bf16.xpose.msra.mxu0 0
  %156 = vmatpush.bf16.xpose.msra.mxu0 0
  %157 = vmatpush.bf16.xpose.msra.mxu0 0
  %158 = vmatpush.bf16.xpose.msra.mxu0 0
  %159 = vmatpush.bf16.xpose.msra.mxu0 0
  %160 = vmatpush.bf16.xpose.msra.mxu0 %v151
  %161 = vmatmul.bf16.gmra.mxu0 %v148
  %v162 = vpop.f32.mrf.mxu0
  %v163 = vadd.f32 0.0, %v162
  %v164 = vpop.f32.mrf.mxu0
  %165 = vdwg.mxu0
  %v167 = vsel %vm70, %v51, 0
  %v170 = vsel %vm70, %v59, 0
  %172 = vmatpush.bf16.xpose.msra.mxu0 0
  %173 = vmatpush.bf16.xpose.msra.mxu0 0
  %174 = vmatpush.bf16.xpose.msra.mxu0 0
  %175 = vmatpush.bf16.xpose.msra.mxu0 0
  %176 = vmatpush.bf16.xpose.msra.mxu0 0
  %177 = vmatpush.bf16.xpose.msra.mxu0 0
  %178 = vmatpush.bf16.xpose.msra.mxu0 0
  %179 = vmatpush.bf16.xpose.msra.mxu0 %v170
  %180 = vmatmul.bf16.gmra.mxu0 %v167
  %v181 = vpop.f32.mrf.mxu0
  %v182 = vadd.f32 0.0, %v181
  %v183 = vpop.f32.mrf.mxu0
  %184 = vdwg.mxu0
  %v186 = vsel %vm70, %v52, 0
  %v189 = vsel %vm70, %v60, 0
  %191 = vmatpush.bf16.xpose.msra.mxu0 0
  %192 = vmatpush.bf16.xpose.msra.mxu0 0
  %193 = vmatpush.bf16.xpose.msra.mxu0 0
  %194 = vmatpush.bf16.xpose.msra.mxu0 0
  %195 = vmatpush.bf16.xpose.msra.mxu0 0
  %196 = vmatpush.bf16.xpose.msra.mxu0 0
  %197 = vmatpush.bf16.xpose.msra.mxu0 0
  %198 = vmatpush.bf16.xpose.msra.mxu0 %v189
  %199 = vmatmul.bf16.gmra.mxu0 %v186
  %v200 = vpop.f32.mrf.mxu0
  %v201 = vadd.f32 0.0, %v200
  %v202 = vpop.f32.mrf.mxu0
  %203 = vdwg.mxu0
  %v205 = vsel %vm70, %v53, 0
  %v208 = vsel %vm70, %v61, 0
  %210 = vmatpush.bf16.xpose.msra.mxu0 0
  %211 = vmatpush.bf16.xpose.msra.mxu0 0
  %212 = vmatpush.bf16.xpose.msra.mxu0 0
  %213 = vmatpush.bf16.xpose.msra.mxu0 0
  %214 = vmatpush.bf16.xpose.msra.mxu0 0
  %215 = vmatpush.bf16.xpose.msra.mxu0 0
  %216 = vmatpush.bf16.xpose.msra.mxu0 0
  %217 = vmatpush.bf16.xpose.msra.mxu0 %v208
  %218 = vmatmul.bf16.gmra.mxu0 %v205
  %v219 = vpop.f32.mrf.mxu0
  %v220 = vadd.f32 0.0, %v219
  %v221 = vpop.f32.mrf.mxu0
  %222 = vdwg.mxu0
  %v223 = vld [vmem:[%s3] sm:$0x1]
  %v224 = vld [vmem:[%s3 + $0x1] sm:$0x1]
  %vm225 = vnez %v223
  %vm226 = vnez %v224
  %v227 = vsel %vm225, 16843009, 0
  %v228 = vsel %vm226, 16843009, 0
  %v229 = vunpack.c.0.s8 %v227
  %v230 = vunpack.c.0.s8 %v228
  %vm231 = vcmp.ne.s32.totalorder %v229, 0
  %vm232 = vcmp.ne.s32.totalorder %v230, 0
  %v233 = vsel %vm231, 1, 0
  %v234 = vsel %vm232, 1, 0
  %vm235 = vcmp.eq.s32.totalorder %v233, 1
  %vm236 = vcmp.eq.s32.totalorder %v234, 1
  %v237 = vsel %vm235, -1e+09, %v87
  %v238 = vsel %vm235, -1e+09, %v106
  %v239 = vsel %vm235, -1e+09, %v125
  %v240 = vsel %vm235, -1e+09, %v144
  %v241 = vsel %vm236, -1e+09, %v163
  %v242 = vsel %vm236, -1e+09, %v182
  %v243 = vsel %vm236, -1e+09, %v201
  %v244 = vsel %vm236, -1e+09, %v220
  %vm245 = vcmask 27648
  %v246 = vsel %vm245, %v237, -inf
  %247 = vmax.xlane.f32.xlu0 %v246
  %v248 = vpop.xlane.xlu0 %247
  %v249 = vsel %vm245, %v238, -inf
  %250 = vmax.xlane.f32.xlu0 %v249
  %v251 = vpop.xlane.xlu0 %250
  %v252 = vsel %vm245, %v239, -inf
  %253 = vmax.xlane.f32.xlu0 %v252
  %v254 = vpop.xlane.xlu0 %253
  %v255 = vsel %vm245, %v240, -inf
  %256 = vmax.xlane.f32.xlu0 %v255
  %v257 = vpop.xlane.xlu0 %256
  %v258 = vsel %vm245, %v241, -inf
  %259 = vmax.xlane.f32.xlu0 %v258
  %v260 = vpop.xlane.xlu0 %259
  %v261 = vsel %vm245, %v242, -inf
  %262 = vmax.xlane.f32.xlu0 %v261
  %v263 = vpop.xlane.xlu0 %262
  %v264 = vsel %vm245, %v243, -inf
  %265 = vmax.xlane.f32.xlu0 %v264
  %v266 = vpop.xlane.xlu0 %265
  %v267 = vsel %vm245, %v244, -inf
  %268 = vmax.xlane.f32.xlu0 %v267
  %v269 = vpop.xlane.xlu0 %268
  %v270 = vsub.f32 %v237, %v248
  %v271 = vsub.f32 %v238, %v251
  %v272 = vsub.f32 %v239, %v254
  %v273 = vsub.f32 %v240, %v257
  %v274 = vsub.f32 %v241, %v260
  %v275 = vsub.f32 %v242, %v263
  %v276 = vsub.f32 %v243, %v266
  %v277 = vsub.f32 %v244, %v269
  %v278 = vmul.f32 %v270, 1.442695
  %v279 = vpow.pop %v278
  %v280 = vmul.f32 %v271, 1.442695
  %v281 = vpow.pop %v280
  %v282 = vmul.f32 %v272, 1.442695
  %v283 = vpow.pop %v282
  %v284 = vmul.f32 %v273, 1.442695
  %v285 = vpow.pop %v284
  %v286 = vmul.f32 %v274, 1.442695
  %v287 = vpow.pop %v286
  %v288 = vmul.f32 %v275, 1.442695
  %v289 = vpow.pop %v288
  %v290 = vmul.f32 %v276, 1.442695
  %v291 = vpow.pop %v290
  %v292 = vmul.f32 %v277, 1.442695
  %v293 = vpow.pop %v292
  %v294 = vsel %vm245, %v279, 0.0
  %295 = vadd.xlane.f32.xlu0 %v294
  %v296 = vpop.xlane.xlu0 %295
  %v297 = vsel %vm245, %v281, 0.0
  %298 = vadd.xlane.f32.xlu0 %v297
  %v299 = vpop.xlane.xlu0 %298
  %v300 = vsel %vm245, %v283, 0.0
  %301 = vadd.xlane.f32.xlu0 %v300
  %v302 = vpop.xlane.xlu0 %301
  %v303 = vsel %vm245, %v285, 0.0
  %304 = vadd.xlane.f32.xlu0 %v303
  %v305 = vpop.xlane.xlu0 %304
  %v306 = vsel %vm245, %v287, 0.0
  %307 = vadd.xlane.f32.xlu0 %v306
  %v308 = vpop.xlane.xlu0 %307
  %v309 = vsel %vm245, %v289, 0.0
  %310 = vadd.xlane.f32.xlu0 %v309
  %v311 = vpop.xlane.xlu0 %310
  %v312 = vsel %vm245, %v291, 0.0
  %313 = vadd.xlane.f32.xlu0 %v312
  %v314 = vpop.xlane.xlu0 %313
  %v315 = vsel %vm245, %v293, 0.0
  %316 = vadd.xlane.f32.xlu0 %v315
  %v317 = vpop.xlane.xlu0 %316
  %v318 = vrcp.pop %v296
  %v319 = vrcp.pop %v299
  %v320 = vrcp.pop %v302
  %v321 = vrcp.pop %v305
  %v322 = vrcp.pop %v308
  %v323 = vrcp.pop %v311
  %v324 = vrcp.pop %v314
  %v325 = vrcp.pop %v317
  %v326 = vmul.f32 %v279, %v318
  %v327 = vmul.f32 %v281, %v319
  %v328 = vmul.f32 %v283, %v320
  %v329 = vmul.f32 %v285, %v321
  %v330 = vmul.f32 %v287, %v322
  %v331 = vmul.f32 %v289, %v323
  %v332 = vmul.f32 %v291, %v324
  %v333 = vmul.f32 %v293, %v325
  %v334 = vpack.c.bf16 %v326, %v326
  %v335 = vpack.c.bf16 %v327, %v327
  %v336 = vpack.c.bf16 %v328, %v328
  %v337 = vpack.c.bf16 %v329, %v329
  %v338 = vpack.c.bf16 %v330, %v330
  %v339 = vpack.c.bf16 %v331, %v331
  %v340 = vpack.c.bf16 %v332, %v332
  %v341 = vpack.c.bf16 %v333, %v333
  %vm342 = vcmask 25600
  %343 = vst.msk [vmem:[%s5] sm:$0x3] %vm342, %v334
  %344 = vst.msk [vmem:[%s5 + $0x2] sm:$0x3] %vm342, %v335
  %345 = vst.msk [vmem:[%s5 + $0x4] sm:$0x3] %vm342, %v336
  %346 = vst.msk [vmem:[%s5 + $0x6] sm:$0x3] %vm342, %v337
  %347 = vst.msk [vmem:[%s5 + $0x8] sm:$0x3] %vm342, %v338
  %348 = vst.msk [vmem:[%s5 + $0xa] sm:$0x3] %vm342, %v339
  %349 = vst.msk [vmem:[%s5 + $0xc] sm:$0x3] %vm342, %v340
  %350 = vst.msk [vmem:[%s5 + $0xe] sm:$0x3] %vm342, %v341
  %vm351 = vcmask 31744
  %v353 = vsel %vm351, %v334, 0
  %vm355 = vcmask 1041408
  %v357 = vsel %vm355, %v62, 0
  %359 = vmatpush.bf16.msra.mxu0 0
  %360 = vmatpush.bf16.msra.mxu0 0
  %361 = vmatpush.bf16.msra.mxu0 0
  %362 = vmatpush.bf16.msra.mxu0 0
  %363 = vmatpush.bf16.msra.mxu0 0
  %364 = vmatpush.bf16.msra.mxu0 0
  %365 = vmatpush.bf16.msra.mxu0 0
  %366 = vmatpush.bf16.msra.mxu0 %v357
  %367 = vmatmul.bf16.gmra.mxu0 %v353
  %v368 = vpop.f32.mrf.mxu0
  %v369 = vadd.f32 0.0, %v368
  %v370 = vpop.f32.mrf.mxu0
  %371 = vdwg.mxu0
  %v373 = vsel %vm351, %v335, 0
  %v376 = vsel %vm355, %v63, 0
  %378 = vmatpush.bf16.msra.mxu0 0
  %379 = vmatpush.bf16.msra.mxu0 0
  %380 = vmatpush.bf16.msra.mxu0 0
  %381 = vmatpush.bf16.msra.mxu0 0
  %382 = vmatpush.bf16.msra.mxu0 0
  %383 = vmatpush.bf16.msra.mxu0 0
  %384 = vmatpush.bf16.msra.mxu0 0
  %385 = vmatpush.bf16.msra.mxu0 %v376
  %386 = vmatmul.bf16.gmra.mxu0 %v373
  %v387 = vpop.f32.mrf.mxu0
  %v388 = vadd.f32 0.0, %v387
  %v389 = vpop.f32.mrf.mxu0
  %390 = vdwg.mxu0
  %v392 = vsel %vm351, %v336, 0
  %v395 = vsel %vm355, %v64, 0
  %397 = vmatpush.bf16.msra.mxu0 0
  %398 = vmatpush.bf16.msra.mxu0 0
  %399 = vmatpush.bf16.msra.mxu0 0
  %400 = vmatpush.bf16.msra.mxu0 0
  %401 = vmatpush.bf16.msra.mxu0 0
  %402 = vmatpush.bf16.msra.mxu0 0
  %403 = vmatpush.bf16.msra.mxu0 0
  %404 = vmatpush.bf16.msra.mxu0 %v395
  %405 = vmatmul.bf16.gmra.mxu0 %v392
  %v406 = vpop.f32.mrf.mxu0
  %v407 = vadd.f32 0.0, %v406
  %v408 = vpop.f32.mrf.mxu0
  %409 = vdwg.mxu0
  %v411 = vsel %vm351, %v337, 0
  %v414 = vsel %vm355, %v65, 0
  %416 = vmatpush.bf16.msra.mxu0 0
  %417 = vmatpush.bf16.msra.mxu0 0
  %418 = vmatpush.bf16.msra.mxu0 0
  %419 = vmatpush.bf16.msra.mxu0 0
  %420 = vmatpush.bf16.msra.mxu0 0
  %421 = vmatpush.bf16.msra.mxu0 0
  %422 = vmatpush.bf16.msra.mxu0 0
  %423 = vmatpush.bf16.msra.mxu0 %v414
  %424 = vmatmul.bf16.gmra.mxu0 %v411
  %v425 = vpop.f32.mrf.mxu0
  %v426 = vadd.f32 0.0, %v425
  %v427 = vpop.f32.mrf.mxu0
  %428 = vdwg.mxu0
  %v430 = vsel %vm351, %v338, 0
  %v433 = vsel %vm355, %v66, 0
  %435 = vmatpush.bf16.msra.mxu0 0
  %436 = vmatpush.bf16.msra.mxu0 0
  %437 = vmatpush.bf16.msra.mxu0 0
  %438 = vmatpush.bf16.msra.mxu0 0
  %439 = vmatpush.bf16.msra.mxu0 0
  %440 = vmatpush.bf16.msra.mxu0 0
  %441 = vmatpush.bf16.msra.mxu0 0
  %442 = vmatpush.bf16.msra.mxu0 %v433
  %443 = vmatmul.bf16.gmra.mxu0 %v430
  %v444 = vpop.f32.mrf.mxu0
  %v445 = vadd.f32 0.0, %v444
  %v446 = vpop.f32.mrf.mxu0
  %447 = vdwg.mxu0
  %v449 = vsel %vm351, %v339, 0
  %v452 = vsel %vm355, %v67, 0
  %454 = vmatpush.bf16.msra.mxu0 0
  %455 = vmatpush.bf16.msra.mxu0 0
  %456 = vmatpush.bf16.msra.mxu0 0
  %457 = vmatpush.bf16.msra.mxu0 0
  %458 = vmatpush.bf16.msra.mxu0 0
  %459 = vmatpush.bf16.msra.mxu0 0
  %460 = vmatpush.bf16.msra.mxu0 0
  %461 = vmatpush.bf16.msra.mxu0 %v452
  %462 = vmatmul.bf16.gmra.mxu0 %v449
  %v463 = vpop.f32.mrf.mxu0
  %v464 = vadd.f32 0.0, %v463
  %v465 = vpop.f32.mrf.mxu0
  %466 = vdwg.mxu0
  %v468 = vsel %vm351, %v340, 0
  %v471 = vsel %vm355, %v68, 0
  %473 = vmatpush.bf16.msra.mxu0 0
  %474 = vmatpush.bf16.msra.mxu0 0
  %475 = vmatpush.bf16.msra.mxu0 0
  %476 = vmatpush.bf16.msra.mxu0 0
  %477 = vmatpush.bf16.msra.mxu0 0
  %478 = vmatpush.bf16.msra.mxu0 0
  %479 = vmatpush.bf16.msra.mxu0 0
  %480 = vmatpush.bf16.msra.mxu0 %v471
  %481 = vmatmul.bf16.gmra.mxu0 %v468
  %v482 = vpop.f32.mrf.mxu0
  %v483 = vadd.f32 0.0, %v482
  %v484 = vpop.f32.mrf.mxu0
  %485 = vdwg.mxu0
  %v487 = vsel %vm351, %v341, 0
  %v490 = vsel %vm355, %v69, 0
  %492 = vmatpush.bf16.msra.mxu0 0
  %493 = vmatpush.bf16.msra.mxu0 0
  %494 = vmatpush.bf16.msra.mxu0 0
  %495 = vmatpush.bf16.msra.mxu0 0
  %496 = vmatpush.bf16.msra.mxu0 0
  %497 = vmatpush.bf16.msra.mxu0 0
  %498 = vmatpush.bf16.msra.mxu0 0
  %499 = vmatpush.bf16.msra.mxu0 %v490
  %500 = vmatmul.bf16.gmra.mxu0 %v487
  %v501 = vpop.f32.mrf.mxu0
  %v502 = vadd.f32 0.0, %v501
  %v503 = vpop.f32.mrf.mxu0
  %504 = vdwg.mxu0
  %507 = vrot.lane.b32.xlu0 %v388, 64
  %v508 = vpop.permute.xlu0 %507
  %509 = vrot.lane.b32.xlu0 %v464, 64
  %v510 = vpop.permute.xlu0 %509
  %515 = vrot.lane.b32.xlu0 %v426, 64
  %v516 = vpop.permute.xlu0 %515
  %517 = vrot.lane.b32.xlu0 %v502, 64
  %v518 = vpop.permute.xlu0 %517
  %v521 = vsel %vm70, %v369, %v508
  %v522 = vsel %vm70, %v445, %v510
  %v523 = vsel %vm70, %v407, %v516
  %v524 = vsel %vm70, %v483, %v518
  %v525 = vpack.c.bf16 %v523, %v521
  %v526 = vpack.c.bf16 %v524, %v522
  %v529 = vrot.slane %v525, 2
  %v530 = vrot.slane %v526, 2
  %v533 = vsel %vm355, %v525, %v529
  %v536 = vsel %vm355, %v526, %v530
  %539 = vst [vmem:[%s4] sm:$0xf] %v533
  %540 = vst [vmem:[%s4 + $0x4] sm:$0xf] %v536
  // Predicated region
  $region18: #{closed_call.18} parent=0 // pred_check
    _
  $region19: #{closed_call.18} parent=0 // pred_check_branch
    %542 = sbr.rel (0) target = $region21
  $region20: #{closed_call.18} parent=0 // pred_region
    _
  $region21: #{closed_call.18} parent=0 // pred_fallthru
    _
  // Predicated region
  $region22: #{closed_call.18} parent=0 // pred_check
    _
  $region23: #{closed_call.18} parent=0 // pred_check_branch
    %544 = sbr.rel (0) target = $region25
  $region24: #{closed_call.18} parent=0 // pred_region
    _
  $region25: #{closed_call.18} parent=0 // pred_fallthru
    _
  // Predicated region
  $region26: #{closed_call.18} parent=0 // pred_check
    _
  $region27: #{closed_call.18} parent=0 // pred_check_branch
    %546 = sbr.rel (0) target = $region29
  $region28: #{closed_call.18} parent=0 // pred_region
    _
  $region29: #{closed_call.18} parent=0 // pred_fallthru
    _
  // Predicated region
  $region30: #{closed_call.18} parent=0 // pred_check
    _
  $region31: #{closed_call.18} parent=0 // pred_check_branch
    %548 = sbr.rel (0) target = $region33
  $region32: #{closed_call.18} parent=0 // pred_region
    _
  $region33: #{closed_call.18} parent=0 // pred_fallthru
    _

// kernel: closed_call.19
$region0: #{closed_call.19}
  #allocation0 [shape = 'u32[]', space=smem, size = 0x4, offset = 0x4, fixed_abs, tag = 'smem constant byte address 0x4 - core index']
  #allocation1 [shape = 'u32[72,128]{1,0:T(1,128)}', space=vmem, size = 0x9000, scoped, tag = 'internal scratch']
  %s0 = inlined_call_operand.vmem [shape: bf16[8,256], index: 0, kind: input, shape index: {}]
  %s1 = inlined_call_operand.vmem [shape: bf16[256,512], index: 1, kind: input, shape index: {}]
  %s2 = inlined_call_operand.vmem [shape: f32[1,512], index: 2, kind: input, shape index: {}]
  %s3 = inlined_call_operand.vmem [shape: bf16[8,512], index: 3, kind: input, shape index: {}]
  %s4 = inlined_call_operand.vmem [shape: f32[1,512], index: 4, kind: input, shape index: {}]
  %s5 = inlined_call_operand.vmem [shape: f32[1,512], index: 5, kind: input, shape index: {}]
  %s6 = inlined_call_operand.vmem [shape: bf16[8,512], index: 6, kind: output, shape index: {}]
  %s7 = sld [smem:[#allocation0]]
  $region34: #{closed_call.19} parent=0
    _
  %s9 = ssub.s32 1, %s7
  %s10 = scalar_select 0, %s9, %s7
  // Predicated region
  $region2: #{closed_call.19} parent=0 // pred_check
    _
  $region3: #{closed_call.19} parent=0 // pred_check_branch
    %12 = sbr.rel (0) target = $region5
  $region4: #{closed_call.19} parent=0 // pred_region
    _
  $region5: #{closed_call.19} parent=0 // pred_fallthru
    _
  // Predicated region
  $region6: #{closed_call.19} parent=0 // pred_check
    _
  $region7: #{closed_call.19} parent=0 // pred_check_branch
    %14 = sbr.rel (0) target = $region9
  $region8: #{closed_call.19} parent=0 // pred_region
    _
  $region9: #{closed_call.19} parent=0 // pred_fallthru
    _
  // Predicated region
  $region10: #{closed_call.19} parent=0 // pred_check
    _
  $region11: #{closed_call.19} parent=0 // pred_check_branch
    %16 = sbr.rel (0) target = $region13
  $region12: #{closed_call.19} parent=0 // pred_region
    _
  $region13: #{closed_call.19} parent=0 // pred_fallthru
    _
  // Predicated region
  $region14: #{closed_call.19} parent=0 // pred_check
    _
  $region15: #{closed_call.19} parent=0 // pred_check_branch
    %18 = sbr.rel (0) target = $region17
  $region16: #{closed_call.19} parent=0 // pred_region
    _
  $region17: #{closed_call.19} parent=0 // pred_fallthru
    _
  // Predicated region
  $region18: #{closed_call.19} parent=0 // pred_check
    _
  $region19: #{closed_call.19} parent=0 // pred_check_branch
    %20 = sbr.rel (0) target = $region21
  $region20: #{closed_call.19} parent=0 // pred_region
    _
  $region21: #{closed_call.19} parent=0 // pred_fallthru
    _
  // Predicated region
  $region22: #{closed_call.19} parent=0 // pred_check
    _
  $region23: #{closed_call.19} parent=0 // pred_check_branch
    %22 = sbr.rel (0) target = $region25
  $region24: #{closed_call.19} parent=0 // pred_region
    _
  $region25: #{closed_call.19} parent=0 // pred_fallthru
    _
  %v23 = vld [vmem:[%s0] sm:$0xff]
  %v24 = vld [vmem:[%s1] sm:$0xff]
  %v25 = vld [vmem:[%s1 + $0x8] sm:$0xff]
  %v26 = vld [vmem:[%s1 + $0x10] sm:$0xff]
  %v27 = vld [vmem:[%s1 + $0x18] sm:$0xff]
  %v28 = vld [vmem:[%s1 + $0x20] sm:$0xff]
  %v29 = vld [vmem:[%s1 + $0x28] sm:$0xff]
  %v30 = vld [vmem:[%s1 + $0x30] sm:$0xff]
  %v31 = vld [vmem:[%s1 + $0x38] sm:$0xff]
  %v32 = vld [vmem:[%s1 + $0x40] sm:$0xff]
  %v33 = vld [vmem:[%s1 + $0x48] sm:$0xff]
  %v34 = vld [vmem:[%s1 + $0x50] sm:$0xff]
  %v35 = vld [vmem:[%s1 + $0x58] sm:$0xff]
  %v36 = vld [vmem:[%s1 + $0x60] sm:$0xff]
  %v37 = vld [vmem:[%s1 + $0x68] sm:$0xff]
  %v38 = vld [vmem:[%s1 + $0x70] sm:$0xff]
  %v39 = vld [vmem:[%s1 + $0x78] sm:$0xff]
  %v40 = vld [vmem:[%s1 + $0x80] sm:$0xff]
  %v41 = vld [vmem:[%s1 + $0x88] sm:$0xff]
  %v42 = vld [vmem:[%s1 + $0x90] sm:$0xff]
  %v43 = vld [vmem:[%s1 + $0x98] sm:$0xff]
  %v44 = vld [vmem:[%s1 + $0xa0] sm:$0xff]
  %v45 = vld [vmem:[%s1 + $0xa8] sm:$0xff]
  %v46 = vld [vmem:[%s1 + $0xb0] sm:$0xff]
  %v47 = vld [vmem:[%s1 + $0xb8] sm:$0xff]
  %v48 = vld [vmem:[%s1 + $0xc0] sm:$0xff]
  %v49 = vld [vmem:[%s1 + $0xc8] sm:$0xff]
  %v50 = vld [vmem:[%s1 + $0xd0] sm:$0xff]
  %v51 = vld [vmem:[%s1 + $0xd8] sm:$0xff]
  %v52 = vld [vmem:[%s1 + $0xe0] sm:$0xff]
  %v53 = vld [vmem:[%s1 + $0xe8] sm:$0xff]
  %v54 = vld [vmem:[%s1 + $0xf0] sm:$0xff]
  %v55 = vld [vmem:[%s1 + $0xf8] sm:$0xff]
  %v56 = vld [vmem:[%s1 + $0x100] sm:$0xff]
  %v57 = vld [vmem:[%s1 + $0x108] sm:$0xff]
  %v58 = vld [vmem:[%s1 + $0x110] sm:$0xff]
  %v59 = vld [vmem:[%s1 + $0x118] sm:$0xff]
  %v60 = vld [vmem:[%s1 + $0x120] sm:$0xff]
  %v61 = vld [vmem:[%s1 + $0x128] sm:$0xff]
  %v62 = vld [vmem:[%s1 + $0x130] sm:$0xff]
  %v63 = vld [vmem:[%s1 + $0x138] sm:$0xff]
  %v64 = vld [vmem:[%s1 + $0x140] sm:$0xff]
  %v65 = vld [vmem:[%s1 + $0x148] sm:$0xff]
  %v66 = vld [vmem:[%s1 + $0x150] sm:$0xff]
  %v67 = vld [vmem:[%s1 + $0x158] sm:$0xff]
  %v68 = vld [vmem:[%s1 + $0x160] sm:$0xff]
  %v69 = vld [vmem:[%s1 + $0x168] sm:$0xff]
  %v70 = vld [vmem:[%s1 + $0x170] sm:$0xff]
  %v71 = vld [vmem:[%s1 + $0x178] sm:$0xff]
  %v72 = vld [vmem:[%s1 + $0x180] sm:$0xff]
  %v73 = vld [vmem:[%s1 + $0x188] sm:$0xff]
  %v74 = vld [vmem:[%s1 + $0x190] sm:$0xff]
  %v75 = vld [vmem:[%s1 + $0x198] sm:$0xff]
  %v76 = vld [vmem:[%s1 + $0x1a0] sm:$0xff]
  %v77 = vld [vmem:[%s1 + $0x1a8] sm:$0xff]
  %v78 = vld [vmem:[%s1 + $0x1b0] sm:$0xff]
  %v79 = vld [vmem:[%s1 + $0x1b8] sm:$0xff]
  %v80 = vld [vmem:[%s1 + $0x1c0] sm:$0xff]
  %v81 = vld [vmem:[%s1 + $0x1c8] sm:$0xff]
  %v82 = vld [vmem:[%s1 + $0x1d0] sm:$0xff]
  %v83 = vld [vmem:[%s1 + $0x1d8] sm:$0xff]
  %v84 = vld [vmem:[%s1 + $0x1e0] sm:$0xff]
  %v85 = vld [vmem:[%s1 + $0x1e8] sm:$0xff]
  %v86 = vld [vmem:[%s1 + $0x1f0] sm:$0xff]
  %v87 = vld [vmem:[%s1 + $0x1f8] sm:$0xff]
  %v88 = vld [vmem:[%s2] sm:$0xf]
  %v90 = vperm.slane %v88, 0
  %v91 = vperm.slane %v88, 1
  %v92 = vperm.slane %v88, 2
  %v93 = vperm.slane %v88, 3
  %v99 = vunpack.c.l.b16 %v23
  %v100 = vunpack.c.h.b16 %v23
  %v101 = vpack.c.b16 %v99, %v99
  %v102 = vpack.c.b16 %v100, %v100
  %v169 = vunpack.c.l.b16 %v24
  %v170 = vunpack.c.h.b16 %v24
  %v171 = vunpack.c.l.b16 %v25
  %v172 = vunpack.c.h.b16 %v25
  %v173 = vunpack.c.l.b16 %v26
  %v174 = vunpack.c.h.b16 %v26
  %v175 = vunpack.c.l.b16 %v27
  %v176 = vunpack.c.h.b16 %v27
  %v177 = vunpack.c.l.b16 %v28
  %v178 = vunpack.c.h.b16 %v28
  %v179 = vunpack.c.l.b16 %v29
  %v180 = vunpack.c.h.b16 %v29
  %v181 = vunpack.c.l.b16 %v30
  %v182 = vunpack.c.h.b16 %v30
  %v183 = vunpack.c.l.b16 %v31
  %v184 = vunpack.c.h.b16 %v31
  %v185 = vunpack.c.l.b16 %v32
  %v186 = vunpack.c.h.b16 %v32
  %v187 = vunpack.c.l.b16 %v33
  %v188 = vunpack.c.h.b16 %v33
  %v189 = vunpack.c.l.b16 %v34
  %v190 = vunpack.c.h.b16 %v34
  %v191 = vunpack.c.l.b16 %v35
  %v192 = vunpack.c.h.b16 %v35
  %v193 = vunpack.c.l.b16 %v36
  %v194 = vunpack.c.h.b16 %v36
  %v195 = vunpack.c.l.b16 %v37
  %v196 = vunpack.c.h.b16 %v37
  %v197 = vunpack.c.l.b16 %v38
  %v198 = vunpack.c.h.b16 %v38
  %v199 = vunpack.c.l.b16 %v39
  %v200 = vunpack.c.h.b16 %v39
  %v201 = vunpack.c.l.b16 %v40
  %v202 = vunpack.c.h.b16 %v40
  %v203 = vunpack.c.l.b16 %v41
  %v204 = vunpack.c.h.b16 %v41
  %v205 = vunpack.c.l.b16 %v42
  %v206 = vunpack.c.h.b16 %v42
  %v207 = vunpack.c.l.b16 %v43
  %v208 = vunpack.c.h.b16 %v43
  %v209 = vunpack.c.l.b16 %v44
  %v210 = vunpack.c.h.b16 %v44
  %v211 = vunpack.c.l.b16 %v45
  %v212 = vunpack.c.h.b16 %v45
  %v213 = vunpack.c.l.b16 %v46
  %v214 = vunpack.c.h.b16 %v46
  %v215 = vunpack.c.l.b16 %v47
  %v216 = vunpack.c.h.b16 %v47
  %v217 = vunpack.c.l.b16 %v48
  %v218 = vunpack.c.h.b16 %v48
  %v219 = vunpack.c.l.b16 %v49
  %v220 = vunpack.c.h.b16 %v49
  %v221 = vunpack.c.l.b16 %v50
  %v222 = vunpack.c.h.b16 %v50
  %v223 = vunpack.c.l.b16 %v51
  %v224 = vunpack.c.h.b16 %v51
  %v225 = vunpack.c.l.b16 %v52
  %v226 = vunpack.c.h.b16 %v52
  %v227 = vunpack.c.l.b16 %v53
  %v228 = vunpack.c.h.b16 %v53
  %v229 = vunpack.c.l.b16 %v54
  %v230 = vunpack.c.h.b16 %v54
  %v231 = vunpack.c.l.b16 %v55
  %v232 = vunpack.c.h.b16 %v55
  %v233 = vunpack.c.l.b16 %v56
  %v234 = vunpack.c.h.b16 %v56
  %v235 = vunpack.c.l.b16 %v57
  %v236 = vunpack.c.h.b16 %v57
  %v237 = vunpack.c.l.b16 %v58
  %v238 = vunpack.c.h.b16 %v58
  %v239 = vunpack.c.l.b16 %v59
  %v240 = vunpack.c.h.b16 %v59
  %v241 = vunpack.c.l.b16 %v60
  %v242 = vunpack.c.h.b16 %v60
  %v243 = vunpack.c.l.b16 %v61
  %v244 = vunpack.c.h.b16 %v61
  %v245 = vunpack.c.l.b16 %v62
  %v246 = vunpack.c.h.b16 %v62
  %v247 = vunpack.c.l.b16 %v63
  %v248 = vunpack.c.h.b16 %v63
  %v249 = vunpack.c.l.b16 %v64
  %v250 = vunpack.c.h.b16 %v64
  %v251 = vunpack.c.l.b16 %v65
  %v252 = vunpack.c.h.b16 %v65
  %v253 = vunpack.c.l.b16 %v66
  %v254 = vunpack.c.h.b16 %v66
  %v255 = vunpack.c.l.b16 %v67
  %v256 = vunpack.c.h.b16 %v67
  %v257 = vunpack.c.l.b16 %v68
  %v258 = vunpack.c.h.b16 %v68
  %v259 = vunpack.c.l.b16 %v69
  %v260 = vunpack.c.h.b16 %v69
  %v261 = vunpack.c.l.b16 %v70
  %v262 = vunpack.c.h.b16 %v70
  %v263 = vunpack.c.l.b16 %v71
  %v264 = vunpack.c.h.b16 %v71
  %v265 = vunpack.c.l.b16 %v72
  %v266 = vunpack.c.h.b16 %v72
  %v267 = vunpack.c.l.b16 %v73
  %v268 = vunpack.c.h.b16 %v73
  %v269 = vunpack.c.l.b16 %v74
  %v270 = vunpack.c.h.b16 %v74
  %v271 = vunpack.c.l.b16 %v75
  %v272 = vunpack.c.h.b16 %v75
  %v273 = vunpack.c.l.b16 %v76
  %v274 = vunpack.c.h.b16 %v76
  %v275 = vunpack.c.l.b16 %v77
  %v276 = vunpack.c.h.b16 %v77
  %v277 = vunpack.c.l.b16 %v78
  %v278 = vunpack.c.h.b16 %v78
  %v279 = vunpack.c.l.b16 %v79
  %v280 = vunpack.c.h.b16 %v79
  %v281 = vunpack.c.l.b16 %v80
  %v282 = vunpack.c.h.b16 %v80
  %v283 = vunpack.c.l.b16 %v81
  %v284 = vunpack.c.h.b16 %v81
  %v285 = vunpack.c.l.b16 %v82
  %v286 = vunpack.c.h.b16 %v82
  %v287 = vunpack.c.l.b16 %v83
  %v288 = vunpack.c.h.b16 %v83
  %v289 = vunpack.c.l.b16 %v84
  %v290 = vunpack.c.h.b16 %v84
  %v291 = vunpack.c.l.b16 %v85
  %v292 = vunpack.c.h.b16 %v85
  %v293 = vunpack.c.l.b16 %v86
  %v294 = vunpack.c.h.b16 %v86
  %v295 = vunpack.c.l.b16 %v87
  %v296 = vunpack.c.h.b16 %v87
  %v297 = vpack.c.b16 %v173, %v169
  %v298 = vpack.c.b16 %v174, %v170
  %v299 = vpack.c.b16 %v175, %v171
  %v300 = vpack.c.b16 %v176, %v172
  %v301 = vpack.c.b16 %v181, %v177
  %v302 = vpack.c.b16 %v182, %v178
  %v303 = vpack.c.b16 %v183, %v179
  %v304 = vpack.c.b16 %v184, %v180
  %v305 = vpack.c.b16 %v189, %v185
  %v306 = vpack.c.b16 %v190, %v186
  %v307 = vpack.c.b16 %v191, %v187
  %v308 = vpack.c.b16 %v192, %v188
  %v309 = vpack.c.b16 %v197, %v193
  %v310 = vpack.c.b16 %v198, %v194
  %v311 = vpack.c.b16 %v199, %v195
  %v312 = vpack.c.b16 %v200, %v196
  %v313 = vpack.c.b16 %v205, %v201
  %v314 = vpack.c.b16 %v206, %v202
  %v315 = vpack.c.b16 %v207, %v203
  %v316 = vpack.c.b16 %v208, %v204
  %v317 = vpack.c.b16 %v213, %v209
  %v318 = vpack.c.b16 %v214, %v210
  %v319 = vpack.c.b16 %v215, %v211
  %v320 = vpack.c.b16 %v216, %v212
  %v321 = vpack.c.b16 %v221, %v217
  %v322 = vpack.c.b16 %v222, %v218
  %v323 = vpack.c.b16 %v223, %v219
  %v324 = vpack.c.b16 %v224, %v220
  %v325 = vpack.c.b16 %v229, %v225
  %v326 = vpack.c.b16 %v230, %v226
  %v327 = vpack.c.b16 %v231, %v227
  %v328 = vpack.c.b16 %v232, %v228
  %v329 = vpack.c.b16 %v237, %v233
  %v330 = vpack.c.b16 %v238, %v234
  %v331 = vpack.c.b16 %v239, %v235
  %v332 = vpack.c.b16 %v240, %v236
  %v333 = vpack.c.b16 %v245, %v241
  %v334 = vpack.c.b16 %v246, %v242
  %v335 = vpack.c.b16 %v247, %v243
  %v336 = vpack.c.b16 %v248, %v244
  %v337 = vpack.c.b16 %v253, %v249
  %v338 = vpack.c.b16 %v254, %v250
  %v339 = vpack.c.b16 %v255, %v251
  %v340 = vpack.c.b16 %v256, %v252
  %v341 = vpack.c.b16 %v261, %v257
  %v342 = vpack.c.b16 %v262, %v258
  %v343 = vpack.c.b16 %v263, %v259
  %v344 = vpack.c.b16 %v264, %v260
  %v345 = vpack.c.b16 %v269, %v265
  %v346 = vpack.c.b16 %v270, %v266
  %v347 = vpack.c.b16 %v271, %v267
  %v348 = vpack.c.b16 %v272, %v268
  %v349 = vpack.c.b16 %v277, %v273
  %v350 = vpack.c.b16 %v278, %v274
  %v351 = vpack.c.b16 %v279, %v275
  %v352 = vpack.c.b16 %v280, %v276
  %v353 = vpack.c.b16 %v285, %v281
  %v354 = vpack.c.b16 %v286, %v282
  %v355 = vpack.c.b16 %v287, %v283
  %v356 = vpack.c.b16 %v288, %v284
  %v357 = vpack.c.b16 %v293, %v289
  %v358 = vpack.c.b16 %v294, %v290
  %v359 = vpack.c.b16 %v295, %v291
  %v360 = vpack.c.b16 %v296, %v292
  %425 = vmatpush.bf16.msra.mxu0 %v325
  %426 = vmatpush.bf16.msra.mxu0 %v321
  %427 = vmatpush.bf16.msra.mxu0 %v317
  %428 = vmatpush.bf16.msra.mxu0 %v313
  %429 = vmatpush.bf16.msra.mxu0 %v309
  %430 = vmatpush.bf16.msra.mxu0 %v305
  %431 = vmatpush.bf16.msra.mxu0 %v301
  %432 = vmatpush.bf16.msra.mxu0 %v297
  %433 = vmatmul.bf16.gmra.mxu0 %v101
  %v434 = vpop.f32.mrf.mxu0
  %v435 = vadd.f32 %v90, %v434
  %v436 = vpop.f32.mrf.mxu0
  %437 = vdwg.mxu0
  %438 = vmatpush.bf16.msra.mxu0 %v357
  %439 = vmatpush.bf16.msra.mxu0 %v353
  %440 = vmatpush.bf16.msra.mxu0 %v349
  %441 = vmatpush.bf16.msra.mxu0 %v345
  %442 = vmatpush.bf16.msra.mxu0 %v341
  %443 = vmatpush.bf16.msra.mxu0 %v337
  %444 = vmatpush.bf16.msra.mxu0 %v333
  %445 = vmatpush.bf16.msra.mxu0 %v329
  %446 = vmatmul.bf16.gmra.mxu0 %v102
  %v447 = vpop.f32.mrf.mxu0
  %v448 = vadd.f32 %v435, %v447
  %v449 = vpop.f32.mrf.mxu0
  %450 = vdwg.mxu0
  %451 = vmatpush.bf16.msra.mxu0 %v326
  %452 = vmatpush.bf16.msra.mxu0 %v322
  %453 = vmatpush.bf16.msra.mxu0 %v318
  %454 = vmatpush.bf16.msra.mxu0 %v314
  %455 = vmatpush.bf16.msra.mxu0 %v310
  %456 = vmatpush.bf16.msra.mxu0 %v306
  %457 = vmatpush.bf16.msra.mxu0 %v302
  %458 = vmatpush.bf16.msra.mxu0 %v298
  %459 = vmatmul.bf16.gmra.mxu0 %v101
  %v460 = vpop.f32.mrf.mxu0
  %v461 = vadd.f32 %v91, %v460
  %v462 = vpop.f32.mrf.mxu0
  %463 = vdwg.mxu0
  %464 = vmatpush.bf16.msra.mxu0 %v358
  %465 = vmatpush.bf16.msra.mxu0 %v354
  %466 = vmatpush.bf16.msra.mxu0 %v350
  %467 = vmatpush.bf16.msra.mxu0 %v346
  %468 = vmatpush.bf16.msra.mxu0 %v342
  %469 = vmatpush.bf16.msra.mxu0 %v338
  %470 = vmatpush.bf16.msra.mxu0 %v334
  %471 = vmatpush.bf16.msra.mxu0 %v330
  %472 = vmatmul.bf16.gmra.mxu0 %v102
  %v473 = vpop.f32.mrf.mxu0
  %v474 = vadd.f32 %v461, %v473
  %v475 = vpop.f32.mrf.mxu0
  %476 = vdwg.mxu0
  %477 = vmatpush.bf16.msra.mxu0 %v327
  %478 = vmatpush.bf16.msra.mxu0 %v323
  %479 = vmatpush.bf16.msra.mxu0 %v319
  %480 = vmatpush.bf16.msra.mxu0 %v315
  %481 = vmatpush.bf16.msra.mxu0 %v311
  %482 = vmatpush.bf16.msra.mxu0 %v307
  %483 = vmatpush.bf16.msra.mxu0 %v303
  %484 = vmatpush.bf16.msra.mxu0 %v299
  %485 = vmatmul.bf16.gmra.mxu0 %v101
  %v486 = vpop.f32.mrf.mxu0
  %v487 = vadd.f32 %v92, %v486
  %v488 = vpop.f32.mrf.mxu0
  %489 = vdwg.mxu0
  %490 = vmatpush.bf16.msra.mxu0 %v359
  %491 = vmatpush.bf16.msra.mxu0 %v355
  %492 = vmatpush.bf16.msra.mxu0 %v351
  %493 = vmatpush.bf16.msra.mxu0 %v347
  %494 = vmatpush.bf16.msra.mxu0 %v343
  %495 = vmatpush.bf16.msra.mxu0 %v339
  %496 = vmatpush.bf16.msra.mxu0 %v335
  %497 = vmatpush.bf16.msra.mxu0 %v331
  %498 = vmatmul.bf16.gmra.mxu0 %v102
  %v499 = vpop.f32.mrf.mxu0
  %v500 = vadd.f32 %v487, %v499
  %v501 = vpop.f32.mrf.mxu0
  %502 = vdwg.mxu0
  %503 = vmatpush.bf16.msra.mxu0 %v328
  %504 = vmatpush.bf16.msra.mxu0 %v324
  %505 = vmatpush.bf16.msra.mxu0 %v320
  %506 = vmatpush.bf16.msra.mxu0 %v316
  %507 = vmatpush.bf16.msra.mxu0 %v312
  %508 = vmatpush.bf16.msra.mxu0 %v308
  %509 = vmatpush.bf16.msra.mxu0 %v304
  %510 = vmatpush.bf16.msra.mxu0 %v300
  %511 = vmatmul.bf16.gmra.mxu0 %v101
  %v512 = vpop.f32.mrf.mxu0
  %v513 = vadd.f32 %v93, %v512
  %v514 = vpop.f32.mrf.mxu0
  %515 = vdwg.mxu0
  %516 = vmatpush.bf16.msra.mxu0 %v360
  %517 = vmatpush.bf16.msra.mxu0 %v356
  %518 = vmatpush.bf16.msra.mxu0 %v352
  %519 = vmatpush.bf16.msra.mxu0 %v348
  %520 = vmatpush.bf16.msra.mxu0 %v344
  %521 = vmatpush.bf16.msra.mxu0 %v340
  %522 = vmatpush.bf16.msra.mxu0 %v336
  %523 = vmatpush.bf16.msra.mxu0 %v332
  %524 = vmatmul.bf16.gmra.mxu0 %v102
  %v525 = vpop.f32.mrf.mxu0
  %v526 = vadd.f32 %v513, %v525
  %v527 = vpop.f32.mrf.mxu0
  %528 = vdwg.mxu0
  %v529 = vld [vmem:[%s3] sm:$0xff]
  %v530 = vld [vmem:[%s3 + $0x8] sm:$0xff]
  %v531 = vunpack.c.l.bf16 %v529
  %v532 = vunpack.c.h.bf16 %v529
  %v533 = vunpack.c.l.bf16 %v530
  %v534 = vunpack.c.h.bf16 %v530
  %v535 = vadd.f32 %v448, %v531
  %v536 = vadd.f32 %v474, %v532
  %v537 = vadd.f32 %v500, %v533
  %v538 = vadd.f32 %v526, %v534
  %v539 = vld [vmem:[%s4] sm:$0xf]
  %v540 = vld [vmem:[%s5] sm:$0xf]
  %v541 = vadd.f32 %v535, %v536
  %v542 = vadd.f32 %v541, %v537
  %v543 = vadd.f32 %v542, %v538
  %544 = vadd.xlane.f32.xlu0 %v543
  %v545 = vpop.xlane.xlu0 %544
  %v546 = vrcp.pop 512.0
  %v547 = vmul.f32 512.0, %v546
  %v548 = vsub.f32 1.0, %v547
  %v549 = vmul.f32 %v546, %v548
  %v550 = vadd.f32 %v546, %v549
  %vm551 = vweird.f32 %v546
  %v552 = vsel %vm551, %v546, %v550
  %v553 = vmul.f32 %v545, %v552
  %v554 = vsub.f32 %v535, %v553
  %v555 = vsub.f32 %v536, %v553
  %v556 = vsub.f32 %v537, %v553
  %v557 = vsub.f32 %v538, %v553
  %v558 = vmul.f32 %v554, %v554
  %v559 = vmul.f32 %v555, %v555
  %v560 = vmul.f32 %v556, %v556
  %v561 = vmul.f32 %v557, %v557
  %v562 = vadd.f32 %v558, %v559
  %v563 = vadd.f32 %v562, %v560
  %v564 = vadd.f32 %v563, %v561
  %565 = vadd.xlane.f32.xlu0 %v564
  %v566 = vpop.xlane.xlu0 %565
  %v567 = vmul.f32 %v566, %v552
  %v568 = vadd.f32 %v567, 1e-05
  %v569 = vrsqrt.pop %v568
  %v570 = vmul.f32 %v569, %v568
  %v571 = vmul.f32 %v570, %v569
  %v572 = vmul.f32 0.5, %v571
  %v573 = vsub.f32 1.5, %v572
  %v574 = vmul.f32 %v569, %v573
  %vm575 = vweird.f32 %v568
  %vm576 = vweird.f32 %v569
  %vm577 = vmor %vm575, %vm576
  %v578 = vsel %vm577, %v569, %v574
  %v579 = vmul.f32 %v554, %v578
  %v580 = vmul.f32 %v555, %v578
  %v581 = vmul.f32 %v556, %v578
  %v582 = vmul.f32 %v557, %v578
  %v584 = vperm.slane %v539, 0
  %v585 = vperm.slane %v539, 1
  %v586 = vperm.slane %v539, 2
  %v587 = vperm.slane %v539, 3
  %v592 = vmul.f32 %v579, %v584
  %v593 = vmul.f32 %v580, %v585
  %v594 = vmul.f32 %v581, %v586
  %v595 = vmul.f32 %v582, %v587
  %v597 = vperm.slane %v540, 0
  %v598 = vperm.slane %v540, 1
  %v599 = vperm.slane %v540, 2
  %v600 = vperm.slane %v540, 3
  %v605 = vadd.f32 %v592, %v597
  %v606 = vadd.f32 %v593, %v598
  %v607 = vadd.f32 %v594, %v599
  %v608 = vadd.f32 %v595, %v600
  %v609 = vpack.c.bf16 %v606, %v605
  %v610 = vpack.c.bf16 %v608, %v607
  %611 = vst [vmem:[%s6] sm:$0xff] %v609
  %612 = vst [vmem:[%s6 + $0x8] sm:$0xff] %v610
  // Predicated region
  $region26: #{closed_call.19} parent=0 // pred_check
    _
  $region27: #{closed_call.19} parent=0 // pred_check_branch
    %614 = sbr.rel (0) target = $region29
  $region28: #{closed_call.19} parent=0 // pred_region
    _
  $region29: #{closed_call.19} parent=0 // pred_fallthru
    _
  // Predicated region
  $region30: #{closed_call.19} parent=0 // pred_check
    _
  $region31: #{closed_call.19} parent=0 // pred_check_branch
    %616 = sbr.rel (0) target = $region33
  $region32: #{closed_call.19} parent=0 // pred_region
    _
  $region33: #{closed_call.19} parent=0 // pred_fallthru
    _

// kernel: closed_call.20
$region0: #{closed_call.20}
  #allocation0 [shape = 'u32[]', space=smem, size = 0x4, offset = 0x4, fixed_abs, tag = 'smem constant byte address 0x4 - core index']
  #allocation1 [shape = 'u32[72,128]{1,0:T(1,128)}', space=vmem, size = 0x9000, scoped, tag = 'internal scratch']
  %s0 = inlined_call_operand.vmem [shape: bf16[8,512], index: 0, kind: input, shape index: {}]
  %s1 = inlined_call_operand.vmem [shape: bf16[512,2048], index: 1, kind: input, shape index: {}]
  %s2 = inlined_call_operand.vmem [shape: f32[1,2048], index: 2, kind: input, shape index: {}]
  %s3 = inlined_call_operand.vmem [shape: bf16[2048,512], index: 3, kind: input, shape index: {}]
  %s4 = inlined_call_operand.vmem [shape: f32[1,512], index: 4, kind: input, shape index: {}]
  %s5 = inlined_call_operand.vmem [shape: f32[1,512], index: 5, kind: input, shape index: {}]
  %s6 = inlined_call_operand.vmem [shape: f32[1,512], index: 6, kind: input, shape index: {}]
  %s7 = inlined_call_operand.vmem [shape: bf16[8,512], index: 7, kind: output, shape index: {}]
  %s8 = sld [smem:[#allocation0]]
  $region38: #{closed_call.20} parent=0
    _
  %s10 = ssub.s32 1, %s8
  %s11 = scalar_select 0, %s10, %s8
  // Predicated region
  $region2: #{closed_call.20} parent=0 // pred_check
    _
  $region3: #{closed_call.20} parent=0 // pred_check_branch
    %13 = sbr.rel (0) target = $region5
  $region4: #{closed_call.20} parent=0 // pred_region
    _
  $region5: #{closed_call.20} parent=0 // pred_fallthru
    _
  // Predicated region
  $region6: #{closed_call.20} parent=0 // pred_check
    _
  $region7: #{closed_call.20} parent=0 // pred_check_branch
    %15 = sbr.rel (0) target = $region9
  $region8: #{closed_call.20} parent=0 // pred_region
    _
  $region9: #{closed_call.20} parent=0 // pred_fallthru
    _
  // Predicated region
  $region10: #{closed_call.20} parent=0 // pred_check
    _
  $region11: #{closed_call.20} parent=0 // pred_check_branch
    %17 = sbr.rel (0) target = $region13
  $region12: #{closed_call.20} parent=0 // pred_region
    _
  $region13: #{closed_call.20} parent=0 // pred_fallthru
    _
  // Predicated region
  $region14: #{closed_call.20} parent=0 // pred_check
    _
  $region15: #{closed_call.20} parent=0 // pred_check_branch
    %19 = sbr.rel (0) target = $region17
  $region16: #{closed_call.20} parent=0 // pred_region
    _
  $region17: #{closed_call.20} parent=0 // pred_fallthru
    _
  // Predicated region
  $region18: #{closed_call.20} parent=0 // pred_check
    _
  $region19: #{closed_call.20} parent=0 // pred_check_branch
    %21 = sbr.rel (0) target = $region21
  $region20: #{closed_call.20} parent=0 // pred_region
    _
  $region21: #{closed_call.20} parent=0 // pred_fallthru
    _
  // Predicated region
  $region22: #{closed_call.20} parent=0 // pred_check
    _
  $region23: #{closed_call.20} parent=0 // pred_check_branch
    %23 = sbr.rel (0) target = $region25
  $region24: #{closed_call.20} parent=0 // pred_region
    _
  $region25: #{closed_call.20} parent=0 // pred_fallthru
    _
  // Predicated region
  $region26: #{closed_call.20} parent=0 // pred_check
    _
  $region27: #{closed_call.20} parent=0 // pred_check_branch
    %25 = sbr.rel (0) target = $region29
  $region28: #{closed_call.20} parent=0 // pred_region
    _
  $region29: #{closed_call.20} parent=0 // pred_fallthru
    _
  %v26 = vld [vmem:[%s0] sm:$0xff]
  %v27 = vld [vmem:[%s0 + $0x8] sm:$0xff]
  %v28 = vld [vmem:[%s1] sm:$0xff]
  %v29 = vld [vmem:[%s1 + $0x8] sm:$0xff]
  %v30 = vld [vmem:[%s1 + $0x10] sm:$0xff]
  %v31 = vld [vmem:[%s1 + $0x18] sm:$0xff]
  %v32 = vld [vmem:[%s1 + $0x20] sm:$0xff]
  %v33 = vld [vmem:[%s1 + $0x28] sm:$0xff]
  %v34 = vld [vmem:[%s1 + $0x30] sm:$0xff]
  %v35 = vld [vmem:[%s1 + $0x38] sm:$0xff]
  %v36 = vld [vmem:[%s1 + $0x40] sm:$0xff]
  %v37 = vld [vmem:[%s1 + $0x48] sm:$0xff]
  %v38 = vld [vmem:[%s1 + $0x50] sm:$0xff]
  %v39 = vld [vmem:[%s1 + $0x58] sm:$0xff]
  %v40 = vld [vmem:[%s1 + $0x60] sm:$0xff]
  %v41 = vld [vmem:[%s1 + $0x68] sm:$0xff]
  %v42 = vld [vmem:[%s1 + $0x70] sm:$0xff]
  %v43 = vld [vmem:[%s1 + $0x78] sm:$0xff]
  %v44 = vld [vmem:[%s1 + $0x80] sm:$0xff]
  %v45 = vld [vmem:[%s1 + $0x88] sm:$0xff]
  %v46 = vld [vmem:[%s1 + $0x90] sm:$0xff]
  %v47 = vld [vmem:[%s1 + $0x98] sm:$0xff]
  %v48 = vld [vmem:[%s1 + $0xa0] sm:$0xff]
  %v49 = vld [vmem:[%s1 + $0xa8] sm:$0xff]
  %v50 = vld [vmem:[%s1 + $0xb0] sm:$0xff]
  %v51 = vld [vmem:[%s1 + $0xb8] sm:$0xff]
  %v52 = vld [vmem:[%s1 + $0xc0] sm:$0xff]
  %v53 = vld [vmem:[%s1 + $0xc8] sm:$0xff]
  %v54 = vld [vmem:[%s1 + $0xd0] sm:$0xff]
  %v55 = vld [vmem:[%s1 + $0xd8] sm:$0xff]
  %v56 = vld [vmem:[%s1 + $0xe0] sm:$0xff]
  %v57 = vld [vmem:[%s1 + $0xe8] sm:$0xff]
  %v58 = vld [vmem:[%s1 + $0xf0] sm:$0xff]
  %v59 = vld [vmem:[%s1 + $0xf8] sm:$0xff]
  %v60 = vld [vmem:[%s1 + $0x100] sm:$0xff]
  %v61 = vld [vmem:[%s1 + $0x108] sm:$0xff]
  %v62 = vld [vmem:[%s1 + $0x110] sm:$0xff]
  %v63 = vld [vmem:[%s1 + $0x118] sm:$0xff]
  %v64 = vld [vmem:[%s1 + $0x120] sm:$0xff]
  %v65 = vld [vmem:[%s1 + $0x128] sm:$0xff]
  %v66 = vld [vmem:[%s1 + $0x130] sm:$0xff]
  %v67 = vld [vmem:[%s1 + $0x138] sm:$0xff]
  %v68 = vld [vmem:[%s1 + $0x140] sm:$0xff]
  %v69 = vld [vmem:[%s1 + $0x148] sm:$0xff]
  %v70 = vld [vmem:[%s1 + $0x150] sm:$0xff]
  %v71 = vld [vmem:[%s1 + $0x158] sm:$0xff]
  %v72 = vld [vmem:[%s1 + $0x160] sm:$0xff]
  %v73 = vld [vmem:[%s1 + $0x168] sm:$0xff]
  %v74 = vld [vmem:[%s1 + $0x170] sm:$0xff]
  %v75 = vld [vmem:[%s1 + $0x178] sm:$0xff]
  %v76 = vld [vmem:[%s1 + $0x180] sm:$0xff]
  %v77 = vld [vmem:[%s1 + $0x188] sm:$0xff]
  %v78 = vld [vmem:[%s1 + $0x190] sm:$0xff]
  %v79 = vld [vmem:[%s1 + $0x198] sm:$0xff]
  %v80 = vld [vmem:[%s1 + $0x1a0] sm:$0xff]
  %v81 = vld [vmem:[%s1 + $0x1a8] sm:$0xff]
  %v82 = vld [vmem:[%s1 + $0x1b0] sm:$0xff]
  %v83 = vld [vmem:[%s1 + $0x1b8] sm:$0xff]
  %v84 = vld [vmem:[%s1 + $0x1c0] sm:$0xff]
  %v85 = vld [vmem:[%s1 + $0x1c8] sm:$0xff]
  %v86 = vld [vmem:[%s1 + $0x1d0] sm:$0xff]
  %v87 = vld [vmem:[%s1 + $0x1d8] sm:$0xff]
  %v88 = vld [vmem:[%s1 + $0x1e0] sm:$0xff]
  %v89 = vld [vmem:[%s1 + $0x1e8] sm:$0xff]
  %v90 = vld [vmem:[%s1 + $0x1f0] sm:$0xff]
  %v91 = vld [vmem:[%s1 + $0x1f8] sm:$0xff]
  %v92 = vld [vmem:[%s1 + $0x200] sm:$0xff]
  %v93 = vld [vmem:[%s1 + $0x208] sm:$0xff]
  %v94 = vld [vmem:[%s1 + $0x210] sm:$0xff]
  %v95 = vld [vmem:[%s1 + $0x218] sm:$0xff]
  %v96 = vld [vmem:[%s1 + $0x220] sm:$0xff]
  %v97 = vld [vmem:[%s1 + $0x228] sm:$0xff]
  %v98 = vld [vmem:[%s1 + $0x230] sm:$0xff]
  %v99 = vld [vmem:[%s1 + $0x238] sm:$0xff]
  %v100 = vld [vmem:[%s1 + $0x240] sm:$0xff]
  %v101 = vld [vmem:[%s1 + $0x248] sm:$0xff]
  %v102 = vld [vmem:[%s1 + $0x250] sm:$0xff]
  %v103 = vld [vmem:[%s1 + $0x258] sm:$0xff]
  %v104 = vld [vmem:[%s1 + $0x260] sm:$0xff]
  %v105 = vld [vmem:[%s1 + $0x268] sm:$0xff]
  %v106 = vld [vmem:[%s1 + $0x270] sm:$0xff]
  %v107 = vld [vmem:[%s1 + $0x278] sm:$0xff]
  %v108 = vld [vmem:[%s1 + $0x280] sm:$0xff]
  %v109 = vld [vmem:[%s1 + $0x288] sm:$0xff]
  %v110 = vld [vmem:[%s1 + $0x290] sm:$0xff]
  %v111 = vld [vmem:[%s1 + $0x298] sm:$0xff]
  %v112 = vld [vmem:[%s1 + $0x2a0] sm:$0xff]
  %v113 = vld [vmem:[%s1 + $0x2a8] sm:$0xff]
  %v114 = vld [vmem:[%s1 + $0x2b0] sm:$0xff]
  %v115 = vld [vmem:[%s1 + $0x2b8] sm:$0xff]
  %v116 = vld [vmem:[%s1 + $0x2c0] sm:$0xff]
  %v117 = vld [vmem:[%s1 + $0x2c8] sm:$0xff]
  %v118 = vld [vmem:[%s1 + $0x2d0] sm:$0xff]
  %v119 = vld [vmem:[%s1 + $0x2d8] sm:$0xff]
  %v120 = vld [vmem:[%s1 + $0x2e0] sm:$0xff]
  %v121 = vld [vmem:[%s1 + $0x2e8] sm:$0xff]
  %v122 = vld [vmem:[%s1 + $0x2f0] sm:$0xff]
  %v123 = vld [vmem:[%s1 + $0x2f8] sm:$0xff]
  %v124 = vld [vmem:[%s1 + $0x300] sm:$0xff]
  %v125 = vld [vmem:[%s1 + $0x308] sm:$0xff]
  %v126 = vld [vmem:[%s1 + $0x310] sm:$0xff]
  %v127 = vld [vmem:[%s1 + $0x318] sm:$0xff]
  %v128 = vld [vmem:[%s1 + $0x320] sm:$0xff]
  %v129 = vld [vmem:[%s1 + $0x328] sm:$0xff]
  %v130 = vld [vmem:[%s1 + $0x330] sm:$0xff]
  %v131 = vld [vmem:[%s1 + $0x338] sm:$0xff]
  %v132 = vld [vmem:[%s1 + $0x340] sm:$0xff]
  %v133 = vld [vmem:[%s1 + $0x348] sm:$0xff]
  %v134 = vld [vmem:[%s1 + $0x350] sm:$0xff]
  %v135 = vld [vmem:[%s1 + $0x358] sm:$0xff]
  %v136 = vld [vmem:[%s1 + $0x360] sm:$0xff]
  %v137 = vld [vmem:[%s1 + $0x368] sm:$0xff]
  %v138 = vld [vmem:[%s1 + $0x370] sm:$0xff]
  %v139 = vld [vmem:[%s1 + $0x378] sm:$0xff]
  %v140 = vld [vmem:[%s1 + $0x380] sm:$0xff]
  %v141 = vld [vmem:[%s1 + $0x388] sm:$0xff]
  %v142 = vld [vmem:[%s1 + $0x390] sm:$0xff]
  %v143 = vld [vmem:[%s1 + $0x398] sm:$0xff]
  %v144 = vld [vmem:[%s1 + $0x3a0] sm:$0xff]
  %v145 = vld [vmem:[%s1 + $0x3a8] sm:$0xff]
  %v146 = vld [vmem:[%s1 + $0x3b0] sm:$0xff]
  %v147 = vld [vmem:[%s1 + $0x3b8] sm:$0xff]
  %v148 = vld [vmem:[%s1 + $0x3c0] sm:$0xff]
  %v149 = vld [vmem:[%s1 + $0x3c8] sm:$0xff]
  %v150 = vld [vmem:[%s1 + $0x3d0] sm:$0xff]
  %v151 = vld [vmem:[%s1 + $0x3d8] sm:$0xff]
  %v152 = vld [vmem:[%s1 + $0x3e0] sm:$0xff]
  %v153 = vld [vmem:[%s1 + $0x3e8] sm:$0xff]
  %v154 = vld [vmem:[%s1 + $0x3f0] sm:$0xff]
  %v155 = vld [vmem:[%s1 + $0x3f8] sm:$0xff]
  %v156 = vld [vmem:[%s1 + $0x400] sm:$0xff]
  %v157 = vld [vmem:[%s1 + $0x408] sm:$0xff]
  %v158 = vld [vmem:[%s1 + $0x410] sm:$0xff]
  %v159 = vld [vmem:[%s1 + $0x418] sm:$0xff]
  %v160 = vld [vmem:[%s1 + $0x420] sm:$0xff]
  %v161 = vld [vmem:[%s1 + $0x428] sm:$0xff]
  %v162 = vld [vmem:[%s1 + $0x430] sm:$0xff]
  %v163 = vld [vmem:[%s1 + $0x438] sm:$0xff]
  %v164 = vld [vmem:[%s1 + $0x440] sm:$0xff]
  %v165 = vld [vmem:[%s1 + $0x448] sm:$0xff]
  %v166 = vld [vmem:[%s1 + $0x450] sm:$0xff]
  %v167 = vld [vmem:[%s1 + $0x458] sm:$0xff]
  %v168 = vld [vmem:[%s1 + $0x460] sm:$0xff]
  %v169 = vld [vmem:[%s1 + $0x468] sm:$0xff]
  %v170 = vld [vmem:[%s1 + $0x470] sm:$0xff]
  %v171 = vld [vmem:[%s1 + $0x478] sm:$0xff]
  %v172 = vld [vmem:[%s1 + $0x480] sm:$0xff]
  %v173 = vld [vmem:[%s1 + $0x488] sm:$0xff]
  %v174 = vld [vmem:[%s1 + $0x490] sm:$0xff]
  %v175 = vld [vmem:[%s1 + $0x498] sm:$0xff]
  %v176 = vld [vmem:[%s1 + $0x4a0] sm:$0xff]
  %v177 = vld [vmem:[%s1 + $0x4a8] sm:$0xff]
  %v178 = vld [vmem:[%s1 + $0x4b0] sm:$0xff]
  %v179 = vld [vmem:[%s1 + $0x4b8] sm:$0xff]
  %v180 = vld [vmem:[%s1 + $0x4c0] sm:$0xff]
  %v181 = vld [vmem:[%s1 + $0x4c8] sm:$0xff]
  %v182 = vld [vmem:[%s1 + $0x4d0] sm:$0xff]
  %v183 = vld [vmem:[%s1 + $0x4d8] sm:$0xff]
  %v184 = vld [vmem:[%s1 + $0x4e0] sm:$0xff]
  %v185 = vld [vmem:[%s1 + $0x4e8] sm:$0xff]
  %v186 = vld [vmem:[%s1 + $0x4f0] sm:$0xff]
  %v187 = vld [vmem:[%s1 + $0x4f8] sm:$0xff]
  %v188 = vld [vmem:[%s1 + $0x500] sm:$0xff]
  %v189 = vld [vmem:[%s1 + $0x508] sm:$0xff]
  %v190 = vld [vmem:[%s1 + $0x510] sm:$0xff]
  %v191 = vld [vmem:[%s1 + $0x518] sm:$0xff]
  %v192 = vld [vmem:[%s1 + $0x520] sm:$0xff]
  %v193 = vld [vmem:[%s1 + $0x528] sm:$0xff]
  %v194 = vld [vmem:[%s1 + $0x530] sm:$0xff]
  %v195 = vld [vmem:[%s1 + $0x538] sm:$0xff]
  %v196 = vld [vmem:[%s1 + $0x540] sm:$0xff]
  %v197 = vld [vmem:[%s1 + $0x548] sm:$0xff]
  %v198 = vld [vmem:[%s1 + $0x550] sm:$0xff]
  %v199 = vld [vmem:[%s1 + $0x558] sm:$0xff]
  %v200 = vld [vmem:[%s1 + $0x560] sm:$0xff]
  %v201 = vld [vmem:[%s1 + $0x568] sm:$0xff]
  %v202 = vld [vmem:[%s1 + $0x570] sm:$0xff]
  %v203 = vld [vmem:[%s1 + $0x578] sm:$0xff]
  %v204 = vld [vmem:[%s1 + $0x580] sm:$0xff]
  %v205 = vld [vmem:[%s1 + $0x588] sm:$0xff]
  %v206 = vld [vmem:[%s1 + $0x590] sm:$0xff]
  %v207 = vld [vmem:[%s1 + $0x598] sm:$0xff]
  %v208 = vld [vmem:[%s1 + $0x5a0] sm:$0xff]
  %v209 = vld [vmem:[%s1 + $0x5a8] sm:$0xff]
  %v210 = vld [vmem:[%s1 + $0x5b0] sm:$0xff]
  %v211 = vld [vmem:[%s1 + $0x5b8] sm:$0xff]
  %v212 = vld [vmem:[%s1 + $0x5c0] sm:$0xff]
  %v213 = vld [vmem:[%s1 + $0x5c8] sm:$0xff]
  %v214 = vld [vmem:[%s1 + $0x5d0] sm:$0xff]
  %v215 = vld [vmem:[%s1 + $0x5d8] sm:$0xff]
  %v216 = vld [vmem:[%s1 + $0x5e0] sm:$0xff]
  %v217 = vld [vmem:[%s1 + $0x5e8] sm:$0xff]
  %v218 = vld [vmem:[%s1 + $0x5f0] sm:$0xff]
  %v219 = vld [vmem:[%s1 + $0x5f8] sm:$0xff]
  %v220 = vld [vmem:[%s1 + $0x600] sm:$0xff]
  %v221 = vld [vmem:[%s1 + $0x608] sm:$0xff]
  %v222 = vld [vmem:[%s1 + $0x610] sm:$0xff]
  %v223 = vld [vmem:[%s1 + $0x618] sm:$0xff]
  %v224 = vld [vmem:[%s1 + $0x620] sm:$0xff]
  %v225 = vld [vmem:[%s1 + $0x628] sm:$0xff]
  %v226 = vld [vmem:[%s1 + $0x630] sm:$0xff]
  %v227 = vld [vmem:[%s1 + $0x638] sm:$0xff]
  %v228 = vld [vmem:[%s1 + $0x640] sm:$0xff]
  %v229 = vld [vmem:[%s1 + $0x648] sm:$0xff]
  %v230 = vld [vmem:[%s1 + $0x650] sm:$0xff]
  %v231 = vld [vmem:[%s1 + $0x658] sm:$0xff]
  %v232 = vld [vmem:[%s1 + $0x660] sm:$0xff]
  %v233 = vld [vmem:[%s1 + $0x668] sm:$0xff]
  %v234 = vld [vmem:[%s1 + $0x670] sm:$0xff]
  %v235 = vld [vmem:[%s1 + $0x678] sm:$0xff]
  %v236 = vld [vmem:[%s1 + $0x680] sm:$0xff]
  %v237 = vld [vmem:[%s1 + $0x688] sm:$0xff]
  %v238 = vld [vmem:[%s1 + $0x690] sm:$0xff]
  %v239 = vld [vmem:[%s1 + $0x698] sm:$0xff]
  %v240 = vld [vmem:[%s1 + $0x6a0] sm:$0xff]
  %v241 = vld [vmem:[%s1 + $0x6a8] sm:$0xff]
  %v242 = vld [vmem:[%s1 + $0x6b0] sm:$0xff]
  %v243 = vld [vmem:[%s1 + $0x6b8] sm:$0xff]
  %v244 = vld [vmem:[%s1 + $0x6c0] sm:$0xff]
  %v245 = vld [vmem:[%s1 + $0x6c8] sm:$0xff]
  %v246 = vld [vmem:[%s1 + $0x6d0] sm:$0xff]
  %v247 = vld [vmem:[%s1 + $0x6d8] sm:$0xff]
  %v248 = vld [vmem:[%s1 + $0x6e0] sm:$0xff]
  %v249 = vld [vmem:[%s1 + $0x6e8] sm:$0xff]
  %v250 = vld [vmem:[%s1 + $0x6f0] sm:$0xff]
  %v251 = vld [vmem:[%s1 + $0x6f8] sm:$0xff]
  %v252 = vld [vmem:[%s1 + $0x700] sm:$0xff]
  %v253 = vld [vmem:[%s1 + $0x708] sm:$0xff]
  %v254 = vld [vmem:[%s1 + $0x710] sm:$0xff]
  %v255 = vld [vmem:[%s1 + $0x718] sm:$0xff]
  %v256 = vld [vmem:[%s1 + $0x720] sm:$0xff]
  %v257 = vld [vmem:[%s1 + $0x728] sm:$0xff]
  %v258 = vld [vmem:[%s1 + $0x730] sm:$0xff]
  %v259 = vld [vmem:[%s1 + $0x738] sm:$0xff]
  %v260 = vld [vmem:[%s1 + $0x740] sm:$0xff]
  %v261 = vld [vmem:[%s1 + $0x748] sm:$0xff]
  %v262 = vld [vmem:[%s1 + $0x750] sm:$0xff]
  %v263 = vld [vmem:[%s1 + $0x758] sm:$0xff]
  %v264 = vld [vmem:[%s1 + $0x760] sm:$0xff]
  %v265 = vld [vmem:[%s1 + $0x768] sm:$0xff]
  %v266 = vld [vmem:[%s1 + $0x770] sm:$0xff]
  %v267 = vld [vmem:[%s1 + $0x778] sm:$0xff]
  %v268 = vld [vmem:[%s1 + $0x780] sm:$0xff]
  %v269 = vld [vmem:[%s1 + $0x788] sm:$0xff]
  %v270 = vld [vmem:[%s1 + $0x790] sm:$0xff]
  %v271 = vld [vmem:[%s1 + $0x798] sm:$0xff]
  %v272 = vld [vmem:[%s1 + $0x7a0] sm:$0xff]
  %v273 = vld [vmem:[%s1 + $0x7a8] sm:$0xff]
  %v274 = vld [vmem:[%s1 + $0x7b0] sm:$0xff]
  %v275 = vld [vmem:[%s1 + $0x7b8] sm:$0xff]
  %v276 = vld [vmem:[%s1 + $0x7c0] sm:$0xff]
  %v277 = vld [vmem:[%s1 + $0x7c8] sm:$0xff]
  %v278 = vld [vmem:[%s1 + $0x7d0] sm:$0xff]
  %v279 = vld [vmem:[%s1 + $0x7d8] sm:$0xff]
  %v280 = vld [vmem:[%s1 + $0x7e0] sm:$0xff]
  %v281 = vld [vmem:[%s1 + $0x7e8] sm:$0xff]
  %v282 = vld [vmem:[%s1 + $0x7f0] sm:$0xff]
  %v283 = vld [vmem:[%s1 + $0x7f8] sm:$0xff]
  %v284 = vld [vmem:[%s1 + $0x800] sm:$0xff]
  %v285 = vld [vmem:[%s1 + $0x808] sm:$0xff]
  %v286 = vld [vmem:[%s1 + $0x810] sm:$0xff]
  %v287 = vld [vmem:[%s1 + $0x818] sm:$0xff]
  %v288 = vld [vmem:[%s1 + $0x820] sm:$0xff]
  %v289 = vld [vmem:[%s1 + $0x828] sm:$0xff]
  %v290 = vld [vmem:[%s1 + $0x830] sm:$0xff]
  %v291 = vld [vmem:[%s1 + $0x838] sm:$0xff]
  %v292 = vld [vmem:[%s1 + $0x840] sm:$0xff]
  %v293 = vld [vmem:[%s1 + $0x848] sm:$0xff]
  %v294 = vld [vmem:[%s1 + $0x850] sm:$0xff]
  %v295 = vld [vmem:[%s1 + $0x858] sm:$0xff]
  %v296 = vld [vmem:[%s1 + $0x860] sm:$0xff]
  %v297 = vld [vmem:[%s1 + $0x868] sm:$0xff]
  %v298 = vld [vmem:[%s1 + $0x870] sm:$0xff]
  %v299 = vld [vmem:[%s1 + $0x878] sm:$0xff]
  %v300 = vld [vmem:[%s1 + $0x880] sm:$0xff]
  %v301 = vld [vmem:[%s1 + $0x888] sm:$0xff]
  %v302 = vld [vmem:[%s1 + $0x890] sm:$0xff]
  %v303 = vld [vmem:[%s1 + $0x898] sm:$0xff]
  %v304 = vld [vmem:[%s1 + $0x8a0] sm:$0xff]
  %v305 = vld [vmem:[%s1 + $0x8a8] sm:$0xff]
  %v306 = vld [vmem:[%s1 + $0x8b0] sm:$0xff]
  %v307 = vld [vmem:[%s1 + $0x8b8] sm:$0xff]
  %v308 = vld [vmem:[%s1 + $0x8c0] sm:$0xff]
  %v309 = vld [vmem:[%s1 + $0x8c8] sm:$0xff]
  %v310 = vld [vmem:[%s1 + $0x8d0] sm:$0xff]
  %v311 = vld [vmem:[%s1 + $0x8d8] sm:$0xff]
  %v312 = vld [vmem:[%s1 + $0x8e0] sm:$0xff]
  %v313 = vld [vmem:[%s1 + $0x8e8] sm:$0xff]
  %v314 = vld [vmem:[%s1 + $0x8f0] sm:$0xff]
  %v315 = vld [vmem:[%s1 + $0x8f8] sm:$0xff]
  %v316 = vld [vmem:[%s1 + $0x900] sm:$0xff]
  %v317 = vld [vmem:[%s1 + $0x908] sm:$0xff]
  %v318 = vld [vmem:[%s1 + $0x910] sm:$0xff]
  %v319 = vld [vmem:[%s1 + $0x918] sm:$0xff]
  %v320 = vld [vmem:[%s1 + $0x920] sm:$0xff]
  %v321 = vld [vmem:[%s1 + $0x928] sm:$0xff]
  %v322 = vld [vmem:[%s1 + $0x930] sm:$0xff]
  %v323 = vld [vmem:[%s1 + $0x938] sm:$0xff]
  %v324 = vld [vmem:[%s1 + $0x940] sm:$0xff]
  %v325 = vld [vmem:[%s1 + $0x948] sm:$0xff]
  %v326 = vld [vmem:[%s1 + $0x950] sm:$0xff]
  %v327 = vld [vmem:[%s1 + $0x958] sm:$0xff]
  %v328 = vld [vmem:[%s1 + $0x960] sm:$0xff]
  %v329 = vld [vmem:[%s1 + $0x968] sm:$0xff]
  %v330 = vld [vmem:[%s1 + $0x970] sm:$0xff]
  %v331 = vld [vmem:[%s1 + $0x978] sm:$0xff]
  %v332 = vld [vmem:[%s1 + $0x980] sm:$0xff]
  %v333 = vld [vmem:[%s1 + $0x988] sm:$0xff]
  %v334 = vld [vmem:[%s1 + $0x990] sm:$0xff]
  %v335 = vld [vmem:[%s1 + $0x998] sm:$0xff]
  %v336 = vld [vmem:[%s1 + $0x9a0] sm:$0xff]
  %v337 = vld [vmem:[%s1 + $0x9a8] sm:$0xff]
  %v338 = vld [vmem:[%s1 + $0x9b0] sm:$0xff]
  %v339 = vld [vmem:[%s1 + $0x9b8] sm:$0xff]
  %v340 = vld [vmem:[%s1 + $0x9c0] sm:$0xff]
  %v341 = vld [vmem:[%s1 + $0x9c8] sm:$0xff]
  %v342 = vld [vmem:[%s1 + $0x9d0] sm:$0xff]
  %v343 = vld [vmem:[%s1 + $0x9d8] sm:$0xff]
  %v344 = vld [vmem:[%s1 + $0x9e0] sm:$0xff]
  %v345 = vld [vmem:[%s1 + $0x9e8] sm:$0xff]
  %v346 = vld [vmem:[%s1 + $0x9f0] sm:$0xff]
  %v347 = vld [vmem:[%s1 + $0x9f8] sm:$0xff]
  %v348 = vld [vmem:[%s1 + $0xa00] sm:$0xff]
  %v349 = vld [vmem:[%s1 + $0xa08] sm:$0xff]
  %v350 = vld [vmem:[%s1 + $0xa10] sm:$0xff]
  %v351 = vld [vmem:[%s1 + $0xa18] sm:$0xff]
  %v352 = vld [vmem:[%s1 + $0xa20] sm:$0xff]
  %v353 = vld [vmem:[%s1 + $0xa28] sm:$0xff]
  %v354 = vld [vmem:[%s1 + $0xa30] sm:$0xff]
  %v355 = vld [vmem:[%s1 + $0xa38] sm:$0xff]
  %v356 = vld [vmem:[%s1 + $0xa40] sm:$0xff]
  %v357 = vld [vmem:[%s1 + $0xa48] sm:$0xff]
  %v358 = vld [vmem:[%s1 + $0xa50] sm:$0xff]
  %v359 = vld [vmem:[%s1 + $0xa58] sm:$0xff]
  %v360 = vld [vmem:[%s1 + $0xa60] sm:$0xff]
  %v361 = vld [vmem:[%s1 + $0xa68] sm:$0xff]
  %v362 = vld [vmem:[%s1 + $0xa70] sm:$0xff]
  %v363 = vld [vmem:[%s1 + $0xa78] sm:$0xff]
  %v364 = vld [vmem:[%s1 + $0xa80] sm:$0xff]
  %v365 = vld [vmem:[%s1 + $0xa88] sm:$0xff]
  %v366 = vld [vmem:[%s1 + $0xa90] sm:$0xff]
  %v367 = vld [vmem:[%s1 + $0xa98] sm:$0xff]
  %v368 = vld [vmem:[%s1 + $0xaa0] sm:$0xff]
  %v369 = vld [vmem:[%s1 + $0xaa8] sm:$0xff]
  %v370 = vld [vmem:[%s1 + $0xab0] sm:$0xff]
  %v371 = vld [vmem:[%s1 + $0xab8] sm:$0xff]
  %v372 = vld [vmem:[%s1 + $0xac0] sm:$0xff]
  %v373 = vld [vmem:[%s1 + $0xac8] sm:$0xff]
  %v374 = vld [vmem:[%s1 + $0xad0] sm:$0xff]
  %v375 = vld [vmem:[%s1 + $0xad8] sm:$0xff]
  %v376 = vld [vmem:[%s1 + $0xae0] sm:$0xff]
  %v377 = vld [vmem:[%s1 + $0xae8] sm:$0xff]
  %v378 = vld [vmem:[%s1 + $0xaf0] sm:$0xff]
  %v379 = vld [vmem:[%s1 + $0xaf8] sm:$0xff]
  %v380 = vld [vmem:[%s1 + $0xb00] sm:$0xff]
  %v381 = vld [vmem:[%s1 + $0xb08] sm:$0xff]
  %v382 = vld [vmem:[%s1 + $0xb10] sm:$0xff]
  %v383 = vld [vmem:[%s1 + $0xb18] sm:$0xff]
  %v384 = vld [vmem:[%s1 + $0xb20] sm:$0xff]
  %v385 = vld [vmem:[%s1 + $0xb28] sm:$0xff]
  %v386 = vld [vmem:[%s1 + $0xb30] sm:$0xff]
  %v387 = vld [vmem:[%s1 + $0xb38] sm:$0xff]
  %v388 = vld [vmem:[%s1 + $0xb40] sm:$0xff]
  %v389 = vld [vmem:[%s1 + $0xb48] sm:$0xff]
  %v390 = vld [vmem:[%s1 + $0xb50] sm:$0xff]
  %v391 = vld [vmem:[%s1 + $0xb58] sm:$0xff]
  %v392 = vld [vmem:[%s1 + $0xb60] sm:$0xff]
  %v393 = vld [vmem:[%s1 + $0xb68] sm:$0xff]
  %v394 = vld [vmem:[%s1 + $0xb70] sm:$0xff]
  %v395 = vld [vmem:[%s1 + $0xb78] sm:$0xff]
  %v396 = vld [vmem:[%s1 + $0xb80] sm:$0xff]
  %v397 = vld [vmem:[%s1 + $0xb88] sm:$0xff]
  %v398 = vld [vmem:[%s1 + $0xb90] sm:$0xff]
  %v399 = vld [vmem:[%s1 + $0xb98] sm:$0xff]
  %v400 = vld [vmem:[%s1 + $0xba0] sm:$0xff]
  %v401 = vld [vmem:[%s1 + $0xba8] sm:$0xff]
  %v402 = vld [vmem:[%s1 + $0xbb0] sm:$0xff]
  %v403 = vld [vmem:[%s1 + $0xbb8] sm:$0xff]
  %v404 = vld [vmem:[%s1 + $0xbc0] sm:$0xff]
  %v405 = vld [vmem:[%s1 + $0xbc8] sm:$0xff]
  %v406 = vld [vmem:[%s1 + $0xbd0] sm:$0xff]
  %v407 = vld [vmem:[%s1 + $0xbd8] sm:$0xff]
  %v408 = vld [vmem:[%s1 + $0xbe0] sm:$0xff]
  %v409 = vld [vmem:[%s1 + $0xbe8] sm:$0xff]
  %v410 = vld [vmem:[%s1 + $0xbf0] sm:$0xff]
  %v411 = vld [vmem:[%s1 + $0xbf8] sm:$0xff]
  %v412 = vld [vmem:[%s1 + $0xc00] sm:$0xff]
  %v413 = vld [vmem:[%s1 + $0xc08] sm:$0xff]
  %v414 = vld [vmem:[%s1 + $0xc10] sm:$0xff]
  %v415 = vld [vmem:[%s1 + $0xc18] sm:$0xff]
  %v416 = vld [vmem:[%s1 + $0xc20] sm:$0xff]
  %v417 = vld [vmem:[%s1 + $0xc28] sm:$0xff]
  %v418 = vld [vmem:[%s1 + $0xc30] sm:$0xff]
  %v419 = vld [vmem:[%s1 + $0xc38] sm:$0xff]
  %v420 = vld [vmem:[%s1 + $0xc40] sm:$0xff]
  %v421 = vld [vmem:[%s1 + $0xc48] sm:$0xff]
  %v422 = vld [vmem:[%s1 + $0xc50] sm:$0xff]
  %v423 = vld [vmem:[%s1 + $0xc58] sm:$0xff]
  %v424 = vld [vmem:[%s1 + $0xc60] sm:$0xff]
  %v425 = vld [vmem:[%s1 + $0xc68] sm:$0xff]
  %v426 = vld [vmem:[%s1 + $0xc70] sm:$0xff]
  %v427 = vld [vmem:[%s1 + $0xc78] sm:$0xff]
  %v428 = vld [vmem:[%s1 + $0xc80] sm:$0xff]
  %v429 = vld [vmem:[%s1 + $0xc88] sm:$0xff]
  %v430 = vld [vmem:[%s1 + $0xc90] sm:$0xff]
  %v431 = vld [vmem:[%s1 + $0xc98] sm:$0xff]
  %v432 = vld [vmem:[%s1 + $0xca0] sm:$0xff]
  %v433 = vld [vmem:[%s1 + $0xca8] sm:$0xff]
  %v434 = vld [vmem:[%s1 + $0xcb0] sm:$0xff]
  %v435 = vld [vmem:[%s1 + $0xcb8] sm:$0xff]
  %v436 = vld [vmem:[%s1 + $0xcc0] sm:$0xff]
  %v437 = vld [vmem:[%s1 + $0xcc8] sm:$0xff]
  %v438 = vld [vmem:[%s1 + $0xcd0] sm:$0xff]
  %v439 = vld [vmem:[%s1 + $0xcd8] sm:$0xff]
  %v440 = vld [vmem:[%s1 + $0xce0] sm:$0xff]
  %v441 = vld [vmem:[%s1 + $0xce8] sm:$0xff]
  %v442 = vld [vmem:[%s1 + $0xcf0] sm:$0xff]
  %v443 = vld [vmem:[%s1 + $0xcf8] sm:$0xff]
  %v444 = vld [vmem:[%s1 + $0xd00] sm:$0xff]
  %v445 = vld [vmem:[%s1 + $0xd08] sm:$0xff]
  %v446 = vld [vmem:[%s1 + $0xd10] sm:$0xff]
  %v447 = vld [vmem:[%s1 + $0xd18] sm:$0xff]
  %v448 = vld [vmem:[%s1 + $0xd20] sm:$0xff]
  %v449 = vld [vmem:[%s1 + $0xd28] sm:$0xff]
  %v450 = vld [vmem:[%s1 + $0xd30] sm:$0xff]
  %v451 = vld [vmem:[%s1 + $0xd38] sm:$0xff]
  %v452 = vld [vmem:[%s1 + $0xd40] sm:$0xff]
  %v453 = vld [vmem:[%s1 + $0xd48] sm:$0xff]
  %v454 = vld [vmem:[%s1 + $0xd50] sm:$0xff]
  %v455 = vld [vmem:[%s1 + $0xd58] sm:$0xff]
  %v456 = vld [vmem:[%s1 + $0xd60] sm:$0xff]
  %v457 = vld [vmem:[%s1 + $0xd68] sm:$0xff]
  %v458 = vld [vmem:[%s1 + $0xd70] sm:$0xff]
  %v459 = vld [vmem:[%s1 + $0xd78] sm:$0xff]
  %v460 = vld [vmem:[%s1 + $0xd80] sm:$0xff]
  %v461 = vld [vmem:[%s1 + $0xd88] sm:$0xff]
  %v462 = vld [vmem:[%s1 + $0xd90] sm:$0xff]
  %v463 = vld [vmem:[%s1 + $0xd98] sm:$0xff]
  %v464 = vld [vmem:[%s1 + $0xda0] sm:$0xff]
  %v465 = vld [vmem:[%s1 + $0xda8] sm:$0xff]
  %v466 = vld [vmem:[%s1 + $0xdb0] sm:$0xff]
  %v467 = vld [vmem:[%s1 + $0xdb8] sm:$0xff]
  %v468 = vld [vmem:[%s1 + $0xdc0] sm:$0xff]
  %v469 = vld [vmem:[%s1 + $0xdc8] sm:$0xff]
  %v470 = vld [vmem:[%s1 + $0xdd0] sm:$0xff]
  %v471 = vld [vmem:[%s1 + $0xdd8] sm:$0xff]
  %v472 = vld [vmem:[%s1 + $0xde0] sm:$0xff]
  %v473 = vld [vmem:[%s1 + $0xde8] sm:$0xff]
  %v474 = vld [vmem:[%s1 + $0xdf0] sm:$0xff]
  %v475 = vld [vmem:[%s1 + $0xdf8] sm:$0xff]
  %v476 = vld [vmem:[%s1 + $0xe00] sm:$0xff]
  %v477 = vld [vmem:[%s1 + $0xe08] sm:$0xff]
  %v478 = vld [vmem:[%s1 + $0xe10] sm:$0xff]
  %v479 = vld [vmem:[%s1 + $0xe18] sm:$0xff]
  %v480 = vld [vmem:[%s1 + $0xe20] sm:$0xff]
  %v481 = vld [vmem:[%s1 + $0xe28] sm:$0xff]
  %v482 = vld [vmem:[%s1 + $0xe30] sm:$0xff]
  %v483 = vld [vmem:[%s1 + $0xe38] sm:$0xff]
  %v484 = vld [vmem:[%s1 + $0xe40] sm:$0xff]
  %v485 = vld [vmem:[%s1 + $0xe48] sm:$0xff]
  %v486 = vld [vmem:[%s1 + $0xe50] sm:$0xff]
  %v487 = vld [vmem:[%s1 + $0xe58] sm:$0xff]
  %v488 = vld [vmem:[%s1 + $0xe60] sm:$0xff]
  %v489 = vld [vmem:[%s1 + $0xe68] sm:$0xff]
  %v490 = vld [vmem:[%s1 + $0xe70] sm:$0xff]
  %v491 = vld [vmem:[%s1 + $0xe78] sm:$0xff]
  %v492 = vld [vmem:[%s1 + $0xe80] sm:$0xff]
  %v493 = vld [vmem:[%s1 + $0xe88] sm:$0xff]
  %v494 = vld [vmem:[%s1 + $0xe90] sm:$0xff]
  %v495 = vld [vmem:[%s1 + $0xe98] sm:$0xff]
  %v496 = vld [vmem:[%s1 + $0xea0] sm:$0xff]
  %v497 = vld [vmem:[%s1 + $0xea8] sm:$0xff]
  %v498 = vld [vmem:[%s1 + $0xeb0] sm:$0xff]
  %v499 = vld [vmem:[%s1 + $0xeb8] sm:$0xff]
  %v500 = vld [vmem:[%s1 + $0xec0] sm:$0xff]
  %v501 = vld [vmem:[%s1 + $0xec8] sm:$0xff]
  %v502 = vld [vmem:[%s1 + $0xed0] sm:$0xff]
  %v503 = vld [vmem:[%s1 + $0xed8] sm:$0xff]
  %v504 = vld [vmem:[%s1 + $0xee0] sm:$0xff]
  %v505 = vld [vmem:[%s1 + $0xee8] sm:$0xff]
  %v506 = vld [vmem:[%s1 + $0xef0] sm:$0xff]
  %v507 = vld [vmem:[%s1 + $0xef8] sm:$0xff]
  %v508 = vld [vmem:[%s1 + $0xf00] sm:$0xff]
  %v509 = vld [vmem:[%s1 + $0xf08] sm:$0xff]
  %v510 = vld [vmem:[%s1 + $0xf10] sm:$0xff]
  %v511 = vld [vmem:[%s1 + $0xf18] sm:$0xff]
  %v512 = vld [vmem:[%s1 + $0xf20] sm:$0xff]
  %v513 = vld [vmem:[%s1 + $0xf28] sm:$0xff]
  %v514 = vld [vmem:[%s1 + $0xf30] sm:$0xff]
  %v515 = vld [vmem:[%s1 + $0xf38] sm:$0xff]
  %v516 = vld [vmem:[%s1 + $0xf40] sm:$0xff]
  %v517 = vld [vmem:[%s1 + $0xf48] sm:$0xff]
  %v518 = vld [vmem:[%s1 + $0xf50] sm:$0xff]
  %v519 = vld [vmem:[%s1 + $0xf58] sm:$0xff]
  %v520 = vld [vmem:[%s1 + $0xf60] sm:$0xff]
  %v521 = vld [vmem:[%s1 + $0xf68] sm:$0xff]
  %v522 = vld [vmem:[%s1 + $0xf70] sm:$0xff]
  %v523 = vld [vmem:[%s1 + $0xf78] sm:$0xff]
  %v524 = vld [vmem:[%s1 + $0xf80] sm:$0xff]
  %v525 = vld [vmem:[%s1 + $0xf88] sm:$0xff]
  %v526 = vld [vmem:[%s1 + $0xf90] sm:$0xff]
  %v527 = vld [vmem:[%s1 + $0xf98] sm:$0xff]
  %v528 = vld [vmem:[%s1 + $0xfa0] sm:$0xff]
  %v529 = vld [vmem:[%s1 + $0xfa8] sm:$0xff]
  %v530 = vld [vmem:[%s1 + $0xfb0] sm:$0xff]
  %v531 = vld [vmem:[%s1 + $0xfb8] sm:$0xff]
  %v532 = vld [vmem:[%s1 + $0xfc0] sm:$0xff]
  %v533 = vld [vmem:[%s1 + $0xfc8] sm:$0xff]
  %v534 = vld [vmem:[%s1 + $0xfd0] sm:$0xff]
  %v535 = vld [vmem:[%s1 + $0xfd8] sm:$0xff]
  %v536 = vld [vmem:[%s1 + $0xfe0] sm:$0xff]
  %v537 = vld [vmem:[%s1 + $0xfe8] sm:$0xff]
  %v538 = vld [vmem:[%s1 + $0xff0] sm:$0xff]
  %v539 = vld [vmem:[%s1 + $0xff8] sm:$0xff]
  %v540 = vld [vmem:[%s2] sm:$0xff]
  %v541 = vld [vmem:[%s2 + $0x8] sm:$0xff]
  %v544 = vperm.slane %v540, 0
  %v545 = vperm.slane %v540, 1
  %v546 = vperm.slane %v540, 2
  %v547 = vperm.slane %v540, 3
  %v548 = vperm.slane %v540, 4
  %v549 = vperm.slane %v540, 5
  %v550 = vperm.slane %v540, 6
  %v551 = vperm.slane %v540, 7
  %v552 = vperm.slane %v541, 0
  %v553 = vperm.slane %v541, 1
  %v554 = vperm.slane %v541, 2
  %v555 = vperm.slane %v541, 3
  %v556 = vperm.slane %v541, 4
  %v557 = vperm.slane %v541, 5
  %v558 = vperm.slane %v541, 6
  %v559 = vperm.slane %v541, 7
  %v578 = vunpack.c.l.b16 %v26
  %v579 = vunpack.c.h.b16 %v26
  %v580 = vunpack.c.l.b16 %v27
  %v581 = vunpack.c.h.b16 %v27
  %v582 = vpack.c.b16 %v578, %v578
  %v583 = vpack.c.b16 %v579, %v579
  %v584 = vpack.c.b16 %v580, %v580
  %v585 = vpack.c.b16 %v581, %v581
  %v1102 = vunpack.c.l.b16 %v28
  %v1103 = vunpack.c.h.b16 %v28
  %v1104 = vunpack.c.l.b16 %v29
  %v1105 = vunpack.c.h.b16 %v29
  %v1106 = vunpack.c.l.b16 %v30
  %v1107 = vunpack.c.h.b16 %v30
  %v1108 = vunpack.c.l.b16 %v31
  %v1109 = vunpack.c.h.b16 %v31
  %v1110 = vunpack.c.l.b16 %v32
  %v1111 = vunpack.c.h.b16 %v32
  %v1112 = vunpack.c.l.b16 %v33
  %v1113 = vunpack.c.h.b16 %v33
  %v1114 = vunpack.c.l.b16 %v34
  %v1115 = vunpack.c.h.b16 %v34
  %v1116 = vunpack.c.l.b16 %v35
  %v1117 = vunpack.c.h.b16 %v35
  %v1118 = vunpack.c.l.b16 %v36
  %v1119 = vunpack.c.h.b16 %v36
  %v1120 = vunpack.c.l.b16 %v37
  %v1121 = vunpack.c.h.b16 %v37
  %v1122 = vunpack.c.l.b16 %v38
  %v1123 = vunpack.c.h.b16 %v38
  %v1124 = vunpack.c.l.b16 %v39
  %v1125 = vunpack.c.h.b16 %v39
  %v1126 = vunpack.c.l.b16 %v40
  %v1127 = vunpack.c.h.b16 %v40
  %v1128 = vunpack.c.l.b16 %v41
  %v1129 = vunpack.c.h.b16 %v41
  %v1130 = vunpack.c.l.b16 %v42
  %v1131 = vunpack.c.h.b16 %v42
  %v1132 = vunpack.c.l.b16 %v43
  %v1133 = vunpack.c.h.b16 %v43
  %v1134 = vunpack.c.l.b16 %v44
  %v1135 = vunpack.c.h.b16 %v44
  %v1136 = vunpack.c.l.b16 %v45
  %v1137 = vunpack.c.h.b16 %v45
  %v1138 = vunpack.c.l.b16 %v46
  %v1139 = vunpack.c.h.b16 %v46
  %v1140 = vunpack.c.l.b16 %v47
  %v1141 = vunpack.c.h.b16 %v47
  %v1142 = vunpack.c.l.b16 %v48
  %v1143 = vunpack.c.h.b16 %v48
  %v1144 = vunpack.c.l.b16 %v49
  %v1145 = vunpack.c.h.b16 %v49
  %v1146 = vunpack.c.l.b16 %v50
  %v1147 = vunpack.c.h.b16 %v50
  %v1148 = vunpack.c.l.b16 %v51
  %v1149 = vunpack.c.h.b16 %v51
  %v1150 = vunpack.c.l.b16 %v52
  %v1151 = vunpack.c.h.b16 %v52
  %v1152 = vunpack.c.l.b16 %v53
  %v1153 = vunpack.c.h.b16 %v53
  %v1154 = vunpack.c.l.b16 %v54
  %v1155 = vunpack.c.h.b16 %v54
  %v1156 = vunpack.c.l.b16 %v55
  %v1157 = vunpack.c.h.b16 %v55
  %v1158 = vunpack.c.l.b16 %v56
  %v1159 = vunpack.c.h.b16 %v56
  %v1160 = vunpack.c.l.b16 %v57
  %v1161 = vunpack.c.h.b16 %v57
  %v1162 = vunpack.c.l.b16 %v58
  %v1163 = vunpack.c.h.b16 %v58
  %v1164 = vunpack.c.l.b16 %v59
  %v1165 = vunpack.c.h.b16 %v59
  %v1166 = vunpack.c.l.b16 %v60
  %v1167 = vunpack.c.h.b16 %v60
  %v1168 = vunpack.c.l.b16 %v61
  %v1169 = vunpack.c.h.b16 %v61
  %v1170 = vunpack.c.l.b16 %v62
  %v1171 = vunpack.c.h.b16 %v62
  %v1172 = vunpack.c.l.b16 %v63
  %v1173 = vunpack.c.h.b16 %v63
  %v1174 = vunpack.c.l.b16 %v64
  %v1175 = vunpack.c.h.b16 %v64
  %v1176 = vunpack.c.l.b16 %v65
  %v1177 = vunpack.c.h.b16 %v65
  %v1178 = vunpack.c.l.b16 %v66
  %v1179 = vunpack.c.h.b16 %v66
  %v1180 = vunpack.c.l.b16 %v67
  %v1181 = vunpack.c.h.b16 %v67
  %v1182 = vunpack.c.l.b16 %v68
  %v1183 = vunpack.c.h.b16 %v68
  %v1184 = vunpack.c.l.b16 %v69
  %v1185 = vunpack.c.h.b16 %v69
  %v1186 = vunpack.c.l.b16 %v70
  %v1187 = vunpack.c.h.b16 %v70
  %v1188 = vunpack.c.l.b16 %v71
  %v1189 = vunpack.c.h.b16 %v71
  %v1190 = vunpack.c.l.b16 %v72
  %v1191 = vunpack.c.h.b16 %v72
  %v1192 = vunpack.c.l.b16 %v73
  %v1193 = vunpack.c.h.b16 %v73
  %v1194 = vunpack.c.l.b16 %v74
  %v1195 = vunpack.c.h.b16 %v74
  %v1196 = vunpack.c.l.b16 %v75
  %v1197 = vunpack.c.h.b16 %v75
  %v1198 = vunpack.c.l.b16 %v76
  %v1199 = vunpack.c.h.b16 %v76
  %v1200 = vunpack.c.l.b16 %v77
  %v1201 = vunpack.c.h.b16 %v77
  %v1202 = vunpack.c.l.b16 %v78
  %v1203 = vunpack.c.h.b16 %v78
  %v1204 = vunpack.c.l.b16 %v79
  %v1205 = vunpack.c.h.b16 %v79
  %v1206 = vunpack.c.l.b16 %v80
  %v1207 = vunpack.c.h.b16 %v80
  %v1208 = vunpack.c.l.b16 %v81
  %v1209 = vunpack.c.h.b16 %v81
  %v1210 = vunpack.c.l.b16 %v82
  %v1211 = vunpack.c.h.b16 %v82
  %v1212 = vunpack.c.l.b16 %v83
  %v1213 = vunpack.c.h.b16 %v83
  %v1214 = vunpack.c.l.b16 %v84
  %v1215 = vunpack.c.h.b16 %v84
  %v1216 = vunpack.c.l.b16 %v85
  %v1217 = vunpack.c.h.b16 %v85
  %v1218 = vunpack.c.l.b16 %v86
  %v1219 = vunpack.c.h.b16 %v86
  %v1220 = vunpack.c.l.b16 %v87
  %v1221 = vunpack.c.h.b16 %v87
  %v1222 = vunpack.c.l.b16 %v88
  %v1223 = vunpack.c.h.b16 %v88
  %v1224 = vunpack.c.l.b16 %v89
  %v1225 = vunpack.c.h.b16 %v89
  %v1226 = vunpack.c.l.b16 %v90
  %v1227 = vunpack.c.h.b16 %v90
  %v1228 = vunpack.c.l.b16 %v91
  %v1229 = vunpack.c.h.b16 %v91
  %v1230 = vunpack.c.l.b16 %v92
  %v1231 = vunpack.c.h.b16 %v92
  %v1232 = vunpack.c.l.b16 %v93
  %v1233 = vunpack.c.h.b16 %v93
  %v1234 = vunpack.c.l.b16 %v94
  %v1235 = vunpack.c.h.b16 %v94
  %v1236 = vunpack.c.l.b16 %v95
  %v1237 = vunpack.c.h.b16 %v95
  %v1238 = vunpack.c.l.b16 %v96
  %v1239 = vunpack.c.h.b16 %v96
  %v1240 = vunpack.c.l.b16 %v97
  %v1241 = vunpack.c.h.b16 %v97
  %v1242 = vunpack.c.l.b16 %v98
  %v1243 = vunpack.c.h.b16 %v98
  %v1244 = vunpack.c.l.b16 %v99
  %v1245 = vunpack.c.h.b16 %v99
  %v1246 = vunpack.c.l.b16 %v100
  %v1247 = vunpack.c.h.b16 %v100
  %v1248 = vunpack.c.l.b16 %v101
  %v1249 = vunpack.c.h.b16 %v101
  %v1250 = vunpack.c.l.b16 %v102
  %v1251 = vunpack.c.h.b16 %v102
  %v1252 = vunpack.c.l.b16 %v103
  %v1253 = vunpack.c.h.b16 %v103
  %v1254 = vunpack.c.l.b16 %v104
  %v1255 = vunpack.c.h.b16 %v104
  %v1256 = vunpack.c.l.b16 %v105
  %v1257 = vunpack.c.h.b16 %v105
  %v1258 = vunpack.c.l.b16 %v106
  %v1259 = vunpack.c.h.b16 %v106
  %v1260 = vunpack.c.l.b16 %v107
  %v1261 = vunpack.c.h.b16 %v107
  %v1262 = vunpack.c.l.b16 %v108
  %v1263 = vunpack.c.h.b16 %v108
  %v1264 = vunpack.c.l.b16 %v109
  %v1265 = vunpack.c.h.b16 %v109
  %v1266 = vunpack.c.l.b16 %v110
  %v1267 = vunpack.c.h.b16 %v110
  %v1268 = vunpack.c.l.b16 %v111
  %v1269 = vunpack.c.h.b16 %v111
  %v1270 = vunpack.c.l.b16 %v112
  %v1271 = vunpack.c.h.b16 %v112
  %v1272 = vunpack.c.l.b16 %v113
  %v1273 = vunpack.c.h.b16 %v113
  %v1274 = vunpack.c.l.b16 %v114
  %v1275 = vunpack.c.h.b16 %v114
  %v1276 = vunpack.c.l.b16 %v115
  %v1277 = vunpack.c.h.b16 %v115
  %v1278 = vunpack.c.l.b16 %v116
  %v1279 = vunpack.c.h.b16 %v116
  %v1280 = vunpack.c.l.b16 %v117
  %v1281 = vunpack.c.h.b16 %v117
  %v1282 = vunpack.c.l.b16 %v118
  %v1283 = vunpack.c.h.b16 %v118
  %v1284 = vunpack.c.l.b16 %v119
  %v1285 = vunpack.c.h.b16 %v119
  %v1286 = vunpack.c.l.b16 %v120
  %v1287 = vunpack.c.h.b16 %v120
  %v1288 = vunpack.c.l.b16 %v121
  %v1289 = vunpack.c.h.b16 %v121
  %v1290 = vunpack.c.l.b16 %v122
  %v1291 = vunpack.c.h.b16 %v122
  %v1292 = vunpack.c.l.b16 %v123
  %v1293 = vunpack.c.h.b16 %v123
  %v1294 = vunpack.c.l.b16 %v124
  %v1295 = vunpack.c.h.b16 %v124
  %v1296 = vunpack.c.l.b16 %v125
  %v1297 = vunpack.c.h.b16 %v125
  %v1298 = vunpack.c.l.b16 %v126
  %v1299 = vunpack.c.h.b16 %v126
  %v1300 = vunpack.c.l.b16 %v127
  %v1301 = vunpack.c.h.b16 %v127
  %v1302 = vunpack.c.l.b16 %v128
  %v1303 = vunpack.c.h.b16 %v128
  %v1304 = vunpack.c.l.b16 %v129
  %v1305 = vunpack.c.h.b16 %v129
  %v1306 = vunpack.c.l.b16 %v130
  %v1307 = vunpack.c.h.b16 %v130
  %v1308 = vunpack.c.l.b16 %v131
  %v1309 = vunpack.c.h.b16 %v131
  %v1310 = vunpack.c.l.b16 %v132
  %v1311 = vunpack.c.h.b16 %v132
  %v1312 = vunpack.c.l.b16 %v133
  %v1313 = vunpack.c.h.b16 %v133
  %v1314 = vunpack.c.l.b16 %v134
  %v1315 = vunpack.c.h.b16 %v134
  %v1316 = vunpack.c.l.b16 %v135
  %v1317 = vunpack.c.h.b16 %v135
  %v1318 = vunpack.c.l.b16 %v136
  %v1319 = vunpack.c.h.b16 %v136
  %v1320 = vunpack.c.l.b16 %v137
  %v1321 = vunpack.c.h.b16 %v137
  %v1322 = vunpack.c.l.b16 %v138
  %v1323 = vunpack.c.h.b16 %v138
  %v1324 = vunpack.c.l.b16 %v139
  %v1325 = vunpack.c.h.b16 %v139
  %v1326 = vunpack.c.l.b16 %v140
  %v1327 = vunpack.c.h.b16 %v140
  %v1328 = vunpack.c.l.b16 %v141
  %v1329 = vunpack.c.h.b16 %v141
  %v1330 = vunpack.c.l.b16 %v142
  %v1331 = vunpack.c.h.b16 %v142
  %v1332 = vunpack.c.l.b16 %v143
  %v1333 = vunpack.c.h.b16 %v143
  %v1334 = vunpack.c.l.b16 %v144
  %v1335 = vunpack.c.h.b16 %v144
  %v1336 = vunpack.c.l.b16 %v145
  %v1337 = vunpack.c.h.b16 %v145
  %v1338 = vunpack.c.l.b16 %v146
  %v1339 = vunpack.c.h.b16 %v146
  %v1340 = vunpack.c.l.b16 %v147
  %v1341 = vunpack.c.h.b16 %v147
  %v1342 = vunpack.c.l.b16 %v148
  %v1343 = vunpack.c.h.b16 %v148
  %v1344 = vunpack.c.l.b16 %v149
  %v1345 = vunpack.c.h.b16 %v149
  %v1346 = vunpack.c.l.b16 %v150
  %v1347 = vunpack.c.h.b16 %v150
  %v1348 = vunpack.c.l.b16 %v151
  %v1349 = vunpack.c.h.b16 %v151
  %v1350 = vunpack.c.l.b16 %v152
  %v1351 = vunpack.c.h.b16 %v152
  %v1352 = vunpack.c.l.b16 %v153
  %v1353 = vunpack.c.h.b16 %v153
  %v1354 = vunpack.c.l.b16 %v154
  %v1355 = vunpack.c.h.b16 %v154
  %v1356 = vunpack.c.l.b16 %v155
  %v1357 = vunpack.c.h.b16 %v155
  %v1358 = vunpack.c.l.b16 %v156
  %v1359 = vunpack.c.h.b16 %v156
  %v1360 = vunpack.c.l.b16 %v157
  %v1361 = vunpack.c.h.b16 %v157
  %v1362 = vunpack.c.l.b16 %v158
  %v1363 = vunpack.c.h.b16 %v158
  %v1364 = vunpack.c.l.b16 %v159
  %v1365 = vunpack.c.h.b16 %v159
  %v1366 = vunpack.c.l.b16 %v160
  %v1367 = vunpack.c.h.b16 %v160
  %v1368 = vunpack.c.l.b16 %v161
  %v1369 = vunpack.c.h.b16 %v161
  %v1370 = vunpack.c.l.b16 %v162
  %v1371 = vunpack.c.h.b16 %v162
  %v1372 = vunpack.c.l.b16 %v163
  %v1373 = vunpack.c.h.b16 %v163
  %v1374 = vunpack.c.l.b16 %v164
  %v1375 = vunpack.c.h.b16 %v164
  %v1376 = vunpack.c.l.b16 %v165
  %v1377 = vunpack.c.h.b16 %v165
  %v1378 = vunpack.c.l.b16 %v166
  %v1379 = vunpack.c.h.b16 %v166
  %v1380 = vunpack.c.l.b16 %v167
  %v1381 = vunpack.c.h.b16 %v167
  %v1382 = vunpack.c.l.b16 %v168
  %v1383 = vunpack.c.h.b16 %v168
  %v1384 = vunpack.c.l.b16 %v169
  %v1385 = vunpack.c.h.b16 %v169
  %v1386 = vunpack.c.l.b16 %v170
  %v1387 = vunpack.c.h.b16 %v170
  %v1388 = vunpack.c.l.b16 %v171
  %v1389 = vunpack.c.h.b16 %v171
  %v1390 = vunpack.c.l.b16 %v172
  %v1391 = vunpack.c.h.b16 %v172
  %v1392 = vunpack.c.l.b16 %v173
  %v1393 = vunpack.c.h.b16 %v173
  %v1394 = vunpack.c.l.b16 %v174
  %v1395 = vunpack.c.h.b16 %v174
  %v1396 = vunpack.c.l.b16 %v175
  %v1397 = vunpack.c.h.b16 %v175
  %v1398 = vunpack.c.l.b16 %v176
  %v1399 = vunpack.c.h.b16 %v176
  %v1400 = vunpack.c.l.b16 %v177
  %v1401 = vunpack.c.h.b16 %v177
  %v1402 = vunpack.c.l.b16 %v178
  %v1403 = vunpack.c.h.b16 %v178
  %v1404 = vunpack.c.l.b16 %v179
  %v1405 = vunpack.c.h.b16 %v179
  %v1406 = vunpack.c.l.b16 %v180
  %v1407 = vunpack.c.h.b16 %v180
  %v1408 = vunpack.c.l.b16 %v181
  %v1409 = vunpack.c.h.b16 %v181
  %v1410 = vunpack.c.l.b16 %v182
  %v1411 = vunpack.c.h.b16 %v182
  %v1412 = vunpack.c.l.b16 %v183
  %v1413 = vunpack.c.h.b16 %v183
  %v1414 = vunpack.c.l.b16 %v184
  %v1415 = vunpack.c.h.b16 %v184
  %v1416 = vunpack.c.l.b16 %v185
  %v1417 = vunpack.c.h.b16 %v185
  %v1418 = vunpack.c.l.b16 %v186
  %v1419 = vunpack.c.h.b16 %v186
  %v1420 = vunpack.c.l.b16 %v187
  %v1421 = vunpack.c.h.b16 %v187
  %v1422 = vunpack.c.l.b16 %v188
  %v1423 = vunpack.c.h.b16 %v188
  %v1424 = vunpack.c.l.b16 %v189
  %v1425 = vunpack.c.h.b16 %v189
  %v1426 = vunpack.c.l.b16 %v190
  %v1427 = vunpack.c.h.b16 %v190
  %v1428 = vunpack.c.l.b16 %v191
  %v1429 = vunpack.c.h.b16 %v191
  %v1430 = vunpack.c.l.b16 %v192
  %v1431 = vunpack.c.h.b16 %v192
  %v1432 = vunpack.c.l.b16 %v193
  %v1433 = vunpack.c.h.b16 %v193
  %v1434 = vunpack.c.l.b16 %v194
  %v1435 = vunpack.c.h.b16 %v194
  %v1436 = vunpack.c.l.b16 %v195
  %v1437 = vunpack.c.h.b16 %v195
  %v1438 = vunpack.c.l.b16 %v196
  %v1439 = vunpack.c.h.b16 %v196
  %v1440 = vunpack.c.l.b16 %v197
  %v1441 = vunpack.c.h.b16 %v197
  %v1442 = vunpack.c.l.b16 %v198
  %v1443 = vunpack.c.h.b16 %v198
  %v1444 = vunpack.c.l.b16 %v199
  %v1445 = vunpack.c.h.b16 %v199
  %v1446 = vunpack.c.l.b16 %v200
  %v1447 = vunpack.c.h.b16 %v200
  %v1448 = vunpack.c.l.b16 %v201
  %v1449 = vunpack.c.h.b16 %v201
  %v1450 = vunpack.c.l.b16 %v202
  %v1451 = vunpack.c.h.b16 %v202
  %v1452 = vunpack.c.l.b16 %v203
  %v1453 = vunpack.c.h.b16 %v203
  %v1454 = vunpack.c.l.b16 %v204
  %v1455 = vunpack.c.h.b16 %v204
  %v1456 = vunpack.c.l.b16 %v205
  %v1457 = vunpack.c.h.b16 %v205
  %v1458 = vunpack.c.l.b16 %v206
  %v1459 = vunpack.c.h.b16 %v206
  %v1460 = vunpack.c.l.b16 %v207
  %v1461 = vunpack.c.h.b16 %v207
  %v1462 = vunpack.c.l.b16 %v208
  %v1463 = vunpack.c.h.b16 %v208
  %v1464 = vunpack.c.l.b16 %v209
  %v1465 = vunpack.c.h.b16 %v209
  %v1466 = vunpack.c.l.b16 %v210
  %v1467 = vunpack.c.h.b16 %v210
  %v1468 = vunpack.c.l.b16 %v211
  %v1469 = vunpack.c.h.b16 %v211
  %v1470 = vunpack.c.l.b16 %v212
  %v1471 = vunpack.c.h.b16 %v212
  %v1472 = vunpack.c.l.b16 %v213
  %v1473 = vunpack.c.h.b16 %v213
  %v1474 = vunpack.c.l.b16 %v214
  %v1475 = vunpack.c.h.b16 %v214
  %v1476 = vunpack.c.l.b16 %v215
  %v1477 = vunpack.c.h.b16 %v215
  %v1478 = vunpack.c.l.b16 %v216
  %v1479 = vunpack.c.h.b16 %v216
  %v1480 = vunpack.c.l.b16 %v217
  %v1481 = vunpack.c.h.b16 %v217
  %v1482 = vunpack.c.l.b16 %v218
  %v1483 = vunpack.c.h.b16 %v218
  %v1484 = vunpack.c.l.b16 %v219
  %v1485 = vunpack.c.h.b16 %v219
  %v1486 = vunpack.c.l.b16 %v220
  %v1487 = vunpack.c.h.b16 %v220
  %v1488 = vunpack.c.l.b16 %v221
  %v1489 = vunpack.c.h.b16 %v221
  %v1490 = vunpack.c.l.b16 %v222
  %v1491 = vunpack.c.h.b16 %v222
  %v1492 = vunpack.c.l.b16 %v223
  %v1493 = vunpack.c.h.b16 %v223
  %v1494 = vunpack.c.l.b16 %v224
  %v1495 = vunpack.c.h.b16 %v224
  %v1496 = vunpack.c.l.b16 %v225
  %v1497 = vunpack.c.h.b16 %v225
  %v1498 = vunpack.c.l.b16 %v226
  %v1499 = vunpack.c.h.b16 %v226
  %v1500 = vunpack.c.l.b16 %v227
  %v1501 = vunpack.c.h.b16 %v227
  %v1502 = vunpack.c.l.b16 %v228
  %v1503 = vunpack.c.h.b16 %v228
  %v1504 = vunpack.c.l.b16 %v229
  %v1505 = vunpack.c.h.b16 %v229
  %v1506 = vunpack.c.l.b16 %v230
  %v1507 = vunpack.c.h.b16 %v230
  %v1508 = vunpack.c.l.b16 %v231
  %v1509 = vunpack.c.h.b16 %v231
  %v1510 = vunpack.c.l.b16 %v232
  %v1511 = vunpack.c.h.b16 %v232
  %v1512 = vunpack.c.l.b16 %v233
  %v1513 = vunpack.c.h.b16 %v233
  %v1514 = vunpack.c.l.b16 %v234
  %v1515 = vunpack.c.h.b16 %v234
  %v1516 = vunpack.c.l.b16 %v235
  %v1517 = vunpack.c.h.b16 %v235
  %v1518 = vunpack.c.l.b16 %v236
  %v1519 = vunpack.c.h.b16 %v236
  %v1520 = vunpack.c.l.b16 %v237
  %v1521 = vunpack.c.h.b16 %v237
  %v1522 = vunpack.c.l.b16 %v238
  %v1523 = vunpack.c.h.b16 %v238
  %v1524 = vunpack.c.l.b16 %v239
  %v1525 = vunpack.c.h.b16 %v239
  %v1526 = vunpack.c.l.b16 %v240
  %v1527 = vunpack.c.h.b16 %v240
  %v1528 = vunpack.c.l.b16 %v241
  %v1529 = vunpack.c.h.b16 %v241
  %v1530 = vunpack.c.l.b16 %v242
  %v1531 = vunpack.c.h.b16 %v242
  %v1532 = vunpack.c.l.b16 %v243
  %v1533 = vunpack.c.h.b16 %v243
  %v1534 = vunpack.c.l.b16 %v244
  %v1535 = vunpack.c.h.b16 %v244
  %v1536 = vunpack.c.l.b16 %v245
  %v1537 = vunpack.c.h.b16 %v245
  %v1538 = vunpack.c.l.b16 %v246
  %v1539 = vunpack.c.h.b16 %v246
  %v1540 = vunpack.c.l.b16 %v247
  %v1541 = vunpack.c.h.b16 %v247
  %v1542 = vunpack.c.l.b16 %v248
  %v1543 = vunpack.c.h.b16 %v248
  %v1544 = vunpack.c.l.b16 %v249
  %v1545 = vunpack.c.h.b16 %v249
  %v1546 = vunpack.c.l.b16 %v250
  %v1547 = vunpack.c.h.b16 %v250
  %v1548 = vunpack.c.l.b16 %v251
  %v1549 = vunpack.c.h.b16 %v251
  %v1550 = vunpack.c.l.b16 %v252
  %v1551 = vunpack.c.h.b16 %v252
  %v1552 = vunpack.c.l.b16 %v253
  %v1553 = vunpack.c.h.b16 %v253
  %v1554 = vunpack.c.l.b16 %v254
  %v1555 = vunpack.c.h.b16 %v254
  %v1556 = vunpack.c.l.b16 %v255
  %v1557 = vunpack.c.h.b16 %v255
  %v1558 = vunpack.c.l.b16 %v256
  %v1559 = vunpack.c.h.b16 %v256
  %v1560 = vunpack.c.l.b16 %v257
  %v1561 = vunpack.c.h.b16 %v257
  %v1562 = vunpack.c.l.b16 %v258
  %v1563 = vunpack.c.h.b16 %v258
  %v1564 = vunpack.c.l.b16 %v259
  %v1565 = vunpack.c.h.b16 %v259
  %v1566 = vunpack.c.l.b16 %v260
  %v1567 = vunpack.c.h.b16 %v260
  %v1568 = vunpack.c.l.b16 %v261
  %v1569 = vunpack.c.h.b16 %v261
  %v1570 = vunpack.c.l.b16 %v262
  %v1571 = vunpack.c.h.b16 %v262
  %v1572 = vunpack.c.l.b16 %v263
  %v1573 = vunpack.c.h.b16 %v263
  %v1574 = vunpack.c.l.b16 %v264
  %v1575 = vunpack.c.h.b16 %v264
  %v1576 = vunpack.c.l.b16 %v265
  %v1577 = vunpack.c.h.b16 %v265
  %v1578 = vunpack.c.l.b16 %v266
  %v1579 = vunpack.c.h.b16 %v266
  %v1580 = vunpack.c.l.b16 %v267
  %v1581 = vunpack.c.h.b16 %v267
  %v1582 = vunpack.c.l.b16 %v268
  %v1583 = vunpack.c.h.b16 %v268
  %v1584 = vunpack.c.l.b16 %v269
  %v1585 = vunpack.c.h.b16 %v269
  %v1586 = vunpack.c.l.b16 %v270
  %v1587 = vunpack.c.h.b16 %v270
  %v1588 = vunpack.c.l.b16 %v271
  %v1589 = vunpack.c.h.b16 %v271
  %v1590 = vunpack.c.l.b16 %v272
  %v1591 = vunpack.c.h.b16 %v272
  %v1592 = vunpack.c.l.b16 %v273
  %v1593 = vunpack.c.h.b16 %v273
  %v1594 = vunpack.c.l.b16 %v274
  %v1595 = vunpack.c.h.b16 %v274
  %v1596 = vunpack.c.l.b16 %v275
  %v1597 = vunpack.c.h.b16 %v275
  %v1598 = vunpack.c.l.b16 %v276
  %v1599 = vunpack.c.h.b16 %v276
  %v1600 = vunpack.c.l.b16 %v277
  %v1601 = vunpack.c.h.b16 %v277
  %v1602 = vunpack.c.l.b16 %v278
  %v1603 = vunpack.c.h.b16 %v278
  %v1604 = vunpack.c.l.b16 %v279
  %v1605 = vunpack.c.h.b16 %v279
  %v1606 = vunpack.c.l.b16 %v280
  %v1607 = vunpack.c.h.b16 %v280
  %v1608 = vunpack.c.l.b16 %v281
  %v1609 = vunpack.c.h.b16 %v281
  %v1610 = vunpack.c.l.b16 %v282
  %v1611 = vunpack.c.h.b16 %v282
  %v1612 = vunpack.c.l.b16 %v283
  %v1613 = vunpack.c.h.b16 %v283
  %v1614 = vunpack.c.l.b16 %v284
  %v1615 = vunpack.c.h.b16 %v284
  %v1616 = vunpack.c.l.b16 %v285
  %v1617 = vunpack.c.h.b16 %v285
  %v1618 = vunpack.c.l.b16 %v286
  %v1619 = vunpack.c.h.b16 %v286
  %v1620 = vunpack.c.l.b16 %v287
  %v1621 = vunpack.c.h.b16 %v287
  %v1622 = vunpack.c.l.b16 %v288
  %v1623 = vunpack.c.h.b16 %v288
  %v1624 = vunpack.c.l.b16 %v289
  %v1625 = vunpack.c.h.b16 %v289
  %v1626 = vunpack.c.l.b16 %v290
  %v1627 = vunpack.c.h.b16 %v290
  %v1628 = vunpack.c.l.b16 %v291
  %v1629 = vunpack.c.h.b16 %v291
  %v1630 = vunpack.c.l.b16 %v292
  %v1631 = vunpack.c.h.b16 %v292
  %v1632 = vunpack.c.l.b16 %v293
  %v1633 = vunpack.c.h.b16 %v293
  %v1634 = vunpack.c.l.b16 %v294
  %v1635 = vunpack.c.h.b16 %v294
  %v1636 = vunpack.c.l.b16 %v295
  %v1637 = vunpack.c.h.b16 %v295
  %v1638 = vunpack.c.l.b16 %v296
  %v1639 = vunpack.c.h.b16 %v296
  %v1640 = vunpack.c.l.b16 %v297
  %v1641 = vunpack.c.h.b16 %v297
  %v1642 = vunpack.c.l.b16 %v298
  %v1643 = vunpack.c.h.b16 %v298
  %v1644 = vunpack.c.l.b16 %v299
  %v1645 = vunpack.c.h.b16 %v299
  %v1646 = vunpack.c.l.b16 %v300
  %v1647 = vunpack.c.h.b16 %v300
  %v1648 = vunpack.c.l.b16 %v301
  %v1649 = vunpack.c.h.b16 %v301
  %v1650 = vunpack.c.l.b16 %v302
  %v1651 = vunpack.c.h.b16 %v302
  %v1652 = vunpack.c.l.b16 %v303
  %v1653 = vunpack.c.h.b16 %v303
  %v1654 = vunpack.c.l.b16 %v304
  %v1655 = vunpack.c.h.b16 %v304
  %v1656 = vunpack.c.l.b16 %v305
  %v1657 = vunpack.c.h.b16 %v305
  %v1658 = vunpack.c.l.b16 %v306
  %v1659 = vunpack.c.h.b16 %v306
  %v1660 = vunpack.c.l.b16 %v307
  %v1661 = vunpack.c.h.b16 %v307
  %v1662 = vunpack.c.l.b16 %v308
  %v1663 = vunpack.c.h.b16 %v308
  %v1664 = vunpack.c.l.b16 %v309
  %v1665 = vunpack.c.h.b16 %v309
  %v1666 = vunpack.c.l.b16 %v310
  %v1667 = vunpack.c.h.b16 %v310
  %v1668 = vunpack.c.l.b16 %v311
  %v1669 = vunpack.c.h.b16 %v311
  %v1670 = vunpack.c.l.b16 %v312
  %v1671 = vunpack.c.h.b16 %v312
  %v1672 = vunpack.c.l.b16 %v313
  %v1673 = vunpack.c.h.b16 %v313
  %v1674 = vunpack.c.l.b16 %v314
  %v1675 = vunpack.c.h.b16 %v314
  %v1676 = vunpack.c.l.b16 %v315
  %v1677 = vunpack.c.h.b16 %v315
  %v1678 = vunpack.c.l.b16 %v316
  %v1679 = vunpack.c.h.b16 %v316
  %v1680 = vunpack.c.l.b16 %v317
  %v1681 = vunpack.c.h.b16 %v317
  %v1682 = vunpack.c.l.b16 %v318
  %v1683 = vunpack.c.h.b16 %v318
  %v1684 = vunpack.c.l.b16 %v319
  %v1685 = vunpack.c.h.b16 %v319
  %v1686 = vunpack.c.l.b16 %v320
  %v1687 = vunpack.c.h.b16 %v320
  %v1688 = vunpack.c.l.b16 %v321
  %v1689 = vunpack.c.h.b16 %v321
  %v1690 = vunpack.c.l.b16 %v322
  %v1691 = vunpack.c.h.b16 %v322
  %v1692 = vunpack.c.l.b16 %v323
  %v1693 = vunpack.c.h.b16 %v323
  %v1694 = vunpack.c.l.b16 %v324
  %v1695 = vunpack.c.h.b16 %v324
  %v1696 = vunpack.c.l.b16 %v325
  %v1697 = vunpack.c.h.b16 %v325
  %v1698 = vunpack.c.l.b16 %v326
  %v1699 = vunpack.c.h.b16 %v326
  %v1700 = vunpack.c.l.b16 %v327
  %v1701 = vunpack.c.h.b16 %v327
  %v1702 = vunpack.c.l.b16 %v328
  %v1703 = vunpack.c.h.b16 %v328
  %v1704 = vunpack.c.l.b16 %v329
  %v1705 = vunpack.c.h.b16 %v329
  %v1706 = vunpack.c.l.b16 %v330
  %v1707 = vunpack.c.h.b16 %v330
  %v1708 = vunpack.c.l.b16 %v331
  %v1709 = vunpack.c.h.b16 %v331
  %v1710 = vunpack.c.l.b16 %v332
  %v1711 = vunpack.c.h.b16 %v332
  %v1712 = vunpack.c.l.b16 %v333
  %v1713 = vunpack.c.h.b16 %v333
  %v1714 = vunpack.c.l.b16 %v334
  %v1715 = vunpack.c.h.b16 %v334
  %v1716 = vunpack.c.l.b16 %v335
  %v1717 = vunpack.c.h.b16 %v335
  %v1718 = vunpack.c.l.b16 %v336
  %v1719 = vunpack.c.h.b16 %v336
  %v1720 = vunpack.c.l.b16 %v337
  %v1721 = vunpack.c.h.b16 %v337
  %v1722 = vunpack.c.l.b16 %v338
  %v1723 = vunpack.c.h.b16 %v338
  %v1724 = vunpack.c.l.b16 %v339
  %v1725 = vunpack.c.h.b16 %v339
  %v1726 = vunpack.c.l.b16 %v340
  %v1727 = vunpack.c.h.b16 %v340
  %v1728 = vunpack.c.l.b16 %v341
  %v1729 = vunpack.c.h.b16 %v341
  %v1730 = vunpack.c.l.b16 %v342
  %v1731 = vunpack.c.h.b16 %v342
  %v1732 = vunpack.c.l.b16 %v343
  %v1733 = vunpack.c.h.b16 %v343
  %v1734 = vunpack.c.l.b16 %v344
  %v1735 = vunpack.c.h.b16 %v344
  %v1736 = vunpack.c.l.b16 %v345
  %v1737 = vunpack.c.h.b16 %v345
  %v1738 = vunpack.c.l.b16 %v346
  %v1739 = vunpack.c.h.b16 %v346
  %v1740 = vunpack.c.l.b16 %v347
  %v1741 = vunpack.c.h.b16 %v347
  %v1742 = vunpack.c.l.b16 %v348
  %v1743 = vunpack.c.h.b16 %v348
  %v1744 = vunpack.c.l.b16 %v349
  %v1745 = vunpack.c.h.b16 %v349
  %v1746 = vunpack.c.l.b16 %v350
  %v1747 = vunpack.c.h.b16 %v350
  %v1748 = vunpack.c.l.b16 %v351
  %v1749 = vunpack.c.h.b16 %v351
  %v1750 = vunpack.c.l.b16 %v352
  %v1751 = vunpack.c.h.b16 %v352
  %v1752 = vunpack.c.l.b16 %v353
  %v1753 = vunpack.c.h.b16 %v353
  %v1754 = vunpack.c.l.b16 %v354
  %v1755 = vunpack.c.h.b16 %v354
  %v1756 = vunpack.c.l.b16 %v355
  %v1757 = vunpack.c.h.b16 %v355
  %v1758 = vunpack.c.l.b16 %v356
  %v1759 = vunpack.c.h.b16 %v356
  %v1760 = vunpack.c.l.b16 %v357
  %v1761 = vunpack.c.h.b16 %v357
  %v1762 = vunpack.c.l.b16 %v358
  %v1763 = vunpack.c.h.b16 %v358
  %v1764 = vunpack.c.l.b16 %v359
  %v1765 = vunpack.c.h.b16 %v359
  %v1766 = vunpack.c.l.b16 %v360
  %v1767 = vunpack.c.h.b16 %v360
  %v1768 = vunpack.c.l.b16 %v361
  %v1769 = vunpack.c.h.b16 %v361
  %v1770 = vunpack.c.l.b16 %v362
  %v1771 = vunpack.c.h.b16 %v362
  %v1772 = vunpack.c.l.b16 %v363
  %v1773 = vunpack.c.h.b16 %v363
  %v1774 = vunpack.c.l.b16 %v364
  %v1775 = vunpack.c.h.b16 %v364
  %v1776 = vunpack.c.l.b16 %v365
  %v1777 = vunpack.c.h.b16 %v365
  %v1778 = vunpack.c.l.b16 %v366
  %v1779 = vunpack.c.h.b16 %v366
  %v1780 = vunpack.c.l.b16 %v367
  %v1781 = vunpack.c.h.b16 %v367
  %v1782 = vunpack.c.l.b16 %v368
  %v1783 = vunpack.c.h.b16 %v368
  %v1784 = vunpack.c.l.b16 %v369
  %v1785 = vunpack.c.h.b16 %v369
  %v1786 = vunpack.c.l.b16 %v370
  %v1787 = vunpack.c.h.b16 %v370
  %v1788 = vunpack.c.l.b16 %v371
  %v1789 = vunpack.c.h.b16 %v371
  %v1790 = vunpack.c.l.b16 %v372
  %v1791 = vunpack.c.h.b16 %v372
  %v1792 = vunpack.c.l.b16 %v373
  %v1793 = vunpack.c.h.b16 %v373
  %v1794 = vunpack.c.l.b16 %v374
  %v1795 = vunpack.c.h.b16 %v374
  %v1796 = vunpack.c.l.b16 %v375
  %v1797 = vunpack.c.h.b16 %v375
  %v1798 = vunpack.c.l.b16 %v376
  %v1799 = vunpack.c.h.b16 %v376
  %v1800 = vunpack.c.l.b16 %v377
  %v1801 = vunpack.c.h.b16 %v377
  %v1802 = vunpack.c.l.b16 %v378
  %v1803 = vunpack.c.h.b16 %v378
  %v1804 = vunpack.c.l.b16 %v379
  %v1805 = vunpack.c.h.b16 %v379
  %v1806 = vunpack.c.l.b16 %v380
  %v1807 = vunpack.c.h.b16 %v380
  %v1808 = vunpack.c.l.b16 %v381
  %v1809 = vunpack.c.h.b16 %v381
  %v1810 = vunpack.c.l.b16 %v382
  %v1811 = vunpack.c.h.b16 %v382
  %v1812 = vunpack.c.l.b16 %v383
  %v1813 = vunpack.c.h.b16 %v383
  %v1814 = vunpack.c.l.b16 %v384
  %v1815 = vunpack.c.h.b16 %v384
  %v1816 = vunpack.c.l.b16 %v385
  %v1817 = vunpack.c.h.b16 %v385
  %v1818 = vunpack.c.l.b16 %v386
  %v1819 = vunpack.c.h.b16 %v386
  %v1820 = vunpack.c.l.b16 %v387
  %v1821 = vunpack.c.h.b16 %v387
  %v1822 = vunpack.c.l.b16 %v388
  %v1823 = vunpack.c.h.b16 %v388
  %v1824 = vunpack.c.l.b16 %v389
  %v1825 = vunpack.c.h.b16 %v389
  %v1826 = vunpack.c.l.b16 %v390
  %v1827 = vunpack.c.h.b16 %v390
  %v1828 = vunpack.c.l.b16 %v391
  %v1829 = vunpack.c.h.b16 %v391
  %v1830 = vunpack.c.l.b16 %v392
  %v1831 = vunpack.c.h.b16 %v392
  %v1832 = vunpack.c.l.b16 %v393
  %v1833 = vunpack.c.h.b16 %v393
  %v1834 = vunpack.c.l.b16 %v394
  %v1835 = vunpack.c.h.b16 %v394
  %v1836 = vunpack.c.l.b16 %v395
  %v1837 = vunpack.c.h.b16 %v395
  %v1838 = vunpack.c.l.b16 %v396
  %v1839 = vunpack.c.h.b16 %v396
  %v1840 = vunpack.c.l.b16 %v397
  %v1841 = vunpack.c.h.b16 %v397
  %v1842 = vunpack.c.l.b16 %v398
  %v1843 = vunpack.c.h.b16 %v398
  %v1844 = vunpack.c.l.b16 %v399
  %v1845 = vunpack.c.h.b16 %v399
  %v1846 = vunpack.c.l.b16 %v400
  %v1847 = vunpack.c.h.b16 %v400
  %v1848 = vunpack.c.l.b16 %v401
  %v1849 = vunpack.c.h.b16 %v401
  %v1850 = vunpack.c.l.b16 %v402
  %v1851 = vunpack.c.h.b16 %v402
  %v1852 = vunpack.c.l.b16 %v403
  %v1853 = vunpack.c.h.b16 %v403
  %v1854 = vunpack.c.l.b16 %v404
  %v1855 = vunpack.c.h.b16 %v404
  %v1856 = vunpack.c.l.b16 %v405
  %v1857 = vunpack.c.h.b16 %v405
  %v1858 = vunpack.c.l.b16 %v406
  %v1859 = vunpack.c.h.b16 %v406
  %v1860 = vunpack.c.l.b16 %v407
  %v1861 = vunpack.c.h.b16 %v407
  %v1862 = vunpack.c.l.b16 %v408
  %v1863 = vunpack.c.h.b16 %v408
  %v1864 = vunpack.c.l.b16 %v409
  %v1865 = vunpack.c.h.b16 %v409
  %v1866 = vunpack.c.l.b16 %v410
  %v1867 = vunpack.c.h.b16 %v410
  %v1868 = vunpack.c.l.b16 %v411
  %v1869 = vunpack.c.h.b16 %v411
  %v1870 = vunpack.c.l.b16 %v412
  %v1871 = vunpack.c.h.b16 %v412
  %v1872 = vunpack.c.l.b16 %v413
  %v1873 = vunpack.c.h.b16 %v413
  %v1874 = vunpack.c.l.b16 %v414
  %v1875 = vunpack.c.h.b16 %v414
  %v1876 = vunpack.c.l.b16 %v415
  %v1877 = vunpack.c.h.b16 %v415
  %v1878 = vunpack.c.l.b16 %v416
  %v1879 = vunpack.c.h.b16 %v416
  %v1880 = vunpack.c.l.b16 %v417
  %v1881 = vunpack.c.h.b16 %v417
  %v1882 = vunpack.c.l.b16 %v418
  %v1883 = vunpack.c.h.b16 %v418
  %v1884 = vunpack.c.l.b16 %v419
  %v1885 = vunpack.c.h.b16 %v419
  %v1886 = vunpack.c.l.b16 %v420
  %v1887 = vunpack.c.h.b16 %v420
  %v1888 = vunpack.c.l.b16 %v421
  %v1889 = vunpack.c.h.b16 %v421
  %v1890 = vunpack.c.l.b16 %v422
  %v1891 = vunpack.c.h.b16 %v422
  %v1892 = vunpack.c.l.b16 %v423
  %v1893 = vunpack.c.h.b16 %v423
  %v1894 = vunpack.c.l.b16 %v424
  %v1895 = vunpack.c.h.b16 %v424
  %v1896 = vunpack.c.l.b16 %v425
  %v1897 = vunpack.c.h.b16 %v425
  %v1898 = vunpack.c.l.b16 %v426
  %v1899 = vunpack.c.h.b16 %v426
  %v1900 = vunpack.c.l.b16 %v427
  %v1901 = vunpack.c.h.b16 %v427
  %v1902 = vunpack.c.l.b16 %v428
  %v1903 = vunpack.c.h.b16 %v428
  %v1904 = vunpack.c.l.b16 %v429
  %v1905 = vunpack.c.h.b16 %v429
  %v1906 = vunpack.c.l.b16 %v430
  %v1907 = vunpack.c.h.b16 %v430
  %v1908 = vunpack.c.l.b16 %v431
  %v1909 = vunpack.c.h.b16 %v431
  %v1910 = vunpack.c.l.b16 %v432
  %v1911 = vunpack.c.h.b16 %v432
  %v1912 = vunpack.c.l.b16 %v433
  %v1913 = vunpack.c.h.b16 %v433
  %v1914 = vunpack.c.l.b16 %v434
  %v1915 = vunpack.c.h.b16 %v434
  %v1916 = vunpack.c.l.b16 %v435
  %v1917 = vunpack.c.h.b16 %v435
  %v1918 = vunpack.c.l.b16 %v436
  %v1919 = vunpack.c.h.b16 %v436
  %v1920 = vunpack.c.l.b16 %v437
  %v1921 = vunpack.c.h.b16 %v437
  %v1922 = vunpack.c.l.b16 %v438
  %v1923 = vunpack.c.h.b16 %v438
  %v1924 = vunpack.c.l.b16 %v439
  %v1925 = vunpack.c.h.b16 %v439
  %v1926 = vunpack.c.l.b16 %v440
  %v1927 = vunpack.c.h.b16 %v440
  %v1928 = vunpack.c.l.b16 %v441
  %v1929 = vunpack.c.h.b16 %v441
  %v1930 = vunpack.c.l.b16 %v442
  %v1931 = vunpack.c.h.b16 %v442
  %v1932 = vunpack.c.l.b16 %v443
  %v1933 = vunpack.c.h.b16 %v443
  %v1934 = vunpack.c.l.b16 %v444
  %v1935 = vunpack.c.h.b16 %v444
  %v1936 = vunpack.c.l.b16 %v445
  %v1937 = vunpack.c.h.b16 %v445
  %v1938 = vunpack.c.l.b16 %v446
  %v1939 = vunpack.c.h.b16 %v446
  %v1940 = vunpack.c.l.b16 %v447
  %v1941 = vunpack.c.h.b16 %v447
  %v1942 = vunpack.c.l.b16 %v448
  %v1943 = vunpack.c.h.b16 %v448
  %v1944 = vunpack.c.l.b16 %v449
  %v1945 = vunpack.c.h.b16 %v449
  %v1946 = vunpack.c.l.b16 %v450
  %v1947 = vunpack.c.h.b16 %v450
  %v1948 = vunpack.c.l.b16 %v451
  %v1949 = vunpack.c.h.b16 %v451
  %v1950 = vunpack.c.l.b16 %v452
  %v1951 = vunpack.c.h.b16 %v452
  %v1952 = vunpack.c.l.b16 %v453
  %v1953 = vunpack.c.h.b16 %v453
  %v1954 = vunpack.c.l.b16 %v454
  %v1955 = vunpack.c.h.b16 %v454
  %v1956 = vunpack.c.l.b16 %v455
  %v1957 = vunpack.c.h.b16 %v455
  %v1958 = vunpack.c.l.b16 %v456
  %v1959 = vunpack.c.h.b16 %v456
  %v1960 = vunpack.c.l.b16 %v457
  %v1961 = vunpack.c.h.b16 %v457
  %v1962 = vunpack.c.l.b16 %v458
  %v1963 = vunpack.c.h.b16 %v458
  %v1964 = vunpack.c.l.b16 %v459
  %v1965 = vunpack.c.h.b16 %v459
  %v1966 = vunpack.c.l.b16 %v460
  %v1967 = vunpack.c.h.b16 %v460
  %v1968 = vunpack.c.l.b16 %v461
  %v1969 = vunpack.c.h.b16 %v461
  %v1970 = vunpack.c.l.b16 %v462
  %v1971 = vunpack.c.h.b16 %v462
  %v1972 = vunpack.c.l.b16 %v463
  %v1973 = vunpack.c.h.b16 %v463
  %v1974 = vunpack.c.l.b16 %v464
  %v1975 = vunpack.c.h.b16 %v464
  %v1976 = vunpack.c.l.b16 %v465
  %v1977 = vunpack.c.h.b16 %v465
  %v1978 = vunpack.c.l.b16 %v466
  %v1979 = vunpack.c.h.b16 %v466
  %v1980 = vunpack.c.l.b16 %v467
  %v1981 = vunpack.c.h.b16 %v467
  %v1982 = vunpack.c.l.b16 %v468
  %v1983 = vunpack.c.h.b16 %v468
  %v1984 = vunpack.c.l.b16 %v469
  %v1985 = vunpack.c.h.b16 %v469
  %v1986 = vunpack.c.l.b16 %v470
  %v1987 = vunpack.c.h.b16 %v470
  %v1988 = vunpack.c.l.b16 %v471
  %v1989 = vunpack.c.h.b16 %v471
  %v1990 = vunpack.c.l.b16 %v472
  %v1991 = vunpack.c.h.b16 %v472
  %v1992 = vunpack.c.l.b16 %v473
  %v1993 = vunpack.c.h.b16 %v473
  %v1994 = vunpack.c.l.b16 %v474
  %v1995 = vunpack.c.h.b16 %v474
  %v1996 = vunpack.c.l.b16 %v475
  %v1997 = vunpack.c.h.b16 %v475
  %v1998 = vunpack.c.l.b16 %v476
  %v1999 = vunpack.c.h.b16 %v476
  %v2000 = vunpack.c.l.b16 %v477
  %v2001 = vunpack.c.h.b16 %v477
  %v2002 = vunpack.c.l.b16 %v478
  %v2003 = vunpack.c.h.b16 %v478
  %v2004 = vunpack.c.l.b16 %v479
  %v2005 = vunpack.c.h.b16 %v479
  %v2006 = vunpack.c.l.b16 %v480
  %v2007 = vunpack.c.h.b16 %v480
  %v2008 = vunpack.c.l.b16 %v481
  %v2009 = vunpack.c.h.b16 %v481
  %v2010 = vunpack.c.l.b16 %v482
  %v2011 = vunpack.c.h.b16 %v482
  %v2012 = vunpack.c.l.b16 %v483
  %v2013 = vunpack.c.h.b16 %v483
  %v2014 = vunpack.c.l.b16 %v484
  %v2015 = vunpack.c.h.b16 %v484
  %v2016 = vunpack.c.l.b16 %v485
  %v2017 = vunpack.c.h.b16 %v485
  %v2018 = vunpack.c.l.b16 %v486
  %v2019 = vunpack.c.h.b16 %v486
  %v2020 = vunpack.c.l.b16 %v487
  %v2021 = vunpack.c.h.b16 %v487
  %v2022 = vunpack.c.l.b16 %v488
  %v2023 = vunpack.c.h.b16 %v488
  %v2024 = vunpack.c.l.b16 %v489
  %v2025 = vunpack.c.h.b16 %v489
  %v2026 = vunpack.c.l.b16 %v490
  %v2027 = vunpack.c.h.b16 %v490
  %v2028 = vunpack.c.l.b16 %v491
  %v2029 = vunpack.c.h.b16 %v491
  %v2030 = vunpack.c.l.b16 %v492
  %v2031 = vunpack.c.h.b16 %v492
  %v2032 = vunpack.c.l.b16 %v493
  %v2033 = vunpack.c.h.b16 %v493
  %v2034 = vunpack.c.l.b16 %v494
  %v2035 = vunpack.c.h.b16 %v494
  %v2036 = vunpack.c.l.b16 %v495
  %v2037 = vunpack.c.h.b16 %v495
  %v2038 = vunpack.c.l.b16 %v496
  %v2039 = vunpack.c.h.b16 %v496
  %v2040 = vunpack.c.l.b16 %v497
  %v2041 = vunpack.c.h.b16 %v497
  %v2042 = vunpack.c.l.b16 %v498
  %v2043 = vunpack.c.h.b16 %v498
  %v2044 = vunpack.c.l.b16 %v499
  %v2045 = vunpack.c.h.b16 %v499
  %v2046 = vunpack.c.l.b16 %v500
  %v2047 = vunpack.c.h.b16 %v500
  %v2048 = vunpack.c.l.b16 %v501
  %v2049 = vunpack.c.h.b16 %v501
  %v2050 = vunpack.c.l.b16 %v502
  %v2051 = vunpack.c.h.b16 %v502
  %v2052 = vunpack.c.l.b16 %v503
  %v2053 = vunpack.c.h.b16 %v503
  %v2054 = vunpack.c.l.b16 %v504
  %v2055 = vunpack.c.h.b16 %v504
  %v2056 = vunpack.c.l.b16 %v505
  %v2057 = vunpack.c.h.b16 %v505
  %v2058 = vunpack.c.l.b16 %v506
  %v2059 = vunpack.c.h.b16 %v506
  %v2060 = vunpack.c.l.b16 %v507
  %v2061 = vunpack.c.h.b16 %v507
  %v2062 = vunpack.c.l.b16 %v508
  %v2063 = vunpack.c.h.b16 %v508
  %v2064 = vunpack.c.l.b16 %v509
  %v2065 = vunpack.c.h.b16 %v509
  %v2066 = vunpack.c.l.b16 %v510
  %v2067 = vunpack.c.h.b16 %v510
  %v2068 = vunpack.c.l.b16 %v511
  %v2069 = vunpack.c.h.b16 %v511
  %v2070 = vunpack.c.l.b16 %v512
  %v2071 = vunpack.c.h.b16 %v512
  %v2072 = vunpack.c.l.b16 %v513
  %v2073 = vunpack.c.h.b16 %v513
  %v2074 = vunpack.c.l.b16 %v514
  %v2075 = vunpack.c.h.b16 %v514
  %v2076 = vunpack.c.l.b16 %v515
  %v2077 = vunpack.c.h.b16 %v515
  %v2078 = vunpack.c.l.b16 %v516
  %v2079 = vunpack.c.h.b16 %v516
  %v2080 = vunpack.c.l.b16 %v517
  %v2081 = vunpack.c.h.b16 %v517
  %v2082 = vunpack.c.l.b16 %v518
  %v2083 = vunpack.c.h.b16 %v518
  %v2084 = vunpack.c.l.b16 %v519
  %v2085 = vunpack.c.h.b16 %v519
  %v2086 = vunpack.c.l.b16 %v520
  %v2087 = vunpack.c.h.b16 %v520
  %v2088 = vunpack.c.l.b16 %v521
  %v2089 = vunpack.c.h.b16 %v521
  %v2090 = vunpack.c.l.b16 %v522
  %v2091 = vunpack.c.h.b16 %v522
  %v2092 = vunpack.c.l.b16 %v523
  %v2093 = vunpack.c.h.b16 %v523
  %v2094 = vunpack.c.l.b16 %v524
  %v2095 = vunpack.c.h.b16 %v524
  %v2096 = vunpack.c.l.b16 %v525
  %v2097 = vunpack.c.h.b16 %v525
  %v2098 = vunpack.c.l.b16 %v526
  %v2099 = vunpack.c.h.b16 %v526
  %v2100 = vunpack.c.l.b16 %v527
  %v2101 = vunpack.c.h.b16 %v527
  %v2102 = vunpack.c.l.b16 %v528
  %v2103 = vunpack.c.h.b16 %v528
  %v2104 = vunpack.c.l.b16 %v529
  %v2105 = vunpack.c.h.b16 %v529
  %v2106 = vunpack.c.l.b16 %v530
  %v2107 = vunpack.c.h.b16 %v530
  %v2108 = vunpack.c.l.b16 %v531
  %v2109 = vunpack.c.h.b16 %v531
  %v2110 = vunpack.c.l.b16 %v532
  %v2111 = vunpack.c.h.b16 %v532
  %v2112 = vunpack.c.l.b16 %v533
  %v2113 = vunpack.c.h.b16 %v533
  %v2114 = vunpack.c.l.b16 %v534
  %v2115 = vunpack.c.h.b16 %v534
  %v2116 = vunpack.c.l.b16 %v535
  %v2117 = vunpack.c.h.b16 %v535
  %v2118 = vunpack.c.l.b16 %v536
  %v2119 = vunpack.c.h.b16 %v536
  %v2120 = vunpack.c.l.b16 %v537
  %v2121 = vunpack.c.h.b16 %v537
  %v2122 = vunpack.c.l.b16 %v538
  %v2123 = vunpack.c.h.b16 %v538
  %v2124 = vunpack.c.l.b16 %v539
  %v2125 = vunpack.c.h.b16 %v539
  %v2126 = vpack.c.b16 %v1118, %v1102
  %v2127 = vpack.c.b16 %v1119, %v1103
  %v2128 = vpack.c.b16 %v1120, %v1104
  %v2129 = vpack.c.b16 %v1121, %v1105
  %v2130 = vpack.c.b16 %v1122, %v1106
  %v2131 = vpack.c.b16 %v1123, %v1107
  %v2132 = vpack.c.b16 %v1124, %v1108
  %v2133 = vpack.c.b16 %v1125, %v1109
  %v2134 = vpack.c.b16 %v1126, %v1110
  %v2135 = vpack.c.b16 %v1127, %v1111
  %v2136 = vpack.c.b16 %v1128, %v1112
  %v2137 = vpack.c.b16 %v1129, %v1113
  %v2138 = vpack.c.b16 %v1130, %v1114
  %v2139 = vpack.c.b16 %v1131, %v1115
  %v2140 = vpack.c.b16 %v1132, %v1116
  %v2141 = vpack.c.b16 %v1133, %v1117
  %v2142 = vpack.c.b16 %v1150, %v1134
  %v2143 = vpack.c.b16 %v1151, %v1135
  %v2144 = vpack.c.b16 %v1152, %v1136
  %v2145 = vpack.c.b16 %v1153, %v1137
  %v2146 = vpack.c.b16 %v1154, %v1138
  %v2147 = vpack.c.b16 %v1155, %v1139
  %v2148 = vpack.c.b16 %v1156, %v1140
  %v2149 = vpack.c.b16 %v1157, %v1141
  %v2150 = vpack.c.b16 %v1158, %v1142
  %v2151 = vpack.c.b16 %v1159, %v1143
  %v2152 = vpack.c.b16 %v1160, %v1144
  %v2153 = vpack.c.b16 %v1161, %v1145
  %v2154 = vpack.c.b16 %v1162, %v1146
  %v2155 = vpack.c.b16 %v1163, %v1147
  %v2156 = vpack.c.b16 %v1164, %v1148
  %v2157 = vpack.c.b16 %v1165, %v1149
  %v2158 = vpack.c.b16 %v1182, %v1166
  %v2159 = vpack.c.b16 %v1183, %v1167
  %v2160 = vpack.c.b16 %v1184, %v1168
  %v2161 = vpack.c.b16 %v1185, %v1169
  %v2162 = vpack.c.b16 %v1186, %v1170
  %v2163 = vpack.c.b16 %v1187, %v1171
  %v2164 = vpack.c.b16 %v1188, %v1172
  %v2165 = vpack.c.b16 %v1189, %v1173
  %v2166 = vpack.c.b16 %v1190, %v1174
  %v2167 = vpack.c.b16 %v1191, %v1175
  %v2168 = vpack.c.b16 %v1192, %v1176
  %v2169 = vpack.c.b16 %v1193, %v1177
  %v2170 = vpack.c.b16 %v1194, %v1178
  %v2171 = vpack.c.b16 %v1195, %v1179
  %v2172 = vpack.c.b16 %v1196, %v1180
  %v2173 = vpack.c.b16 %v1197, %v1181
  %v2174 = vpack.c.b16 %v1214, %v1198
  %v2175 = vpack.c.b16 %v1215, %v1199
  %v2176 = vpack.c.b16 %v1216, %v1200
  %v2177 = vpack.c.b16 %v1217, %v1201
  %v2178 = vpack.c.b16 %v1218, %v1202
  %v2179 = vpack.c.b16 %v1219, %v1203
  %v2180 = vpack.c.b16 %v1220, %v1204
  %v2181 = vpack.c.b16 %v1221, %v1205
  %v2182 = vpack.c.b16 %v1222, %v1206
  %v2183 = vpack.c.b16 %v1223, %v1207
  %v2184 = vpack.c.b16 %v1224, %v1208
  %v2185 = vpack.c.b16 %v1225, %v1209
  %v2186 = vpack.c.b16 %v1226, %v1210
  %v2187 = vpack.c.b16 %v1227, %v1211
  %v2188 = vpack.c.b16 %v1228, %v1212
  %v2189 = vpack.c.b16 %v1229, %v1213
  %v2190 = vpack.c.b16 %v1246, %v1230
  %v2191 = vpack.c.b16 %v1247, %v1231
  %v2192 = vpack.c.b16 %v1248, %v1232
  %v2193 = vpack.c.b16 %v1249, %v1233
  %v2194 = vpack.c.b16 %v1250, %v1234
  %v2195 = vpack.c.b16 %v1251, %v1235
  %v2196 = vpack.c.b16 %v1252, %v1236
  %v2197 = vpack.c.b16 %v1253, %v1237
  %v2198 = vpack.c.b16 %v1254, %v1238
  %v2199 = vpack.c.b16 %v1255, %v1239
  %v2200 = vpack.c.b16 %v1256, %v1240
  %v2201 = vpack.c.b16 %v1257, %v1241
  %v2202 = vpack.c.b16 %v1258, %v1242
  %v2203 = vpack.c.b16 %v1259, %v1243
  %v2204 = vpack.c.b16 %v1260, %v1244
  %v2205 = vpack.c.b16 %v1261, %v1245
  %v2206 = vpack.c.b16 %v1278, %v1262
  %v2207 = vpack.c.b16 %v1279, %v1263
  %v2208 = vpack.c.b16 %v1280, %v1264
  %v2209 = vpack.c.b16 %v1281, %v1265
  %v2210 = vpack.c.b16 %v1282, %v1266
  %v2211 = vpack.c.b16 %v1283, %v1267
  %v2212 = vpack.c.b16 %v1284, %v1268
  %v2213 = vpack.c.b16 %v1285, %v1269
  %v2214 = vpack.c.b16 %v1286, %v1270
  %v2215 = vpack.c.b16 %v1287, %v1271
  %v2216 = vpack.c.b16 %v1288, %v1272
  %v2217 = vpack.c.b16 %v1289, %v1273
  %v2218 = vpack.c.b16 %v1290, %v1274
  %v2219 = vpack.c.b16 %v1291, %v1275
  %v2220 = vpack.c.b16 %v1292, %v1276
  %v2221 = vpack.c.b16 %v1293, %v1277
  %v2222 = vpack.c.b16 %v1310, %v1294
  %v2223 = vpack.c.b16 %v1311, %v1295
  %v2224 = vpack.c.b16 %v1312, %v1296
  %v2225 = vpack.c.b16 %v1313, %v1297
  %v2226 = vpack.c.b16 %v1314, %v1298
  %v2227 = vpack.c.b16 %v1315, %v1299
  %v2228 = vpack.c.b16 %v1316, %v1300
  %v2229 = vpack.c.b16 %v1317, %v1301
  %v2230 = vpack.c.b16 %v1318, %v1302
  %v2231 = vpack.c.b16 %v1319, %v1303
  %v2232 = vpack.c.b16 %v1320, %v1304
  %v2233 = vpack.c.b16 %v1321, %v1305
  %v2234 = vpack.c.b16 %v1322, %v1306
  %v2235 = vpack.c.b16 %v1323, %v1307
  %v2236 = vpack.c.b16 %v1324, %v1308
  %v2237 = vpack.c.b16 %v1325, %v1309
  %v2238 = vpack.c.b16 %v1342, %v1326
  %v2239 = vpack.c.b16 %v1343, %v1327
  %v2240 = vpack.c.b16 %v1344, %v1328
  %v2241 = vpack.c.b16 %v1345, %v1329
  %v2242 = vpack.c.b16 %v1346, %v1330
  %v2243 = vpack.c.b16 %v1347, %v1331
  %v2244 = vpack.c.b16 %v1348, %v1332
  %v2245 = vpack.c.b16 %v1349, %v1333
  %v2246 = vpack.c.b16 %v1350, %v1334
  %v2247 = vpack.c.b16 %v1351, %v1335
  %v2248 = vpack.c.b16 %v1352, %v1336
  %v2249 = vpack.c.b16 %v1353, %v1337
  %v2250 = vpack.c.b16 %v1354, %v1338
  %v2251 = vpack.c.b16 %v1355, %v1339
  %v2252 = vpack.c.b16 %v1356, %v1340
  %v2253 = vpack.c.b16 %v1357, %v1341
  %v2254 = vpack.c.b16 %v1374, %v1358
  %v2255 = vpack.c.b16 %v1375, %v1359
  %v2256 = vpack.c.b16 %v1376, %v1360
  %v2257 = vpack.c.b16 %v1377, %v1361
  %v2258 = vpack.c.b16 %v1378, %v1362
  %v2259 = vpack.c.b16 %v1379, %v1363
  %v2260 = vpack.c.b16 %v1380, %v1364
  %v2261 = vpack.c.b16 %v1381, %v1365
  %v2262 = vpack.c.b16 %v1382, %v1366
  %v2263 = vpack.c.b16 %v1383, %v1367
  %v2264 = vpack.c.b16 %v1384, %v1368
  %v2265 = vpack.c.b16 %v1385, %v1369
  %v2266 = vpack.c.b16 %v1386, %v1370
  %v2267 = vpack.c.b16 %v1387, %v1371
  %v2268 = vpack.c.b16 %v1388, %v1372
  %v2269 = vpack.c.b16 %v1389, %v1373
  %v2270 = vpack.c.b16 %v1406, %v1390
  %v2271 = vpack.c.b16 %v1407, %v1391
  %v2272 = vpack.c.b16 %v1408, %v1392
  %v2273 = vpack.c.b16 %v1409, %v1393
  %v2274 = vpack.c.b16 %v1410, %v1394
  %v2275 = vpack.c.b16 %v1411, %v1395
  %v2276 = vpack.c.b16 %v1412, %v1396
  %v2277 = vpack.c.b16 %v1413, %v1397
  %v2278 = vpack.c.b16 %v1414, %v1398
  %v2279 = vpack.c.b16 %v1415, %v1399
  %v2280 = vpack.c.b16 %v1416, %v1400
  %v2281 = vpack.c.b16 %v1417, %v1401
  %v2282 = vpack.c.b16 %v1418, %v1402
  %v2283 = vpack.c.b16 %v1419, %v1403
  %v2284 = vpack.c.b16 %v1420, %v1404
  %v2285 = vpack.c.b16 %v1421, %v1405
  %v2286 = vpack.c.b16 %v1438, %v1422
  %v2287 = vpack.c.b16 %v1439, %v1423
  %v2288 = vpack.c.b16 %v1440, %v1424
  %v2289 = vpack.c.b16 %v1441, %v1425
  %v2290 = vpack.c.b16 %v1442, %v1426
  %v2291 = vpack.c.b16 %v1443, %v1427
  %v2292 = vpack.c.b16 %v1444, %v1428
  %v2293 = vpack.c.b16 %v1445, %v1429
  %v2294 = vpack.c.b16 %v1446, %v1430
  %v2295 = vpack.c.b16 %v1447, %v1431
  %v2296 = vpack.c.b16 %v1448, %v1432
  %v2297 = vpack.c.b16 %v1449, %v1433
  %v2298 = vpack.c.b16 %v1450, %v1434
  %v2299 = vpack.c.b16 %v1451, %v1435
  %v2300 = vpack.c.b16 %v1452, %v1436
  %v2301 = vpack.c.b16 %v1453, %v1437
  %v2302 = vpack.c.b16 %v1470, %v1454
  %v2303 = vpack.c.b16 %v1471, %v1455
  %v2304 = vpack.c.b16 %v1472, %v1456
  %v2305 = vpack.c.b16 %v1473, %v1457
  %v2306 = vpack.c.b16 %v1474, %v1458
  %v2307 = vpack.c.b16 %v1475, %v1459
  %v2308 = vpack.c.b16 %v1476, %v1460
  %v2309 = vpack.c.b16 %v1477, %v1461
  %v2310 = vpack.c.b16 %v1478, %v1462
  %v2311 = vpack.c.b16 %v1479, %v1463
  %v2312 = vpack.c.b16 %v1480, %v1464
  %v2313 = vpack.c.b16 %v1481, %v1465
  %v2314 = vpack.c.b16 %v1482, %v1466
  %v2315 = vpack.c.b16 %v1483, %v1467
  %v2316 = vpack.c.b16 %v1484, %v1468
  %v2317 = vpack.c.b16 %v1485, %v1469
  %v2318 = vpack.c.b16 %v1502, %v1486
  %v2319 = vpack.c.b16 %v1503, %v1487
  %v2320 = vpack.c.b16 %v1504, %v1488
  %v2321 = vpack.c.b16 %v1505, %v1489
  %v2322 = vpack.c.b16 %v1506, %v1490
  %v2323 = vpack.c.b16 %v1507, %v1491
  %v2324 = vpack.c.b16 %v1508, %v1492
  %v2325 = vpack.c.b16 %v1509, %v1493
  %v2326 = vpack.c.b16 %v1510, %v1494
  %v2327 = vpack.c.b16 %v1511, %v1495
  %v2328 = vpack.c.b16 %v1512, %v1496
  %v2329 = vpack.c.b16 %v1513, %v1497
  %v2330 = vpack.c.b16 %v1514, %v1498
  %v2331 = vpack.c.b16 %v1515, %v1499
  %v2332 = vpack.c.b16 %v1516, %v1500
  %v2333 = vpack.c.b16 %v1517, %v1501
  %v2334 = vpack.c.b16 %v1534, %v1518
  %v2335 = vpack.c.b16 %v1535, %v1519
  %v2336 = vpack.c.b16 %v1536, %v1520
  %v2337 = vpack.c.b16 %v1537, %v1521
  %v2338 = vpack.c.b16 %v1538, %v1522
  %v2339 = vpack.c.b16 %v1539, %v1523
  %v2340 = vpack.c.b16 %v1540, %v1524
  %v2341 = vpack.c.b16 %v1541, %v1525
  %v2342 = vpack.c.b16 %v1542, %v1526
  %v2343 = vpack.c.b16 %v1543, %v1527
  %v2344 = vpack.c.b16 %v1544, %v1528
  %v2345 = vpack.c.b16 %v1545, %v1529
  %v2346 = vpack.c.b16 %v1546, %v1530
  %v2347 = vpack.c.b16 %v1547, %v1531
  %v2348 = vpack.c.b16 %v1548, %v1532
  %v2349 = vpack.c.b16 %v1549, %v1533
  %v2350 = vpack.c.b16 %v1566, %v1550
  %v2351 = vpack.c.b16 %v1567, %v1551
  %v2352 = vpack.c.b16 %v1568, %v1552
  %v2353 = vpack.c.b16 %v1569, %v1553
  %v2354 = vpack.c.b16 %v1570, %v1554
  %v2355 = vpack.c.b16 %v1571, %v1555
  %v2356 = vpack.c.b16 %v1572, %v1556
  %v2357 = vpack.c.b16 %v1573, %v1557
  %v2358 = vpack.c.b16 %v1574, %v1558
  %v2359 = vpack.c.b16 %v1575, %v1559
  %v2360 = vpack.c.b16 %v1576, %v1560
  %v2361 = vpack.c.b16 %v1577, %v1561
  %v2362 = vpack.c.b16 %v1578, %v1562
  %v2363 = vpack.c.b16 %v1579, %v1563
  %v2364 = vpack.c.b16 %v1580, %v1564
  %v2365 = vpack.c.b16 %v1581, %v1565
  %v2366 = vpack.c.b16 %v1598, %v1582
  %v2367 = vpack.c.b16 %v1599, %v1583
  %v2368 = vpack.c.b16 %v1600, %v1584
  %v2369 = vpack.c.b16 %v1601, %v1585
  %v2370 = vpack.c.b16 %v1602, %v1586
  %v2371 = vpack.c.b16 %v1603, %v1587
  %v2372 = vpack.c.b16 %v1604, %v1588
  %v2373 = vpack.c.b16 %v1605, %v1589
  %v2374 = vpack.c.b16 %v1606, %v1590
  %v2375 = vpack.c.b16 %v1607, %v1591
  %v2376 = vpack.c.b16 %v1608, %v1592
  %v2377 = vpack.c.b16 %v1609, %v1593
  %v2378 = vpack.c.b16 %v1610, %v1594
  %v2379 = vpack.c.b16 %v1611, %v1595
  %v2380 = vpack.c.b16 %v1612, %v1596
  %v2381 = vpack.c.b16 %v1613, %v1597
  %v2382 = vpack.c.b16 %v1630, %v1614
  %v2383 = vpack.c.b16 %v1631, %v1615
  %v2384 = vpack.c.b16 %v1632, %v1616
  %v2385 = vpack.c.b16 %v1633, %v1617
  %v2386 = vpack.c.b16 %v1634, %v1618
  %v2387 = vpack.c.b16 %v1635, %v1619
  %v2388 = vpack.c.b16 %v1636, %v1620
  %v2389 = vpack.c.b16 %v1637, %v1621
  %v2390 = vpack.c.b16 %v1638, %v1622
  %v2391 = vpack.c.b16 %v1639, %v1623
  %v2392 = vpack.c.b16 %v1640, %v1624
  %v2393 = vpack.c.b16 %v1641, %v1625
  %v2394 = vpack.c.b16 %v1642, %v1626
  %v2395 = vpack.c.b16 %v1643, %v1627
  %v2396 = vpack.c.b16 %v1644, %v1628
  %v2397 = vpack.c.b16 %v1645, %v1629
  %v2398 = vpack.c.b16 %v1662, %v1646
  %v2399 = vpack.c.b16 %v1663, %v1647
  %v2400 = vpack.c.b16 %v1664, %v1648
  %v2401 = vpack.c.b16 %v1665, %v1649
  %v2402 = vpack.c.b16 %v1666, %v1650
  %v2403 = vpack.c.b16 %v1667, %v1651
  %v2404 = vpack.c.b16 %v1668, %v1652
  %v2405 = vpack.c.b16 %v1669, %v1653
  %v2406 = vpack.c.b16 %v1670, %v1654
  %v2407 = vpack.c.b16 %v1671, %v1655
  %v2408 = vpack.c.b16 %v1672, %v1656
  %v2409 = vpack.c.b16 %v1673, %v1657
  %v2410 = vpack.c.b16 %v1674, %v1658
  %v2411 = vpack.c.b16 %v1675, %v1659
  %v2412 = vpack.c.b16 %v1676, %v1660
  %v2413 = vpack.c.b16 %v1677, %v1661
  %v2414 = vpack.c.b16 %v1694, %v1678
  %v2415 = vpack.c.b16 %v1695, %v1679
  %v2416 = vpack.c.b16 %v1696, %v1680
  %v2417 = vpack.c.b16 %v1697, %v1681
  %v2418 = vpack.c.b16 %v1698, %v1682
  %v2419 = vpack.c.b16 %v1699, %v1683
  %v2420 = vpack.c.b16 %v1700, %v1684
  %v2421 = vpack.c.b16 %v1701, %v1685
  %v2422 = vpack.c.b16 %v1702, %v1686
  %v2423 = vpack.c.b16 %v1703, %v1687
  %v2424 = vpack.c.b16 %v1704, %v1688
  %v2425 = vpack.c.b16 %v1705, %v1689
  %v2426 = vpack.c.b16 %v1706, %v1690
  %v2427 = vpack.c.b16 %v1707, %v1691
  %v2428 = vpack.c.b16 %v1708, %v1692
  %v2429 = vpack.c.b16 %v1709, %v1693
  %v2430 = vpack.c.b16 %v1726, %v1710
  %v2431 = vpack.c.b16 %v1727, %v1711
  %v2432 = vpack.c.b16 %v1728, %v1712
  %v2433 = vpack.c.b16 %v1729, %v1713
  %v2434 = vpack.c.b16 %v1730, %v1714
  %v2435 = vpack.c.b16 %v1731, %v1715
  %v2436 = vpack.c.b16 %v1732, %v1716
  %v2437 = vpack.c.b16 %v1733, %v1717
  %v2438 = vpack.c.b16 %v1734, %v1718
  %v2439 = vpack.c.b16 %v1735, %v1719
  %v2440 = vpack.c.b16 %v1736, %v1720
  %v2441 = vpack.c.b16 %v1737, %v1721
  %v2442 = vpack.c.b16 %v1738, %v1722
  %v2443 = vpack.c.b16 %v1739, %v1723
  %v2444 = vpack.c.b16 %v1740, %v1724
  %v2445 = vpack.c.b16 %v1741, %v1725
  %v2446 = vpack.c.b16 %v1758, %v1742
  %v2447 = vpack.c.b16 %v1759, %v1743
  %v2448 = vpack.c.b16 %v1760, %v1744
  %v2449 = vpack.c.b16 %v1761, %v1745
  %v2450 = vpack.c.b16 %v1762, %v1746
  %v2451 = vpack.c.b16 %v1763, %v1747
  %v2452 = vpack.c.b16 %v1764, %v1748
  %v2453 = vpack.c.b16 %v1765, %v1749
  %v2454 = vpack.c.b16 %v1766, %v1750
  %v2455 = vpack.c.b16 %v1767, %v1751
  %v2456 = vpack.c.b16 %v1768, %v1752
  %v2457 = vpack.c.b16 %v1769, %v1753
  %v2458 = vpack.c.b16 %v1770, %v1754
  %v2459 = vpack.c.b16 %v1771, %v1755
  %v2460 = vpack.c.b16 %v1772, %v1756
  %v2461 = vpack.c.b16 %v1773, %v1757
  %v2462 = vpack.c.b16 %v1790, %v1774
  %v2463 = vpack.c.b16 %v1791, %v1775
  %v2464 = vpack.c.b16 %v1792, %v1776
  %v2465 = vpack.c.b16 %v1793, %v1777
  %v2466 = vpack.c.b16 %v1794, %v1778
  %v2467 = vpack.c.b16 %v1795, %v1779
  %v2468 = vpack.c.b16 %v1796, %v1780
  %v2469 = vpack.c.b16 %v1797, %v1781
  %v2470 = vpack.c.b16 %v1798, %v1782
  %v2471 = vpack.c.b16 %v1799, %v1783
  %v2472 = vpack.c.b16 %v1800, %v1784
  %v2473 = vpack.c.b16 %v1801, %v1785
  %v2474 = vpack.c.b16 %v1802, %v1786
  %v2475 = vpack.c.b16 %v1803, %v1787
  %v2476 = vpack.c.b16 %v1804, %v1788
  %v2477 = vpack.c.b16 %v1805, %v1789
  %v2478 = vpack.c.b16 %v1822, %v1806
  %v2479 = vpack.c.b16 %v1823, %v1807
  %v2480 = vpack.c.b16 %v1824, %v1808
  %v2481 = vpack.c.b16 %v1825, %v1809
  %v2482 = vpack.c.b16 %v1826, %v1810
  %v2483 = vpack.c.b16 %v1827, %v1811
  %v2484 = vpack.c.b16 %v1828, %v1812
  %v2485 = vpack.c.b16 %v1829, %v1813
  %v2486 = vpack.c.b16 %v1830, %v1814
  %v2487 = vpack.c.b16 %v1831, %v1815
  %v2488 = vpack.c.b16 %v1832, %v1816
  %v2489 = vpack.c.b16 %v1833, %v1817
  %v2490 = vpack.c.b16 %v1834, %v1818
  %v2491 = vpack.c.b16 %v1835, %v1819
  %v2492 = vpack.c.b16 %v1836, %v1820
  %v2493 = vpack.c.b16 %v1837, %v1821
  %v2494 = vpack.c.b16 %v1854, %v1838
  %v2495 = vpack.c.b16 %v1855, %v1839
  %v2496 = vpack.c.b16 %v1856, %v1840
  %v2497 = vpack.c.b16 %v1857, %v1841
  %v2498 = vpack.c.b16 %v1858, %v1842
  %v2499 = vpack.c.b16 %v1859, %v1843
  %v2500 = vpack.c.b16 %v1860, %v1844
  %v2501 = vpack.c.b16 %v1861, %v1845
  %v2502 = vpack.c.b16 %v1862, %v1846
  %v2503 = vpack.c.b16 %v1863, %v1847
  %v2504 = vpack.c.b16 %v1864, %v1848
  %v2505 = vpack.c.b16 %v1865, %v1849
  %v2506 = vpack.c.b16 %v1866, %v1850
  %v2507 = vpack.c.b16 %v1867, %v1851
  %v2508 = vpack.c.b16 %v1868, %v1852
  %v2509 = vpack.c.b16 %v1869, %v1853
  %v2510 = vpack.c.b16 %v1886, %v1870
  %v2511 = vpack.c.b16 %v1887, %v1871
  %v2512 = vpack.c.b16 %v1888, %v1872
  %v2513 = vpack.c.b16 %v1889, %v1873
  %v2514 = vpack.c.b16 %v1890, %v1874
  %v2515 = vpack.c.b16 %v1891, %v1875
  %v2516 = vpack.c.b16 %v1892, %v1876
  %v2517 = vpack.c.b16 %v1893, %v1877
  %v2518 = vpack.c.b16 %v1894, %v1878
  %v2519 = vpack.c.b16 %v1895, %v1879
  %v2520 = vpack.c.b16 %v1896, %v1880
  %v2521 = vpack.c.b16 %v1897, %v1881
  %v2522 = vpack.c.b16 %v1898, %v1882
  %v2523 = vpack.c.b16 %v1899, %v1883
  %v2524 = vpack.c.b16 %v1900, %v1884
  %v2525 = vpack.c.b16 %v1901, %v1885
  %v2526 = vpack.c.b16 %v1918, %v1902
  %v2527 = vpack.c.b16 %v1919, %v1903
  %v2528 = vpack.c.b16 %v1920, %v1904
  %v2529 = vpack.c.b16 %v1921, %v1905
  %v2530 = vpack.c.b16 %v1922, %v1906
  %v2531 = vpack.c.b16 %v1923, %v1907
  %v2532 = vpack.c.b16 %v1924, %v1908
  %v2533 = vpack.c.b16 %v1925, %v1909
  %v2534 = vpack.c.b16 %v1926, %v1910
  %v2535 = vpack.c.b16 %v1927, %v1911
  %v2536 = vpack.c.b16 %v1928, %v1912
  %v2537 = vpack.c.b16 %v1929, %v1913
  %v2538 = vpack.c.b16 %v1930, %v1914
  %v2539 = vpack.c.b16 %v1931, %v1915
  %v2540 = vpack.c.b16 %v1932, %v1916
  %v2541 = vpack.c.b16 %v1933, %v1917
  %v2542 = vpack.c.b16 %v1950, %v1934
  %v2543 = vpack.c.b16 %v1951, %v1935
  %v2544 = vpack.c.b16 %v1952, %v1936
  %v2545 = vpack.c.b16 %v1953, %v1937
  %v2546 = vpack.c.b16 %v1954, %v1938
  %v2547 = vpack.c.b16 %v1955, %v1939
  %v2548 = vpack.c.b16 %v1956, %v1940
  %v2549 = vpack.c.b16 %v1957, %v1941
  %v2550 = vpack.c.b16 %v1958, %v1942
  %v2551 = vpack.c.b16 %v1959, %v1943
  %v2552 = vpack.c.b16 %v1960, %v1944
  %v2553 = vpack.c.b16 %v1961, %v1945
  %v2554 = vpack.c.b16 %v1962, %v1946
  %v2555 = vpack.c.b16 %v1963, %v1947
  %v2556 = vpack.c.b16 %v1964, %v1948
  %v2557 = vpack.c.b16 %v1965, %v1949
  %v2558 = vpack.c.b16 %v1982, %v1966
  %v2559 = vpack.c.b16 %v1983, %v1967
  %v2560 = vpack.c.b16 %v1984, %v1968
  %v2561 = vpack.c.b16 %v1985, %v1969
  %v2562 = vpack.c.b16 %v1986, %v1970
  %v2563 = vpack.c.b16 %v1987, %v1971
  %v2564 = vpack.c.b16 %v1988, %v1972
  %v2565 = vpack.c.b16 %v1989, %v1973
  %v2566 = vpack.c.b16 %v1990, %v1974
  %v2567 = vpack.c.b16 %v1991, %v1975
  %v2568 = vpack.c.b16 %v1992, %v1976
  %v2569 = vpack.c.b16 %v1993, %v1977
  %v2570 = vpack.c.b16 %v1994, %v1978
  %v2571 = vpack.c.b16 %v1995, %v1979
  %v2572 = vpack.c.b16 %v1996, %v1980
  %v2573 = vpack.c.b16 %v1997, %v1981
  %v2574 = vpack.c.b16 %v2014, %v1998
  %v2575 = vpack.c.b16 %v2015, %v1999
  %v2576 = vpack.c.b16 %v2016, %v2000
  %v2577 = vpack.c.b16 %v2017, %v2001
  %v2578 = vpack.c.b16 %v2018, %v2002
  %v2579 = vpack.c.b16 %v2019, %v2003
  %v2580 = vpack.c.b16 %v2020, %v2004
  %v2581 = vpack.c.b16 %v2021, %v2005
  %v2582 = vpack.c.b16 %v2022, %v2006
  %v2583 = vpack.c.b16 %v2023, %v2007
  %v2584 = vpack.c.b16 %v2024, %v2008
  %v2585 = vpack.c.b16 %v2025, %v2009
  %v2586 = vpack.c.b16 %v2026, %v2010
  %v2587 = vpack.c.b16 %v2027, %v2011
  %v2588 = vpack.c.b16 %v2028, %v2012
  %v2589 = vpack.c.b16 %v2029, %v2013
  %v2590 = vpack.c.b16 %v2046, %v2030
  %v2591 = vpack.c.b16 %v2047, %v2031
  %v2592 = vpack.c.b16 %v2048, %v2032
  %v2593 = vpack.c.b16 %v2049, %v2033
  %v2594 = vpack.c.b16 %v2050, %v2034
  %v2595 = vpack.c.b16 %v2051, %v2035
  %v2596 = vpack.c.b16 %v2052, %v2036
  %v2597 = vpack.c.b16 %v2053, %v2037
  %v2598 = vpack.c.b16 %v2054, %v2038
  %v2599 = vpack.c.b16 %v2055, %v2039
  %v2600 = vpack.c.b16 %v2056, %v2040
  %v2601 = vpack.c.b16 %v2057, %v2041
  %v2602 = vpack.c.b16 %v2058, %v2042
  %v2603 = vpack.c.b16 %v2059, %v2043
  %v2604 = vpack.c.b16 %v2060, %v2044
  %v2605 = vpack.c.b16 %v2061, %v2045
  %v2606 = vpack.c.b16 %v2078, %v2062
  %v2607 = vpack.c.b16 %v2079, %v2063
  %v2608 = vpack.c.b16 %v2080, %v2064
  %v2609 = vpack.c.b16 %v2081, %v2065
  %v2610 = vpack.c.b16 %v2082, %v2066
  %v2611 = vpack.c.b16 %v2083, %v2067
  %v2612 = vpack.c.b16 %v2084, %v2068
  %v2613 = vpack.c.b16 %v2085, %v2069
  %v2614 = vpack.c.b16 %v2086, %v2070
  %v2615 = vpack.c.b16 %v2087, %v2071
  %v2616 = vpack.c.b16 %v2088, %v2072
  %v2617 = vpack.c.b16 %v2089, %v2073
  %v2618 = vpack.c.b16 %v2090, %v2074
  %v2619 = vpack.c.b16 %v2091, %v2075
  %v2620 = vpack.c.b16 %v2092, %v2076
  %v2621 = vpack.c.b16 %v2093, %v2077
  %v2622 = vpack.c.b16 %v2110, %v2094
  %v2623 = vpack.c.b16 %v2111, %v2095
  %v2624 = vpack.c.b16 %v2112, %v2096
  %v2625 = vpack.c.b16 %v2113, %v2097
  %v2626 = vpack.c.b16 %v2114, %v2098
  %v2627 = vpack.c.b16 %v2115, %v2099
  %v2628 = vpack.c.b16 %v2116, %v2100
  %v2629 = vpack.c.b16 %v2117, %v2101
  %v2630 = vpack.c.b16 %v2118, %v2102
  %v2631 = vpack.c.b16 %v2119, %v2103
  %v2632 = vpack.c.b16 %v2120, %v2104
  %v2633 = vpack.c.b16 %v2121, %v2105
  %v2634 = vpack.c.b16 %v2122, %v2106
  %v2635 = vpack.c.b16 %v2123, %v2107
  %v2636 = vpack.c.b16 %v2124, %v2108
  %v2637 = vpack.c.b16 %v2125, %v2109
  %3150 = vmatpush.bf16.msra.mxu0 %v2238
  %3151 = vmatpush.bf16.msra.mxu0 %v2222
  %3152 = vmatpush.bf16.msra.mxu0 %v2206
  %3153 = vmatpush.bf16.msra.mxu0 %v2190
  %3154 = vmatpush.bf16.msra.mxu0 %v2174
  %3155 = vmatpush.bf16.msra.mxu0 %v2158
  %3156 = vmatpush.bf16.msra.mxu0 %v2142
  %3157 = vmatpush.bf16.msra.mxu0 %v2126
  %3158 = vmatmul.bf16.gmra.mxu0 %v582
  %v3159 = vpop.f32.mrf.mxu0
  %v3160 = vadd.f32 %v544, %v3159
  %v3161 = vpop.f32.mrf.mxu0
  %3162 = vdwg.mxu0
  %3163 = vmatpush.bf16.msra.mxu0 %v2366
  %3164 = vmatpush.bf16.msra.mxu0 %v2350
  %3165 = vmatpush.bf16.msra.mxu0 %v2334
  %3166 = vmatpush.bf16.msra.mxu0 %v2318
  %3167 = vmatpush.bf16.msra.mxu0 %v2302
  %3168 = vmatpush.bf16.msra.mxu0 %v2286
  %3169 = vmatpush.bf16.msra.mxu0 %v2270
  %3170 = vmatpush.bf16.msra.mxu0 %v2254
  %3171 = vmatmul.bf16.gmra.mxu0 %v583
  %v3172 = vpop.f32.mrf.mxu0
  %v3173 = vadd.f32 %v3160, %v3172
  %v3174 = vpop.f32.mrf.mxu0
  %3175 = vdwg.mxu0
  %3176 = vmatpush.bf16.msra.mxu0 %v2494
  %3177 = vmatpush.bf16.msra.mxu0 %v2478
  %3178 = vmatpush.bf16.msra.mxu0 %v2462
  %3179 = vmatpush.bf16.msra.mxu0 %v2446
  %3180 = vmatpush.bf16.msra.mxu0 %v2430
  %3181 = vmatpush.bf16.msra.mxu0 %v2414
  %3182 = vmatpush.bf16.msra.mxu0 %v2398
  %3183 = vmatpush.bf16.msra.mxu0 %v2382
  %3184 = vmatmul.bf16.gmra.mxu0 %v584
  %v3185 = vpop.f32.mrf.mxu0
  %v3186 = vadd.f32 %v3173, %v3185
  %v3187 = vpop.f32.mrf.mxu0
  %3188 = vdwg.mxu0
  %3189 = vmatpush.bf16.msra.mxu0 %v2622
  %3190 = vmatpush.bf16.msra.mxu0 %v2606
  %3191 = vmatpush.bf16.msra.mxu0 %v2590
  %3192 = vmatpush.bf16.msra.mxu0 %v2574
  %3193 = vmatpush.bf16.msra.mxu0 %v2558
  %3194 = vmatpush.bf16.msra.mxu0 %v2542
  %3195 = vmatpush.bf16.msra.mxu0 %v2526
  %3196 = vmatpush.bf16.msra.mxu0 %v2510
  %3197 = vmatmul.bf16.gmra.mxu0 %v585
  %v3198 = vpop.f32.mrf.mxu0
  %v3199 = vadd.f32 %v3186, %v3198
  %v3200 = vpop.f32.mrf.mxu0
  %3201 = vdwg.mxu0
  %3202 = vmatpush.bf16.msra.mxu0 %v2239
  %3203 = vmatpush.bf16.msra.mxu0 %v2223
  %3204 = vmatpush.bf16.msra.mxu0 %v2207
  %3205 = vmatpush.bf16.msra.mxu0 %v2191
  %3206 = vmatpush.bf16.msra.mxu0 %v2175
  %3207 = vmatpush.bf16.msra.mxu0 %v2159
  %3208 = vmatpush.bf16.msra.mxu0 %v2143
  %3209 = vmatpush.bf16.msra.mxu0 %v2127
  %3210 = vmatmul.bf16.gmra.mxu0 %v582
  %v3211 = vpop.f32.mrf.mxu0
  %v3212 = vadd.f32 %v545, %v3211
  %v3213 = vpop.f32.mrf.mxu0
  %3214 = vdwg.mxu0
  %3215 = vmatpush.bf16.msra.mxu0 %v2367
  %3216 = vmatpush.bf16.msra.mxu0 %v2351
  %3217 = vmatpush.bf16.msra.mxu0 %v2335
  %3218 = vmatpush.bf16.msra.mxu0 %v2319
  %3219 = vmatpush.bf16.msra.mxu0 %v2303
  %3220 = vmatpush.bf16.msra.mxu0 %v2287
  %3221 = vmatpush.bf16.msra.mxu0 %v2271
  %3222 = vmatpush.bf16.msra.mxu0 %v2255
  %3223 = vmatmul.bf16.gmra.mxu0 %v583
  %v3224 = vpop.f32.mrf.mxu0
  %v3225 = vadd.f32 %v3212, %v3224
  %v3226 = vpop.f32.mrf.mxu0
  %3227 = vdwg.mxu0
  %3228 = vmatpush.bf16.msra.mxu0 %v2495
  %3229 = vmatpush.bf16.msra.mxu0 %v2479
  %3230 = vmatpush.bf16.msra.mxu0 %v2463
  %3231 = vmatpush.bf16.msra.mxu0 %v2447
  %3232 = vmatpush.bf16.msra.mxu0 %v2431
  %3233 = vmatpush.bf16.msra.mxu0 %v2415
  %3234 = vmatpush.bf16.msra.mxu0 %v2399
  %3235 = vmatpush.bf16.msra.mxu0 %v2383
  %3236 = vmatmul.bf16.gmra.mxu0 %v584
  %v3237 = vpop.f32.mrf.mxu0
  %v3238 = vadd.f32 %v3225, %v3237
  %v3239 = vpop.f32.mrf.mxu0
  %3240 = vdwg.mxu0
  %3241 = vmatpush.bf16.msra.mxu0 %v2623
  %3242 = vmatpush.bf16.msra.mxu0 %v2607
  %3243 = vmatpush.bf16.msra.mxu0 %v2591
  %3244 = vmatpush.bf16.msra.mxu0 %v2575
  %3245 = vmatpush.bf16.msra.mxu0 %v2559
  %3246 = vmatpush.bf16.msra.mxu0 %v2543
  %3247 = vmatpush.bf16.msra.mxu0 %v2527
  %3248 = vmatpush.bf16.msra.mxu0 %v2511
  %3249 = vmatmul.bf16.gmra.mxu0 %v585
  %v3250 = vpop.f32.mrf.mxu0
  %v3251 = vadd.f32 %v3238, %v3250
  %v3252 = vpop.f32.mrf.mxu0
  %3253 = vdwg.mxu0
  %3254 = vmatpush.bf16.msra.mxu0 %v2240
  %3255 = vmatpush.bf16.msra.mxu0 %v2224
  %3256 = vmatpush.bf16.msra.mxu0 %v2208
  %3257 = vmatpush.bf16.msra.mxu0 %v2192
  %3258 = vmatpush.bf16.msra.mxu0 %v2176
  %3259 = vmatpush.bf16.msra.mxu0 %v2160
  %3260 = vmatpush.bf16.msra.mxu0 %v2144
  %3261 = vmatpush.bf16.msra.mxu0 %v2128
  %3262 = vmatmul.bf16.gmra.mxu0 %v582
  %v3263 = vpop.f32.mrf.mxu0
  %v3264 = vadd.f32 %v546, %v3263
  %v3265 = vpop.f32.mrf.mxu0
  %3266 = vdwg.mxu0
  %3267 = vmatpush.bf16.msra.mxu0 %v2368
  %3268 = vmatpush.bf16.msra.mxu0 %v2352
  %3269 = vmatpush.bf16.msra.mxu0 %v2336
  %3270 = vmatpush.bf16.msra.mxu0 %v2320
  %3271 = vmatpush.bf16.msra.mxu0 %v2304
  %3272 = vmatpush.bf16.msra.mxu0 %v2288
  %3273 = vmatpush.bf16.msra.mxu0 %v2272
  %3274 = vmatpush.bf16.msra.mxu0 %v2256
  %3275 = vmatmul.bf16.gmra.mxu0 %v583
  %v3276 = vpop.f32.mrf.mxu0
  %v3277 = vadd.f32 %v3264, %v3276
  %v3278 = vpop.f32.mrf.mxu0
  %3279 = vdwg.mxu0
  %3280 = vmatpush.bf16.msra.mxu0 %v2496
  %3281 = vmatpush.bf16.msra.mxu0 %v2480
  %3282 = vmatpush.bf16.msra.mxu0 %v2464
  %3283 = vmatpush.bf16.msra.mxu0 %v2448
  %3284 = vmatpush.bf16.msra.mxu0 %v2432
  %3285 = vmatpush.bf16.msra.mxu0 %v2416
  %3286 = vmatpush.bf16.msra.mxu0 %v2400
  %3287 = vmatpush.bf16.msra.mxu0 %v2384
  %3288 = vmatmul.bf16.gmra.mxu0 %v584
  %v3289 = vpop.f32.mrf.mxu0
  %v3290 = vadd.f32 %v3277, %v3289
  %v3291 = vpop.f32.mrf.mxu0
  %3292 = vdwg.mxu0
  %3293 = vmatpush.bf16.msra.mxu0 %v2624
  %3294 = vmatpush.bf16.msra.mxu0 %v2608
  %3295 = vmatpush.bf16.msra.mxu0 %v2592
  %3296 = vmatpush.bf16.msra.mxu0 %v2576
  %3297 = vmatpush.bf16.msra.mxu0 %v2560
  %3298 = vmatpush.bf16.msra.mxu0 %v2544
  %3299 = vmatpush.bf16.msra.mxu0 %v2528
  %3300 = vmatpush.bf16.msra.mxu0 %v2512
  %3301 = vmatmul.bf16.gmra.mxu0 %v585
  %v3302 = vpop.f32.mrf.mxu0
  %v3303 = vadd.f32 %v3290, %v3302
  %v3304 = vpop.f32.mrf.mxu0
  %3305 = vdwg.mxu0
  %3306 = vmatpush.bf16.msra.mxu0 %v2241
  %3307 = vmatpush.bf16.msra.mxu0 %v2225
  %3308 = vmatpush.bf16.msra.mxu0 %v2209
  %3309 = vmatpush.bf16.msra.mxu0 %v2193
  %3310 = vmatpush.bf16.msra.mxu0 %v2177
  %3311 = vmatpush.bf16.msra.mxu0 %v2161
  %3312 = vmatpush.bf16.msra.mxu0 %v2145
  %3313 = vmatpush.bf16.msra.mxu0 %v2129
  %3314 = vmatmul.bf16.gmra.mxu0 %v582
  %v3315 = vpop.f32.mrf.mxu0
  %v3316 = vadd.f32 %v547, %v3315
  %v3317 = vpop.f32.mrf.mxu0
  %3318 = vdwg.mxu0
  %3319 = vmatpush.bf16.msra.mxu0 %v2369
  %3320 = vmatpush.bf16.msra.mxu0 %v2353
  %3321 = vmatpush.bf16.msra.mxu0 %v2337
  %3322 = vmatpush.bf16.msra.mxu0 %v2321
  %3323 = vmatpush.bf16.msra.mxu0 %v2305
  %3324 = vmatpush.bf16.msra.mxu0 %v2289
  %3325 = vmatpush.bf16.msra.mxu0 %v2273
  %3326 = vmatpush.bf16.msra.mxu0 %v2257
  %3327 = vmatmul.bf16.gmra.mxu0 %v583
  %v3328 = vpop.f32.mrf.mxu0
  %v3329 = vadd.f32 %v3316, %v3328
  %v3330 = vpop.f32.mrf.mxu0
  %3331 = vdwg.mxu0
  %3332 = vmatpush.bf16.msra.mxu0 %v2497
  %3333 = vmatpush.bf16.msra.mxu0 %v2481
  %3334 = vmatpush.bf16.msra.mxu0 %v2465
  %3335 = vmatpush.bf16.msra.mxu0 %v2449
  %3336 = vmatpush.bf16.msra.mxu0 %v2433
  %3337 = vmatpush.bf16.msra.mxu0 %v2417
  %3338 = vmatpush.bf16.msra.mxu0 %v2401
  %3339 = vmatpush.bf16.msra.mxu0 %v2385
  %3340 = vmatmul.bf16.gmra.mxu0 %v584
  %v3341 = vpop.f32.mrf.mxu0
  %v3342 = vadd.f32 %v3329, %v3341
  %v3343 = vpop.f32.mrf.mxu0
  %3344 = vdwg.mxu0
  %3345 = vmatpush.bf16.msra.mxu0 %v2625
  %3346 = vmatpush.bf16.msra.mxu0 %v2609
  %3347 = vmatpush.bf16.msra.mxu0 %v2593
  %3348 = vmatpush.bf16.msra.mxu0 %v2577
  %3349 = vmatpush.bf16.msra.mxu0 %v2561
  %3350 = vmatpush.bf16.msra.mxu0 %v2545
  %3351 = vmatpush.bf16.msra.mxu0 %v2529
  %3352 = vmatpush.bf16.msra.mxu0 %v2513
  %3353 = vmatmul.bf16.gmra.mxu0 %v585
  %v3354 = vpop.f32.mrf.mxu0
  %v3355 = vadd.f32 %v3342, %v3354
  %v3356 = vpop.f32.mrf.mxu0
  %3357 = vdwg.mxu0
  %3358 = vmatpush.bf16.msra.mxu0 %v2242
  %3359 = vmatpush.bf16.msra.mxu0 %v2226
  %3360 = vmatpush.bf16.msra.mxu0 %v2210
  %3361 = vmatpush.bf16.msra.mxu0 %v2194
  %3362 = vmatpush.bf16.msra.mxu0 %v2178
  %3363 = vmatpush.bf16.msra.mxu0 %v2162
  %3364 = vmatpush.bf16.msra.mxu0 %v2146
  %3365 = vmatpush.bf16.msra.mxu0 %v2130
  %3366 = vmatmul.bf16.gmra.mxu0 %v582
  %v3367 = vpop.f32.mrf.mxu0
  %v3368 = vadd.f32 %v548, %v3367
  %v3369 = vpop.f32.mrf.mxu0
  %3370 = vdwg.mxu0
  %3371 = vmatpush.bf16.msra.mxu0 %v2370
  %3372 = vmatpush.bf16.msra.mxu0 %v2354
  %3373 = vmatpush.bf16.msra.mxu0 %v2338
  %3374 = vmatpush.bf16.msra.mxu0 %v2322
  %3375 = vmatpush.bf16.msra.mxu0 %v2306
  %3376 = vmatpush.bf16.msra.mxu0 %v2290
  %3377 = vmatpush.bf16.msra.mxu0 %v2274
  %3378 = vmatpush.bf16.msra.mxu0 %v2258
  %3379 = vmatmul.bf16.gmra.mxu0 %v583
  %v3380 = vpop.f32.mrf.mxu0
  %v3381 = vadd.f32 %v3368, %v3380
  %v3382 = vpop.f32.mrf.mxu0
  %3383 = vdwg.mxu0
  %3384 = vmatpush.bf16.msra.mxu0 %v2498
  %3385 = vmatpush.bf16.msra.mxu0 %v2482
  %3386 = vmatpush.bf16.msra.mxu0 %v2466
  %3387 = vmatpush.bf16.msra.mxu0 %v2450
  %3388 = vmatpush.bf16.msra.mxu0 %v2434
  %3389 = vmatpush.bf16.msra.mxu0 %v2418
  %3390 = vmatpush.bf16.msra.mxu0 %v2402
  %3391 = vmatpush.bf16.msra.mxu0 %v2386
  %3392 = vmatmul.bf16.gmra.mxu0 %v584
  %v3393 = vpop.f32.mrf.mxu0
  %v3394 = vadd.f32 %v3381, %v3393
  %v3395 = vpop.f32.mrf.mxu0
  %3396 = vdwg.mxu0
  %3397 = vmatpush.bf16.msra.mxu0 %v2626
  %3398 = vmatpush.bf16.msra.mxu0 %v2610
  %3399 = vmatpush.bf16.msra.mxu0 %v2594
  %3400 = vmatpush.bf16.msra.mxu0 %v2578
  %3401 = vmatpush.bf16.msra.mxu0 %v2562
  %3402 = vmatpush.bf16.msra.mxu0 %v2546
  %3403 = vmatpush.bf16.msra.mxu0 %v2530
  %3404 = vmatpush.bf16.msra.mxu0 %v2514
  %3405 = vmatmul.bf16.gmra.mxu0 %v585
  %v3406 = vpop.f32.mrf.mxu0
  %v3407 = vadd.f32 %v3394, %v3406
  %v3408 = vpop.f32.mrf.mxu0
  %3409 = vdwg.mxu0
  %3410 = vmatpush.bf16.msra.mxu0 %v2243
  %3411 = vmatpush.bf16.msra.mxu0 %v2227
  %3412 = vmatpush.bf16.msra.mxu0 %v2211
  %3413 = vmatpush.bf16.msra.mxu0 %v2195
  %3414 = vmatpush.bf16.msra.mxu0 %v2179
  %3415 = vmatpush.bf16.msra.mxu0 %v2163
  %3416 = vmatpush.bf16.msra.mxu0 %v2147
  %3417 = vmatpush.bf16.msra.mxu0 %v2131
  %3418 = vmatmul.bf16.gmra.mxu0 %v582
  %v3419 = vpop.f32.mrf.mxu0
  %v3420 = vadd.f32 %v549, %v3419
  %v3421 = vpop.f32.mrf.mxu0
  %3422 = vdwg.mxu0
  %3423 = vmatpush.bf16.msra.mxu0 %v2371
  %3424 = vmatpush.bf16.msra.mxu0 %v2355
  %3425 = vmatpush.bf16.msra.mxu0 %v2339
  %3426 = vmatpush.bf16.msra.mxu0 %v2323
  %3427 = vmatpush.bf16.msra.mxu0 %v2307
  %3428 = vmatpush.bf16.msra.mxu0 %v2291
  %3429 = vmatpush.bf16.msra.mxu0 %v2275
  %3430 = vmatpush.bf16.msra.mxu0 %v2259
  %3431 = vmatmul.bf16.gmra.mxu0 %v583
  %v3432 = vpop.f32.mrf.mxu0
  %v3433 = vadd.f32 %v3420, %v3432
  %v3434 = vpop.f32.mrf.mxu0
  %3435 = vdwg.mxu0
  %3436 = vmatpush.bf16.msra.mxu0 %v2499
  %3437 = vmatpush.bf16.msra.mxu0 %v2483
  %3438 = vmatpush.bf16.msra.mxu0 %v2467
  %3439 = vmatpush.bf16.msra.mxu0 %v2451
  %3440 = vmatpush.bf16.msra.mxu0 %v2435
  %3441 = vmatpush.bf16.msra.mxu0 %v2419
  %3442 = vmatpush.bf16.msra.mxu0 %v2403
  %3443 = vmatpush.bf16.msra.mxu0 %v2387
  %3444 = vmatmul.bf16.gmra.mxu0 %v584
  %v3445 = vpop.f32.mrf.mxu0
  %v3446 = vadd.f32 %v3433, %v3445
  %v3447 = vpop.f32.mrf.mxu0
  %3448 = vdwg.mxu0
  %3449 = vmatpush.bf16.msra.mxu0 %v2627
  %3450 = vmatpush.bf16.msra.mxu0 %v2611
  %3451 = vmatpush.bf16.msra.mxu0 %v2595
  %3452 = vmatpush.bf16.msra.mxu0 %v2579
  %3453 = vmatpush.bf16.msra.mxu0 %v2563
  %3454 = vmatpush.bf16.msra.mxu0 %v2547
  %3455 = vmatpush.bf16.msra.mxu0 %v2531
  %3456 = vmatpush.bf16.msra.mxu0 %v2515
  %3457 = vmatmul.bf16.gmra.mxu0 %v585
  %v3458 = vpop.f32.mrf.mxu0
  %v3459 = vadd.f32 %v3446, %v3458
  %v3460 = vpop.f32.mrf.mxu0
  %3461 = vdwg.mxu0
  %3462 = vmatpush.bf16.msra.mxu0 %v2244
  %3463 = vmatpush.bf16.msra.mxu0 %v2228
  %3464 = vmatpush.bf16.msra.mxu0 %v2212
  %3465 = vmatpush.bf16.msra.mxu0 %v2196
  %3466 = vmatpush.bf16.msra.mxu0 %v2180
  %3467 = vmatpush.bf16.msra.mxu0 %v2164
  %3468 = vmatpush.bf16.msra.mxu0 %v2148
  %3469 = vmatpush.bf16.msra.mxu0 %v2132
  %3470 = vmatmul.bf16.gmra.mxu0 %v582
  %v3471 = vpop.f32.mrf.mxu0
  %v3472 = vadd.f32 %v550, %v3471
  %v3473 = vpop.f32.mrf.mxu0
  %3474 = vdwg.mxu0
  %3475 = vmatpush.bf16.msra.mxu0 %v2372
  %3476 = vmatpush.bf16.msra.mxu0 %v2356
  %3477 = vmatpush.bf16.msra.mxu0 %v2340
  %3478 = vmatpush.bf16.msra.mxu0 %v2324
  %3479 = vmatpush.bf16.msra.mxu0 %v2308
  %3480 = vmatpush.bf16.msra.mxu0 %v2292
  %3481 = vmatpush.bf16.msra.mxu0 %v2276
  %3482 = vmatpush.bf16.msra.mxu0 %v2260
  %3483 = vmatmul.bf16.gmra.mxu0 %v583
  %v3484 = vpop.f32.mrf.mxu0
  %v3485 = vadd.f32 %v3472, %v3484
  %v3486 = vpop.f32.mrf.mxu0
  %3487 = vdwg.mxu0
  %3488 = vmatpush.bf16.msra.mxu0 %v2500
  %3489 = vmatpush.bf16.msra.mxu0 %v2484
  %3490 = vmatpush.bf16.msra.mxu0 %v2468
  %3491 = vmatpush.bf16.msra.mxu0 %v2452
  %3492 = vmatpush.bf16.msra.mxu0 %v2436
  %3493 = vmatpush.bf16.msra.mxu0 %v2420
  %3494 = vmatpush.bf16.msra.mxu0 %v2404
  %3495 = vmatpush.bf16.msra.mxu0 %v2388
  %3496 = vmatmul.bf16.gmra.mxu0 %v584
  %v3497 = vpop.f32.mrf.mxu0
  %v3498 = vadd.f32 %v3485, %v3497
  %v3499 = vpop.f32.mrf.mxu0
  %3500 = vdwg.mxu0
  %3501 = vmatpush.bf16.msra.mxu0 %v2628
  %3502 = vmatpush.bf16.msra.mxu0 %v2612
  %3503 = vmatpush.bf16.msra.mxu0 %v2596
  %3504 = vmatpush.bf16.msra.mxu0 %v2580
  %3505 = vmatpush.bf16.msra.mxu0 %v2564
  %3506 = vmatpush.bf16.msra.mxu0 %v2548
  %3507 = vmatpush.bf16.msra.mxu0 %v2532
  %3508 = vmatpush.bf16.msra.mxu0 %v2516
  %3509 = vmatmul.bf16.gmra.mxu0 %v585
  %v3510 = vpop.f32.mrf.mxu0
  %v3511 = vadd.f32 %v3498, %v3510
  %v3512 = vpop.f32.mrf.mxu0
  %3513 = vdwg.mxu0
  %3514 = vmatpush.bf16.msra.mxu0 %v2245
  %3515 = vmatpush.bf16.msra.mxu0 %v2229
  %3516 = vmatpush.bf16.msra.mxu0 %v2213
  %3517 = vmatpush.bf16.msra.mxu0 %v2197
  %3518 = vmatpush.bf16.msra.mxu0 %v2181
  %3519 = vmatpush.bf16.msra.mxu0 %v2165
  %3520 = vmatpush.bf16.msra.mxu0 %v2149
  %3521 = vmatpush.bf16.msra.mxu0 %v2133
  %3522 = vmatmul.bf16.gmra.mxu0 %v582
  %v3523 = vpop.f32.mrf.mxu0
  %v3524 = vadd.f32 %v551, %v3523
  %v3525 = vpop.f32.mrf.mxu0
  %3526 = vdwg.mxu0
  %3527 = vmatpush.bf16.msra.mxu0 %v2373
  %3528 = vmatpush.bf16.msra.mxu0 %v2357
  %3529 = vmatpush.bf16.msra.mxu0 %v2341
  %3530 = vmatpush.bf16.msra.mxu0 %v2325
  %3531 = vmatpush.bf16.msra.mxu0 %v2309
  %3532 = vmatpush.bf16.msra.mxu0 %v2293
  %3533 = vmatpush.bf16.msra.mxu0 %v2277
  %3534 = vmatpush.bf16.msra.mxu0 %v2261
  %3535 = vmatmul.bf16.gmra.mxu0 %v583
  %v3536 = vpop.f32.mrf.mxu0
  %v3537 = vadd.f32 %v3524, %v3536
  %v3538 = vpop.f32.mrf.mxu0
  %3539 = vdwg.mxu0
  %3540 = vmatpush.bf16.msra.mxu0 %v2501
  %3541 = vmatpush.bf16.msra.mxu0 %v2485
  %3542 = vmatpush.bf16.msra.mxu0 %v2469
  %3543 = vmatpush.bf16.msra.mxu0 %v2453
  %3544 = vmatpush.bf16.msra.mxu0 %v2437
  %3545 = vmatpush.bf16.msra.mxu0 %v2421
  %3546 = vmatpush.bf16.msra.mxu0 %v2405
  %3547 = vmatpush.bf16.msra.mxu0 %v2389
  %3548 = vmatmul.bf16.gmra.mxu0 %v584
  %v3549 = vpop.f32.mrf.mxu0
  %v3550 = vadd.f32 %v3537, %v3549
  %v3551 = vpop.f32.mrf.mxu0
  %3552 = vdwg.mxu0
  %3553 = vmatpush.bf16.msra.mxu0 %v2629
  %3554 = vmatpush.bf16.msra.mxu0 %v2613
  %3555 = vmatpush.bf16.msra.mxu0 %v2597
  %3556 = vmatpush.bf16.msra.mxu0 %v2581
  %3557 = vmatpush.bf16.msra.mxu0 %v2565
  %3558 = vmatpush.bf16.msra.mxu0 %v2549
  %3559 = vmatpush.bf16.msra.mxu0 %v2533
  %3560 = vmatpush.bf16.msra.mxu0 %v2517
  %3561 = vmatmul.bf16.gmra.mxu0 %v585
  %v3562 = vpop.f32.mrf.mxu0
  %v3563 = vadd.f32 %v3550, %v3562
  %v3564 = vpop.f32.mrf.mxu0
  %3565 = vdwg.mxu0
  %3566 = vmatpush.bf16.msra.mxu0 %v2246
  %3567 = vmatpush.bf16.msra.mxu0 %v2230
  %3568 = vmatpush.bf16.msra.mxu0 %v2214
  %3569 = vmatpush.bf16.msra.mxu0 %v2198
  %3570 = vmatpush.bf16.msra.mxu0 %v2182
  %3571 = vmatpush.bf16.msra.mxu0 %v2166
  %3572 = vmatpush.bf16.msra.mxu0 %v2150
  %3573 = vmatpush.bf16.msra.mxu0 %v2134
  %3574 = vmatmul.bf16.gmra.mxu0 %v582
  %v3575 = vpop.f32.mrf.mxu0
  %v3576 = vadd.f32 %v552, %v3575
  %v3577 = vpop.f32.mrf.mxu0
  %3578 = vdwg.mxu0
  %3579 = vmatpush.bf16.msra.mxu0 %v2374
  %3580 = vmatpush.bf16.msra.mxu0 %v2358
  %3581 = vmatpush.bf16.msra.mxu0 %v2342
  %3582 = vmatpush.bf16.msra.mxu0 %v2326
  %3583 = vmatpush.bf16.msra.mxu0 %v2310
  %3584 = vmatpush.bf16.msra.mxu0 %v2294
  %3585 = vmatpush.bf16.msra.mxu0 %v2278
  %3586 = vmatpush.bf16.msra.mxu0 %v2262
  %3587 = vmatmul.bf16.gmra.mxu0 %v583
  %v3588 = vpop.f32.mrf.mxu0
  %v3589 = vadd.f32 %v3576, %v3588
  %v3590 = vpop.f32.mrf.mxu0
  %3591 = vdwg.mxu0
  %3592 = vmatpush.bf16.msra.mxu0 %v2502
  %3593 = vmatpush.bf16.msra.mxu0 %v2486
  %3594 = vmatpush.bf16.msra.mxu0 %v2470
  %3595 = vmatpush.bf16.msra.mxu0 %v2454
  %3596 = vmatpush.bf16.msra.mxu0 %v2438
  %3597 = vmatpush.bf16.msra.mxu0 %v2422
  %3598 = vmatpush.bf16.msra.mxu0 %v2406
  %3599 = vmatpush.bf16.msra.mxu0 %v2390
  %3600 = vmatmul.bf16.gmra.mxu0 %v584
  %v3601 = vpop.f32.mrf.mxu0
  %v3602 = vadd.f32 %v3589, %v3601
  %v3603 = vpop.f32.mrf.mxu0
  %3604 = vdwg.mxu0
  %3605 = vmatpush.bf16.msra.mxu0 %v2630
  %3606 = vmatpush.bf16.msra.mxu0 %v2614
  %3607 = vmatpush.bf16.msra.mxu0 %v2598
  %3608 = vmatpush.bf16.msra.mxu0 %v2582
  %3609 = vmatpush.bf16.msra.mxu0 %v2566
  %3610 = vmatpush.bf16.msra.mxu0 %v2550
  %3611 = vmatpush.bf16.msra.mxu0 %v2534
  %3612 = vmatpush.bf16.msra.mxu0 %v2518
  %3613 = vmatmul.bf16.gmra.mxu0 %v585
  %v3614 = vpop.f32.mrf.mxu0
  %v3615 = vadd.f32 %v3602, %v3614
  %v3616 = vpop.f32.mrf.mxu0
  %3617 = vdwg.mxu0
  %3618 = vmatpush.bf16.msra.mxu0 %v2247
  %3619 = vmatpush.bf16.msra.mxu0 %v2231
  %3620 = vmatpush.bf16.msra.mxu0 %v2215
  %3621 = vmatpush.bf16.msra.mxu0 %v2199
  %3622 = vmatpush.bf16.msra.mxu0 %v2183
  %3623 = vmatpush.bf16.msra.mxu0 %v2167
  %3624 = vmatpush.bf16.msra.mxu0 %v2151
  %3625 = vmatpush.bf16.msra.mxu0 %v2135
  %3626 = vmatmul.bf16.gmra.mxu0 %v582
  %v3627 = vpop.f32.mrf.mxu0
  %v3628 = vadd.f32 %v553, %v3627
  %v3629 = vpop.f32.mrf.mxu0
  %3630 = vdwg.mxu0
  %3631 = vmatpush.bf16.msra.mxu0 %v2375
  %3632 = vmatpush.bf16.msra.mxu0 %v2359
  %3633 = vmatpush.bf16.msra.mxu0 %v2343
  %3634 = vmatpush.bf16.msra.mxu0 %v2327
  %3635 = vmatpush.bf16.msra.mxu0 %v2311
  %3636 = vmatpush.bf16.msra.mxu0 %v2295
  %3637 = vmatpush.bf16.msra.mxu0 %v2279
  %3638 = vmatpush.bf16.msra.mxu0 %v2263
  %3639 = vmatmul.bf16.gmra.mxu0 %v583
  %v3640 = vpop.f32.mrf.mxu0
  %v3641 = vadd.f32 %v3628, %v3640
  %v3642 = vpop.f32.mrf.mxu0
  %3643 = vdwg.mxu0
  %3644 = vmatpush.bf16.msra.mxu0 %v2503
  %3645 = vmatpush.bf16.msra.mxu0 %v2487
  %3646 = vmatpush.bf16.msra.mxu0 %v2471
  %3647 = vmatpush.bf16.msra.mxu0 %v2455
  %3648 = vmatpush.bf16.msra.mxu0 %v2439
  %3649 = vmatpush.bf16.msra.mxu0 %v2423
  %3650 = vmatpush.bf16.msra.mxu0 %v2407
  %3651 = vmatpush.bf16.msra.mxu0 %v2391
  %3652 = vmatmul.bf16.gmra.mxu0 %v584
  %v3653 = vpop.f32.mrf.mxu0
  %v3654 = vadd.f32 %v3641, %v3653
  %v3655 = vpop.f32.mrf.mxu0
  %3656 = vdwg.mxu0
  %3657 = vmatpush.bf16.msra.mxu0 %v2631
  %3658 = vmatpush.bf16.msra.mxu0 %v2615
  %3659 = vmatpush.bf16.msra.mxu0 %v2599
  %3660 = vmatpush.bf16.msra.mxu0 %v2583
  %3661 = vmatpush.bf16.msra.mxu0 %v2567
  %3662 = vmatpush.bf16.msra.mxu0 %v2551
  %3663 = vmatpush.bf16.msra.mxu0 %v2535
  %3664 = vmatpush.bf16.msra.mxu0 %v2519
  %3665 = vmatmul.bf16.gmra.mxu0 %v585
  %v3666 = vpop.f32.mrf.mxu0
  %v3667 = vadd.f32 %v3654, %v3666
  %v3668 = vpop.f32.mrf.mxu0
  %3669 = vdwg.mxu0
  %3670 = vmatpush.bf16.msra.mxu0 %v2248
  %3671 = vmatpush.bf16.msra.mxu0 %v2232
  %3672 = vmatpush.bf16.msra.mxu0 %v2216
  %3673 = vmatpush.bf16.msra.mxu0 %v2200
  %3674 = vmatpush.bf16.msra.mxu0 %v2184
  %3675 = vmatpush.bf16.msra.mxu0 %v2168
  %3676 = vmatpush.bf16.msra.mxu0 %v2152
  %3677 = vmatpush.bf16.msra.mxu0 %v2136
  %3678 = vmatmul.bf16.gmra.mxu0 %v582
  %v3679 = vpop.f32.mrf.mxu0
  %v3680 = vadd.f32 %v554, %v3679
  %v3681 = vpop.f32.mrf.mxu0
  %3682 = vdwg.mxu0
  %3683 = vmatpush.bf16.msra.mxu0 %v2376
  %3684 = vmatpush.bf16.msra.mxu0 %v2360
  %3685 = vmatpush.bf16.msra.mxu0 %v2344
  %3686 = vmatpush.bf16.msra.mxu0 %v2328
  %3687 = vmatpush.bf16.msra.mxu0 %v2312
  %3688 = vmatpush.bf16.msra.mxu0 %v2296
  %3689 = vmatpush.bf16.msra.mxu0 %v2280
  %3690 = vmatpush.bf16.msra.mxu0 %v2264
  %3691 = vmatmul.bf16.gmra.mxu0 %v583
  %v3692 = vpop.f32.mrf.mxu0
  %v3693 = vadd.f32 %v3680, %v3692
  %v3694 = vpop.f32.mrf.mxu0
  %3695 = vdwg.mxu0
  %3696 = vmatpush.bf16.msra.mxu0 %v2504
  %3697 = vmatpush.bf16.msra.mxu0 %v2488
  %3698 = vmatpush.bf16.msra.mxu0 %v2472
  %3699 = vmatpush.bf16.msra.mxu0 %v2456
  %3700 = vmatpush.bf16.msra.mxu0 %v2440
  %3701 = vmatpush.bf16.msra.mxu0 %v2424
  %3702 = vmatpush.bf16.msra.mxu0 %v2408
  %3703 = vmatpush.bf16.msra.mxu0 %v2392
  %3704 = vmatmul.bf16.gmra.mxu0 %v584
  %v3705 = vpop.f32.mrf.mxu0
  %v3706 = vadd.f32 %v3693, %v3705
  %v3707 = vpop.f32.mrf.mxu0
  %3708 = vdwg.mxu0
  %3709 = vmatpush.bf16.msra.mxu0 %v2632
  %3710 = vmatpush.bf16.msra.mxu0 %v2616
  %3711 = vmatpush.bf16.msra.mxu0 %v2600
  %3712 = vmatpush.bf16.msra.mxu0 %v2584
  %3713 = vmatpush.bf16.msra.mxu0 %v2568
  %3714 = vmatpush.bf16.msra.mxu0 %v2552
  %3715 = vmatpush.bf16.msra.mxu0 %v2536
  %3716 = vmatpush.bf16.msra.mxu0 %v2520
  %3717 = vmatmul.bf16.gmra.mxu0 %v585
  %v3718 = vpop.f32.mrf.mxu0
  %v3719 = vadd.f32 %v3706, %v3718
  %v3720 = vpop.f32.mrf.mxu0
  %3721 = vdwg.mxu0
  %3722 = vmatpush.bf16.msra.mxu0 %v2249
  %3723 = vmatpush.bf16.msra.mxu0 %v2233
  %3724 = vmatpush.bf16.msra.mxu0 %v2217
  %3725 = vmatpush.bf16.msra.mxu0 %v2201
  %3726 = vmatpush.bf16.msra.mxu0 %v2185
  %3727 = vmatpush.bf16.msra.mxu0 %v2169
  %3728 = vmatpush.bf16.msra.mxu0 %v2153
  %3729 = vmatpush.bf16.msra.mxu0 %v2137
  %3730 = vmatmul.bf16.gmra.mxu0 %v582
  %v3731 = vpop.f32.mrf.mxu0
  %v3732 = vadd.f32 %v555, %v3731
  %v3733 = vpop.f32.mrf.mxu0
  %3734 = vdwg.mxu0
  %3735 = vmatpush.bf16.msra.mxu0 %v2377
  %3736 = vmatpush.bf16.msra.mxu0 %v2361
  %3737 = vmatpush.bf16.msra.mxu0 %v2345
  %3738 = vmatpush.bf16.msra.mxu0 %v2329
  %3739 = vmatpush.bf16.msra.mxu0 %v2313
  %3740 = vmatpush.bf16.msra.mxu0 %v2297
  %3741 = vmatpush.bf16.msra.mxu0 %v2281
  %3742 = vmatpush.bf16.msra.mxu0 %v2265
  %3743 = vmatmul.bf16.gmra.mxu0 %v583
  %v3744 = vpop.f32.mrf.mxu0
  %v3745 = vadd.f32 %v3732, %v3744
  %v3746 = vpop.f32.mrf.mxu0
  %3747 = vdwg.mxu0
  %3748 = vmatpush.bf16.msra.mxu0 %v2505
  %3749 = vmatpush.bf16.msra.mxu0 %v2489
  %3750 = vmatpush.bf16.msra.mxu0 %v2473
  %3751 = vmatpush.bf16.msra.mxu0 %v2457
  %3752 = vmatpush.bf16.msra.mxu0 %v2441
  %3753 = vmatpush.bf16.msra.mxu0 %v2425
  %3754 = vmatpush.bf16.msra.mxu0 %v2409
  %3755 = vmatpush.bf16.msra.mxu0 %v2393
  %3756 = vmatmul.bf16.gmra.mxu0 %v584
  %v3757 = vpop.f32.mrf.mxu0
  %v3758 = vadd.f32 %v3745, %v3757
  %v3759 = vpop.f32.mrf.mxu0
  %3760 = vdwg.mxu0
  %3761 = vmatpush.bf16.msra.mxu0 %v2633
  %3762 = vmatpush.bf16.msra.mxu0 %v2617
  %3763 = vmatpush.bf16.msra.mxu0 %v2601
  %3764 = vmatpush.bf16.msra.mxu0 %v2585
  %3765 = vmatpush.bf16.msra.mxu0 %v2569
  %3766 = vmatpush.bf16.msra.mxu0 %v2553
  %3767 = vmatpush.bf16.msra.mxu0 %v2537
  %3768 = vmatpush.bf16.msra.mxu0 %v2521
  %3769 = vmatmul.bf16.gmra.mxu0 %v585
  %v3770 = vpop.f32.mrf.mxu0
  %v3771 = vadd.f32 %v3758, %v3770
  %v3772 = vpop.f32.mrf.mxu0
  %3773 = vdwg.mxu0
  %3774 = vmatpush.bf16.msra.mxu0 %v2250
  %3775 = vmatpush.bf16.msra.mxu0 %v2234
  %3776 = vmatpush.bf16.msra.mxu0 %v2218
  %3777 = vmatpush.bf16.msra.mxu0 %v2202
  %3778 = vmatpush.bf16.msra.mxu0 %v2186
  %3779 = vmatpush.bf16.msra.mxu0 %v2170
  %3780 = vmatpush.bf16.msra.mxu0 %v2154
  %3781 = vmatpush.bf16.msra.mxu0 %v2138
  %3782 = vmatmul.bf16.gmra.mxu0 %v582
  %v3783 = vpop.f32.mrf.mxu0
  %v3784 = vadd.f32 %v556, %v3783
  %v3785 = vpop.f32.mrf.mxu0
  %3786 = vdwg.mxu0
  %3787 = vmatpush.bf16.msra.mxu0 %v2378
  %3788 = vmatpush.bf16.msra.mxu0 %v2362
  %3789 = vmatpush.bf16.msra.mxu0 %v2346
  %3790 = vmatpush.bf16.msra.mxu0 %v2330
  %3791 = vmatpush.bf16.msra.mxu0 %v2314
  %3792 = vmatpush.bf16.msra.mxu0 %v2298
  %3793 = vmatpush.bf16.msra.mxu0 %v2282
  %3794 = vmatpush.bf16.msra.mxu0 %v2266
  %3795 = vmatmul.bf16.gmra.mxu0 %v583
  %v3796 = vpop.f32.mrf.mxu0
  %v3797 = vadd.f32 %v3784, %v3796
  %v3798 = vpop.f32.mrf.mxu0
  %3799 = vdwg.mxu0
  %3800 = vmatpush.bf16.msra.mxu0 %v2506
  %3801 = vmatpush.bf16.msra.mxu0 %v2490
  %3802 = vmatpush.bf16.msra.mxu0 %v2474
  %3803 = vmatpush.bf16.msra.mxu0 %v2458
  %3804 = vmatpush.bf16.msra.mxu0 %v2442
  %3805 = vmatpush.bf16.msra.mxu0 %v2426
  %3806 = vmatpush.bf16.msra.mxu0 %v2410
  %3807 = vmatpush.bf16.msra.mxu0 %v2394
  %3808 = vmatmul.bf16.gmra.mxu0 %v584
  %v3809 = vpop.f32.mrf.mxu0
  %v3810 = vadd.f32 %v3797, %v3809
  %v3811 = vpop.f32.mrf.mxu0
  %3812 = vdwg.mxu0
  %3813 = vmatpush.bf16.msra.mxu0 %v2634
  %3814 = vmatpush.bf16.msra.mxu0 %v2618
  %3815 = vmatpush.bf16.msra.mxu0 %v2602
  %3816 = vmatpush.bf16.msra.mxu0 %v2586
  %3817 = vmatpush.bf16.msra.mxu0 %v2570
  %3818 = vmatpush.bf16.msra.mxu0 %v2554
  %3819 = vmatpush.bf16.msra.mxu0 %v2538
  %3820 = vmatpush.bf16.msra.mxu0 %v2522
  %3821 = vmatmul.bf16.gmra.mxu0 %v585
  %v3822 = vpop.f32.mrf.mxu0
  %v3823 = vadd.f32 %v3810, %v3822
  %v3824 = vpop.f32.mrf.mxu0
  %3825 = vdwg.mxu0
  %3826 = vmatpush.bf16.msra.mxu0 %v2251
  %3827 = vmatpush.bf16.msra.mxu0 %v2235
  %3828 = vmatpush.bf16.msra.mxu0 %v2219
  %3829 = vmatpush.bf16.msra.mxu0 %v2203
  %3830 = vmatpush.bf16.msra.mxu0 %v2187
  %3831 = vmatpush.bf16.msra.mxu0 %v2171
  %3832 = vmatpush.bf16.msra.mxu0 %v2155
  %3833 = vmatpush.bf16.msra.mxu0 %v2139
  %3834 = vmatmul.bf16.gmra.mxu0 %v582
  %v3835 = vpop.f32.mrf.mxu0
  %v3836 = vadd.f32 %v557, %v3835
  %v3837 = vpop.f32.mrf.mxu0
  %3838 = vdwg.mxu0
  %3839 = vmatpush.bf16.msra.mxu0 %v2379
  %3840 = vmatpush.bf16.msra.mxu0 %v2363
  %3841 = vmatpush.bf16.msra.mxu0 %v2347
  %3842 = vmatpush.bf16.msra.mxu0 %v2331
  %3843 = vmatpush.bf16.msra.mxu0 %v2315
  %3844 = vmatpush.bf16.msra.mxu0 %v2299
  %3845 = vmatpush.bf16.msra.mxu0 %v2283
  %3846 = vmatpush.bf16.msra.mxu0 %v2267
  %3847 = vmatmul.bf16.gmra.mxu0 %v583
  %v3848 = vpop.f32.mrf.mxu0
  %v3849 = vadd.f32 %v3836, %v3848
  %v3850 = vpop.f32.mrf.mxu0
  %3851 = vdwg.mxu0
  %3852 = vmatpush.bf16.msra.mxu0 %v2507
  %3853 = vmatpush.bf16.msra.mxu0 %v2491
  %3854 = vmatpush.bf16.msra.mxu0 %v2475
  %3855 = vmatpush.bf16.msra.mxu0 %v2459
  %3856 = vmatpush.bf16.msra.mxu0 %v2443
  %3857 = vmatpush.bf16.msra.mxu0 %v2427
  %3858 = vmatpush.bf16.msra.mxu0 %v2411
  %3859 = vmatpush.bf16.msra.mxu0 %v2395
  %3860 = vmatmul.bf16.gmra.mxu0 %v584
  %v3861 = vpop.f32.mrf.mxu0
  %v3862 = vadd.f32 %v3849, %v3861
  %v3863 = vpop.f32.mrf.mxu0
  %3864 = vdwg.mxu0
  %3865 = vmatpush.bf16.msra.mxu0 %v2635
  %3866 = vmatpush.bf16.msra.mxu0 %v2619
  %3867 = vmatpush.bf16.msra.mxu0 %v2603
  %3868 = vmatpush.bf16.msra.mxu0 %v2587
  %3869 = vmatpush.bf16.msra.mxu0 %v2571
  %3870 = vmatpush.bf16.msra.mxu0 %v2555
  %3871 = vmatpush.bf16.msra.mxu0 %v2539
  %3872 = vmatpush.bf16.msra.mxu0 %v2523
  %3873 = vmatmul.bf16.gmra.mxu0 %v585
  %v3874 = vpop.f32.mrf.mxu0
  %v3875 = vadd.f32 %v3862, %v3874
  %v3876 = vpop.f32.mrf.mxu0
  %3877 = vdwg.mxu0
  %3878 = vmatpush.bf16.msra.mxu0 %v2252
  %3879 = vmatpush.bf16.msra.mxu0 %v2236
  %3880 = vmatpush.bf16.msra.mxu0 %v2220
  %3881 = vmatpush.bf16.msra.mxu0 %v2204
  %3882 = vmatpush.bf16.msra.mxu0 %v2188
  %3883 = vmatpush.bf16.msra.mxu0 %v2172
  %3884 = vmatpush.bf16.msra.mxu0 %v2156
  %3885 = vmatpush.bf16.msra.mxu0 %v2140
  %3886 = vmatmul.bf16.gmra.mxu0 %v582
  %v3887 = vpop.f32.mrf.mxu0
  %v3888 = vadd.f32 %v558, %v3887
  %v3889 = vpop.f32.mrf.mxu0
  %3890 = vdwg.mxu0
  %3891 = vmatpush.bf16.msra.mxu0 %v2380
  %3892 = vmatpush.bf16.msra.mxu0 %v2364
  %3893 = vmatpush.bf16.msra.mxu0 %v2348
  %3894 = vmatpush.bf16.msra.mxu0 %v2332
  %3895 = vmatpush.bf16.msra.mxu0 %v2316
  %3896 = vmatpush.bf16.msra.mxu0 %v2300
  %3897 = vmatpush.bf16.msra.mxu0 %v2284
  %3898 = vmatpush.bf16.msra.mxu0 %v2268
  %3899 = vmatmul.bf16.gmra.mxu0 %v583
  %v3900 = vpop.f32.mrf.mxu0
  %v3901 = vadd.f32 %v3888, %v3900
  %v3902 = vpop.f32.mrf.mxu0
  %3903 = vdwg.mxu0
  %3904 = vmatpush.bf16.msra.mxu0 %v2508
  %3905 = vmatpush.bf16.msra.mxu0 %v2492
  %3906 = vmatpush.bf16.msra.mxu0 %v2476
  %3907 = vmatpush.bf16.msra.mxu0 %v2460
  %3908 = vmatpush.bf16.msra.mxu0 %v2444
  %3909 = vmatpush.bf16.msra.mxu0 %v2428
  %3910 = vmatpush.bf16.msra.mxu0 %v2412
  %3911 = vmatpush.bf16.msra.mxu0 %v2396
  %3912 = vmatmul.bf16.gmra.mxu0 %v584
  %v3913 = vpop.f32.mrf.mxu0
  %v3914 = vadd.f32 %v3901, %v3913
  %v3915 = vpop.f32.mrf.mxu0
  %3916 = vdwg.mxu0
  %3917 = vmatpush.bf16.msra.mxu0 %v2636
  %3918 = vmatpush.bf16.msra.mxu0 %v2620
  %3919 = vmatpush.bf16.msra.mxu0 %v2604
  %3920 = vmatpush.bf16.msra.mxu0 %v2588
  %3921 = vmatpush.bf16.msra.mxu0 %v2572
  %3922 = vmatpush.bf16.msra.mxu0 %v2556
  %3923 = vmatpush.bf16.msra.mxu0 %v2540
  %3924 = vmatpush.bf16.msra.mxu0 %v2524
  %3925 = vmatmul.bf16.gmra.mxu0 %v585
  %v3926 = vpop.f32.mrf.mxu0
  %v3927 = vadd.f32 %v3914, %v3926
  %v3928 = vpop.f32.mrf.mxu0
  %3929 = vdwg.mxu0
  %3930 = vmatpush.bf16.msra.mxu0 %v2253
  %3931 = vmatpush.bf16.msra.mxu0 %v2237
  %3932 = vmatpush.bf16.msra.mxu0 %v2221
  %3933 = vmatpush.bf16.msra.mxu0 %v2205
  %3934 = vmatpush.bf16.msra.mxu0 %v2189
  %3935 = vmatpush.bf16.msra.mxu0 %v2173
  %3936 = vmatpush.bf16.msra.mxu0 %v2157
  %3937 = vmatpush.bf16.msra.mxu0 %v2141
  %3938 = vmatmul.bf16.gmra.mxu0 %v582
  %v3939 = vpop.f32.mrf.mxu0
  %v3940 = vadd.f32 %v559, %v3939
  %v3941 = vpop.f32.mrf.mxu0
  %3942 = vdwg.mxu0
  %3943 = vmatpush.bf16.msra.mxu0 %v2381
  %3944 = vmatpush.bf16.msra.mxu0 %v2365
  %3945 = vmatpush.bf16.msra.mxu0 %v2349
  %3946 = vmatpush.bf16.msra.mxu0 %v2333
  %3947 = vmatpush.bf16.msra.mxu0 %v2317
  %3948 = vmatpush.bf16.msra.mxu0 %v2301
  %3949 = vmatpush.bf16.msra.mxu0 %v2285
  %3950 = vmatpush.bf16.msra.mxu0 %v2269
  %3951 = vmatmul.bf16.gmra.mxu0 %v583
  %v3952 = vpop.f32.mrf.mxu0
  %v3953 = vadd.f32 %v3940, %v3952
  %v3954 = vpop.f32.mrf.mxu0
  %3955 = vdwg.mxu0
  %3956 = vmatpush.bf16.msra.mxu0 %v2509
  %3957 = vmatpush.bf16.msra.mxu0 %v2493
  %3958 = vmatpush.bf16.msra.mxu0 %v2477
  %3959 = vmatpush.bf16.msra.mxu0 %v2461
  %3960 = vmatpush.bf16.msra.mxu0 %v2445
  %3961 = vmatpush.bf16.msra.mxu0 %v2429
  %3962 = vmatpush.bf16.msra.mxu0 %v2413
  %3963 = vmatpush.bf16.msra.mxu0 %v2397
  %3964 = vmatmul.bf16.gmra.mxu0 %v584
  %v3965 = vpop.f32.mrf.mxu0
  %v3966 = vadd.f32 %v3953, %v3965
  %v3967 = vpop.f32.mrf.mxu0
  %3968 = vdwg.mxu0
  %3969 = vmatpush.bf16.msra.mxu0 %v2637
  %3970 = vmatpush.bf16.msra.mxu0 %v2621
  %3971 = vmatpush.bf16.msra.mxu0 %v2605
  %3972 = vmatpush.bf16.msra.mxu0 %v2589
  %3973 = vmatpush.bf16.msra.mxu0 %v2573
  %3974 = vmatpush.bf16.msra.mxu0 %v2557
  %3975 = vmatpush.bf16.msra.mxu0 %v2541
  %3976 = vmatpush.bf16.msra.mxu0 %v2525
  %3977 = vmatmul.bf16.gmra.mxu0 %v585
  %v3978 = vpop.f32.mrf.mxu0
  %v3979 = vadd.f32 %v3966, %v3978
  %v3980 = vpop.f32.mrf.mxu0
  %3981 = vdwg.mxu0
  %v3982 = vmax.f32 %v3199, 0.0
  %v3983 = vmax.f32 %v3251, 0.0
  %v3984 = vmax.f32 %v3303, 0.0
  %v3985 = vmax.f32 %v3355, 0.0
  %v3986 = vmax.f32 %v3407, 0.0
  %v3987 = vmax.f32 %v3459, 0.0
  %v3988 = vmax.f32 %v3511, 0.0
  %v3989 = vmax.f32 %v3563, 0.0
  %v3990 = vmax.f32 %v3615, 0.0
  %v3991 = vmax.f32 %v3667, 0.0
  %v3992 = vmax.f32 %v3719, 0.0
  %v3993 = vmax.f32 %v3771, 0.0
  %v3994 = vmax.f32 %v3823, 0.0
  %v3995 = vmax.f32 %v3875, 0.0
  %v3996 = vmax.f32 %v3927, 0.0
  %v3997 = vmax.f32 %v3979, 0.0
  %v3998 = vpack.c.bf16 %v3982, %v3982
  %v3999 = vpack.c.bf16 %v3983, %v3983
  %v4000 = vpack.c.bf16 %v3984, %v3984
  %v4001 = vpack.c.bf16 %v3985, %v3985
  %v4002 = vpack.c.bf16 %v3986, %v3986
  %v4003 = vpack.c.bf16 %v3987, %v3987
  %v4004 = vpack.c.bf16 %v3988, %v3988
  %v4005 = vpack.c.bf16 %v3989, %v3989
  %v4006 = vpack.c.bf16 %v3990, %v3990
  %v4007 = vpack.c.bf16 %v3991, %v3991
  %v4008 = vpack.c.bf16 %v3992, %v3992
  %v4009 = vpack.c.bf16 %v3993, %v3993
  %v4010 = vpack.c.bf16 %v3994, %v3994
  %v4011 = vpack.c.bf16 %v3995, %v3995
  %v4012 = vpack.c.bf16 %v3996, %v3996
  %v4013 = vpack.c.bf16 %v3997, %v3997
  %v4014 = vld [vmem:[%s3] sm:$0xff]
  %v4015 = vld [vmem:[%s3 + $0x8] sm:$0xff]
  %v4016 = vld [vmem:[%s3 + $0x10] sm:$0xff]
  %v4017 = vld [vmem:[%s3 + $0x18] sm:$0xff]
  %v4018 = vld [vmem:[%s3 + $0x20] sm:$0xff]
  %v4019 = vld [vmem:[%s3 + $0x28] sm:$0xff]
  %v4020 = vld [vmem:[%s3 + $0x30] sm:$0xff]
  %v4021 = vld [vmem:[%s3 + $0x38] sm:$0xff]
  %v4022 = vld [vmem:[%s3 + $0x40] sm:$0xff]
  %v4023 = vld [vmem:[%s3 + $0x48] sm:$0xff]
  %v4024 = vld [vmem:[%s3 + $0x50] sm:$0xff]
  %v4025 = vld [vmem:[%s3 + $0x58] sm:$0xff]
  %v4026 = vld [vmem:[%s3 + $0x60] sm:$0xff]
  %v4027 = vld [vmem:[%s3 + $0x68] sm:$0xff]
  %v4028 = vld [vmem:[%s3 + $0x70] sm:$0xff]
  %v4029 = vld [vmem:[%s3 + $0x78] sm:$0xff]
  %v4030 = vld [vmem:[%s3 + $0x80] sm:$0xff]
  %v4031 = vld [vmem:[%s3 + $0x88] sm:$0xff]
  %v4032 = vld [vmem:[%s3 + $0x90] sm:$0xff]
  %v4033 = vld [vmem:[%s3 + $0x98] sm:$0xff]
  %v4034 = vld [vmem:[%s3 + $0xa0] sm:$0xff]
  %v4035 = vld [vmem:[%s3 + $0xa8] sm:$0xff]
  %v4036 = vld [vmem:[%s3 + $0xb0] sm:$0xff]
  %v4037 = vld [vmem:[%s3 + $0xb8] sm:$0xff]
  %v4038 = vld [vmem:[%s3 + $0xc0] sm:$0xff]
  %v4039 = vld [vmem:[%s3 + $0xc8] sm:$0xff]
  %v4040 = vld [vmem:[%s3 + $0xd0] sm:$0xff]
  %v4041 = vld [vmem:[%s3 + $0xd8] sm:$0xff]
  %v4042 = vld [vmem:[%s3 + $0xe0] sm:$0xff]
  %v4043 = vld [vmem:[%s3 + $0xe8] sm:$0xff]
  %v4044 = vld [vmem:[%s3 + $0xf0] sm:$0xff]
  %v4045 = vld [vmem:[%s3 + $0xf8] sm:$0xff]
  %v4046 = vld [vmem:[%s3 + $0x100] sm:$0xff]
  %v4047 = vld [vmem:[%s3 + $0x108] sm:$0xff]
  %v4048 = vld [vmem:[%s3 + $0x110] sm:$0xff]
  %v4049 = vld [vmem:[%s3 + $0x118] sm:$0xff]
  %v4050 = vld [vmem:[%s3 + $0x120] sm:$0xff]
  %v4051 = vld [vmem:[%s3 + $0x128] sm:$0xff]
  %v4052 = vld [vmem:[%s3 + $0x130] sm:$0xff]
  %v4053 = vld [vmem:[%s3 + $0x138] sm:$0xff]
  %v4054 = vld [vmem:[%s3 + $0x140] sm:$0xff]
  %v4055 = vld [vmem:[%s3 + $0x148] sm:$0xff]
  %v4056 = vld [vmem:[%s3 + $0x150] sm:$0xff]
  %v4057 = vld [vmem:[%s3 + $0x158] sm:$0xff]
  %v4058 = vld [vmem:[%s3 + $0x160] sm:$0xff]
  %v4059 = vld [vmem:[%s3 + $0x168] sm:$0xff]
  %v4060 = vld [vmem:[%s3 + $0x170] sm:$0xff]
  %v4061 = vld [vmem:[%s3 + $0x178] sm:$0xff]
  %v4062 = vld [vmem:[%s3 + $0x180] sm:$0xff]
  %v4063 = vld [vmem:[%s3 + $0x188] sm:$0xff]
  %v4064 = vld [vmem:[%s3 + $0x190] sm:$0xff]
  %v4065 = vld [vmem:[%s3 + $0x198] sm:$0xff]
  %v4066 = vld [vmem:[%s3 + $0x1a0] sm:$0xff]
  %v4067 = vld [vmem:[%s3 + $0x1a8] sm:$0xff]
  %v4068 = vld [vmem:[%s3 + $0x1b0] sm:$0xff]
  %v4069 = vld [vmem:[%s3 + $0x1b8] sm:$0xff]
  %v4070 = vld [vmem:[%s3 + $0x1c0] sm:$0xff]
  %v4071 = vld [vmem:[%s3 + $0x1c8] sm:$0xff]
  %v4072 = vld [vmem:[%s3 + $0x1d0] sm:$0xff]
  %v4073 = vld [vmem:[%s3 + $0x1d8] sm:$0xff]
  %v4074 = vld [vmem:[%s3 + $0x1e0] sm:$0xff]
  %v4075 = vld [vmem:[%s3 + $0x1e8] sm:$0xff]
  %v4076 = vld [vmem:[%s3 + $0x1f0] sm:$0xff]
  %v4077 = vld [vmem:[%s3 + $0x1f8] sm:$0xff]
  %v4078 = vld [vmem:[%s3 + $0x200] sm:$0xff]
  %v4079 = vld [vmem:[%s3 + $0x208] sm:$0xff]
  %v4080 = vld [vmem:[%s3 + $0x210] sm:$0xff]
  %v4081 = vld [vmem:[%s3 + $0x218] sm:$0xff]
  %v4082 = vld [vmem:[%s3 + $0x220] sm:$0xff]
  %v4083 = vld [vmem:[%s3 + $0x228] sm:$0xff]
  %v4084 = vld [vmem:[%s3 + $0x230] sm:$0xff]
  %v4085 = vld [vmem:[%s3 + $0x238] sm:$0xff]
  %v4086 = vld [vmem:[%s3 + $0x240] sm:$0xff]
  %v4087 = vld [vmem:[%s3 + $0x248] sm:$0xff]
  %v4088 = vld [vmem:[%s3 + $0x250] sm:$0xff]
  %v4089 = vld [vmem:[%s3 + $0x258] sm:$0xff]
  %v4090 = vld [vmem:[%s3 + $0x260] sm:$0xff]
  %v4091 = vld [vmem:[%s3 + $0x268] sm:$0xff]
  %v4092 = vld [vmem:[%s3 + $0x270] sm:$0xff]
  %v4093 = vld [vmem:[%s3 + $0x278] sm:$0xff]
  %v4094 = vld [vmem:[%s3 + $0x280] sm:$0xff]
  %v4095 = vld [vmem:[%s3 + $0x288] sm:$0xff]
  %v4096 = vld [vmem:[%s3 + $0x290] sm:$0xff]
  %v4097 = vld [vmem:[%s3 + $0x298] sm:$0xff]
  %v4098 = vld [vmem:[%s3 + $0x2a0] sm:$0xff]
  %v4099 = vld [vmem:[%s3 + $0x2a8] sm:$0xff]
  %v4100 = vld [vmem:[%s3 + $0x2b0] sm:$0xff]
  %v4101 = vld [vmem:[%s3 + $0x2b8] sm:$0xff]
  %v4102 = vld [vmem:[%s3 + $0x2c0] sm:$0xff]
  %v4103 = vld [vmem:[%s3 + $0x2c8] sm:$0xff]
  %v4104 = vld [vmem:[%s3 + $0x2d0] sm:$0xff]
  %v4105 = vld [vmem:[%s3 + $0x2d8] sm:$0xff]
  %v4106 = vld [vmem:[%s3 + $0x2e0] sm:$0xff]
  %v4107 = vld [vmem:[%s3 + $0x2e8] sm:$0xff]
  %v4108 = vld [vmem:[%s3 + $0x2f0] sm:$0xff]
  %v4109 = vld [vmem:[%s3 + $0x2f8] sm:$0xff]
  %v4110 = vld [vmem:[%s3 + $0x300] sm:$0xff]
  %v4111 = vld [vmem:[%s3 + $0x308] sm:$0xff]
  %v4112 = vld [vmem:[%s3 + $0x310] sm:$0xff]
  %v4113 = vld [vmem:[%s3 + $0x318] sm:$0xff]
  %v4114 = vld [vmem:[%s3 + $0x320] sm:$0xff]
  %v4115 = vld [vmem:[%s3 + $0x328] sm:$0xff]
  %v4116 = vld [vmem:[%s3 + $0x330] sm:$0xff]
  %v4117 = vld [vmem:[%s3 + $0x338] sm:$0xff]
  %v4118 = vld [vmem:[%s3 + $0x340] sm:$0xff]
  %v4119 = vld [vmem:[%s3 + $0x348] sm:$0xff]
  %v4120 = vld [vmem:[%s3 + $0x350] sm:$0xff]
  %v4121 = vld [vmem:[%s3 + $0x358] sm:$0xff]
  %v4122 = vld [vmem:[%s3 + $0x360] sm:$0xff]
  %v4123 = vld [vmem:[%s3 + $0x368] sm:$0xff]
  %v4124 = vld [vmem:[%s3 + $0x370] sm:$0xff]
  %v4125 = vld [vmem:[%s3 + $0x378] sm:$0xff]
  %v4126 = vld [vmem:[%s3 + $0x380] sm:$0xff]
  %v4127 = vld [vmem:[%s3 + $0x388] sm:$0xff]
  %v4128 = vld [vmem:[%s3 + $0x390] sm:$0xff]
  %v4129 = vld [vmem:[%s3 + $0x398] sm:$0xff]
  %v4130 = vld [vmem:[%s3 + $0x3a0] sm:$0xff]
  %v4131 = vld [vmem:[%s3 + $0x3a8] sm:$0xff]
  %v4132 = vld [vmem:[%s3 + $0x3b0] sm:$0xff]
  %v4133 = vld [vmem:[%s3 + $0x3b8] sm:$0xff]
  %v4134 = vld [vmem:[%s3 + $0x3c0] sm:$0xff]
  %v4135 = vld [vmem:[%s3 + $0x3c8] sm:$0xff]
  %v4136 = vld [vmem:[%s3 + $0x3d0] sm:$0xff]
  %v4137 = vld [vmem:[%s3 + $0x3d8] sm:$0xff]
  %v4138 = vld [vmem:[%s3 + $0x3e0] sm:$0xff]
  %v4139 = vld [vmem:[%s3 + $0x3e8] sm:$0xff]
  %v4140 = vld [vmem:[%s3 + $0x3f0] sm:$0xff]
  %v4141 = vld [vmem:[%s3 + $0x3f8] sm:$0xff]
  %v4142 = vld [vmem:[%s3 + $0x400] sm:$0xff]
  %v4143 = vld [vmem:[%s3 + $0x408] sm:$0xff]
  %v4144 = vld [vmem:[%s3 + $0x410] sm:$0xff]
  %v4145 = vld [vmem:[%s3 + $0x418] sm:$0xff]
  %v4146 = vld [vmem:[%s3 + $0x420] sm:$0xff]
  %v4147 = vld [vmem:[%s3 + $0x428] sm:$0xff]
  %v4148 = vld [vmem:[%s3 + $0x430] sm:$0xff]
  %v4149 = vld [vmem:[%s3 + $0x438] sm:$0xff]
  %v4150 = vld [vmem:[%s3 + $0x440] sm:$0xff]
  %v4151 = vld [vmem:[%s3 + $0x448] sm:$0xff]
  %v4152 = vld [vmem:[%s3 + $0x450] sm:$0xff]
  %v4153 = vld [vmem:[%s3 + $0x458] sm:$0xff]
  %v4154 = vld [vmem:[%s3 + $0x460] sm:$0xff]
  %v4155 = vld [vmem:[%s3 + $0x468] sm:$0xff]
  %v4156 = vld [vmem:[%s3 + $0x470] sm:$0xff]
  %v4157 = vld [vmem:[%s3 + $0x478] sm:$0xff]
  %v4158 = vld [vmem:[%s3 + $0x480] sm:$0xff]
  %v4159 = vld [vmem:[%s3 + $0x488] sm:$0xff]
  %v4160 = vld [vmem:[%s3 + $0x490] sm:$0xff]
  %v4161 = vld [vmem:[%s3 + $0x498] sm:$0xff]
  %v4162 = vld [vmem:[%s3 + $0x4a0] sm:$0xff]
  %v4163 = vld [vmem:[%s3 + $0x4a8] sm:$0xff]
  %v4164 = vld [vmem:[%s3 + $0x4b0] sm:$0xff]
  %v4165 = vld [vmem:[%s3 + $0x4b8] sm:$0xff]
  %v4166 = vld [vmem:[%s3 + $0x4c0] sm:$0xff]
  %v4167 = vld [vmem:[%s3 + $0x4c8] sm:$0xff]
  %v4168 = vld [vmem:[%s3 + $0x4d0] sm:$0xff]
  %v4169 = vld [vmem:[%s3 + $0x4d8] sm:$0xff]
  %v4170 = vld [vmem:[%s3 + $0x4e0] sm:$0xff]
  %v4171 = vld [vmem:[%s3 + $0x4e8] sm:$0xff]
  %v4172 = vld [vmem:[%s3 + $0x4f0] sm:$0xff]
  %v4173 = vld [vmem:[%s3 + $0x4f8] sm:$0xff]
  %v4174 = vld [vmem:[%s3 + $0x500] sm:$0xff]
  %v4175 = vld [vmem:[%s3 + $0x508] sm:$0xff]
  %v4176 = vld [vmem:[%s3 + $0x510] sm:$0xff]
  %v4177 = vld [vmem:[%s3 + $0x518] sm:$0xff]
  %v4178 = vld [vmem:[%s3 + $0x520] sm:$0xff]
  %v4179 = vld [vmem:[%s3 + $0x528] sm:$0xff]
  %v4180 = vld [vmem:[%s3 + $0x530] sm:$0xff]
  %v4181 = vld [vmem:[%s3 + $0x538] sm:$0xff]
  %v4182 = vld [vmem:[%s3 + $0x540] sm:$0xff]
  %v4183 = vld [vmem:[%s3 + $0x548] sm:$0xff]
  %v4184 = vld [vmem:[%s3 + $0x550] sm:$0xff]
  %v4185 = vld [vmem:[%s3 + $0x558] sm:$0xff]
  %v4186 = vld [vmem:[%s3 + $0x560] sm:$0xff]
  %v4187 = vld [vmem:[%s3 + $0x568] sm:$0xff]
  %v4188 = vld [vmem:[%s3 + $0x570] sm:$0xff]
  %v4189 = vld [vmem:[%s3 + $0x578] sm:$0xff]
  %v4190 = vld [vmem:[%s3 + $0x580] sm:$0xff]
  %v4191 = vld [vmem:[%s3 + $0x588] sm:$0xff]
  %v4192 = vld [vmem:[%s3 + $0x590] sm:$0xff]
  %v4193 = vld [vmem:[%s3 + $0x598] sm:$0xff]
  %v4194 = vld [vmem:[%s3 + $0x5a0] sm:$0xff]
  %v4195 = vld [vmem:[%s3 + $0x5a8] sm:$0xff]
  %v4196 = vld [vmem:[%s3 + $0x5b0] sm:$0xff]
  %v4197 = vld [vmem:[%s3 + $0x5b8] sm:$0xff]
  %v4198 = vld [vmem:[%s3 + $0x5c0] sm:$0xff]
  %v4199 = vld [vmem:[%s3 + $0x5c8] sm:$0xff]
  %v4200 = vld [vmem:[%s3 + $0x5d0] sm:$0xff]
  %v4201 = vld [vmem:[%s3 + $0x5d8] sm:$0xff]
  %v4202 = vld [vmem:[%s3 + $0x5e0] sm:$0xff]
  %v4203 = vld [vmem:[%s3 + $0x5e8] sm:$0xff]
  %v4204 = vld [vmem:[%s3 + $0x5f0] sm:$0xff]
  %v4205 = vld [vmem:[%s3 + $0x5f8] sm:$0xff]
  %v4206 = vld [vmem:[%s3 + $0x600] sm:$0xff]
  %v4207 = vld [vmem:[%s3 + $0x608] sm:$0xff]
  %v4208 = vld [vmem:[%s3 + $0x610] sm:$0xff]
  %v4209 = vld [vmem:[%s3 + $0x618] sm:$0xff]
  %v4210 = vld [vmem:[%s3 + $0x620] sm:$0xff]
  %v4211 = vld [vmem:[%s3 + $0x628] sm:$0xff]
  %v4212 = vld [vmem:[%s3 + $0x630] sm:$0xff]
  %v4213 = vld [vmem:[%s3 + $0x638] sm:$0xff]
  %v4214 = vld [vmem:[%s3 + $0x640] sm:$0xff]
  %v4215 = vld [vmem:[%s3 + $0x648] sm:$0xff]
  %v4216 = vld [vmem:[%s3 + $0x650] sm:$0xff]
  %v4217 = vld [vmem:[%s3 + $0x658] sm:$0xff]
  %v4218 = vld [vmem:[%s3 + $0x660] sm:$0xff]
  %v4219 = vld [vmem:[%s3 + $0x668] sm:$0xff]
  %v4220 = vld [vmem:[%s3 + $0x670] sm:$0xff]
  %v4221 = vld [vmem:[%s3 + $0x678] sm:$0xff]
  %v4222 = vld [vmem:[%s3 + $0x680] sm:$0xff]
  %v4223 = vld [vmem:[%s3 + $0x688] sm:$0xff]
  %v4224 = vld [vmem:[%s3 + $0x690] sm:$0xff]
  %v4225 = vld [vmem:[%s3 + $0x698] sm:$0xff]
  %v4226 = vld [vmem:[%s3 + $0x6a0] sm:$0xff]
  %v4227 = vld [vmem:[%s3 + $0x6a8] sm:$0xff]
  %v4228 = vld [vmem:[%s3 + $0x6b0] sm:$0xff]
  %v4229 = vld [vmem:[%s3 + $0x6b8] sm:$0xff]
  %v4230 = vld [vmem:[%s3 + $0x6c0] sm:$0xff]
  %v4231 = vld [vmem:[%s3 + $0x6c8] sm:$0xff]
  %v4232 = vld [vmem:[%s3 + $0x6d0] sm:$0xff]
  %v4233 = vld [vmem:[%s3 + $0x6d8] sm:$0xff]
  %v4234 = vld [vmem:[%s3 + $0x6e0] sm:$0xff]
  %v4235 = vld [vmem:[%s3 + $0x6e8] sm:$0xff]
  %v4236 = vld [vmem:[%s3 + $0x6f0] sm:$0xff]
  %v4237 = vld [vmem:[%s3 + $0x6f8] sm:$0xff]
  %v4238 = vld [vmem:[%s3 + $0x700] sm:$0xff]
  %v4239 = vld [vmem:[%s3 + $0x708] sm:$0xff]
  %v4240 = vld [vmem:[%s3 + $0x710] sm:$0xff]
  %v4241 = vld [vmem:[%s3 + $0x718] sm:$0xff]
  %v4242 = vld [vmem:[%s3 + $0x720] sm:$0xff]
  %v4243 = vld [vmem:[%s3 + $0x728] sm:$0xff]
  %v4244 = vld [vmem:[%s3 + $0x730] sm:$0xff]
  %v4245 = vld [vmem:[%s3 + $0x738] sm:$0xff]
  %v4246 = vld [vmem:[%s3 + $0x740] sm:$0xff]
  %v4247 = vld [vmem:[%s3 + $0x748] sm:$0xff]
  %v4248 = vld [vmem:[%s3 + $0x750] sm:$0xff]
  %v4249 = vld [vmem:[%s3 + $0x758] sm:$0xff]
  %v4250 = vld [vmem:[%s3 + $0x760] sm:$0xff]
  %v4251 = vld [vmem:[%s3 + $0x768] sm:$0xff]
  %v4252 = vld [vmem:[%s3 + $0x770] sm:$0xff]
  %v4253 = vld [vmem:[%s3 + $0x778] sm:$0xff]
  %v4254 = vld [vmem:[%s3 + $0x780] sm:$0xff]
  %v4255 = vld [vmem:[%s3 + $0x788] sm:$0xff]
  %v4256 = vld [vmem:[%s3 + $0x790] sm:$0xff]
  %v4257 = vld [vmem:[%s3 + $0x798] sm:$0xff]
  %v4258 = vld [vmem:[%s3 + $0x7a0] sm:$0xff]
  %v4259 = vld [vmem:[%s3 + $0x7a8] sm:$0xff]
  %v4260 = vld [vmem:[%s3 + $0x7b0] sm:$0xff]
  %v4261 = vld [vmem:[%s3 + $0x7b8] sm:$0xff]
  %v4262 = vld [vmem:[%s3 + $0x7c0] sm:$0xff]
  %v4263 = vld [vmem:[%s3 + $0x7c8] sm:$0xff]
  %v4264 = vld [vmem:[%s3 + $0x7d0] sm:$0xff]
  %v4265 = vld [vmem:[%s3 + $0x7d8] sm:$0xff]
  %v4266 = vld [vmem:[%s3 + $0x7e0] sm:$0xff]
  %v4267 = vld [vmem:[%s3 + $0x7e8] sm:$0xff]
  %v4268 = vld [vmem:[%s3 + $0x7f0] sm:$0xff]
  %v4269 = vld [vmem:[%s3 + $0x7f8] sm:$0xff]
  %v4270 = vld [vmem:[%s3 + $0x800] sm:$0xff]
  %v4271 = vld [vmem:[%s3 + $0x808] sm:$0xff]
  %v4272 = vld [vmem:[%s3 + $0x810] sm:$0xff]
  %v4273 = vld [vmem:[%s3 + $0x818] sm:$0xff]
  %v4274 = vld [vmem:[%s3 + $0x820] sm:$0xff]
  %v4275 = vld [vmem:[%s3 + $0x828] sm:$0xff]
  %v4276 = vld [vmem:[%s3 + $0x830] sm:$0xff]
  %v4277 = vld [vmem:[%s3 + $0x838] sm:$0xff]
  %v4278 = vld [vmem:[%s3 + $0x840] sm:$0xff]
  %v4279 = vld [vmem:[%s3 + $0x848] sm:$0xff]
  %v4280 = vld [vmem:[%s3 + $0x850] sm:$0xff]
  %v4281 = vld [vmem:[%s3 + $0x858] sm:$0xff]
  %v4282 = vld [vmem:[%s3 + $0x860] sm:$0xff]
  %v4283 = vld [vmem:[%s3 + $0x868] sm:$0xff]
  %v4284 = vld [vmem:[%s3 + $0x870] sm:$0xff]
  %v4285 = vld [vmem:[%s3 + $0x878] sm:$0xff]
  %v4286 = vld [vmem:[%s3 + $0x880] sm:$0xff]
  %v4287 = vld [vmem:[%s3 + $0x888] sm:$0xff]
  %v4288 = vld [vmem:[%s3 + $0x890] sm:$0xff]
  %v4289 = vld [vmem:[%s3 + $0x898] sm:$0xff]
  %v4290 = vld [vmem:[%s3 + $0x8a0] sm:$0xff]
  %v4291 = vld [vmem:[%s3 + $0x8a8] sm:$0xff]
  %v4292 = vld [vmem:[%s3 + $0x8b0] sm:$0xff]
  %v4293 = vld [vmem:[%s3 + $0x8b8] sm:$0xff]
  %v4294 = vld [vmem:[%s3 + $0x8c0] sm:$0xff]
  %v4295 = vld [vmem:[%s3 + $0x8c8] sm:$0xff]
  %v4296 = vld [vmem:[%s3 + $0x8d0] sm:$0xff]
  %v4297 = vld [vmem:[%s3 + $0x8d8] sm:$0xff]
  %v4298 = vld [vmem:[%s3 + $0x8e0] sm:$0xff]
  %v4299 = vld [vmem:[%s3 + $0x8e8] sm:$0xff]
  %v4300 = vld [vmem:[%s3 + $0x8f0] sm:$0xff]
  %v4301 = vld [vmem:[%s3 + $0x8f8] sm:$0xff]
  %v4302 = vld [vmem:[%s3 + $0x900] sm:$0xff]
  %v4303 = vld [vmem:[%s3 + $0x908] sm:$0xff]
  %v4304 = vld [vmem:[%s3 + $0x910] sm:$0xff]
  %v4305 = vld [vmem:[%s3 + $0x918] sm:$0xff]
  %v4306 = vld [vmem:[%s3 + $0x920] sm:$0xff]
  %v4307 = vld [vmem:[%s3 + $0x928] sm:$0xff]
  %v4308 = vld [vmem:[%s3 + $0x930] sm:$0xff]
  %v4309 = vld [vmem:[%s3 + $0x938] sm:$0xff]
  %v4310 = vld [vmem:[%s3 + $0x940] sm:$0xff]
  %v4311 = vld [vmem:[%s3 + $0x948] sm:$0xff]
  %v4312 = vld [vmem:[%s3 + $0x950] sm:$0xff]
  %v4313 = vld [vmem:[%s3 + $0x958] sm:$0xff]
  %v4314 = vld [vmem:[%s3 + $0x960] sm:$0xff]
  %v4315 = vld [vmem:[%s3 + $0x968] sm:$0xff]
  %v4316 = vld [vmem:[%s3 + $0x970] sm:$0xff]
  %v4317 = vld [vmem:[%s3 + $0x978] sm:$0xff]
  %v4318 = vld [vmem:[%s3 + $0x980] sm:$0xff]
  %v4319 = vld [vmem:[%s3 + $0x988] sm:$0xff]
  %v4320 = vld [vmem:[%s3 + $0x990] sm:$0xff]
  %v4321 = vld [vmem:[%s3 + $0x998] sm:$0xff]
  %v4322 = vld [vmem:[%s3 + $0x9a0] sm:$0xff]
  %v4323 = vld [vmem:[%s3 + $0x9a8] sm:$0xff]
  %v4324 = vld [vmem:[%s3 + $0x9b0] sm:$0xff]
  %v4325 = vld [vmem:[%s3 + $0x9b8] sm:$0xff]
  %v4326 = vld [vmem:[%s3 + $0x9c0] sm:$0xff]
  %v4327 = vld [vmem:[%s3 + $0x9c8] sm:$0xff]
  %v4328 = vld [vmem:[%s3 + $0x9d0] sm:$0xff]
  %v4329 = vld [vmem:[%s3 + $0x9d8] sm:$0xff]
  %v4330 = vld [vmem:[%s3 + $0x9e0] sm:$0xff]
  %v4331 = vld [vmem:[%s3 + $0x9e8] sm:$0xff]
  %v4332 = vld [vmem:[%s3 + $0x9f0] sm:$0xff]
  %v4333 = vld [vmem:[%s3 + $0x9f8] sm:$0xff]
  %v4334 = vld [vmem:[%s3 + $0xa00] sm:$0xff]
  %v4335 = vld [vmem:[%s3 + $0xa08] sm:$0xff]
  %v4336 = vld [vmem:[%s3 + $0xa10] sm:$0xff]
  %v4337 = vld [vmem:[%s3 + $0xa18] sm:$0xff]
  %v4338 = vld [vmem:[%s3 + $0xa20] sm:$0xff]
  %v4339 = vld [vmem:[%s3 + $0xa28] sm:$0xff]
  %v4340 = vld [vmem:[%s3 + $0xa30] sm:$0xff]
  %v4341 = vld [vmem:[%s3 + $0xa38] sm:$0xff]
  %v4342 = vld [vmem:[%s3 + $0xa40] sm:$0xff]
  %v4343 = vld [vmem:[%s3 + $0xa48] sm:$0xff]
  %v4344 = vld [vmem:[%s3 + $0xa50] sm:$0xff]
  %v4345 = vld [vmem:[%s3 + $0xa58] sm:$0xff]
  %v4346 = vld [vmem:[%s3 + $0xa60] sm:$0xff]
  %v4347 = vld [vmem:[%s3 + $0xa68] sm:$0xff]
  %v4348 = vld [vmem:[%s3 + $0xa70] sm:$0xff]
  %v4349 = vld [vmem:[%s3 + $0xa78] sm:$0xff]
  %v4350 = vld [vmem:[%s3 + $0xa80] sm:$0xff]
  %v4351 = vld [vmem:[%s3 + $0xa88] sm:$0xff]
  %v4352 = vld [vmem:[%s3 + $0xa90] sm:$0xff]
  %v4353 = vld [vmem:[%s3 + $0xa98] sm:$0xff]
  %v4354 = vld [vmem:[%s3 + $0xaa0] sm:$0xff]
  %v4355 = vld [vmem:[%s3 + $0xaa8] sm:$0xff]
  %v4356 = vld [vmem:[%s3 + $0xab0] sm:$0xff]
  %v4357 = vld [vmem:[%s3 + $0xab8] sm:$0xff]
  %v4358 = vld [vmem:[%s3 + $0xac0] sm:$0xff]
  %v4359 = vld [vmem:[%s3 + $0xac8] sm:$0xff]
  %v4360 = vld [vmem:[%s3 + $0xad0] sm:$0xff]
  %v4361 = vld [vmem:[%s3 + $0xad8] sm:$0xff]
  %v4362 = vld [vmem:[%s3 + $0xae0] sm:$0xff]
  %v4363 = vld [vmem:[%s3 + $0xae8] sm:$0xff]
  %v4364 = vld [vmem:[%s3 + $0xaf0] sm:$0xff]
  %v4365 = vld [vmem:[%s3 + $0xaf8] sm:$0xff]
  %v4366 = vld [vmem:[%s3 + $0xb00] sm:$0xff]
  %v4367 = vld [vmem:[%s3 + $0xb08] sm:$0xff]
  %v4368 = vld [vmem:[%s3 + $0xb10] sm:$0xff]
  %v4369 = vld [vmem:[%s3 + $0xb18] sm:$0xff]
  %v4370 = vld [vmem:[%s3 + $0xb20] sm:$0xff]
  %v4371 = vld [vmem:[%s3 + $0xb28] sm:$0xff]
  %v4372 = vld [vmem:[%s3 + $0xb30] sm:$0xff]
  %v4373 = vld [vmem:[%s3 + $0xb38] sm:$0xff]
  %v4374 = vld [vmem:[%s3 + $0xb40] sm:$0xff]
  %v4375 = vld [vmem:[%s3 + $0xb48] sm:$0xff]
  %v4376 = vld [vmem:[%s3 + $0xb50] sm:$0xff]
  %v4377 = vld [vmem:[%s3 + $0xb58] sm:$0xff]
  %v4378 = vld [vmem:[%s3 + $0xb60] sm:$0xff]
  %v4379 = vld [vmem:[%s3 + $0xb68] sm:$0xff]
  %v4380 = vld [vmem:[%s3 + $0xb70] sm:$0xff]
  %v4381 = vld [vmem:[%s3 + $0xb78] sm:$0xff]
  %v4382 = vld [vmem:[%s3 + $0xb80] sm:$0xff]
  %v4383 = vld [vmem:[%s3 + $0xb88] sm:$0xff]
  %v4384 = vld [vmem:[%s3 + $0xb90] sm:$0xff]
  %v4385 = vld [vmem:[%s3 + $0xb98] sm:$0xff]
  %v4386 = vld [vmem:[%s3 + $0xba0] sm:$0xff]
  %v4387 = vld [vmem:[%s3 + $0xba8] sm:$0xff]
  %v4388 = vld [vmem:[%s3 + $0xbb0] sm:$0xff]
  %v4389 = vld [vmem:[%s3 + $0xbb8] sm:$0xff]
  %v4390 = vld [vmem:[%s3 + $0xbc0] sm:$0xff]
  %v4391 = vld [vmem:[%s3 + $0xbc8] sm:$0xff]
  %v4392 = vld [vmem:[%s3 + $0xbd0] sm:$0xff]
  %v4393 = vld [vmem:[%s3 + $0xbd8] sm:$0xff]
  %v4394 = vld [vmem:[%s3 + $0xbe0] sm:$0xff]
  %v4395 = vld [vmem:[%s3 + $0xbe8] sm:$0xff]
  %v4396 = vld [vmem:[%s3 + $0xbf0] sm:$0xff]
  %v4397 = vld [vmem:[%s3 + $0xbf8] sm:$0xff]
  %v4398 = vld [vmem:[%s3 + $0xc00] sm:$0xff]
  %v4399 = vld [vmem:[%s3 + $0xc08] sm:$0xff]
  %v4400 = vld [vmem:[%s3 + $0xc10] sm:$0xff]
  %v4401 = vld [vmem:[%s3 + $0xc18] sm:$0xff]
  %v4402 = vld [vmem:[%s3 + $0xc20] sm:$0xff]
  %v4403 = vld [vmem:[%s3 + $0xc28] sm:$0xff]
  %v4404 = vld [vmem:[%s3 + $0xc30] sm:$0xff]
  %v4405 = vld [vmem:[%s3 + $0xc38] sm:$0xff]
  %v4406 = vld [vmem:[%s3 + $0xc40] sm:$0xff]
  %v4407 = vld [vmem:[%s3 + $0xc48] sm:$0xff]
  %v4408 = vld [vmem:[%s3 + $0xc50] sm:$0xff]
  %v4409 = vld [vmem:[%s3 + $0xc58] sm:$0xff]
  %v4410 = vld [vmem:[%s3 + $0xc60] sm:$0xff]
  %v4411 = vld [vmem:[%s3 + $0xc68] sm:$0xff]
  %v4412 = vld [vmem:[%s3 + $0xc70] sm:$0xff]
  %v4413 = vld [vmem:[%s3 + $0xc78] sm:$0xff]
  %v4414 = vld [vmem:[%s3 + $0xc80] sm:$0xff]
  %v4415 = vld [vmem:[%s3 + $0xc88] sm:$0xff]
  %v4416 = vld [vmem:[%s3 + $0xc90] sm:$0xff]
  %v4417 = vld [vmem:[%s3 + $0xc98] sm:$0xff]
  %v4418 = vld [vmem:[%s3 + $0xca0] sm:$0xff]
  %v4419 = vld [vmem:[%s3 + $0xca8] sm:$0xff]
  %v4420 = vld [vmem:[%s3 + $0xcb0] sm:$0xff]
  %v4421 = vld [vmem:[%s3 + $0xcb8] sm:$0xff]
  %v4422 = vld [vmem:[%s3 + $0xcc0] sm:$0xff]
  %v4423 = vld [vmem:[%s3 + $0xcc8] sm:$0xff]
  %v4424 = vld [vmem:[%s3 + $0xcd0] sm:$0xff]
  %v4425 = vld [vmem:[%s3 + $0xcd8] sm:$0xff]
  %v4426 = vld [vmem:[%s3 + $0xce0] sm:$0xff]
  %v4427 = vld [vmem:[%s3 + $0xce8] sm:$0xff]
  %v4428 = vld [vmem:[%s3 + $0xcf0] sm:$0xff]
  %v4429 = vld [vmem:[%s3 + $0xcf8] sm:$0xff]
  %v4430 = vld [vmem:[%s3 + $0xd00] sm:$0xff]
  %v4431 = vld [vmem:[%s3 + $0xd08] sm:$0xff]
  %v4432 = vld [vmem:[%s3 + $0xd10] sm:$0xff]
  %v4433 = vld [vmem:[%s3 + $0xd18] sm:$0xff]
  %v4434 = vld [vmem:[%s3 + $0xd20] sm:$0xff]
  %v4435 = vld [vmem:[%s3 + $0xd28] sm:$0xff]
  %v4436 = vld [vmem:[%s3 + $0xd30] sm:$0xff]
  %v4437 = vld [vmem:[%s3 + $0xd38] sm:$0xff]
  %v4438 = vld [vmem:[%s3 + $0xd40] sm:$0xff]
  %v4439 = vld [vmem:[%s3 + $0xd48] sm:$0xff]
  %v4440 = vld [vmem:[%s3 + $0xd50] sm:$0xff]
  %v4441 = vld [vmem:[%s3 + $0xd58] sm:$0xff]
  %v4442 = vld [vmem:[%s3 + $0xd60] sm:$0xff]
  %v4443 = vld [vmem:[%s3 + $0xd68] sm:$0xff]
  %v4444 = vld [vmem:[%s3 + $0xd70] sm:$0xff]
  %v4445 = vld [vmem:[%s3 + $0xd78] sm:$0xff]
  %v4446 = vld [vmem:[%s3 + $0xd80] sm:$0xff]
  %v4447 = vld [vmem:[%s3 + $0xd88] sm:$0xff]
  %v4448 = vld [vmem:[%s3 + $0xd90] sm:$0xff]
  %v4449 = vld [vmem:[%s3 + $0xd98] sm:$0xff]
  %v4450 = vld [vmem:[%s3 + $0xda0] sm:$0xff]
  %v4451 = vld [vmem:[%s3 + $0xda8] sm:$0xff]
  %v4452 = vld [vmem:[%s3 + $0xdb0] sm:$0xff]
  %v4453 = vld [vmem:[%s3 + $0xdb8] sm:$0xff]
  %v4454 = vld [vmem:[%s3 + $0xdc0] sm:$0xff]
  %v4455 = vld [vmem:[%s3 + $0xdc8] sm:$0xff]
  %v4456 = vld [vmem:[%s3 + $0xdd0] sm:$0xff]
  %v4457 = vld [vmem:[%s3 + $0xdd8] sm:$0xff]
  %v4458 = vld [vmem:[%s3 + $0xde0] sm:$0xff]
  %v4459 = vld [vmem:[%s3 + $0xde8] sm:$0xff]
  %v4460 = vld [vmem:[%s3 + $0xdf0] sm:$0xff]
  %v4461 = vld [vmem:[%s3 + $0xdf8] sm:$0xff]
  %v4462 = vld [vmem:[%s3 + $0xe00] sm:$0xff]
  %v4463 = vld [vmem:[%s3 + $0xe08] sm:$0xff]
  %v4464 = vld [vmem:[%s3 + $0xe10] sm:$0xff]
  %v4465 = vld [vmem:[%s3 + $0xe18] sm:$0xff]
  %v4466 = vld [vmem:[%s3 + $0xe20] sm:$0xff]
  %v4467 = vld [vmem:[%s3 + $0xe28] sm:$0xff]
  %v4468 = vld [vmem:[%s3 + $0xe30] sm:$0xff]
  %v4469 = vld [vmem:[%s3 + $0xe38] sm:$0xff]
  %v4470 = vld [vmem:[%s3 + $0xe40] sm:$0xff]
  %v4471 = vld [vmem:[%s3 + $0xe48] sm:$0xff]
  %v4472 = vld [vmem:[%s3 + $0xe50] sm:$0xff]
  %v4473 = vld [vmem:[%s3 + $0xe58] sm:$0xff]
  %v4474 = vld [vmem:[%s3 + $0xe60] sm:$0xff]
  %v4475 = vld [vmem:[%s3 + $0xe68] sm:$0xff]
  %v4476 = vld [vmem:[%s3 + $0xe70] sm:$0xff]
  %v4477 = vld [vmem:[%s3 + $0xe78] sm:$0xff]
  %v4478 = vld [vmem:[%s3 + $0xe80] sm:$0xff]
  %v4479 = vld [vmem:[%s3 + $0xe88] sm:$0xff]
  %v4480 = vld [vmem:[%s3 + $0xe90] sm:$0xff]
  %v4481 = vld [vmem:[%s3 + $0xe98] sm:$0xff]
  %v4482 = vld [vmem:[%s3 + $0xea0] sm:$0xff]
  %v4483 = vld [vmem:[%s3 + $0xea8] sm:$0xff]
  %v4484 = vld [vmem:[%s3 + $0xeb0] sm:$0xff]
  %v4485 = vld [vmem:[%s3 + $0xeb8] sm:$0xff]
  %v4486 = vld [vmem:[%s3 + $0xec0] sm:$0xff]
  %v4487 = vld [vmem:[%s3 + $0xec8] sm:$0xff]
  %v4488 = vld [vmem:[%s3 + $0xed0] sm:$0xff]
  %v4489 = vld [vmem:[%s3 + $0xed8] sm:$0xff]
  %v4490 = vld [vmem:[%s3 + $0xee0] sm:$0xff]
  %v4491 = vld [vmem:[%s3 + $0xee8] sm:$0xff]
  %v4492 = vld [vmem:[%s3 + $0xef0] sm:$0xff]
  %v4493 = vld [vmem:[%s3 + $0xef8] sm:$0xff]
  %v4494 = vld [vmem:[%s3 + $0xf00] sm:$0xff]
  %v4495 = vld [vmem:[%s3 + $0xf08] sm:$0xff]
  %v4496 = vld [vmem:[%s3 + $0xf10] sm:$0xff]
  %v4497 = vld [vmem:[%s3 + $0xf18] sm:$0xff]
  %v4498 = vld [vmem:[%s3 + $0xf20] sm:$0xff]
  %v4499 = vld [vmem:[%s3 + $0xf28] sm:$0xff]
  %v4500 = vld [vmem:[%s3 + $0xf30] sm:$0xff]
  %v4501 = vld [vmem:[%s3 + $0xf38] sm:$0xff]
  %v4502 = vld [vmem:[%s3 + $0xf40] sm:$0xff]
  %v4503 = vld [vmem:[%s3 + $0xf48] sm:$0xff]
  %v4504 = vld [vmem:[%s3 + $0xf50] sm:$0xff]
  %v4505 = vld [vmem:[%s3 + $0xf58] sm:$0xff]
  %v4506 = vld [vmem:[%s3 + $0xf60] sm:$0xff]
  %v4507 = vld [vmem:[%s3 + $0xf68] sm:$0xff]
  %v4508 = vld [vmem:[%s3 + $0xf70] sm:$0xff]
  %v4509 = vld [vmem:[%s3 + $0xf78] sm:$0xff]
  %v4510 = vld [vmem:[%s3 + $0xf80] sm:$0xff]
  %v4511 = vld [vmem:[%s3 + $0xf88] sm:$0xff]
  %v4512 = vld [vmem:[%s3 + $0xf90] sm:$0xff]
  %v4513 = vld [vmem:[%s3 + $0xf98] sm:$0xff]
  %v4514 = vld [vmem:[%s3 + $0xfa0] sm:$0xff]
  %v4515 = vld [vmem:[%s3 + $0xfa8] sm:$0xff]
  %v4516 = vld [vmem:[%s3 + $0xfb0] sm:$0xff]
  %v4517 = vld [vmem:[%s3 + $0xfb8] sm:$0xff]
  %v4518 = vld [vmem:[%s3 + $0xfc0] sm:$0xff]
  %v4519 = vld [vmem:[%s3 + $0xfc8] sm:$0xff]
  %v4520 = vld [vmem:[%s3 + $0xfd0] sm:$0xff]
  %v4521 = vld [vmem:[%s3 + $0xfd8] sm:$0xff]
  %v4522 = vld [vmem:[%s3 + $0xfe0] sm:$0xff]
  %v4523 = vld [vmem:[%s3 + $0xfe8] sm:$0xff]
  %v4524 = vld [vmem:[%s3 + $0xff0] sm:$0xff]
  %v4525 = vld [vmem:[%s3 + $0xff8] sm:$0xff]
  %v4526 = vld [vmem:[%s4] sm:$0xf]
  %v4528 = vperm.slane %v4526, 0
  %v4529 = vperm.slane %v4526, 1
  %v4530 = vperm.slane %v4526, 2
  %v4531 = vperm.slane %v4526, 3
  %v5048 = vunpack.c.l.b16 %v4014
  %v5049 = vunpack.c.h.b16 %v4014
  %v5050 = vunpack.c.l.b16 %v4015
  %v5051 = vunpack.c.h.b16 %v4015
  %v5052 = vunpack.c.l.b16 %v4016
  %v5053 = vunpack.c.h.b16 %v4016
  %v5054 = vunpack.c.l.b16 %v4017
  %v5055 = vunpack.c.h.b16 %v4017
  %v5056 = vunpack.c.l.b16 %v4018
  %v5057 = vunpack.c.h.b16 %v4018
  %v5058 = vunpack.c.l.b16 %v4019
  %v5059 = vunpack.c.h.b16 %v4019
  %v5060 = vunpack.c.l.b16 %v4020
  %v5061 = vunpack.c.h.b16 %v4020
  %v5062 = vunpack.c.l.b16 %v4021
  %v5063 = vunpack.c.h.b16 %v4021
  %v5064 = vunpack.c.l.b16 %v4022
  %v5065 = vunpack.c.h.b16 %v4022
  %v5066 = vunpack.c.l.b16 %v4023
  %v5067 = vunpack.c.h.b16 %v4023
  %v5068 = vunpack.c.l.b16 %v4024
  %v5069 = vunpack.c.h.b16 %v4024
  %v5070 = vunpack.c.l.b16 %v4025
  %v5071 = vunpack.c.h.b16 %v4025
  %v5072 = vunpack.c.l.b16 %v4026
  %v5073 = vunpack.c.h.b16 %v4026
  %v5074 = vunpack.c.l.b16 %v4027
  %v5075 = vunpack.c.h.b16 %v4027
  %v5076 = vunpack.c.l.b16 %v4028
  %v5077 = vunpack.c.h.b16 %v4028
  %v5078 = vunpack.c.l.b16 %v4029
  %v5079 = vunpack.c.h.b16 %v4029
  %v5080 = vunpack.c.l.b16 %v4030
  %v5081 = vunpack.c.h.b16 %v4030
  %v5082 = vunpack.c.l.b16 %v4031
  %v5083 = vunpack.c.h.b16 %v4031
  %v5084 = vunpack.c.l.b16 %v4032
  %v5085 = vunpack.c.h.b16 %v4032
  %v5086 = vunpack.c.l.b16 %v4033
  %v5087 = vunpack.c.h.b16 %v4033
  %v5088 = vunpack.c.l.b16 %v4034
  %v5089 = vunpack.c.h.b16 %v4034
  %v5090 = vunpack.c.l.b16 %v4035
  %v5091 = vunpack.c.h.b16 %v4035
  %v5092 = vunpack.c.l.b16 %v4036
  %v5093 = vunpack.c.h.b16 %v4036
  %v5094 = vunpack.c.l.b16 %v4037
  %v5095 = vunpack.c.h.b16 %v4037
  %v5096 = vunpack.c.l.b16 %v4038
  %v5097 = vunpack.c.h.b16 %v4038
  %v5098 = vunpack.c.l.b16 %v4039
  %v5099 = vunpack.c.h.b16 %v4039
  %v5100 = vunpack.c.l.b16 %v4040
  %v5101 = vunpack.c.h.b16 %v4040
  %v5102 = vunpack.c.l.b16 %v4041
  %v5103 = vunpack.c.h.b16 %v4041
  %v5104 = vunpack.c.l.b16 %v4042
  %v5105 = vunpack.c.h.b16 %v4042
  %v5106 = vunpack.c.l.b16 %v4043
  %v5107 = vunpack.c.h.b16 %v4043
  %v5108 = vunpack.c.l.b16 %v4044
  %v5109 = vunpack.c.h.b16 %v4044
  %v5110 = vunpack.c.l.b16 %v4045
  %v5111 = vunpack.c.h.b16 %v4045
  %v5112 = vunpack.c.l.b16 %v4046
  %v5113 = vunpack.c.h.b16 %v4046
  %v5114 = vunpack.c.l.b16 %v4047
  %v5115 = vunpack.c.h.b16 %v4047
  %v5116 = vunpack.c.l.b16 %v4048
  %v5117 = vunpack.c.h.b16 %v4048
  %v5118 = vunpack.c.l.b16 %v4049
  %v5119 = vunpack.c.h.b16 %v4049
  %v5120 = vunpack.c.l.b16 %v4050
  %v5121 = vunpack.c.h.b16 %v4050
  %v5122 = vunpack.c.l.b16 %v4051
  %v5123 = vunpack.c.h.b16 %v4051
  %v5124 = vunpack.c.l.b16 %v4052
  %v5125 = vunpack.c.h.b16 %v4052
  %v5126 = vunpack.c.l.b16 %v4053
  %v5127 = vunpack.c.h.b16 %v4053
  %v5128 = vunpack.c.l.b16 %v4054
  %v5129 = vunpack.c.h.b16 %v4054
  %v5130 = vunpack.c.l.b16 %v4055
  %v5131 = vunpack.c.h.b16 %v4055
  %v5132 = vunpack.c.l.b16 %v4056
  %v5133 = vunpack.c.h.b16 %v4056
  %v5134 = vunpack.c.l.b16 %v4057
  %v5135 = vunpack.c.h.b16 %v4057
  %v5136 = vunpack.c.l.b16 %v4058
  %v5137 = vunpack.c.h.b16 %v4058
  %v5138 = vunpack.c.l.b16 %v4059
  %v5139 = vunpack.c.h.b16 %v4059
  %v5140 = vunpack.c.l.b16 %v4060
  %v5141 = vunpack.c.h.b16 %v4060
  %v5142 = vunpack.c.l.b16 %v4061
  %v5143 = vunpack.c.h.b16 %v4061
  %v5144 = vunpack.c.l.b16 %v4062
  %v5145 = vunpack.c.h.b16 %v4062
  %v5146 = vunpack.c.l.b16 %v4063
  %v5147 = vunpack.c.h.b16 %v4063
  %v5148 = vunpack.c.l.b16 %v4064
  %v5149 = vunpack.c.h.b16 %v4064
  %v5150 = vunpack.c.l.b16 %v4065
  %v5151 = vunpack.c.h.b16 %v4065
  %v5152 = vunpack.c.l.b16 %v4066
  %v5153 = vunpack.c.h.b16 %v4066
  %v5154 = vunpack.c.l.b16 %v4067
  %v5155 = vunpack.c.h.b16 %v4067
  %v5156 = vunpack.c.l.b16 %v4068
  %v5157 = vunpack.c.h.b16 %v4068
  %v5158 = vunpack.c.l.b16 %v4069
  %v5159 = vunpack.c.h.b16 %v4069
  %v5160 = vunpack.c.l.b16 %v4070
  %v5161 = vunpack.c.h.b16 %v4070
  %v5162 = vunpack.c.l.b16 %v4071
  %v5163 = vunpack.c.h.b16 %v4071
  %v5164 = vunpack.c.l.b16 %v4072
  %v5165 = vunpack.c.h.b16 %v4072
  %v5166 = vunpack.c.l.b16 %v4073
  %v5167 = vunpack.c.h.b16 %v4073
  %v5168 = vunpack.c.l.b16 %v4074
  %v5169 = vunpack.c.h.b16 %v4074
  %v5170 = vunpack.c.l.b16 %v4075
  %v5171 = vunpack.c.h.b16 %v4075
  %v5172 = vunpack.c.l.b16 %v4076
  %v5173 = vunpack.c.h.b16 %v4076
  %v5174 = vunpack.c.l.b16 %v4077
  %v5175 = vunpack.c.h.b16 %v4077
  %v5176 = vunpack.c.l.b16 %v4078
  %v5177 = vunpack.c.h.b16 %v4078
  %v5178 = vunpack.c.l.b16 %v4079
  %v5179 = vunpack.c.h.b16 %v4079
  %v5180 = vunpack.c.l.b16 %v4080
  %v5181 = vunpack.c.h.b16 %v4080
  %v5182 = vunpack.c.l.b16 %v4081
  %v5183 = vunpack.c.h.b16 %v4081
  %v5184 = vunpack.c.l.b16 %v4082
  %v5185 = vunpack.c.h.b16 %v4082
  %v5186 = vunpack.c.l.b16 %v4083
  %v5187 = vunpack.c.h.b16 %v4083
  %v5188 = vunpack.c.l.b16 %v4084
  %v5189 = vunpack.c.h.b16 %v4084
  %v5190 = vunpack.c.l.b16 %v4085
  %v5191 = vunpack.c.h.b16 %v4085
  %v5192 = vunpack.c.l.b16 %v4086
  %v5193 = vunpack.c.h.b16 %v4086
  %v5194 = vunpack.c.l.b16 %v4087
  %v5195 = vunpack.c.h.b16 %v4087
  %v5196 = vunpack.c.l.b16 %v4088
  %v5197 = vunpack.c.h.b16 %v4088
  %v5198 = vunpack.c.l.b16 %v4089
  %v5199 = vunpack.c.h.b16 %v4089
  %v5200 = vunpack.c.l.b16 %v4090
  %v5201 = vunpack.c.h.b16 %v4090
  %v5202 = vunpack.c.l.b16 %v4091
  %v5203 = vunpack.c.h.b16 %v4091
  %v5204 = vunpack.c.l.b16 %v4092
  %v5205 = vunpack.c.h.b16 %v4092
  %v5206 = vunpack.c.l.b16 %v4093
  %v5207 = vunpack.c.h.b16 %v4093
  %v5208 = vunpack.c.l.b16 %v4094
  %v5209 = vunpack.c.h.b16 %v4094
  %v5210 = vunpack.c.l.b16 %v4095
  %v5211 = vunpack.c.h.b16 %v4095
  %v5212 = vunpack.c.l.b16 %v4096
  %v5213 = vunpack.c.h.b16 %v4096
  %v5214 = vunpack.c.l.b16 %v4097
  %v5215 = vunpack.c.h.b16 %v4097
  %v5216 = vunpack.c.l.b16 %v4098
  %v5217 = vunpack.c.h.b16 %v4098
  %v5218 = vunpack.c.l.b16 %v4099
  %v5219 = vunpack.c.h.b16 %v4099
  %v5220 = vunpack.c.l.b16 %v4100
  %v5221 = vunpack.c.h.b16 %v4100
  %v5222 = vunpack.c.l.b16 %v4101
  %v5223 = vunpack.c.h.b16 %v4101
  %v5224 = vunpack.c.l.b16 %v4102
  %v5225 = vunpack.c.h.b16 %v4102
  %v5226 = vunpack.c.l.b16 %v4103
  %v5227 = vunpack.c.h.b16 %v4103
  %v5228 = vunpack.c.l.b16 %v4104
  %v5229 = vunpack.c.h.b16 %v4104
  %v5230 = vunpack.c.l.b16 %v4105
  %v5231 = vunpack.c.h.b16 %v4105
  %v5232 = vunpack.c.l.b16 %v4106
  %v5233 = vunpack.c.h.b16 %v4106
  %v5234 = vunpack.c.l.b16 %v4107
  %v5235 = vunpack.c.h.b16 %v4107
  %v5236 = vunpack.c.l.b16 %v4108
  %v5237 = vunpack.c.h.b16 %v4108
  %v5238 = vunpack.c.l.b16 %v4109
  %v5239 = vunpack.c.h.b16 %v4109
  %v5240 = vunpack.c.l.b16 %v4110
  %v5241 = vunpack.c.h.b16 %v4110
  %v5242 = vunpack.c.l.b16 %v4111
  %v5243 = vunpack.c.h.b16 %v4111
  %v5244 = vunpack.c.l.b16 %v4112
  %v5245 = vunpack.c.h.b16 %v4112
  %v5246 = vunpack.c.l.b16 %v4113
  %v5247 = vunpack.c.h.b16 %v4113
  %v5248 = vunpack.c.l.b16 %v4114
  %v5249 = vunpack.c.h.b16 %v4114
  %v5250 = vunpack.c.l.b16 %v4115
  %v5251 = vunpack.c.h.b16 %v4115
  %v5252 = vunpack.c.l.b16 %v4116
  %v5253 = vunpack.c.h.b16 %v4116
  %v5254 = vunpack.c.l.b16 %v4117
  %v5255 = vunpack.c.h.b16 %v4117
  %v5256 = vunpack.c.l.b16 %v4118
  %v5257 = vunpack.c.h.b16 %v4118
  %v5258 = vunpack.c.l.b16 %v4119
  %v5259 = vunpack.c.h.b16 %v4119
  %v5260 = vunpack.c.l.b16 %v4120
  %v5261 = vunpack.c.h.b16 %v4120
  %v5262 = vunpack.c.l.b16 %v4121
  %v5263 = vunpack.c.h.b16 %v4121
  %v5264 = vunpack.c.l.b16 %v4122
  %v5265 = vunpack.c.h.b16 %v4122
  %v5266 = vunpack.c.l.b16 %v4123
  %v5267 = vunpack.c.h.b16 %v4123
  %v5268 = vunpack.c.l.b16 %v4124
  %v5269 = vunpack.c.h.b16 %v4124
  %v5270 = vunpack.c.l.b16 %v4125
  %v5271 = vunpack.c.h.b16 %v4125
  %v5272 = vunpack.c.l.b16 %v4126
  %v5273 = vunpack.c.h.b16 %v4126
  %v5274 = vunpack.c.l.b16 %v4127
  %v5275 = vunpack.c.h.b16 %v4127
  %v5276 = vunpack.c.l.b16 %v4128
  %v5277 = vunpack.c.h.b16 %v4128
  %v5278 = vunpack.c.l.b16 %v4129
  %v5279 = vunpack.c.h.b16 %v4129
  %v5280 = vunpack.c.l.b16 %v4130
  %v5281 = vunpack.c.h.b16 %v4130
  %v5282 = vunpack.c.l.b16 %v4131
  %v5283 = vunpack.c.h.b16 %v4131
  %v5284 = vunpack.c.l.b16 %v4132
  %v5285 = vunpack.c.h.b16 %v4132
  %v5286 = vunpack.c.l.b16 %v4133
  %v5287 = vunpack.c.h.b16 %v4133
  %v5288 = vunpack.c.l.b16 %v4134
  %v5289 = vunpack.c.h.b16 %v4134
  %v5290 = vunpack.c.l.b16 %v4135
  %v5291 = vunpack.c.h.b16 %v4135
  %v5292 = vunpack.c.l.b16 %v4136
  %v5293 = vunpack.c.h.b16 %v4136
  %v5294 = vunpack.c.l.b16 %v4137
  %v5295 = vunpack.c.h.b16 %v4137
  %v5296 = vunpack.c.l.b16 %v4138
  %v5297 = vunpack.c.h.b16 %v4138
  %v5298 = vunpack.c.l.b16 %v4139
  %v5299 = vunpack.c.h.b16 %v4139
  %v5300 = vunpack.c.l.b16 %v4140
  %v5301 = vunpack.c.h.b16 %v4140
  %v5302 = vunpack.c.l.b16 %v4141
  %v5303 = vunpack.c.h.b16 %v4141
  %v5304 = vunpack.c.l.b16 %v4142
  %v5305 = vunpack.c.h.b16 %v4142
  %v5306 = vunpack.c.l.b16 %v4143
  %v5307 = vunpack.c.h.b16 %v4143
  %v5308 = vunpack.c.l.b16 %v4144
  %v5309 = vunpack.c.h.b16 %v4144
  %v5310 = vunpack.c.l.b16 %v4145
  %v5311 = vunpack.c.h.b16 %v4145
  %v5312 = vunpack.c.l.b16 %v4146
  %v5313 = vunpack.c.h.b16 %v4146
  %v5314 = vunpack.c.l.b16 %v4147
  %v5315 = vunpack.c.h.b16 %v4147
  %v5316 = vunpack.c.l.b16 %v4148
  %v5317 = vunpack.c.h.b16 %v4148
  %v5318 = vunpack.c.l.b16 %v4149
  %v5319 = vunpack.c.h.b16 %v4149
  %v5320 = vunpack.c.l.b16 %v4150
  %v5321 = vunpack.c.h.b16 %v4150
  %v5322 = vunpack.c.l.b16 %v4151
  %v5323 = vunpack.c.h.b16 %v4151
  %v5324 = vunpack.c.l.b16 %v4152
  %v5325 = vunpack.c.h.b16 %v4152
  %v5326 = vunpack.c.l.b16 %v4153
  %v5327 = vunpack.c.h.b16 %v4153
  %v5328 = vunpack.c.l.b16 %v4154
  %v5329 = vunpack.c.h.b16 %v4154
  %v5330 = vunpack.c.l.b16 %v4155
  %v5331 = vunpack.c.h.b16 %v4155
  %v5332 = vunpack.c.l.b16 %v4156
  %v5333 = vunpack.c.h.b16 %v4156
  %v5334 = vunpack.c.l.b16 %v4157
  %v5335 = vunpack.c.h.b16 %v4157
  %v5336 = vunpack.c.l.b16 %v4158
  %v5337 = vunpack.c.h.b16 %v4158
  %v5338 = vunpack.c.l.b16 %v4159
  %v5339 = vunpack.c.h.b16 %v4159
  %v5340 = vunpack.c.l.b16 %v4160
  %v5341 = vunpack.c.h.b16 %v4160
  %v5342 = vunpack.c.l.b16 %v4161
  %v5343 = vunpack.c.h.b16 %v4161
  %v5344 = vunpack.c.l.b16 %v4162
  %v5345 = vunpack.c.h.b16 %v4162
  %v5346 = vunpack.c.l.b16 %v4163
  %v5347 = vunpack.c.h.b16 %v4163
  %v5348 = vunpack.c.l.b16 %v4164
  %v5349 = vunpack.c.h.b16 %v4164
  %v5350 = vunpack.c.l.b16 %v4165
  %v5351 = vunpack.c.h.b16 %v4165
  %v5352 = vunpack.c.l.b16 %v4166
  %v5353 = vunpack.c.h.b16 %v4166
  %v5354 = vunpack.c.l.b16 %v4167
  %v5355 = vunpack.c.h.b16 %v4167
  %v5356 = vunpack.c.l.b16 %v4168
  %v5357 = vunpack.c.h.b16 %v4168
  %v5358 = vunpack.c.l.b16 %v4169
  %v5359 = vunpack.c.h.b16 %v4169
  %v5360 = vunpack.c.l.b16 %v4170
  %v5361 = vunpack.c.h.b16 %v4170
  %v5362 = vunpack.c.l.b16 %v4171
  %v5363 = vunpack.c.h.b16 %v4171
  %v5364 = vunpack.c.l.b16 %v4172
  %v5365 = vunpack.c.h.b16 %v4172
  %v5366 = vunpack.c.l.b16 %v4173
  %v5367 = vunpack.c.h.b16 %v4173
  %v5368 = vunpack.c.l.b16 %v4174
  %v5369 = vunpack.c.h.b16 %v4174
  %v5370 = vunpack.c.l.b16 %v4175
  %v5371 = vunpack.c.h.b16 %v4175
  %v5372 = vunpack.c.l.b16 %v4176
  %v5373 = vunpack.c.h.b16 %v4176
  %v5374 = vunpack.c.l.b16 %v4177
  %v5375 = vunpack.c.h.b16 %v4177
  %v5376 = vunpack.c.l.b16 %v4178
  %v5377 = vunpack.c.h.b16 %v4178
  %v5378 = vunpack.c.l.b16 %v4179
  %v5379 = vunpack.c.h.b16 %v4179
  %v5380 = vunpack.c.l.b16 %v4180
  %v5381 = vunpack.c.h.b16 %v4180
  %v5382 = vunpack.c.l.b16 %v4181
  %v5383 = vunpack.c.h.b16 %v4181
  %v5384 = vunpack.c.l.b16 %v4182
  %v5385 = vunpack.c.h.b16 %v4182
  %v5386 = vunpack.c.l.b16 %v4183
  %v5387 = vunpack.c.h.b16 %v4183
  %v5388 = vunpack.c.l.b16 %v4184
  %v5389 = vunpack.c.h.b16 %v4184
  %v5390 = vunpack.c.l.b16 %v4185
  %v5391 = vunpack.c.h.b16 %v4185
  %v5392 = vunpack.c.l.b16 %v4186
  %v5393 = vunpack.c.h.b16 %v4186
  %v5394 = vunpack.c.l.b16 %v4187
  %v5395 = vunpack.c.h.b16 %v4187
  %v5396 = vunpack.c.l.b16 %v4188
  %v5397 = vunpack.c.h.b16 %v4188
  %v5398 = vunpack.c.l.b16 %v4189
  %v5399 = vunpack.c.h.b16 %v4189
  %v5400 = vunpack.c.l.b16 %v4190
  %v5401 = vunpack.c.h.b16 %v4190
  %v5402 = vunpack.c.l.b16 %v4191
  %v5403 = vunpack.c.h.b16 %v4191
  %v5404 = vunpack.c.l.b16 %v4192
  %v5405 = vunpack.c.h.b16 %v4192
  %v5406 = vunpack.c.l.b16 %v4193
  %v5407 = vunpack.c.h.b16 %v4193
  %v5408 = vunpack.c.l.b16 %v4194
  %v5409 = vunpack.c.h.b16 %v4194
  %v5410 = vunpack.c.l.b16 %v4195
  %v5411 = vunpack.c.h.b16 %v4195
  %v5412 = vunpack.c.l.b16 %v4196
  %v5413 = vunpack.c.h.b16 %v4196
  %v5414 = vunpack.c.l.b16 %v4197
  %v5415 = vunpack.c.h.b16 %v4197
  %v5416 = vunpack.c.l.b16 %v4198
  %v5417 = vunpack.c.h.b16 %v4198
  %v5418 = vunpack.c.l.b16 %v4199
  %v5419 = vunpack.c.h.b16 %v4199
  %v5420 = vunpack.c.l.b16 %v4200
  %v5421 = vunpack.c.h.b16 %v4200
  %v5422 = vunpack.c.l.b16 %v4201
  %v5423 = vunpack.c.h.b16 %v4201
  %v5424 = vunpack.c.l.b16 %v4202
  %v5425 = vunpack.c.h.b16 %v4202
  %v5426 = vunpack.c.l.b16 %v4203
  %v5427 = vunpack.c.h.b16 %v4203
  %v5428 = vunpack.c.l.b16 %v4204
  %v5429 = vunpack.c.h.b16 %v4204
  %v5430 = vunpack.c.l.b16 %v4205
  %v5431 = vunpack.c.h.b16 %v4205
  %v5432 = vunpack.c.l.b16 %v4206
  %v5433 = vunpack.c.h.b16 %v4206
  %v5434 = vunpack.c.l.b16 %v4207
  %v5435 = vunpack.c.h.b16 %v4207
  %v5436 = vunpack.c.l.b16 %v4208
  %v5437 = vunpack.c.h.b16 %v4208
  %v5438 = vunpack.c.l.b16 %v4209
  %v5439 = vunpack.c.h.b16 %v4209
  %v5440 = vunpack.c.l.b16 %v4210
  %v5441 = vunpack.c.h.b16 %v4210
  %v5442 = vunpack.c.l.b16 %v4211
  %v5443 = vunpack.c.h.b16 %v4211
  %v5444 = vunpack.c.l.b16 %v4212
  %v5445 = vunpack.c.h.b16 %v4212
  %v5446 = vunpack.c.l.b16 %v4213
  %v5447 = vunpack.c.h.b16 %v4213
  %v5448 = vunpack.c.l.b16 %v4214
  %v5449 = vunpack.c.h.b16 %v4214
  %v5450 = vunpack.c.l.b16 %v4215
  %v5451 = vunpack.c.h.b16 %v4215
  %v5452 = vunpack.c.l.b16 %v4216
  %v5453 = vunpack.c.h.b16 %v4216
  %v5454 = vunpack.c.l.b16 %v4217
  %v5455 = vunpack.c.h.b16 %v4217
  %v5456 = vunpack.c.l.b16 %v4218
  %v5457 = vunpack.c.h.b16 %v4218
  %v5458 = vunpack.c.l.b16 %v4219
  %v5459 = vunpack.c.h.b16 %v4219
  %v5460 = vunpack.c.l.b16 %v4220
  %v5461 = vunpack.c.h.b16 %v4220
  %v5462 = vunpack.c.l.b16 %v4221
  %v5463 = vunpack.c.h.b16 %v4221
  %v5464 = vunpack.c.l.b16 %v4222
  %v5465 = vunpack.c.h.b16 %v4222
  %v5466 = vunpack.c.l.b16 %v4223
  %v5467 = vunpack.c.h.b16 %v4223
  %v5468 = vunpack.c.l.b16 %v4224
  %v5469 = vunpack.c.h.b16 %v4224
  %v5470 = vunpack.c.l.b16 %v4225
  %v5471 = vunpack.c.h.b16 %v4225
  %v5472 = vunpack.c.l.b16 %v4226
  %v5473 = vunpack.c.h.b16 %v4226
  %v5474 = vunpack.c.l.b16 %v4227
  %v5475 = vunpack.c.h.b16 %v4227
  %v5476 = vunpack.c.l.b16 %v4228
  %v5477 = vunpack.c.h.b16 %v4228
  %v5478 = vunpack.c.l.b16 %v4229
  %v5479 = vunpack.c.h.b16 %v4229
  %v5480 = vunpack.c.l.b16 %v4230
  %v5481 = vunpack.c.h.b16 %v4230
  %v5482 = vunpack.c.l.b16 %v4231
  %v5483 = vunpack.c.h.b16 %v4231
  %v5484 = vunpack.c.l.b16 %v4232
  %v5485 = vunpack.c.h.b16 %v4232
  %v5486 = vunpack.c.l.b16 %v4233
  %v5487 = vunpack.c.h.b16 %v4233
  %v5488 = vunpack.c.l.b16 %v4234
  %v5489 = vunpack.c.h.b16 %v4234
  %v5490 = vunpack.c.l.b16 %v4235
  %v5491 = vunpack.c.h.b16 %v4235
  %v5492 = vunpack.c.l.b16 %v4236
  %v5493 = vunpack.c.h.b16 %v4236
  %v5494 = vunpack.c.l.b16 %v4237
  %v5495 = vunpack.c.h.b16 %v4237
  %v5496 = vunpack.c.l.b16 %v4238
  %v5497 = vunpack.c.h.b16 %v4238
  %v5498 = vunpack.c.l.b16 %v4239
  %v5499 = vunpack.c.h.b16 %v4239
  %v5500 = vunpack.c.l.b16 %v4240
  %v5501 = vunpack.c.h.b16 %v4240
  %v5502 = vunpack.c.l.b16 %v4241
  %v5503 = vunpack.c.h.b16 %v4241
  %v5504 = vunpack.c.l.b16 %v4242
  %v5505 = vunpack.c.h.b16 %v4242
  %v5506 = vunpack.c.l.b16 %v4243
  %v5507 = vunpack.c.h.b16 %v4243
  %v5508 = vunpack.c.l.b16 %v4244
  %v5509 = vunpack.c.h.b16 %v4244
  %v5510 = vunpack.c.l.b16 %v4245
  %v5511 = vunpack.c.h.b16 %v4245
  %v5512 = vunpack.c.l.b16 %v4246
  %v5513 = vunpack.c.h.b16 %v4246
  %v5514 = vunpack.c.l.b16 %v4247
  %v5515 = vunpack.c.h.b16 %v4247
  %v5516 = vunpack.c.l.b16 %v4248
  %v5517 = vunpack.c.h.b16 %v4248
  %v5518 = vunpack.c.l.b16 %v4249
  %v5519 = vunpack.c.h.b16 %v4249
  %v5520 = vunpack.c.l.b16 %v4250
  %v5521 = vunpack.c.h.b16 %v4250
  %v5522 = vunpack.c.l.b16 %v4251
  %v5523 = vunpack.c.h.b16 %v4251
  %v5524 = vunpack.c.l.b16 %v4252
  %v5525 = vunpack.c.h.b16 %v4252
  %v5526 = vunpack.c.l.b16 %v4253
  %v5527 = vunpack.c.h.b16 %v4253
  %v5528 = vunpack.c.l.b16 %v4254
  %v5529 = vunpack.c.h.b16 %v4254
  %v5530 = vunpack.c.l.b16 %v4255
  %v5531 = vunpack.c.h.b16 %v4255
  %v5532 = vunpack.c.l.b16 %v4256
  %v5533 = vunpack.c.h.b16 %v4256
  %v5534 = vunpack.c.l.b16 %v4257
  %v5535 = vunpack.c.h.b16 %v4257
  %v5536 = vunpack.c.l.b16 %v4258
  %v5537 = vunpack.c.h.b16 %v4258
  %v5538 = vunpack.c.l.b16 %v4259
  %v5539 = vunpack.c.h.b16 %v4259
  %v5540 = vunpack.c.l.b16 %v4260
  %v5541 = vunpack.c.h.b16 %v4260
  %v5542 = vunpack.c.l.b16 %v4261
  %v5543 = vunpack.c.h.b16 %v4261
  %v5544 = vunpack.c.l.b16 %v4262
  %v5545 = vunpack.c.h.b16 %v4262
  %v5546 = vunpack.c.l.b16 %v4263
  %v5547 = vunpack.c.h.b16 %v4263
  %v5548 = vunpack.c.l.b16 %v4264
  %v5549 = vunpack.c.h.b16 %v4264
  %v5550 = vunpack.c.l.b16 %v4265
  %v5551 = vunpack.c.h.b16 %v4265
  %v5552 = vunpack.c.l.b16 %v4266
  %v5553 = vunpack.c.h.b16 %v4266
  %v5554 = vunpack.c.l.b16 %v4267
  %v5555 = vunpack.c.h.b16 %v4267
  %v5556 = vunpack.c.l.b16 %v4268
  %v5557 = vunpack.c.h.b16 %v4268
  %v5558 = vunpack.c.l.b16 %v4269
  %v5559 = vunpack.c.h.b16 %v4269
  %v5560 = vunpack.c.l.b16 %v4270
  %v5561 = vunpack.c.h.b16 %v4270
  %v5562 = vunpack.c.l.b16 %v4271
  %v5563 = vunpack.c.h.b16 %v4271
  %v5564 = vunpack.c.l.b16 %v4272
  %v5565 = vunpack.c.h.b16 %v4272
  %v5566 = vunpack.c.l.b16 %v4273
  %v5567 = vunpack.c.h.b16 %v4273
  %v5568 = vunpack.c.l.b16 %v4274
  %v5569 = vunpack.c.h.b16 %v4274
  %v5570 = vunpack.c.l.b16 %v4275
  %v5571 = vunpack.c.h.b16 %v4275
  %v5572 = vunpack.c.l.b16 %v4276
  %v5573 = vunpack.c.h.b16 %v4276
  %v5574 = vunpack.c.l.b16 %v4277
  %v5575 = vunpack.c.h.b16 %v4277
  %v5576 = vunpack.c.l.b16 %v4278
  %v5577 = vunpack.c.h.b16 %v4278
  %v5578 = vunpack.c.l.b16 %v4279
  %v5579 = vunpack.c.h.b16 %v4279
  %v5580 = vunpack.c.l.b16 %v4280
  %v5581 = vunpack.c.h.b16 %v4280
  %v5582 = vunpack.c.l.b16 %v4281
  %v5583 = vunpack.c.h.b16 %v4281
  %v5584 = vunpack.c.l.b16 %v4282
  %v5585 = vunpack.c.h.b16 %v4282
  %v5586 = vunpack.c.l.b16 %v4283
  %v5587 = vunpack.c.h.b16 %v4283
  %v5588 = vunpack.c.l.b16 %v4284
  %v5589 = vunpack.c.h.b16 %v4284
  %v5590 = vunpack.c.l.b16 %v4285
  %v5591 = vunpack.c.h.b16 %v4285
  %v5592 = vunpack.c.l.b16 %v4286
  %v5593 = vunpack.c.h.b16 %v4286
  %v5594 = vunpack.c.l.b16 %v4287
  %v5595 = vunpack.c.h.b16 %v4287
  %v5596 = vunpack.c.l.b16 %v4288
  %v5597 = vunpack.c.h.b16 %v4288
  %v5598 = vunpack.c.l.b16 %v4289
  %v5599 = vunpack.c.h.b16 %v4289
  %v5600 = vunpack.c.l.b16 %v4290
  %v5601 = vunpack.c.h.b16 %v4290
  %v5602 = vunpack.c.l.b16 %v4291
  %v5603 = vunpack.c.h.b16 %v4291
  %v5604 = vunpack.c.l.b16 %v4292
  %v5605 = vunpack.c.h.b16 %v4292
  %v5606 = vunpack.c.l.b16 %v4293
  %v5607 = vunpack.c.h.b16 %v4293
  %v5608 = vunpack.c.l.b16 %v4294
  %v5609 = vunpack.c.h.b16 %v4294
  %v5610 = vunpack.c.l.b16 %v4295
  %v5611 = vunpack.c.h.b16 %v4295
  %v5612 = vunpack.c.l.b16 %v4296
  %v5613 = vunpack.c.h.b16 %v4296
  %v5614 = vunpack.c.l.b16 %v4297
  %v5615 = vunpack.c.h.b16 %v4297
  %v5616 = vunpack.c.l.b16 %v4298
  %v5617 = vunpack.c.h.b16 %v4298
  %v5618 = vunpack.c.l.b16 %v4299
  %v5619 = vunpack.c.h.b16 %v4299
  %v5620 = vunpack.c.l.b16 %v4300
  %v5621 = vunpack.c.h.b16 %v4300
  %v5622 = vunpack.c.l.b16 %v4301
  %v5623 = vunpack.c.h.b16 %v4301
  %v5624 = vunpack.c.l.b16 %v4302
  %v5625 = vunpack.c.h.b16 %v4302
  %v5626 = vunpack.c.l.b16 %v4303
  %v5627 = vunpack.c.h.b16 %v4303
  %v5628 = vunpack.c.l.b16 %v4304
  %v5629 = vunpack.c.h.b16 %v4304
  %v5630 = vunpack.c.l.b16 %v4305
  %v5631 = vunpack.c.h.b16 %v4305
  %v5632 = vunpack.c.l.b16 %v4306
  %v5633 = vunpack.c.h.b16 %v4306
  %v5634 = vunpack.c.l.b16 %v4307
  %v5635 = vunpack.c.h.b16 %v4307
  %v5636 = vunpack.c.l.b16 %v4308
  %v5637 = vunpack.c.h.b16 %v4308
  %v5638 = vunpack.c.l.b16 %v4309
  %v5639 = vunpack.c.h.b16 %v4309
  %v5640 = vunpack.c.l.b16 %v4310
  %v5641 = vunpack.c.h.b16 %v4310
  %v5642 = vunpack.c.l.b16 %v4311
  %v5643 = vunpack.c.h.b16 %v4311
  %v5644 = vunpack.c.l.b16 %v4312
  %v5645 = vunpack.c.h.b16 %v4312
  %v5646 = vunpack.c.l.b16 %v4313
  %v5647 = vunpack.c.h.b16 %v4313
  %v5648 = vunpack.c.l.b16 %v4314
  %v5649 = vunpack.c.h.b16 %v4314
  %v5650 = vunpack.c.l.b16 %v4315
  %v5651 = vunpack.c.h.b16 %v4315
  %v5652 = vunpack.c.l.b16 %v4316
  %v5653 = vunpack.c.h.b16 %v4316
  %v5654 = vunpack.c.l.b16 %v4317
  %v5655 = vunpack.c.h.b16 %v4317
  %v5656 = vunpack.c.l.b16 %v4318
  %v5657 = vunpack.c.h.b16 %v4318
  %v5658 = vunpack.c.l.b16 %v4319
  %v5659 = vunpack.c.h.b16 %v4319
  %v5660 = vunpack.c.l.b16 %v4320
  %v5661 = vunpack.c.h.b16 %v4320
  %v5662 = vunpack.c.l.b16 %v4321
  %v5663 = vunpack.c.h.b16 %v4321
  %v5664 = vunpack.c.l.b16 %v4322
  %v5665 = vunpack.c.h.b16 %v4322
  %v5666 = vunpack.c.l.b16 %v4323
  %v5667 = vunpack.c.h.b16 %v4323
  %v5668 = vunpack.c.l.b16 %v4324
  %v5669 = vunpack.c.h.b16 %v4324
  %v5670 = vunpack.c.l.b16 %v4325
  %v5671 = vunpack.c.h.b16 %v4325
  %v5672 = vunpack.c.l.b16 %v4326
  %v5673 = vunpack.c.h.b16 %v4326
  %v5674 = vunpack.c.l.b16 %v4327
  %v5675 = vunpack.c.h.b16 %v4327
  %v5676 = vunpack.c.l.b16 %v4328
  %v5677 = vunpack.c.h.b16 %v4328
  %v5678 = vunpack.c.l.b16 %v4329
  %v5679 = vunpack.c.h.b16 %v4329
  %v5680 = vunpack.c.l.b16 %v4330
  %v5681 = vunpack.c.h.b16 %v4330
  %v5682 = vunpack.c.l.b16 %v4331
  %v5683 = vunpack.c.h.b16 %v4331
  %v5684 = vunpack.c.l.b16 %v4332
  %v5685 = vunpack.c.h.b16 %v4332
  %v5686 = vunpack.c.l.b16 %v4333
  %v5687 = vunpack.c.h.b16 %v4333
  %v5688 = vunpack.c.l.b16 %v4334
  %v5689 = vunpack.c.h.b16 %v4334
  %v5690 = vunpack.c.l.b16 %v4335
  %v5691 = vunpack.c.h.b16 %v4335
  %v5692 = vunpack.c.l.b16 %v4336
  %v5693 = vunpack.c.h.b16 %v4336
  %v5694 = vunpack.c.l.b16 %v4337
  %v5695 = vunpack.c.h.b16 %v4337
  %v5696 = vunpack.c.l.b16 %v4338
  %v5697 = vunpack.c.h.b16 %v4338
  %v5698 = vunpack.c.l.b16 %v4339
  %v5699 = vunpack.c.h.b16 %v4339
  %v5700 = vunpack.c.l.b16 %v4340
  %v5701 = vunpack.c.h.b16 %v4340
  %v5702 = vunpack.c.l.b16 %v4341
  %v5703 = vunpack.c.h.b16 %v4341
  %v5704 = vunpack.c.l.b16 %v4342
  %v5705 = vunpack.c.h.b16 %v4342
  %v5706 = vunpack.c.l.b16 %v4343
  %v5707 = vunpack.c.h.b16 %v4343
  %v5708 = vunpack.c.l.b16 %v4344
  %v5709 = vunpack.c.h.b16 %v4344
  %v5710 = vunpack.c.l.b16 %v4345
  %v5711 = vunpack.c.h.b16 %v4345
  %v5712 = vunpack.c.l.b16 %v4346
  %v5713 = vunpack.c.h.b16 %v4346
  %v5714 = vunpack.c.l.b16 %v4347
  %v5715 = vunpack.c.h.b16 %v4347
  %v5716 = vunpack.c.l.b16 %v4348
  %v5717 = vunpack.c.h.b16 %v4348
  %v5718 = vunpack.c.l.b16 %v4349
  %v5719 = vunpack.c.h.b16 %v4349
  %v5720 = vunpack.c.l.b16 %v4350
  %v5721 = vunpack.c.h.b16 %v4350
  %v5722 = vunpack.c.l.b16 %v4351
  %v5723 = vunpack.c.h.b16 %v4351
  %v5724 = vunpack.c.l.b16 %v4352
  %v5725 = vunpack.c.h.b16 %v4352
  %v5726 = vunpack.c.l.b16 %v4353
  %v5727 = vunpack.c.h.b16 %v4353
  %v5728 = vunpack.c.l.b16 %v4354
  %v5729 = vunpack.c.h.b16 %v4354
  %v5730 = vunpack.c.l.b16 %v4355
  %v5731 = vunpack.c.h.b16 %v4355
  %v5732 = vunpack.c.l.b16 %v4356
  %v5733 = vunpack.c.h.b16 %v4356
  %v5734 = vunpack.c.l.b16 %v4357
  %v5735 = vunpack.c.h.b16 %v4357
  %v5736 = vunpack.c.l.b16 %v4358
  %v5737 = vunpack.c.h.b16 %v4358
  %v5738 = vunpack.c.l.b16 %v4359
  %v5739 = vunpack.c.h.b16 %v4359
  %v5740 = vunpack.c.l.b16 %v4360
  %v5741 = vunpack.c.h.b16 %v4360
  %v5742 = vunpack.c.l.b16 %v4361
  %v5743 = vunpack.c.h.b16 %v4361
  %v5744 = vunpack.c.l.b16 %v4362
  %v5745 = vunpack.c.h.b16 %v4362
  %v5746 = vunpack.c.l.b16 %v4363
  %v5747 = vunpack.c.h.b16 %v4363
  %v5748 = vunpack.c.l.b16 %v4364
  %v5749 = vunpack.c.h.b16 %v4364
  %v5750 = vunpack.c.l.b16 %v4365
  %v5751 = vunpack.c.h.b16 %v4365
  %v5752 = vunpack.c.l.b16 %v4366
  %v5753 = vunpack.c.h.b16 %v4366
  %v5754 = vunpack.c.l.b16 %v4367
  %v5755 = vunpack.c.h.b16 %v4367
  %v5756 = vunpack.c.l.b16 %v4368
  %v5757 = vunpack.c.h.b16 %v4368
  %v5758 = vunpack.c.l.b16 %v4369
  %v5759 = vunpack.c.h.b16 %v4369
  %v5760 = vunpack.c.l.b16 %v4370
  %v5761 = vunpack.c.h.b16 %v4370
  %v5762 = vunpack.c.l.b16 %v4371
  %v5763 = vunpack.c.h.b16 %v4371
  %v5764 = vunpack.c.l.b16 %v4372
  %v5765 = vunpack.c.h.b16 %v4372
  %v5766 = vunpack.c.l.b16 %v4373
  %v5767 = vunpack.c.h.b16 %v4373
  %v5768 = vunpack.c.l.b16 %v4374
  %v5769 = vunpack.c.h.b16 %v4374
  %v5770 = vunpack.c.l.b16 %v4375
  %v5771 = vunpack.c.h.b16 %v4375
  %v5772 = vunpack.c.l.b16 %v4376
  %v5773 = vunpack.c.h.b16 %v4376
  %v5774 = vunpack.c.l.b16 %v4377
  %v5775 = vunpack.c.h.b16 %v4377
  %v5776 = vunpack.c.l.b16 %v4378
  %v5777 = vunpack.c.h.b16 %v4378
  %v5778 = vunpack.c.l.b16 %v4379
  %v5779 = vunpack.c.h.b16 %v4379
  %v5780 = vunpack.c.l.b16 %v4380
  %v5781 = vunpack.c.h.b16 %v4380
  %v5782 = vunpack.c.l.b16 %v4381
  %v5783 = vunpack.c.h.b16 %v4381
  %v5784 = vunpack.c.l.b16 %v4382
  %v5785 = vunpack.c.h.b16 %v4382
  %v5786 = vunpack.c.l.b16 %v4383
  %v5787 = vunpack.c.h.b16 %v4383
  %v5788 = vunpack.c.l.b16 %v4384
  %v5789 = vunpack.c.h.b16 %v4384
  %v5790 = vunpack.c.l.b16 %v4385
  %v5791 = vunpack.c.h.b16 %v4385
  %v5792 = vunpack.c.l.b16 %v4386
  %v5793 = vunpack.c.h.b16 %v4386
  %v5794 = vunpack.c.l.b16 %v4387
  %v5795 = vunpack.c.h.b16 %v4387
  %v5796 = vunpack.c.l.b16 %v4388
  %v5797 = vunpack.c.h.b16 %v4388
  %v5798 = vunpack.c.l.b16 %v4389
  %v5799 = vunpack.c.h.b16 %v4389
  %v5800 = vunpack.c.l.b16 %v4390
  %v5801 = vunpack.c.h.b16 %v4390
  %v5802 = vunpack.c.l.b16 %v4391
  %v5803 = vunpack.c.h.b16 %v4391
  %v5804 = vunpack.c.l.b16 %v4392
  %v5805 = vunpack.c.h.b16 %v4392
  %v5806 = vunpack.c.l.b16 %v4393
  %v5807 = vunpack.c.h.b16 %v4393
  %v5808 = vunpack.c.l.b16 %v4394
  %v5809 = vunpack.c.h.b16 %v4394
  %v5810 = vunpack.c.l.b16 %v4395
  %v5811 = vunpack.c.h.b16 %v4395
  %v5812 = vunpack.c.l.b16 %v4396
  %v5813 = vunpack.c.h.b16 %v4396
  %v5814 = vunpack.c.l.b16 %v4397
  %v5815 = vunpack.c.h.b16 %v4397
  %v5816 = vunpack.c.l.b16 %v4398
  %v5817 = vunpack.c.h.b16 %v4398
  %v5818 = vunpack.c.l.b16 %v4399
  %v5819 = vunpack.c.h.b16 %v4399
  %v5820 = vunpack.c.l.b16 %v4400
  %v5821 = vunpack.c.h.b16 %v4400
  %v5822 = vunpack.c.l.b16 %v4401
  %v5823 = vunpack.c.h.b16 %v4401
  %v5824 = vunpack.c.l.b16 %v4402
  %v5825 = vunpack.c.h.b16 %v4402
  %v5826 = vunpack.c.l.b16 %v4403
  %v5827 = vunpack.c.h.b16 %v4403
  %v5828 = vunpack.c.l.b16 %v4404
  %v5829 = vunpack.c.h.b16 %v4404
  %v5830 = vunpack.c.l.b16 %v4405
  %v5831 = vunpack.c.h.b16 %v4405
  %v5832 = vunpack.c.l.b16 %v4406
  %v5833 = vunpack.c.h.b16 %v4406
  %v5834 = vunpack.c.l.b16 %v4407
  %v5835 = vunpack.c.h.b16 %v4407
  %v5836 = vunpack.c.l.b16 %v4408
  %v5837 = vunpack.c.h.b16 %v4408
  %v5838 = vunpack.c.l.b16 %v4409
  %v5839 = vunpack.c.h.b16 %v4409
  %v5840 = vunpack.c.l.b16 %v4410
  %v5841 = vunpack.c.h.b16 %v4410
  %v5842 = vunpack.c.l.b16 %v4411
  %v5843 = vunpack.c.h.b16 %v4411
  %v5844 = vunpack.c.l.b16 %v4412
  %v5845 = vunpack.c.h.b16 %v4412
  %v5846 = vunpack.c.l.b16 %v4413
  %v5847 = vunpack.c.h.b16 %v4413
  %v5848 = vunpack.c.l.b16 %v4414
  %v5849 = vunpack.c.h.b16 %v4414
  %v5850 = vunpack.c.l.b16 %v4415
  %v5851 = vunpack.c.h.b16 %v4415
  %v5852 = vunpack.c.l.b16 %v4416
  %v5853 = vunpack.c.h.b16 %v4416
  %v5854 = vunpack.c.l.b16 %v4417
  %v5855 = vunpack.c.h.b16 %v4417
  %v5856 = vunpack.c.l.b16 %v4418
  %v5857 = vunpack.c.h.b16 %v4418
  %v5858 = vunpack.c.l.b16 %v4419
  %v5859 = vunpack.c.h.b16 %v4419
  %v5860 = vunpack.c.l.b16 %v4420
  %v5861 = vunpack.c.h.b16 %v4420
  %v5862 = vunpack.c.l.b16 %v4421
  %v5863 = vunpack.c.h.b16 %v4421
  %v5864 = vunpack.c.l.b16 %v4422
  %v5865 = vunpack.c.h.b16 %v4422
  %v5866 = vunpack.c.l.b16 %v4423
  %v5867 = vunpack.c.h.b16 %v4423
  %v5868 = vunpack.c.l.b16 %v4424
  %v5869 = vunpack.c.h.b16 %v4424
  %v5870 = vunpack.c.l.b16 %v4425
  %v5871 = vunpack.c.h.b16 %v4425
  %v5872 = vunpack.c.l.b16 %v4426
  %v5873 = vunpack.c.h.b16 %v4426
  %v5874 = vunpack.c.l.b16 %v4427
  %v5875 = vunpack.c.h.b16 %v4427
  %v5876 = vunpack.c.l.b16 %v4428
  %v5877 = vunpack.c.h.b16 %v4428
  %v5878 = vunpack.c.l.b16 %v4429
  %v5879 = vunpack.c.h.b16 %v4429
  %v5880 = vunpack.c.l.b16 %v4430
  %v5881 = vunpack.c.h.b16 %v4430
  %v5882 = vunpack.c.l.b16 %v4431
  %v5883 = vunpack.c.h.b16 %v4431
  %v5884 = vunpack.c.l.b16 %v4432
  %v5885 = vunpack.c.h.b16 %v4432
  %v5886 = vunpack.c.l.b16 %v4433
  %v5887 = vunpack.c.h.b16 %v4433
  %v5888 = vunpack.c.l.b16 %v4434
  %v5889 = vunpack.c.h.b16 %v4434
  %v5890 = vunpack.c.l.b16 %v4435
  %v5891 = vunpack.c.h.b16 %v4435
  %v5892 = vunpack.c.l.b16 %v4436
  %v5893 = vunpack.c.h.b16 %v4436
  %v5894 = vunpack.c.l.b16 %v4437
  %v5895 = vunpack.c.h.b16 %v4437
  %v5896 = vunpack.c.l.b16 %v4438
  %v5897 = vunpack.c.h.b16 %v4438
  %v5898 = vunpack.c.l.b16 %v4439
  %v5899 = vunpack.c.h.b16 %v4439
  %v5900 = vunpack.c.l.b16 %v4440
  %v5901 = vunpack.c.h.b16 %v4440
  %v5902 = vunpack.c.l.b16 %v4441
  %v5903 = vunpack.c.h.b16 %v4441
  %v5904 = vunpack.c.l.b16 %v4442
  %v5905 = vunpack.c.h.b16 %v4442
  %v5906 = vunpack.c.l.b16 %v4443
  %v5907 = vunpack.c.h.b16 %v4443
  %v5908 = vunpack.c.l.b16 %v4444
  %v5909 = vunpack.c.h.b16 %v4444
  %v5910 = vunpack.c.l.b16 %v4445
  %v5911 = vunpack.c.h.b16 %v4445
  %v5912 = vunpack.c.l.b16 %v4446
  %v5913 = vunpack.c.h.b16 %v4446
  %v5914 = vunpack.c.l.b16 %v4447
  %v5915 = vunpack.c.h.b16 %v4447
  %v5916 = vunpack.c.l.b16 %v4448
  %v5917 = vunpack.c.h.b16 %v4448
  %v5918 = vunpack.c.l.b16 %v4449
  %v5919 = vunpack.c.h.b16 %v4449
  %v5920 = vunpack.c.l.b16 %v4450
  %v5921 = vunpack.c.h.b16 %v4450
  %v5922 = vunpack.c.l.b16 %v4451
  %v5923 = vunpack.c.h.b16 %v4451
  %v5924 = vunpack.c.l.b16 %v4452
  %v5925 = vunpack.c.h.b16 %v4452
  %v5926 = vunpack.c.l.b16 %v4453
  %v5927 = vunpack.c.h.b16 %v4453
  %v5928 = vunpack.c.l.b16 %v4454
  %v5929 = vunpack.c.h.b16 %v4454
  %v5930 = vunpack.c.l.b16 %v4455
  %v5931 = vunpack.c.h.b16 %v4455
  %v5932 = vunpack.c.l.b16 %v4456
  %v5933 = vunpack.c.h.b16 %v4456
  %v5934 = vunpack.c.l.b16 %v4457
  %v5935 = vunpack.c.h.b16 %v4457
  %v5936 = vunpack.c.l.b16 %v4458
  %v5937 = vunpack.c.h.b16 %v4458
  %v5938 = vunpack.c.l.b16 %v4459
  %v5939 = vunpack.c.h.b16 %v4459
  %v5940 = vunpack.c.l.b16 %v4460
  %v5941 = vunpack.c.h.b16 %v4460
  %v5942 = vunpack.c.l.b16 %v4461
  %v5943 = vunpack.c.h.b16 %v4461
  %v5944 = vunpack.c.l.b16 %v4462
  %v5945 = vunpack.c.h.b16 %v4462
  %v5946 = vunpack.c.l.b16 %v4463
  %v5947 = vunpack.c.h.b16 %v4463
  %v5948 = vunpack.c.l.b16 %v4464
  %v5949 = vunpack.c.h.b16 %v4464
  %v5950 = vunpack.c.l.b16 %v4465
  %v5951 = vunpack.c.h.b16 %v4465
  %v5952 = vunpack.c.l.b16 %v4466
  %v5953 = vunpack.c.h.b16 %v4466
  %v5954 = vunpack.c.l.b16 %v4467
  %v5955 = vunpack.c.h.b16 %v4467
  %v5956 = vunpack.c.l.b16 %v4468
  %v5957 = vunpack.c.h.b16 %v4468
  %v5958 = vunpack.c.l.b16 %v4469
  %v5959 = vunpack.c.h.b16 %v4469
  %v5960 = vunpack.c.l.b16 %v4470
  %v5961 = vunpack.c.h.b16 %v4470
  %v5962 = vunpack.c.l.b16 %v4471
  %v5963 = vunpack.c.h.b16 %v4471
  %v5964 = vunpack.c.l.b16 %v4472
  %v5965 = vunpack.c.h.b16 %v4472
  %v5966 = vunpack.c.l.b16 %v4473
  %v5967 = vunpack.c.h.b16 %v4473
  %v5968 = vunpack.c.l.b16 %v4474
  %v5969 = vunpack.c.h.b16 %v4474
  %v5970 = vunpack.c.l.b16 %v4475
  %v5971 = vunpack.c.h.b16 %v4475
  %v5972 = vunpack.c.l.b16 %v4476
  %v5973 = vunpack.c.h.b16 %v4476
  %v5974 = vunpack.c.l.b16 %v4477
  %v5975 = vunpack.c.h.b16 %v4477
  %v5976 = vunpack.c.l.b16 %v4478
  %v5977 = vunpack.c.h.b16 %v4478
  %v5978 = vunpack.c.l.b16 %v4479
  %v5979 = vunpack.c.h.b16 %v4479
  %v5980 = vunpack.c.l.b16 %v4480
  %v5981 = vunpack.c.h.b16 %v4480
  %v5982 = vunpack.c.l.b16 %v4481
  %v5983 = vunpack.c.h.b16 %v4481
  %v5984 = vunpack.c.l.b16 %v4482
  %v5985 = vunpack.c.h.b16 %v4482
  %v5986 = vunpack.c.l.b16 %v4483
  %v5987 = vunpack.c.h.b16 %v4483
  %v5988 = vunpack.c.l.b16 %v4484
  %v5989 = vunpack.c.h.b16 %v4484
  %v5990 = vunpack.c.l.b16 %v4485
  %v5991 = vunpack.c.h.b16 %v4485
  %v5992 = vunpack.c.l.b16 %v4486
  %v5993 = vunpack.c.h.b16 %v4486
  %v5994 = vunpack.c.l.b16 %v4487
  %v5995 = vunpack.c.h.b16 %v4487
  %v5996 = vunpack.c.l.b16 %v4488
  %v5997 = vunpack.c.h.b16 %v4488
  %v5998 = vunpack.c.l.b16 %v4489
  %v5999 = vunpack.c.h.b16 %v4489
  %v6000 = vunpack.c.l.b16 %v4490
  %v6001 = vunpack.c.h.b16 %v4490
  %v6002 = vunpack.c.l.b16 %v4491
  %v6003 = vunpack.c.h.b16 %v4491
  %v6004 = vunpack.c.l.b16 %v4492
  %v6005 = vunpack.c.h.b16 %v4492
  %v6006 = vunpack.c.l.b16 %v4493
  %v6007 = vunpack.c.h.b16 %v4493
  %v6008 = vunpack.c.l.b16 %v4494
  %v6009 = vunpack.c.h.b16 %v4494
  %v6010 = vunpack.c.l.b16 %v4495
  %v6011 = vunpack.c.h.b16 %v4495
  %v6012 = vunpack.c.l.b16 %v4496
  %v6013 = vunpack.c.h.b16 %v4496
  %v6014 = vunpack.c.l.b16 %v4497
  %v6015 = vunpack.c.h.b16 %v4497
  %v6016 = vunpack.c.l.b16 %v4498
  %v6017 = vunpack.c.h.b16 %v4498
  %v6018 = vunpack.c.l.b16 %v4499
  %v6019 = vunpack.c.h.b16 %v4499
  %v6020 = vunpack.c.l.b16 %v4500
  %v6021 = vunpack.c.h.b16 %v4500
  %v6022 = vunpack.c.l.b16 %v4501
  %v6023 = vunpack.c.h.b16 %v4501
  %v6024 = vunpack.c.l.b16 %v4502
  %v6025 = vunpack.c.h.b16 %v4502
  %v6026 = vunpack.c.l.b16 %v4503
  %v6027 = vunpack.c.h.b16 %v4503
  %v6028 = vunpack.c.l.b16 %v4504
  %v6029 = vunpack.c.h.b16 %v4504
  %v6030 = vunpack.c.l.b16 %v4505
  %v6031 = vunpack.c.h.b16 %v4505
  %v6032 = vunpack.c.l.b16 %v4506
  %v6033 = vunpack.c.h.b16 %v4506
  %v6034 = vunpack.c.l.b16 %v4507
  %v6035 = vunpack.c.h.b16 %v4507
  %v6036 = vunpack.c.l.b16 %v4508
  %v6037 = vunpack.c.h.b16 %v4508
  %v6038 = vunpack.c.l.b16 %v4509
  %v6039 = vunpack.c.h.b16 %v4509
  %v6040 = vunpack.c.l.b16 %v4510
  %v6041 = vunpack.c.h.b16 %v4510
  %v6042 = vunpack.c.l.b16 %v4511
  %v6043 = vunpack.c.h.b16 %v4511
  %v6044 = vunpack.c.l.b16 %v4512
  %v6045 = vunpack.c.h.b16 %v4512
  %v6046 = vunpack.c.l.b16 %v4513
  %v6047 = vunpack.c.h.b16 %v4513
  %v6048 = vunpack.c.l.b16 %v4514
  %v6049 = vunpack.c.h.b16 %v4514
  %v6050 = vunpack.c.l.b16 %v4515
  %v6051 = vunpack.c.h.b16 %v4515
  %v6052 = vunpack.c.l.b16 %v4516
  %v6053 = vunpack.c.h.b16 %v4516
  %v6054 = vunpack.c.l.b16 %v4517
  %v6055 = vunpack.c.h.b16 %v4517
  %v6056 = vunpack.c.l.b16 %v4518
  %v6057 = vunpack.c.h.b16 %v4518
  %v6058 = vunpack.c.l.b16 %v4519
  %v6059 = vunpack.c.h.b16 %v4519
  %v6060 = vunpack.c.l.b16 %v4520
  %v6061 = vunpack.c.h.b16 %v4520
  %v6062 = vunpack.c.l.b16 %v4521
  %v6063 = vunpack.c.h.b16 %v4521
  %v6064 = vunpack.c.l.b16 %v4522
  %v6065 = vunpack.c.h.b16 %v4522
  %v6066 = vunpack.c.l.b16 %v4523
  %v6067 = vunpack.c.h.b16 %v4523
  %v6068 = vunpack.c.l.b16 %v4524
  %v6069 = vunpack.c.h.b16 %v4524
  %v6070 = vunpack.c.l.b16 %v4525
  %v6071 = vunpack.c.h.b16 %v4525
  %v6072 = vpack.c.b16 %v5052, %v5048
  %v6073 = vpack.c.b16 %v5053, %v5049
  %v6074 = vpack.c.b16 %v5054, %v5050
  %v6075 = vpack.c.b16 %v5055, %v5051
  %v6076 = vpack.c.b16 %v5060, %v5056
  %v6077 = vpack.c.b16 %v5061, %v5057
  %v6078 = vpack.c.b16 %v5062, %v5058
  %v6079 = vpack.c.b16 %v5063, %v5059
  %v6080 = vpack.c.b16 %v5068, %v5064
  %v6081 = vpack.c.b16 %v5069, %v5065
  %v6082 = vpack.c.b16 %v5070, %v5066
  %v6083 = vpack.c.b16 %v5071, %v5067
  %v6084 = vpack.c.b16 %v5076, %v5072
  %v6085 = vpack.c.b16 %v5077, %v5073
  %v6086 = vpack.c.b16 %v5078, %v5074
  %v6087 = vpack.c.b16 %v5079, %v5075
  %v6088 = vpack.c.b16 %v5084, %v5080
  %v6089 = vpack.c.b16 %v5085, %v5081
  %v6090 = vpack.c.b16 %v5086, %v5082
  %v6091 = vpack.c.b16 %v5087, %v5083
  %v6092 = vpack.c.b16 %v5092, %v5088
  %v6093 = vpack.c.b16 %v5093, %v5089
  %v6094 = vpack.c.b16 %v5094, %v5090
  %v6095 = vpack.c.b16 %v5095, %v5091
  %v6096 = vpack.c.b16 %v5100, %v5096
  %v6097 = vpack.c.b16 %v5101, %v5097
  %v6098 = vpack.c.b16 %v5102, %v5098
  %v6099 = vpack.c.b16 %v5103, %v5099
  %v6100 = vpack.c.b16 %v5108, %v5104
  %v6101 = vpack.c.b16 %v5109, %v5105
  %v6102 = vpack.c.b16 %v5110, %v5106
  %v6103 = vpack.c.b16 %v5111, %v5107
  %v6104 = vpack.c.b16 %v5116, %v5112
  %v6105 = vpack.c.b16 %v5117, %v5113
  %v6106 = vpack.c.b16 %v5118, %v5114
  %v6107 = vpack.c.b16 %v5119, %v5115
  %v6108 = vpack.c.b16 %v5124, %v5120
  %v6109 = vpack.c.b16 %v5125, %v5121
  %v6110 = vpack.c.b16 %v5126, %v5122
  %v6111 = vpack.c.b16 %v5127, %v5123
  %v6112 = vpack.c.b16 %v5132, %v5128
  %v6113 = vpack.c.b16 %v5133, %v5129
  %v6114 = vpack.c.b16 %v5134, %v5130
  %v6115 = vpack.c.b16 %v5135, %v5131
  %v6116 = vpack.c.b16 %v5140, %v5136
  %v6117 = vpack.c.b16 %v5141, %v5137
  %v6118 = vpack.c.b16 %v5142, %v5138
  %v6119 = vpack.c.b16 %v5143, %v5139
  %v6120 = vpack.c.b16 %v5148, %v5144
  %v6121 = vpack.c.b16 %v5149, %v5145
  %v6122 = vpack.c.b16 %v5150, %v5146
  %v6123 = vpack.c.b16 %v5151, %v5147
  %v6124 = vpack.c.b16 %v5156, %v5152
  %v6125 = vpack.c.b16 %v5157, %v5153
  %v6126 = vpack.c.b16 %v5158, %v5154
  %v6127 = vpack.c.b16 %v5159, %v5155
  %v6128 = vpack.c.b16 %v5164, %v5160
  %v6129 = vpack.c.b16 %v5165, %v5161
  %v6130 = vpack.c.b16 %v5166, %v5162
  %v6131 = vpack.c.b16 %v5167, %v5163
  %v6132 = vpack.c.b16 %v5172, %v5168
  %v6133 = vpack.c.b16 %v5173, %v5169
  %v6134 = vpack.c.b16 %v5174, %v5170
  %v6135 = vpack.c.b16 %v5175, %v5171
  %v6136 = vpack.c.b16 %v5180, %v5176
  %v6137 = vpack.c.b16 %v5181, %v5177
  %v6138 = vpack.c.b16 %v5182, %v5178
  %v6139 = vpack.c.b16 %v5183, %v5179
  %v6140 = vpack.c.b16 %v5188, %v5184
  %v6141 = vpack.c.b16 %v5189, %v5185
  %v6142 = vpack.c.b16 %v5190, %v5186
  %v6143 = vpack.c.b16 %v5191, %v5187
  %v6144 = vpack.c.b16 %v5196, %v5192
  %v6145 = vpack.c.b16 %v5197, %v5193
  %v6146 = vpack.c.b16 %v5198, %v5194
  %v6147 = vpack.c.b16 %v5199, %v5195
  %v6148 = vpack.c.b16 %v5204, %v5200
  %v6149 = vpack.c.b16 %v5205, %v5201
  %v6150 = vpack.c.b16 %v5206, %v5202
  %v6151 = vpack.c.b16 %v5207, %v5203
  %v6152 = vpack.c.b16 %v5212, %v5208
  %v6153 = vpack.c.b16 %v5213, %v5209
  %v6154 = vpack.c.b16 %v5214, %v5210
  %v6155 = vpack.c.b16 %v5215, %v5211
  %v6156 = vpack.c.b16 %v5220, %v5216
  %v6157 = vpack.c.b16 %v5221, %v5217
  %v6158 = vpack.c.b16 %v5222, %v5218
  %v6159 = vpack.c.b16 %v5223, %v5219
  %v6160 = vpack.c.b16 %v5228, %v5224
  %v6161 = vpack.c.b16 %v5229, %v5225
  %v6162 = vpack.c.b16 %v5230, %v5226
  %v6163 = vpack.c.b16 %v5231, %v5227
  %v6164 = vpack.c.b16 %v5236, %v5232
  %v6165 = vpack.c.b16 %v5237, %v5233
  %v6166 = vpack.c.b16 %v5238, %v5234
  %v6167 = vpack.c.b16 %v5239, %v5235
  %v6168 = vpack.c.b16 %v5244, %v5240
  %v6169 = vpack.c.b16 %v5245, %v5241
  %v6170 = vpack.c.b16 %v5246, %v5242
  %v6171 = vpack.c.b16 %v5247, %v5243
  %v6172 = vpack.c.b16 %v5252, %v5248
  %v6173 = vpack.c.b16 %v5253, %v5249
  %v6174 = vpack.c.b16 %v5254, %v5250
  %v6175 = vpack.c.b16 %v5255, %v5251
  %v6176 = vpack.c.b16 %v5260, %v5256
  %v6177 = vpack.c.b16 %v5261, %v5257
  %v6178 = vpack.c.b16 %v5262, %v5258
  %v6179 = vpack.c.b16 %v5263, %v5259
  %v6180 = vpack.c.b16 %v5268, %v5264
  %v6181 = vpack.c.b16 %v5269, %v5265
  %v6182 = vpack.c.b16 %v5270, %v5266
  %v6183 = vpack.c.b16 %v5271, %v5267
  %v6184 = vpack.c.b16 %v5276, %v5272
  %v6185 = vpack.c.b16 %v5277, %v5273
  %v6186 = vpack.c.b16 %v5278, %v5274
  %v6187 = vpack.c.b16 %v5279, %v5275
  %v6188 = vpack.c.b16 %v5284, %v5280
  %v6189 = vpack.c.b16 %v5285, %v5281
  %v6190 = vpack.c.b16 %v5286, %v5282
  %v6191 = vpack.c.b16 %v5287, %v5283
  %v6192 = vpack.c.b16 %v5292, %v5288
  %v6193 = vpack.c.b16 %v5293, %v5289
  %v6194 = vpack.c.b16 %v5294, %v5290
  %v6195 = vpack.c.b16 %v5295, %v5291
  %v6196 = vpack.c.b16 %v5300, %v5296
  %v6197 = vpack.c.b16 %v5301, %v5297
  %v6198 = vpack.c.b16 %v5302, %v5298
  %v6199 = vpack.c.b16 %v5303, %v5299
  %v6200 = vpack.c.b16 %v5308, %v5304
  %v6201 = vpack.c.b16 %v5309, %v5305
  %v6202 = vpack.c.b16 %v5310, %v5306
  %v6203 = vpack.c.b16 %v5311, %v5307
  %v6204 = vpack.c.b16 %v5316, %v5312
  %v6205 = vpack.c.b16 %v5317, %v5313
  %v6206 = vpack.c.b16 %v5318, %v5314
  %v6207 = vpack.c.b16 %v5319, %v5315
  %v6208 = vpack.c.b16 %v5324, %v5320
  %v6209 = vpack.c.b16 %v5325, %v5321
  %v6210 = vpack.c.b16 %v5326, %v5322
  %v6211 = vpack.c.b16 %v5327, %v5323
  %v6212 = vpack.c.b16 %v5332, %v5328
  %v6213 = vpack.c.b16 %v5333, %v5329
  %v6214 = vpack.c.b16 %v5334, %v5330
  %v6215 = vpack.c.b16 %v5335, %v5331
  %v6216 = vpack.c.b16 %v5340, %v5336
  %v6217 = vpack.c.b16 %v5341, %v5337
  %v6218 = vpack.c.b16 %v5342, %v5338
  %v6219 = vpack.c.b16 %v5343, %v5339
  %v6220 = vpack.c.b16 %v5348, %v5344
  %v6221 = vpack.c.b16 %v5349, %v5345
  %v6222 = vpack.c.b16 %v5350, %v5346
  %v6223 = vpack.c.b16 %v5351, %v5347
  %v6224 = vpack.c.b16 %v5356, %v5352
  %v6225 = vpack.c.b16 %v5357, %v5353
  %v6226 = vpack.c.b16 %v5358, %v5354
  %v6227 = vpack.c.b16 %v5359, %v5355
  %v6228 = vpack.c.b16 %v5364, %v5360
  %v6229 = vpack.c.b16 %v5365, %v5361
  %v6230 = vpack.c.b16 %v5366, %v5362
  %v6231 = vpack.c.b16 %v5367, %v5363
  %v6232 = vpack.c.b16 %v5372, %v5368
  %v6233 = vpack.c.b16 %v5373, %v5369
  %v6234 = vpack.c.b16 %v5374, %v5370
  %v6235 = vpack.c.b16 %v5375, %v5371
  %v6236 = vpack.c.b16 %v5380, %v5376
  %v6237 = vpack.c.b16 %v5381, %v5377
  %v6238 = vpack.c.b16 %v5382, %v5378
  %v6239 = vpack.c.b16 %v5383, %v5379
  %v6240 = vpack.c.b16 %v5388, %v5384
  %v6241 = vpack.c.b16 %v5389, %v5385
  %v6242 = vpack.c.b16 %v5390, %v5386
  %v6243 = vpack.c.b16 %v5391, %v5387
  %v6244 = vpack.c.b16 %v5396, %v5392
  %v6245 = vpack.c.b16 %v5397, %v5393
  %v6246 = vpack.c.b16 %v5398, %v5394
  %v6247 = vpack.c.b16 %v5399, %v5395
  %v6248 = vpack.c.b16 %v5404, %v5400
  %v6249 = vpack.c.b16 %v5405, %v5401
  %v6250 = vpack.c.b16 %v5406, %v5402
  %v6251 = vpack.c.b16 %v5407, %v5403
  %v6252 = vpack.c.b16 %v5412, %v5408
  %v6253 = vpack.c.b16 %v5413, %v5409
  %v6254 = vpack.c.b16 %v5414, %v5410
  %v6255 = vpack.c.b16 %v5415, %v5411
  %v6256 = vpack.c.b16 %v5420, %v5416
  %v6257 = vpack.c.b16 %v5421, %v5417
  %v6258 = vpack.c.b16 %v5422, %v5418
  %v6259 = vpack.c.b16 %v5423, %v5419
  %v6260 = vpack.c.b16 %v5428, %v5424
  %v6261 = vpack.c.b16 %v5429, %v5425
  %v6262 = vpack.c.b16 %v5430, %v5426
  %v6263 = vpack.c.b16 %v5431, %v5427
  %v6264 = vpack.c.b16 %v5436, %v5432
  %v6265 = vpack.c.b16 %v5437, %v5433
  %v6266 = vpack.c.b16 %v5438, %v5434
  %v6267 = vpack.c.b16 %v5439, %v5435
  %v6268 = vpack.c.b16 %v5444, %v5440
  %v6269 = vpack.c.b16 %v5445, %v5441
  %v6270 = vpack.c.b16 %v5446, %v5442
  %v6271 = vpack.c.b16 %v5447, %v5443
  %v6272 = vpack.c.b16 %v5452, %v5448
  %v6273 = vpack.c.b16 %v5453, %v5449
  %v6274 = vpack.c.b16 %v5454, %v5450
  %v6275 = vpack.c.b16 %v5455, %v5451
  %v6276 = vpack.c.b16 %v5460, %v5456
  %v6277 = vpack.c.b16 %v5461, %v5457
  %v6278 = vpack.c.b16 %v5462, %v5458
  %v6279 = vpack.c.b16 %v5463, %v5459
  %v6280 = vpack.c.b16 %v5468, %v5464
  %v6281 = vpack.c.b16 %v5469, %v5465
  %v6282 = vpack.c.b16 %v5470, %v5466
  %v6283 = vpack.c.b16 %v5471, %v5467
  %v6284 = vpack.c.b16 %v5476, %v5472
  %v6285 = vpack.c.b16 %v5477, %v5473
  %v6286 = vpack.c.b16 %v5478, %v5474
  %v6287 = vpack.c.b16 %v5479, %v5475
  %v6288 = vpack.c.b16 %v5484, %v5480
  %v6289 = vpack.c.b16 %v5485, %v5481
  %v6290 = vpack.c.b16 %v5486, %v5482
  %v6291 = vpack.c.b16 %v5487, %v5483
  %v6292 = vpack.c.b16 %v5492, %v5488
  %v6293 = vpack.c.b16 %v5493, %v5489
  %v6294 = vpack.c.b16 %v5494, %v5490
  %v6295 = vpack.c.b16 %v5495, %v5491
  %v6296 = vpack.c.b16 %v5500, %v5496
  %v6297 = vpack.c.b16 %v5501, %v5497
  %v6298 = vpack.c.b16 %v5502, %v5498
  %v6299 = vpack.c.b16 %v5503, %v5499
  %v6300 = vpack.c.b16 %v5508, %v5504
  %v6301 = vpack.c.b16 %v5509, %v5505
  %v6302 = vpack.c.b16 %v5510, %v5506
  %v6303 = vpack.c.b16 %v5511, %v5507
  %v6304 = vpack.c.b16 %v5516, %v5512
  %v6305 = vpack.c.b16 %v5517, %v5513
  %v6306 = vpack.c.b16 %v5518, %v5514
  %v6307 = vpack.c.b16 %v5519, %v5515
  %v6308 = vpack.c.b16 %v5524, %v5520
  %v6309 = vpack.c.b16 %v5525, %v5521
  %v6310 = vpack.c.b16 %v5526, %v5522
  %v6311 = vpack.c.b16 %v5527, %v5523
  %v6312 = vpack.c.b16 %v5532, %v5528
  %v6313 = vpack.c.b16 %v5533, %v5529
  %v6314 = vpack.c.b16 %v5534, %v5530
  %v6315 = vpack.c.b16 %v5535, %v5531
  %v6316 = vpack.c.b16 %v5540, %v5536
  %v6317 = vpack.c.b16 %v5541, %v5537
  %v6318 = vpack.c.b16 %v5542, %v5538
  %v6319 = vpack.c.b16 %v5543, %v5539
  %v6320 = vpack.c.b16 %v5548, %v5544
  %v6321 = vpack.c.b16 %v5549, %v5545
  %v6322 = vpack.c.b16 %v5550, %v5546
  %v6323 = vpack.c.b16 %v5551, %v5547
  %v6324 = vpack.c.b16 %v5556, %v5552
  %v6325 = vpack.c.b16 %v5557, %v5553
  %v6326 = vpack.c.b16 %v5558, %v5554
  %v6327 = vpack.c.b16 %v5559, %v5555
  %v6328 = vpack.c.b16 %v5564, %v5560
  %v6329 = vpack.c.b16 %v5565, %v5561
  %v6330 = vpack.c.b16 %v5566, %v5562
  %v6331 = vpack.c.b16 %v5567, %v5563
  %v6332 = vpack.c.b16 %v5572, %v5568
  %v6333 = vpack.c.b16 %v5573, %v5569
  %v6334 = vpack.c.b16 %v5574, %v5570
  %v6335 = vpack.c.b16 %v5575, %v5571
  %v6336 = vpack.c.b16 %v5580, %v5576
  %v6337 = vpack.c.b16 %v5581, %v5577
  %v6338 = vpack.c.b16 %v5582, %v5578
  %v6339 = vpack.c.b16 %v5583, %v5579
  %v6340 = vpack.c.b16 %v5588, %v5584
  %v6341 = vpack.c.b16 %v5589, %v5585
  %v6342 = vpack.c.b16 %v5590, %v5586
  %v6343 = vpack.c.b16 %v5591, %v5587
  %v6344 = vpack.c.b16 %v5596, %v5592
  %v6345 = vpack.c.b16 %v5597, %v5593
  %v6346 = vpack.c.b16 %v5598, %v5594
  %v6347 = vpack.c.b16 %v5599, %v5595
  %v6348 = vpack.c.b16 %v5604, %v5600
  %v6349 = vpack.c.b16 %v5605, %v5601
  %v6350 = vpack.c.b16 %v5606, %v5602
  %v6351 = vpack.c.b16 %v5607, %v5603
  %v6352 = vpack.c.b16 %v5612, %v5608
  %v6353 = vpack.c.b16 %v5613, %v5609
  %v6354 = vpack.c.b16 %v5614, %v5610
  %v6355 = vpack.c.b16 %v5615, %v5611
  %v6356 = vpack.c.b16 %v5620, %v5616
  %v6357 = vpack.c.b16 %v5621, %v5617
  %v6358 = vpack.c.b16 %v5622, %v5618
  %v6359 = vpack.c.b16 %v5623, %v5619
  %v6360 = vpack.c.b16 %v5628, %v5624
  %v6361 = vpack.c.b16 %v5629, %v5625
  %v6362 = vpack.c.b16 %v5630, %v5626
  %v6363 = vpack.c.b16 %v5631, %v5627
  %v6364 = vpack.c.b16 %v5636, %v5632
  %v6365 = vpack.c.b16 %v5637, %v5633
  %v6366 = vpack.c.b16 %v5638, %v5634
  %v6367 = vpack.c.b16 %v5639, %v5635
  %v6368 = vpack.c.b16 %v5644, %v5640
  %v6369 = vpack.c.b16 %v5645, %v5641
  %v6370 = vpack.c.b16 %v5646, %v5642
  %v6371 = vpack.c.b16 %v5647, %v5643
  %v6372 = vpack.c.b16 %v5652, %v5648
  %v6373 = vpack.c.b16 %v5653, %v5649
  %v6374 = vpack.c.b16 %v5654, %v5650
  %v6375 = vpack.c.b16 %v5655, %v5651
  %v6376 = vpack.c.b16 %v5660, %v5656
  %v6377 = vpack.c.b16 %v5661, %v5657
  %v6378 = vpack.c.b16 %v5662, %v5658
  %v6379 = vpack.c.b16 %v5663, %v5659
  %v6380 = vpack.c.b16 %v5668, %v5664
  %v6381 = vpack.c.b16 %v5669, %v5665
  %v6382 = vpack.c.b16 %v5670, %v5666
  %v6383 = vpack.c.b16 %v5671, %v5667
  %v6384 = vpack.c.b16 %v5676, %v5672
  %v6385 = vpack.c.b16 %v5677, %v5673
  %v6386 = vpack.c.b16 %v5678, %v5674
  %v6387 = vpack.c.b16 %v5679, %v5675
  %v6388 = vpack.c.b16 %v5684, %v5680
  %v6389 = vpack.c.b16 %v5685, %v5681
  %v6390 = vpack.c.b16 %v5686, %v5682
  %v6391 = vpack.c.b16 %v5687, %v5683
  %v6392 = vpack.c.b16 %v5692, %v5688
  %v6393 = vpack.c.b16 %v5693, %v5689
  %v6394 = vpack.c.b16 %v5694, %v5690
  %v6395 = vpack.c.b16 %v5695, %v5691
  %v6396 = vpack.c.b16 %v5700, %v5696
  %v6397 = vpack.c.b16 %v5701, %v5697
  %v6398 = vpack.c.b16 %v5702, %v5698
  %v6399 = vpack.c.b16 %v5703, %v5699
  %v6400 = vpack.c.b16 %v5708, %v5704
  %v6401 = vpack.c.b16 %v5709, %v5705
  %v6402 = vpack.c.b16 %v5710, %v5706
  %v6403 = vpack.c.b16 %v5711, %v5707
  %v6404 = vpack.c.b16 %v5716, %v5712
  %v6405 = vpack.c.b16 %v5717, %v5713
  %v6406 = vpack.c.b16 %v5718, %v5714
  %v6407 = vpack.c.b16 %v5719, %v5715
  %v6408 = vpack.c.b16 %v5724, %v5720
  %v6409 = vpack.c.b16 %v5725, %v5721
  %v6410 = vpack.c.b16 %v5726, %v5722
  %v6411 = vpack.c.b16 %v5727, %v5723
  %v6412 = vpack.c.b16 %v5732, %v5728
  %v6413 = vpack.c.b16 %v5733, %v5729
  %v6414 = vpack.c.b16 %v5734, %v5730
  %v6415 = vpack.c.b16 %v5735, %v5731
  %v6416 = vpack.c.b16 %v5740, %v5736
  %v6417 = vpack.c.b16 %v5741, %v5737
  %v6418 = vpack.c.b16 %v5742, %v5738
  %v6419 = vpack.c.b16 %v5743, %v5739
  %v6420 = vpack.c.b16 %v5748, %v5744
  %v6421 = vpack.c.b16 %v5749, %v5745
  %v6422 = vpack.c.b16 %v5750, %v5746
  %v6423 = vpack.c.b16 %v5751, %v5747
  %v6424 = vpack.c.b16 %v5756, %v5752
  %v6425 = vpack.c.b16 %v5757, %v5753
  %v6426 = vpack.c.b16 %v5758, %v5754
  %v6427 = vpack.c.b16 %v5759, %v5755
  %v6428 = vpack.c.b16 %v5764, %v5760
  %v6429 = vpack.c.b16 %v5765, %v5761
  %v6430 = vpack.c.b16 %v5766, %v5762
  %v6431 = vpack.c.b16 %v5767, %v5763
  %v6432 = vpack.c.b16 %v5772, %v5768
  %v6433 = vpack.c.b16 %v5773, %v5769
  %v6434 = vpack.c.b16 %v5774, %v5770
  %v6435 = vpack.c.b16 %v5775, %v5771
  %v6436 = vpack.c.b16 %v5780, %v5776
  %v6437 = vpack.c.b16 %v5781, %v5777
  %v6438 = vpack.c.b16 %v5782, %v5778
  %v6439 = vpack.c.b16 %v5783, %v5779
  %v6440 = vpack.c.b16 %v5788, %v5784
  %v6441 = vpack.c.b16 %v5789, %v5785
  %v6442 = vpack.c.b16 %v5790, %v5786
  %v6443 = vpack.c.b16 %v5791, %v5787
  %v6444 = vpack.c.b16 %v5796, %v5792
  %v6445 = vpack.c.b16 %v5797, %v5793
  %v6446 = vpack.c.b16 %v5798, %v5794
  %v6447 = vpack.c.b16 %v5799, %v5795
  %v6448 = vpack.c.b16 %v5804, %v5800
  %v6449 = vpack.c.b16 %v5805, %v5801
  %v6450 = vpack.c.b16 %v5806, %v5802
  %v6451 = vpack.c.b16 %v5807, %v5803
  %v6452 = vpack.c.b16 %v5812, %v5808
  %v6453 = vpack.c.b16 %v5813, %v5809
  %v6454 = vpack.c.b16 %v5814, %v5810
  %v6455 = vpack.c.b16 %v5815, %v5811
  %v6456 = vpack.c.b16 %v5820, %v5816
  %v6457 = vpack.c.b16 %v5821, %v5817
  %v6458 = vpack.c.b16 %v5822, %v5818
  %v6459 = vpack.c.b16 %v5823, %v5819
  %v6460 = vpack.c.b16 %v5828, %v5824
  %v6461 = vpack.c.b16 %v5829, %v5825
  %v6462 = vpack.c.b16 %v5830, %v5826
  %v6463 = vpack.c.b16 %v5831, %v5827
  %v6464 = vpack.c.b16 %v5836, %v5832
  %v6465 = vpack.c.b16 %v5837, %v5833
  %v6466 = vpack.c.b16 %v5838, %v5834
  %v6467 = vpack.c.b16 %v5839, %v5835
  %v6468 = vpack.c.b16 %v5844, %v5840
  %v6469 = vpack.c.b16 %v5845, %v5841
  %v6470 = vpack.c.b16 %v5846, %v5842
  %v6471 = vpack.c.b16 %v5847, %v5843
  %v6472 = vpack.c.b16 %v5852, %v5848
  %v6473 = vpack.c.b16 %v5853, %v5849
  %v6474 = vpack.c.b16 %v5854, %v5850
  %v6475 = vpack.c.b16 %v5855, %v5851
  %v6476 = vpack.c.b16 %v5860, %v5856
  %v6477 = vpack.c.b16 %v5861, %v5857
  %v6478 = vpack.c.b16 %v5862, %v5858
  %v6479 = vpack.c.b16 %v5863, %v5859
  %v6480 = vpack.c.b16 %v5868, %v5864
  %v6481 = vpack.c.b16 %v5869, %v5865
  %v6482 = vpack.c.b16 %v5870, %v5866
  %v6483 = vpack.c.b16 %v5871, %v5867
  %v6484 = vpack.c.b16 %v5876, %v5872
  %v6485 = vpack.c.b16 %v5877, %v5873
  %v6486 = vpack.c.b16 %v5878, %v5874
  %v6487 = vpack.c.b16 %v5879, %v5875
  %v6488 = vpack.c.b16 %v5884, %v5880
  %v6489 = vpack.c.b16 %v5885, %v5881
  %v6490 = vpack.c.b16 %v5886, %v5882
  %v6491 = vpack.c.b16 %v5887, %v5883
  %v6492 = vpack.c.b16 %v5892, %v5888
  %v6493 = vpack.c.b16 %v5893, %v5889
  %v6494 = vpack.c.b16 %v5894, %v5890
  %v6495 = vpack.c.b16 %v5895, %v5891
  %v6496 = vpack.c.b16 %v5900, %v5896
  %v6497 = vpack.c.b16 %v5901, %v5897
  %v6498 = vpack.c.b16 %v5902, %v5898
  %v6499 = vpack.c.b16 %v5903, %v5899
  %v6500 = vpack.c.b16 %v5908, %v5904
  %v6501 = vpack.c.b16 %v5909, %v5905
  %v6502 = vpack.c.b16 %v5910, %v5906
  %v6503 = vpack.c.b16 %v5911, %v5907
  %v6504 = vpack.c.b16 %v5916, %v5912
  %v6505 = vpack.c.b16 %v5917, %v5913
  %v6506 = vpack.c.b16 %v5918, %v5914
  %v6507 = vpack.c.b16 %v5919, %v5915
  %v6508 = vpack.c.b16 %v5924, %v5920
  %v6509 = vpack.c.b16 %v5925, %v5921
  %v6510 = vpack.c.b16 %v5926, %v5922
  %v6511 = vpack.c.b16 %v5927, %v5923
  %v6512 = vpack.c.b16 %v5932, %v5928
  %v6513 = vpack.c.b16 %v5933, %v5929
  %v6514 = vpack.c.b16 %v5934, %v5930
  %v6515 = vpack.c.b16 %v5935, %v5931
  %v6516 = vpack.c.b16 %v5940, %v5936
  %v6517 = vpack.c.b16 %v5941, %v5937
  %v6518 = vpack.c.b16 %v5942, %v5938
  %v6519 = vpack.c.b16 %v5943, %v5939
  %v6520 = vpack.c.b16 %v5948, %v5944
  %v6521 = vpack.c.b16 %v5949, %v5945
  %v6522 = vpack.c.b16 %v5950, %v5946
  %v6523 = vpack.c.b16 %v5951, %v5947
  %v6524 = vpack.c.b16 %v5956, %v5952
  %v6525 = vpack.c.b16 %v5957, %v5953
  %v6526 = vpack.c.b16 %v5958, %v5954
  %v6527 = vpack.c.b16 %v5959, %v5955
  %v6528 = vpack.c.b16 %v5964, %v5960
  %v6529 = vpack.c.b16 %v5965, %v5961
  %v6530 = vpack.c.b16 %v5966, %v5962
  %v6531 = vpack.c.b16 %v5967, %v5963
  %v6532 = vpack.c.b16 %v5972, %v5968
  %v6533 = vpack.c.b16 %v5973, %v5969
  %v6534 = vpack.c.b16 %v5974, %v5970
  %v6535 = vpack.c.b16 %v5975, %v5971
  %v6536 = vpack.c.b16 %v5980, %v5976
  %v6537 = vpack.c.b16 %v5981, %v5977
  %v6538 = vpack.c.b16 %v5982, %v5978
  %v6539 = vpack.c.b16 %v5983, %v5979
  %v6540 = vpack.c.b16 %v5988, %v5984
  %v6541 = vpack.c.b16 %v5989, %v5985
  %v6542 = vpack.c.b16 %v5990, %v5986
  %v6543 = vpack.c.b16 %v5991, %v5987
  %v6544 = vpack.c.b16 %v5996, %v5992
  %v6545 = vpack.c.b16 %v5997, %v5993
  %v6546 = vpack.c.b16 %v5998, %v5994
  %v6547 = vpack.c.b16 %v5999, %v5995
  %v6548 = vpack.c.b16 %v6004, %v6000
  %v6549 = vpack.c.b16 %v6005, %v6001
  %v6550 = vpack.c.b16 %v6006, %v6002
  %v6551 = vpack.c.b16 %v6007, %v6003
  %v6552 = vpack.c.b16 %v6012, %v6008
  %v6553 = vpack.c.b16 %v6013, %v6009
  %v6554 = vpack.c.b16 %v6014, %v6010
  %v6555 = vpack.c.b16 %v6015, %v6011
  %v6556 = vpack.c.b16 %v6020, %v6016
  %v6557 = vpack.c.b16 %v6021, %v6017
  %v6558 = vpack.c.b16 %v6022, %v6018
  %v6559 = vpack.c.b16 %v6023, %v6019
  %v6560 = vpack.c.b16 %v6028, %v6024
  %v6561 = vpack.c.b16 %v6029, %v6025
  %v6562 = vpack.c.b16 %v6030, %v6026
  %v6563 = vpack.c.b16 %v6031, %v6027
  %v6564 = vpack.c.b16 %v6036, %v6032
  %v6565 = vpack.c.b16 %v6037, %v6033
  %v6566 = vpack.c.b16 %v6038, %v6034
  %v6567 = vpack.c.b16 %v6039, %v6035
  %v6568 = vpack.c.b16 %v6044, %v6040
  %v6569 = vpack.c.b16 %v6045, %v6041
  %v6570 = vpack.c.b16 %v6046, %v6042
  %v6571 = vpack.c.b16 %v6047, %v6043
  %v6572 = vpack.c.b16 %v6052, %v6048
  %v6573 = vpack.c.b16 %v6053, %v6049
  %v6574 = vpack.c.b16 %v6054, %v6050
  %v6575 = vpack.c.b16 %v6055, %v6051
  %v6576 = vpack.c.b16 %v6060, %v6056
  %v6577 = vpack.c.b16 %v6061, %v6057
  %v6578 = vpack.c.b16 %v6062, %v6058
  %v6579 = vpack.c.b16 %v6063, %v6059
  %v6580 = vpack.c.b16 %v6068, %v6064
  %v6581 = vpack.c.b16 %v6069, %v6065
  %v6582 = vpack.c.b16 %v6070, %v6066
  %v6583 = vpack.c.b16 %v6071, %v6067
  %7096 = vmatpush.bf16.msra.mxu0 %v6100
  %7097 = vmatpush.bf16.msra.mxu0 %v6096
  %7098 = vmatpush.bf16.msra.mxu0 %v6092
  %7099 = vmatpush.bf16.msra.mxu0 %v6088
  %7100 = vmatpush.bf16.msra.mxu0 %v6084
  %7101 = vmatpush.bf16.msra.mxu0 %v6080
  %7102 = vmatpush.bf16.msra.mxu0 %v6076
  %7103 = vmatpush.bf16.msra.mxu0 %v6072
  %7104 = vmatmul.bf16.gmra.mxu0 %v3998
  %v7105 = vpop.f32.mrf.mxu0
  %v7106 = vadd.f32 %v4528, %v7105
  %v7107 = vpop.f32.mrf.mxu0
  %7108 = vdwg.mxu0
  %7109 = vmatpush.bf16.msra.mxu0 %v6132
  %7110 = vmatpush.bf16.msra.mxu0 %v6128
  %7111 = vmatpush.bf16.msra.mxu0 %v6124
  %7112 = vmatpush.bf16.msra.mxu0 %v6120
  %7113 = vmatpush.bf16.msra.mxu0 %v6116
  %7114 = vmatpush.bf16.msra.mxu0 %v6112
  %7115 = vmatpush.bf16.msra.mxu0 %v6108
  %7116 = vmatpush.bf16.msra.mxu0 %v6104
  %7117 = vmatmul.bf16.gmra.mxu0 %v3999
  %v7118 = vpop.f32.mrf.mxu0
  %v7119 = vadd.f32 %v7106, %v7118
  %v7120 = vpop.f32.mrf.mxu0
  %7121 = vdwg.mxu0
  %7122 = vmatpush.bf16.msra.mxu0 %v6164
  %7123 = vmatpush.bf16.msra.mxu0 %v6160
  %7124 = vmatpush.bf16.msra.mxu0 %v6156
  %7125 = vmatpush.bf16.msra.mxu0 %v6152
  %7126 = vmatpush.bf16.msra.mxu0 %v6148
  %7127 = vmatpush.bf16.msra.mxu0 %v6144
  %7128 = vmatpush.bf16.msra.mxu0 %v6140
  %7129 = vmatpush.bf16.msra.mxu0 %v6136
  %7130 = vmatmul.bf16.gmra.mxu0 %v4000
  %v7131 = vpop.f32.mrf.mxu0
  %v7132 = vadd.f32 %v7119, %v7131
  %v7133 = vpop.f32.mrf.mxu0
  %7134 = vdwg.mxu0
  %7135 = vmatpush.bf16.msra.mxu0 %v6196
  %7136 = vmatpush.bf16.msra.mxu0 %v6192
  %7137 = vmatpush.bf16.msra.mxu0 %v6188
  %7138 = vmatpush.bf16.msra.mxu0 %v6184
  %7139 = vmatpush.bf16.msra.mxu0 %v6180
  %7140 = vmatpush.bf16.msra.mxu0 %v6176
  %7141 = vmatpush.bf16.msra.mxu0 %v6172
  %7142 = vmatpush.bf16.msra.mxu0 %v6168
  %7143 = vmatmul.bf16.gmra.mxu0 %v4001
  %v7144 = vpop.f32.mrf.mxu0
  %v7145 = vadd.f32 %v7132, %v7144
  %v7146 = vpop.f32.mrf.mxu0
  %7147 = vdwg.mxu0
  %7148 = vmatpush.bf16.msra.mxu0 %v6228
  %7149 = vmatpush.bf16.msra.mxu0 %v6224
  %7150 = vmatpush.bf16.msra.mxu0 %v6220
  %7151 = vmatpush.bf16.msra.mxu0 %v6216
  %7152 = vmatpush.bf16.msra.mxu0 %v6212
  %7153 = vmatpush.bf16.msra.mxu0 %v6208
  %7154 = vmatpush.bf16.msra.mxu0 %v6204
  %7155 = vmatpush.bf16.msra.mxu0 %v6200
  %7156 = vmatmul.bf16.gmra.mxu0 %v4002
  %v7157 = vpop.f32.mrf.mxu0
  %v7158 = vadd.f32 %v7145, %v7157
  %v7159 = vpop.f32.mrf.mxu0
  %7160 = vdwg.mxu0
  %7161 = vmatpush.bf16.msra.mxu0 %v6260
  %7162 = vmatpush.bf16.msra.mxu0 %v6256
  %7163 = vmatpush.bf16.msra.mxu0 %v6252
  %7164 = vmatpush.bf16.msra.mxu0 %v6248
  %7165 = vmatpush.bf16.msra.mxu0 %v6244
  %7166 = vmatpush.bf16.msra.mxu0 %v6240
  %7167 = vmatpush.bf16.msra.mxu0 %v6236
  %7168 = vmatpush.bf16.msra.mxu0 %v6232
  %7169 = vmatmul.bf16.gmra.mxu0 %v4003
  %v7170 = vpop.f32.mrf.mxu0
  %v7171 = vadd.f32 %v7158, %v7170
  %v7172 = vpop.f32.mrf.mxu0
  %7173 = vdwg.mxu0
  %7174 = vmatpush.bf16.msra.mxu0 %v6292
  %7175 = vmatpush.bf16.msra.mxu0 %v6288
  %7176 = vmatpush.bf16.msra.mxu0 %v6284
  %7177 = vmatpush.bf16.msra.mxu0 %v6280
  %7178 = vmatpush.bf16.msra.mxu0 %v6276
  %7179 = vmatpush.bf16.msra.mxu0 %v6272
  %7180 = vmatpush.bf16.msra.mxu0 %v6268
  %7181 = vmatpush.bf16.msra.mxu0 %v6264
  %7182 = vmatmul.bf16.gmra.mxu0 %v4004
  %v7183 = vpop.f32.mrf.mxu0
  %v7184 = vadd.f32 %v7171, %v7183
  %v7185 = vpop.f32.mrf.mxu0
  %7186 = vdwg.mxu0
  %7187 = vmatpush.bf16.msra.mxu0 %v6324
  %7188 = vmatpush.bf16.msra.mxu0 %v6320
  %7189 = vmatpush.bf16.msra.mxu0 %v6316
  %7190 = vmatpush.bf16.msra.mxu0 %v6312
  %7191 = vmatpush.bf16.msra.mxu0 %v6308
  %7192 = vmatpush.bf16.msra.mxu0 %v6304
  %7193 = vmatpush.bf16.msra.mxu0 %v6300
  %7194 = vmatpush.bf16.msra.mxu0 %v6296
  %7195 = vmatmul.bf16.gmra.mxu0 %v4005
  %v7196 = vpop.f32.mrf.mxu0
  %v7197 = vadd.f32 %v7184, %v7196
  %v7198 = vpop.f32.mrf.mxu0
  %7199 = vdwg.mxu0
  %7200 = vmatpush.bf16.msra.mxu0 %v6356
  %7201 = vmatpush.bf16.msra.mxu0 %v6352
  %7202 = vmatpush.bf16.msra.mxu0 %v6348
  %7203 = vmatpush.bf16.msra.mxu0 %v6344
  %7204 = vmatpush.bf16.msra.mxu0 %v6340
  %7205 = vmatpush.bf16.msra.mxu0 %v6336
  %7206 = vmatpush.bf16.msra.mxu0 %v6332
  %7207 = vmatpush.bf16.msra.mxu0 %v6328
  %7208 = vmatmul.bf16.gmra.mxu0 %v4006
  %v7209 = vpop.f32.mrf.mxu0
  %v7210 = vadd.f32 %v7197, %v7209
  %v7211 = vpop.f32.mrf.mxu0
  %7212 = vdwg.mxu0
  %7213 = vmatpush.bf16.msra.mxu0 %v6388
  %7214 = vmatpush.bf16.msra.mxu0 %v6384
  %7215 = vmatpush.bf16.msra.mxu0 %v6380
  %7216 = vmatpush.bf16.msra.mxu0 %v6376
  %7217 = vmatpush.bf16.msra.mxu0 %v6372
  %7218 = vmatpush.bf16.msra.mxu0 %v6368
  %7219 = vmatpush.bf16.msra.mxu0 %v6364
  %7220 = vmatpush.bf16.msra.mxu0 %v6360
  %7221 = vmatmul.bf16.gmra.mxu0 %v4007
  %v7222 = vpop.f32.mrf.mxu0
  %v7223 = vadd.f32 %v7210, %v7222
  %v7224 = vpop.f32.mrf.mxu0
  %7225 = vdwg.mxu0
  %7226 = vmatpush.bf16.msra.mxu0 %v6420
  %7227 = vmatpush.bf16.msra.mxu0 %v6416
  %7228 = vmatpush.bf16.msra.mxu0 %v6412
  %7229 = vmatpush.bf16.msra.mxu0 %v6408
  %7230 = vmatpush.bf16.msra.mxu0 %v6404
  %7231 = vmatpush.bf16.msra.mxu0 %v6400
  %7232 = vmatpush.bf16.msra.mxu0 %v6396
  %7233 = vmatpush.bf16.msra.mxu0 %v6392
  %7234 = vmatmul.bf16.gmra.mxu0 %v4008
  %v7235 = vpop.f32.mrf.mxu0
  %v7236 = vadd.f32 %v7223, %v7235
  %v7237 = vpop.f32.mrf.mxu0
  %7238 = vdwg.mxu0
  %7239 = vmatpush.bf16.msra.mxu0 %v6452
  %7240 = vmatpush.bf16.msra.mxu0 %v6448
  %7241 = vmatpush.bf16.msra.mxu0 %v6444
  %7242 = vmatpush.bf16.msra.mxu0 %v6440
  %7243 = vmatpush.bf16.msra.mxu0 %v6436
  %7244 = vmatpush.bf16.msra.mxu0 %v6432
  %7245 = vmatpush.bf16.msra.mxu0 %v6428
  %7246 = vmatpush.bf16.msra.mxu0 %v6424
  %7247 = vmatmul.bf16.gmra.mxu0 %v4009
  %v7248 = vpop.f32.mrf.mxu0
  %v7249 = vadd.f32 %v7236, %v7248
  %v7250 = vpop.f32.mrf.mxu0
  %7251 = vdwg.mxu0
  %7252 = vmatpush.bf16.msra.mxu0 %v6484
  %7253 = vmatpush.bf16.msra.mxu0 %v6480
  %7254 = vmatpush.bf16.msra.mxu0 %v6476
  %7255 = vmatpush.bf16.msra.mxu0 %v6472
  %7256 = vmatpush.bf16.msra.mxu0 %v6468
  %7257 = vmatpush.bf16.msra.mxu0 %v6464
  %7258 = vmatpush.bf16.msra.mxu0 %v6460
  %7259 = vmatpush.bf16.msra.mxu0 %v6456
  %7260 = vmatmul.bf16.gmra.mxu0 %v4010
  %v7261 = vpop.f32.mrf.mxu0
  %v7262 = vadd.f32 %v7249, %v7261
  %v7263 = vpop.f32.mrf.mxu0
  %7264 = vdwg.mxu0
  %7265 = vmatpush.bf16.msra.mxu0 %v6516
  %7266 = vmatpush.bf16.msra.mxu0 %v6512
  %7267 = vmatpush.bf16.msra.mxu0 %v6508
  %7268 = vmatpush.bf16.msra.mxu0 %v6504
  %7269 = vmatpush.bf16.msra.mxu0 %v6500
  %7270 = vmatpush.bf16.msra.mxu0 %v6496
  %7271 = vmatpush.bf16.msra.mxu0 %v6492
  %7272 = vmatpush.bf16.msra.mxu0 %v6488
  %7273 = vmatmul.bf16.gmra.mxu0 %v4011
  %v7274 = vpop.f32.mrf.mxu0
  %v7275 = vadd.f32 %v7262, %v7274
  %v7276 = vpop.f32.mrf.mxu0
  %7277 = vdwg.mxu0
  %7278 = vmatpush.bf16.msra.mxu0 %v6548
  %7279 = vmatpush.bf16.msra.mxu0 %v6544
  %7280 = vmatpush.bf16.msra.mxu0 %v6540
  %7281 = vmatpush.bf16.msra.mxu0 %v6536
  %7282 = vmatpush.bf16.msra.mxu0 %v6532
  %7283 = vmatpush.bf16.msra.mxu0 %v6528
  %7284 = vmatpush.bf16.msra.mxu0 %v6524
  %7285 = vmatpush.bf16.msra.mxu0 %v6520
  %7286 = vmatmul.bf16.gmra.mxu0 %v4012
  %v7287 = vpop.f32.mrf.mxu0
  %v7288 = vadd.f32 %v7275, %v7287
  %v7289 = vpop.f32.mrf.mxu0
  %7290 = vdwg.mxu0
  %7291 = vmatpush.bf16.msra.mxu0 %v6580
  %7292 = vmatpush.bf16.msra.mxu0 %v6576
  %7293 = vmatpush.bf16.msra.mxu0 %v6572
  %7294 = vmatpush.bf16.msra.mxu0 %v6568
  %7295 = vmatpush.bf16.msra.mxu0 %v6564
  %7296 = vmatpush.bf16.msra.mxu0 %v6560
  %7297 = vmatpush.bf16.msra.mxu0 %v6556
  %7298 = vmatpush.bf16.msra.mxu0 %v6552
  %7299 = vmatmul.bf16.gmra.mxu0 %v4013
  %v7300 = vpop.f32.mrf.mxu0
  %v7301 = vadd.f32 %v7288, %v7300
  %v7302 = vpop.f32.mrf.mxu0
  %7303 = vdwg.mxu0
  %7304 = vmatpush.bf16.msra.mxu0 %v6101
  %7305 = vmatpush.bf16.msra.mxu0 %v6097
  %7306 = vmatpush.bf16.msra.mxu0 %v6093
  %7307 = vmatpush.bf16.msra.mxu0 %v6089
  %7308 = vmatpush.bf16.msra.mxu0 %v6085
  %7309 = vmatpush.bf16.msra.mxu0 %v6081
  %7310 = vmatpush.bf16.msra.mxu0 %v6077
  %7311 = vmatpush.bf16.msra.mxu0 %v6073
  %7312 = vmatmul.bf16.gmra.mxu0 %v3998
  %v7313 = vpop.f32.mrf.mxu0
  %v7314 = vadd.f32 %v4529, %v7313
  %v7315 = vpop.f32.mrf.mxu0
  %7316 = vdwg.mxu0
  %7317 = vmatpush.bf16.msra.mxu0 %v6133
  %7318 = vmatpush.bf16.msra.mxu0 %v6129
  %7319 = vmatpush.bf16.msra.mxu0 %v6125
  %7320 = vmatpush.bf16.msra.mxu0 %v6121
  %7321 = vmatpush.bf16.msra.mxu0 %v6117
  %7322 = vmatpush.bf16.msra.mxu0 %v6113
  %7323 = vmatpush.bf16.msra.mxu0 %v6109
  %7324 = vmatpush.bf16.msra.mxu0 %v6105
  %7325 = vmatmul.bf16.gmra.mxu0 %v3999
  %v7326 = vpop.f32.mrf.mxu0
  %v7327 = vadd.f32 %v7314, %v7326
  %v7328 = vpop.f32.mrf.mxu0
  %7329 = vdwg.mxu0
  %7330 = vmatpush.bf16.msra.mxu0 %v6165
  %7331 = vmatpush.bf16.msra.mxu0 %v6161
  %7332 = vmatpush.bf16.msra.mxu0 %v6157
  %7333 = vmatpush.bf16.msra.mxu0 %v6153
  %7334 = vmatpush.bf16.msra.mxu0 %v6149
  %7335 = vmatpush.bf16.msra.mxu0 %v6145
  %7336 = vmatpush.bf16.msra.mxu0 %v6141
  %7337 = vmatpush.bf16.msra.mxu0 %v6137
  %7338 = vmatmul.bf16.gmra.mxu0 %v4000
  %v7339 = vpop.f32.mrf.mxu0
  %v7340 = vadd.f32 %v7327, %v7339
  %v7341 = vpop.f32.mrf.mxu0
  %7342 = vdwg.mxu0
  %7343 = vmatpush.bf16.msra.mxu0 %v6197
  %7344 = vmatpush.bf16.msra.mxu0 %v6193
  %7345 = vmatpush.bf16.msra.mxu0 %v6189
  %7346 = vmatpush.bf16.msra.mxu0 %v6185
  %7347 = vmatpush.bf16.msra.mxu0 %v6181
  %7348 = vmatpush.bf16.msra.mxu0 %v6177
  %7349 = vmatpush.bf16.msra.mxu0 %v6173
  %7350 = vmatpush.bf16.msra.mxu0 %v6169
  %7351 = vmatmul.bf16.gmra.mxu0 %v4001
  %v7352 = vpop.f32.mrf.mxu0
  %v7353 = vadd.f32 %v7340, %v7352
  %v7354 = vpop.f32.mrf.mxu0
  %7355 = vdwg.mxu0
  %7356 = vmatpush.bf16.msra.mxu0 %v6229
  %7357 = vmatpush.bf16.msra.mxu0 %v6225
  %7358 = vmatpush.bf16.msra.mxu0 %v6221
  %7359 = vmatpush.bf16.msra.mxu0 %v6217
  %7360 = vmatpush.bf16.msra.mxu0 %v6213
  %7361 = vmatpush.bf16.msra.mxu0 %v6209
  %7362 = vmatpush.bf16.msra.mxu0 %v6205
  %7363 = vmatpush.bf16.msra.mxu0 %v6201
  %7364 = vmatmul.bf16.gmra.mxu0 %v4002
  %v7365 = vpop.f32.mrf.mxu0
  %v7366 = vadd.f32 %v7353, %v7365
  %v7367 = vpop.f32.mrf.mxu0
  %7368 = vdwg.mxu0
  %7369 = vmatpush.bf16.msra.mxu0 %v6261
  %7370 = vmatpush.bf16.msra.mxu0 %v6257
  %7371 = vmatpush.bf16.msra.mxu0 %v6253
  %7372 = vmatpush.bf16.msra.mxu0 %v6249
  %7373 = vmatpush.bf16.msra.mxu0 %v6245
  %7374 = vmatpush.bf16.msra.mxu0 %v6241
  %7375 = vmatpush.bf16.msra.mxu0 %v6237
  %7376 = vmatpush.bf16.msra.mxu0 %v6233
  %7377 = vmatmul.bf16.gmra.mxu0 %v4003
  %v7378 = vpop.f32.mrf.mxu0
  %v7379 = vadd.f32 %v7366, %v7378
  %v7380 = vpop.f32.mrf.mxu0
  %7381 = vdwg.mxu0
  %7382 = vmatpush.bf16.msra.mxu0 %v6293
  %7383 = vmatpush.bf16.msra.mxu0 %v6289
  %7384 = vmatpush.bf16.msra.mxu0 %v6285
  %7385 = vmatpush.bf16.msra.mxu0 %v6281
  %7386 = vmatpush.bf16.msra.mxu0 %v6277
  %7387 = vmatpush.bf16.msra.mxu0 %v6273
  %7388 = vmatpush.bf16.msra.mxu0 %v6269
  %7389 = vmatpush.bf16.msra.mxu0 %v6265
  %7390 = vmatmul.bf16.gmra.mxu0 %v4004
  %v7391 = vpop.f32.mrf.mxu0
  %v7392 = vadd.f32 %v7379, %v7391
  %v7393 = vpop.f32.mrf.mxu0
  %7394 = vdwg.mxu0
  %7395 = vmatpush.bf16.msra.mxu0 %v6325
  %7396 = vmatpush.bf16.msra.mxu0 %v6321
  %7397 = vmatpush.bf16.msra.mxu0 %v6317
  %7398 = vmatpush.bf16.msra.mxu0 %v6313
  %7399 = vmatpush.bf16.msra.mxu0 %v6309
  %7400 = vmatpush.bf16.msra.mxu0 %v6305
  %7401 = vmatpush.bf16.msra.mxu0 %v6301
  %7402 = vmatpush.bf16.msra.mxu0 %v6297
  %7403 = vmatmul.bf16.gmra.mxu0 %v4005
  %v7404 = vpop.f32.mrf.mxu0
  %v7405 = vadd.f32 %v7392, %v7404
  %v7406 = vpop.f32.mrf.mxu0
  %7407 = vdwg.mxu0
  %7408 = vmatpush.bf16.msra.mxu0 %v6357
  %7409 = vmatpush.bf16.msra.mxu0 %v6353
  %7410 = vmatpush.bf16.msra.mxu0 %v6349
  %7411 = vmatpush.bf16.msra.mxu0 %v6345
  %7412 = vmatpush.bf16.msra.mxu0 %v6341
  %7413 = vmatpush.bf16.msra.mxu0 %v6337
  %7414 = vmatpush.bf16.msra.mxu0 %v6333
  %7415 = vmatpush.bf16.msra.mxu0 %v6329
  %7416 = vmatmul.bf16.gmra.mxu0 %v4006
  %v7417 = vpop.f32.mrf.mxu0
  %v7418 = vadd.f32 %v7405, %v7417
  %v7419 = vpop.f32.mrf.mxu0
  %7420 = vdwg.mxu0
  %7421 = vmatpush.bf16.msra.mxu0 %v6389
  %7422 = vmatpush.bf16.msra.mxu0 %v6385
  %7423 = vmatpush.bf16.msra.mxu0 %v6381
  %7424 = vmatpush.bf16.msra.mxu0 %v6377
  %7425 = vmatpush.bf16.msra.mxu0 %v6373
  %7426 = vmatpush.bf16.msra.mxu0 %v6369
  %7427 = vmatpush.bf16.msra.mxu0 %v6365
  %7428 = vmatpush.bf16.msra.mxu0 %v6361
  %7429 = vmatmul.bf16.gmra.mxu0 %v4007
  %v7430 = vpop.f32.mrf.mxu0
  %v7431 = vadd.f32 %v7418, %v7430
  %v7432 = vpop.f32.mrf.mxu0
  %7433 = vdwg.mxu0
  %7434 = vmatpush.bf16.msra.mxu0 %v6421
  %7435 = vmatpush.bf16.msra.mxu0 %v6417
  %7436 = vmatpush.bf16.msra.mxu0 %v6413
  %7437 = vmatpush.bf16.msra.mxu0 %v6409
  %7438 = vmatpush.bf16.msra.mxu0 %v6405
  %7439 = vmatpush.bf16.msra.mxu0 %v6401
  %7440 = vmatpush.bf16.msra.mxu0 %v6397
  %7441 = vmatpush.bf16.msra.mxu0 %v6393
  %7442 = vmatmul.bf16.gmra.mxu0 %v4008
  %v7443 = vpop.f32.mrf.mxu0
  %v7444 = vadd.f32 %v7431, %v7443
  %v7445 = vpop.f32.mrf.mxu0
  %7446 = vdwg.mxu0
  %7447 = vmatpush.bf16.msra.mxu0 %v6453
  %7448 = vmatpush.bf16.msra.mxu0 %v6449
  %7449 = vmatpush.bf16.msra.mxu0 %v6445
  %7450 = vmatpush.bf16.msra.mxu0 %v6441
  %7451 = vmatpush.bf16.msra.mxu0 %v6437
  %7452 = vmatpush.bf16.msra.mxu0 %v6433
  %7453 = vmatpush.bf16.msra.mxu0 %v6429
  %7454 = vmatpush.bf16.msra.mxu0 %v6425
  %7455 = vmatmul.bf16.gmra.mxu0 %v4009
  %v7456 = vpop.f32.mrf.mxu0
  %v7457 = vadd.f32 %v7444, %v7456
  %v7458 = vpop.f32.mrf.mxu0
  %7459 = vdwg.mxu0
  %7460 = vmatpush.bf16.msra.mxu0 %v6485
  %7461 = vmatpush.bf16.msra.mxu0 %v6481
  %7462 = vmatpush.bf16.msra.mxu0 %v6477
  %7463 = vmatpush.bf16.msra.mxu0 %v6473
  %7464 = vmatpush.bf16.msra.mxu0 %v6469
  %7465 = vmatpush.bf16.msra.mxu0 %v6465
  %7466 = vmatpush.bf16.msra.mxu0 %v6461
  %7467 = vmatpush.bf16.msra.mxu0 %v6457
  %7468 = vmatmul.bf16.gmra.mxu0 %v4010
  %v7469 = vpop.f32.mrf.mxu0
  %v7470 = vadd.f32 %v7457, %v7469
  %v7471 = vpop.f32.mrf.mxu0
  %7472 = vdwg.mxu0
  %7473 = vmatpush.bf16.msra.mxu0 %v6517
  %7474 = vmatpush.bf16.msra.mxu0 %v6513
  %7475 = vmatpush.bf16.msra.mxu0 %v6509
  %7476 = vmatpush.bf16.msra.mxu0 %v6505
  %7477 = vmatpush.bf16.msra.mxu0 %v6501
  %7478 = vmatpush.bf16.msra.mxu0 %v6497
  %7479 = vmatpush.bf16.msra.mxu0 %v6493
  %7480 = vmatpush.bf16.msra.mxu0 %v6489
  %7481 = vmatmul.bf16.gmra.mxu0 %v4011
  %v7482 = vpop.f32.mrf.mxu0
  %v7483 = vadd.f32 %v7470, %v7482
  %v7484 = vpop.f32.mrf.mxu0
  %7485 = vdwg.mxu0
  %7486 = vmatpush.bf16.msra.mxu0 %v6549
  %7487 = vmatpush.bf16.msra.mxu0 %v6545
  %7488 = vmatpush.bf16.msra.mxu0 %v6541
  %7489 = vmatpush.bf16.msra.mxu0 %v6537
  %7490 = vmatpush.bf16.msra.mxu0 %v6533
  %7491 = vmatpush.bf16.msra.mxu0 %v6529
  %7492 = vmatpush.bf16.msra.mxu0 %v6525
  %7493 = vmatpush.bf16.msra.mxu0 %v6521
  %7494 = vmatmul.bf16.gmra.mxu0 %v4012
  %v7495 = vpop.f32.mrf.mxu0
  %v7496 = vadd.f32 %v7483, %v7495
  %v7497 = vpop.f32.mrf.mxu0
  %7498 = vdwg.mxu0
  %7499 = vmatpush.bf16.msra.mxu0 %v6581
  %7500 = vmatpush.bf16.msra.mxu0 %v6577
  %7501 = vmatpush.bf16.msra.mxu0 %v6573
  %7502 = vmatpush.bf16.msra.mxu0 %v6569
  %7503 = vmatpush.bf16.msra.mxu0 %v6565
  %7504 = vmatpush.bf16.msra.mxu0 %v6561
  %7505 = vmatpush.bf16.msra.mxu0 %v6557
  %7506 = vmatpush.bf16.msra.mxu0 %v6553
  %7507 = vmatmul.bf16.gmra.mxu0 %v4013
  %v7508 = vpop.f32.mrf.mxu0
  %v7509 = vadd.f32 %v7496, %v7508
  %v7510 = vpop.f32.mrf.mxu0
  %7511 = vdwg.mxu0
  %7512 = vmatpush.bf16.msra.mxu0 %v6102
  %7513 = vmatpush.bf16.msra.mxu0 %v6098
  %7514 = vmatpush.bf16.msra.mxu0 %v6094
  %7515 = vmatpush.bf16.msra.mxu0 %v6090
  %7516 = vmatpush.bf16.msra.mxu0 %v6086
  %7517 = vmatpush.bf16.msra.mxu0 %v6082
  %7518 = vmatpush.bf16.msra.mxu0 %v6078
  %7519 = vmatpush.bf16.msra.mxu0 %v6074
  %7520 = vmatmul.bf16.gmra.mxu0 %v3998
  %v7521 = vpop.f32.mrf.mxu0
  %v7522 = vadd.f32 %v4530, %v7521
  %v7523 = vpop.f32.mrf.mxu0
  %7524 = vdwg.mxu0
  %7525 = vmatpush.bf16.msra.mxu0 %v6134
  %7526 = vmatpush.bf16.msra.mxu0 %v6130
  %7527 = vmatpush.bf16.msra.mxu0 %v6126
  %7528 = vmatpush.bf16.msra.mxu0 %v6122
  %7529 = vmatpush.bf16.msra.mxu0 %v6118
  %7530 = vmatpush.bf16.msra.mxu0 %v6114
  %7531 = vmatpush.bf16.msra.mxu0 %v6110
  %7532 = vmatpush.bf16.msra.mxu0 %v6106
  %7533 = vmatmul.bf16.gmra.mxu0 %v3999
  %v7534 = vpop.f32.mrf.mxu0
  %v7535 = vadd.f32 %v7522, %v7534
  %v7536 = vpop.f32.mrf.mxu0
  %7537 = vdwg.mxu0
  %7538 = vmatpush.bf16.msra.mxu0 %v6166
  %7539 = vmatpush.bf16.msra.mxu0 %v6162
  %7540 = vmatpush.bf16.msra.mxu0 %v6158
  %7541 = vmatpush.bf16.msra.mxu0 %v6154
  %7542 = vmatpush.bf16.msra.mxu0 %v6150
  %7543 = vmatpush.bf16.msra.mxu0 %v6146
  %7544 = vmatpush.bf16.msra.mxu0 %v6142
  %7545 = vmatpush.bf16.msra.mxu0 %v6138
  %7546 = vmatmul.bf16.gmra.mxu0 %v4000
  %v7547 = vpop.f32.mrf.mxu0
  %v7548 = vadd.f32 %v7535, %v7547
  %v7549 = vpop.f32.mrf.mxu0
  %7550 = vdwg.mxu0
  %7551 = vmatpush.bf16.msra.mxu0 %v6198
  %7552 = vmatpush.bf16.msra.mxu0 %v6194
  %7553 = vmatpush.bf16.msra.mxu0 %v6190
  %7554 = vmatpush.bf16.msra.mxu0 %v6186
  %7555 = vmatpush.bf16.msra.mxu0 %v6182
  %7556 = vmatpush.bf16.msra.mxu0 %v6178
  %7557 = vmatpush.bf16.msra.mxu0 %v6174
  %7558 = vmatpush.bf16.msra.mxu0 %v6170
  %7559 = vmatmul.bf16.gmra.mxu0 %v4001
  %v7560 = vpop.f32.mrf.mxu0
  %v7561 = vadd.f32 %v7548, %v7560
  %v7562 = vpop.f32.mrf.mxu0
  %7563 = vdwg.mxu0
  %7564 = vmatpush.bf16.msra.mxu0 %v6230
  %7565 = vmatpush.bf16.msra.mxu0 %v6226
  %7566 = vmatpush.bf16.msra.mxu0 %v6222
  %7567 = vmatpush.bf16.msra.mxu0 %v6218
  %7568 = vmatpush.bf16.msra.mxu0 %v6214
  %7569 = vmatpush.bf16.msra.mxu0 %v6210
  %7570 = vmatpush.bf16.msra.mxu0 %v6206
  %7571 = vmatpush.bf16.msra.mxu0 %v6202
  %7572 = vmatmul.bf16.gmra.mxu0 %v4002
  %v7573 = vpop.f32.mrf.mxu0
  %v7574 = vadd.f32 %v7561, %v7573
  %v7575 = vpop.f32.mrf.mxu0
  %7576 = vdwg.mxu0
  %7577 = vmatpush.bf16.msra.mxu0 %v6262
  %7578 = vmatpush.bf16.msra.mxu0 %v6258
  %7579 = vmatpush.bf16.msra.mxu0 %v6254
  %7580 = vmatpush.bf16.msra.mxu0 %v6250
  %7581 = vmatpush.bf16.msra.mxu0 %v6246
  %7582 = vmatpush.bf16.msra.mxu0 %v6242
  %7583 = vmatpush.bf16.msra.mxu0 %v6238
  %7584 = vmatpush.bf16.msra.mxu0 %v6234
  %7585 = vmatmul.bf16.gmra.mxu0 %v4003
  %v7586 = vpop.f32.mrf.mxu0
  %v7587 = vadd.f32 %v7574, %v7586
  %v7588 = vpop.f32.mrf.mxu0
  %7589 = vdwg.mxu0
  %7590 = vmatpush.bf16.msra.mxu0 %v6294
  %7591 = vmatpush.bf16.msra.mxu0 %v6290
  %7592 = vmatpush.bf16.msra.mxu0 %v6286
  %7593 = vmatpush.bf16.msra.mxu0 %v6282
  %7594 = vmatpush.bf16.msra.mxu0 %v6278
  %7595 = vmatpush.bf16.msra.mxu0 %v6274
  %7596 = vmatpush.bf16.msra.mxu0 %v6270
  %7597 = vmatpush.bf16.msra.mxu0 %v6266
  %7598 = vmatmul.bf16.gmra.mxu0 %v4004
  %v7599 = vpop.f32.mrf.mxu0
  %v7600 = vadd.f32 %v7587, %v7599
  %v7601 = vpop.f32.mrf.mxu0
  %7602 = vdwg.mxu0
  %7603 = vmatpush.bf16.msra.mxu0 %v6326
  %7604 = vmatpush.bf16.msra.mxu0 %v6322
  %7605 = vmatpush.bf16.msra.mxu0 %v6318
  %7606 = vmatpush.bf16.msra.mxu0 %v6314
  %7607 = vmatpush.bf16.msra.mxu0 %v6310
  %7608 = vmatpush.bf16.msra.mxu0 %v6306
  %7609 = vmatpush.bf16.msra.mxu0 %v6302
  %7610 = vmatpush.bf16.msra.mxu0 %v6298
  %7611 = vmatmul.bf16.gmra.mxu0 %v4005
  %v7612 = vpop.f32.mrf.mxu0
  %v7613 = vadd.f32 %v7600, %v7612
  %v7614 = vpop.f32.mrf.mxu0
  %7615 = vdwg.mxu0
  %7616 = vmatpush.bf16.msra.mxu0 %v6358
  %7617 = vmatpush.bf16.msra.mxu0 %v6354
  %7618 = vmatpush.bf16.msra.mxu0 %v6350
  %7619 = vmatpush.bf16.msra.mxu0 %v6346
  %7620 = vmatpush.bf16.msra.mxu0 %v6342
  %7621 = vmatpush.bf16.msra.mxu0 %v6338
  %7622 = vmatpush.bf16.msra.mxu0 %v6334
  %7623 = vmatpush.bf16.msra.mxu0 %v6330
  %7624 = vmatmul.bf16.gmra.mxu0 %v4006
  %v7625 = vpop.f32.mrf.mxu0
  %v7626 = vadd.f32 %v7613, %v7625
  %v7627 = vpop.f32.mrf.mxu0
  %7628 = vdwg.mxu0
  %7629 = vmatpush.bf16.msra.mxu0 %v6390
  %7630 = vmatpush.bf16.msra.mxu0 %v6386
  %7631 = vmatpush.bf16.msra.mxu0 %v6382
  %7632 = vmatpush.bf16.msra.mxu0 %v6378
  %7633 = vmatpush.bf16.msra.mxu0 %v6374
  %7634 = vmatpush.bf16.msra.mxu0 %v6370
  %7635 = vmatpush.bf16.msra.mxu0 %v6366
  %7636 = vmatpush.bf16.msra.mxu0 %v6362
  %7637 = vmatmul.bf16.gmra.mxu0 %v4007
  %v7638 = vpop.f32.mrf.mxu0
  %v7639 = vadd.f32 %v7626, %v7638
  %v7640 = vpop.f32.mrf.mxu0
  %7641 = vdwg.mxu0
  %7642 = vmatpush.bf16.msra.mxu0 %v6422
  %7643 = vmatpush.bf16.msra.mxu0 %v6418
  %7644 = vmatpush.bf16.msra.mxu0 %v6414
  %7645 = vmatpush.bf16.msra.mxu0 %v6410
  %7646 = vmatpush.bf16.msra.mxu0 %v6406
  %7647 = vmatpush.bf16.msra.mxu0 %v6402
  %7648 = vmatpush.bf16.msra.mxu0 %v6398
  %7649 = vmatpush.bf16.msra.mxu0 %v6394
  %7650 = vmatmul.bf16.gmra.mxu0 %v4008
  %v7651 = vpop.f32.mrf.mxu0
  %v7652 = vadd.f32 %v7639, %v7651
  %v7653 = vpop.f32.mrf.mxu0
  %7654 = vdwg.mxu0
  %7655 = vmatpush.bf16.msra.mxu0 %v6454
  %7656 = vmatpush.bf16.msra.mxu0 %v6450
  %7657 = vmatpush.bf16.msra.mxu0 %v6446
  %7658 = vmatpush.bf16.msra.mxu0 %v6442
  %7659 = vmatpush.bf16.msra.mxu0 %v6438
  %7660 = vmatpush.bf16.msra.mxu0 %v6434
  %7661 = vmatpush.bf16.msra.mxu0 %v6430
  %7662 = vmatpush.bf16.msra.mxu0 %v6426
  %7663 = vmatmul.bf16.gmra.mxu0 %v4009
  %v7664 = vpop.f32.mrf.mxu0
  %v7665 = vadd.f32 %v7652, %v7664
  %v7666 = vpop.f32.mrf.mxu0
  %7667 = vdwg.mxu0
  %7668 = vmatpush.bf16.msra.mxu0 %v6486
  %7669 = vmatpush.bf16.msra.mxu0 %v6482
  %7670 = vmatpush.bf16.msra.mxu0 %v6478
  %7671 = vmatpush.bf16.msra.mxu0 %v6474
  %7672 = vmatpush.bf16.msra.mxu0 %v6470
  %7673 = vmatpush.bf16.msra.mxu0 %v6466
  %7674 = vmatpush.bf16.msra.mxu0 %v6462
  %7675 = vmatpush.bf16.msra.mxu0 %v6458
  %7676 = vmatmul.bf16.gmra.mxu0 %v4010
  %v7677 = vpop.f32.mrf.mxu0
  %v7678 = vadd.f32 %v7665, %v7677
  %v7679 = vpop.f32.mrf.mxu0
  %7680 = vdwg.mxu0
  %7681 = vmatpush.bf16.msra.mxu0 %v6518
  %7682 = vmatpush.bf16.msra.mxu0 %v6514
  %7683 = vmatpush.bf16.msra.mxu0 %v6510
  %7684 = vmatpush.bf16.msra.mxu0 %v6506
  %7685 = vmatpush.bf16.msra.mxu0 %v6502
  %7686 = vmatpush.bf16.msra.mxu0 %v6498
  %7687 = vmatpush.bf16.msra.mxu0 %v6494
  %7688 = vmatpush.bf16.msra.mxu0 %v6490
  %7689 = vmatmul.bf16.gmra.mxu0 %v4011
  %v7690 = vpop.f32.mrf.mxu0
  %v7691 = vadd.f32 %v7678, %v7690
  %v7692 = vpop.f32.mrf.mxu0
  %7693 = vdwg.mxu0
  %7694 = vmatpush.bf16.msra.mxu0 %v6550
  %7695 = vmatpush.bf16.msra.mxu0 %v6546
  %7696 = vmatpush.bf16.msra.mxu0 %v6542
  %7697 = vmatpush.bf16.msra.mxu0 %v6538
  %7698 = vmatpush.bf16.msra.mxu0 %v6534
  %7699 = vmatpush.bf16.msra.mxu0 %v6530
  %7700 = vmatpush.bf16.msra.mxu0 %v6526
  %7701 = vmatpush.bf16.msra.mxu0 %v6522
  %7702 = vmatmul.bf16.gmra.mxu0 %v4012
  %v7703 = vpop.f32.mrf.mxu0
  %v7704 = vadd.f32 %v7691, %v7703
  %v7705 = vpop.f32.mrf.mxu0
  %7706 = vdwg.mxu0
  %7707 = vmatpush.bf16.msra.mxu0 %v6582
  %7708 = vmatpush.bf16.msra.mxu0 %v6578
  %7709 = vmatpush.bf16.msra.mxu0 %v6574
  %7710 = vmatpush.bf16.msra.mxu0 %v6570
  %7711 = vmatpush.bf16.msra.mxu0 %v6566
  %7712 = vmatpush.bf16.msra.mxu0 %v6562
  %7713 = vmatpush.bf16.msra.mxu0 %v6558
  %7714 = vmatpush.bf16.msra.mxu0 %v6554
  %7715 = vmatmul.bf16.gmra.mxu0 %v4013
  %v7716 = vpop.f32.mrf.mxu0
  %v7717 = vadd.f32 %v7704, %v7716
  %v7718 = vpop.f32.mrf.mxu0
  %7719 = vdwg.mxu0
  %7720 = vmatpush.bf16.msra.mxu0 %v6103
  %7721 = vmatpush.bf16.msra.mxu0 %v6099
  %7722 = vmatpush.bf16.msra.mxu0 %v6095
  %7723 = vmatpush.bf16.msra.mxu0 %v6091
  %7724 = vmatpush.bf16.msra.mxu0 %v6087
  %7725 = vmatpush.bf16.msra.mxu0 %v6083
  %7726 = vmatpush.bf16.msra.mxu0 %v6079
  %7727 = vmatpush.bf16.msra.mxu0 %v6075
  %7728 = vmatmul.bf16.gmra.mxu0 %v3998
  %v7729 = vpop.f32.mrf.mxu0
  %v7730 = vadd.f32 %v4531, %v7729
  %v7731 = vpop.f32.mrf.mxu0
  %7732 = vdwg.mxu0
  %7733 = vmatpush.bf16.msra.mxu0 %v6135
  %7734 = vmatpush.bf16.msra.mxu0 %v6131
  %7735 = vmatpush.bf16.msra.mxu0 %v6127
  %7736 = vmatpush.bf16.msra.mxu0 %v6123
  %7737 = vmatpush.bf16.msra.mxu0 %v6119
  %7738 = vmatpush.bf16.msra.mxu0 %v6115
  %7739 = vmatpush.bf16.msra.mxu0 %v6111
  %7740 = vmatpush.bf16.msra.mxu0 %v6107
  %7741 = vmatmul.bf16.gmra.mxu0 %v3999
  %v7742 = vpop.f32.mrf.mxu0
  %v7743 = vadd.f32 %v7730, %v7742
  %v7744 = vpop.f32.mrf.mxu0
  %7745 = vdwg.mxu0
  %7746 = vmatpush.bf16.msra.mxu0 %v6167
  %7747 = vmatpush.bf16.msra.mxu0 %v6163
  %7748 = vmatpush.bf16.msra.mxu0 %v6159
  %7749 = vmatpush.bf16.msra.mxu0 %v6155
  %7750 = vmatpush.bf16.msra.mxu0 %v6151
  %7751 = vmatpush.bf16.msra.mxu0 %v6147
  %7752 = vmatpush.bf16.msra.mxu0 %v6143
  %7753 = vmatpush.bf16.msra.mxu0 %v6139
  %7754 = vmatmul.bf16.gmra.mxu0 %v4000
  %v7755 = vpop.f32.mrf.mxu0
  %v7756 = vadd.f32 %v7743, %v7755
  %v7757 = vpop.f32.mrf.mxu0
  %7758 = vdwg.mxu0
  %7759 = vmatpush.bf16.msra.mxu0 %v6199
  %7760 = vmatpush.bf16.msra.mxu0 %v6195
  %7761 = vmatpush.bf16.msra.mxu0 %v6191
  %7762 = vmatpush.bf16.msra.mxu0 %v6187
  %7763 = vmatpush.bf16.msra.mxu0 %v6183
  %7764 = vmatpush.bf16.msra.mxu0 %v6179
  %7765 = vmatpush.bf16.msra.mxu0 %v6175
  %7766 = vmatpush.bf16.msra.mxu0 %v6171
  %7767 = vmatmul.bf16.gmra.mxu0 %v4001
  %v7768 = vpop.f32.mrf.mxu0
  %v7769 = vadd.f32 %v7756, %v7768
  %v7770 = vpop.f32.mrf.mxu0
  %7771 = vdwg.mxu0
  %7772 = vmatpush.bf16.msra.mxu0 %v6231
  %7773 = vmatpush.bf16.msra.mxu0 %v6227
  %7774 = vmatpush.bf16.msra.mxu0 %v6223
  %7775 = vmatpush.bf16.msra.mxu0 %v6219
  %7776 = vmatpush.bf16.msra.mxu0 %v6215
  %7777 = vmatpush.bf16.msra.mxu0 %v6211
  %7778 = vmatpush.bf16.msra.mxu0 %v6207
  %7779 = vmatpush.bf16.msra.mxu0 %v6203
  %7780 = vmatmul.bf16.gmra.mxu0 %v4002
  %v7781 = vpop.f32.mrf.mxu0
  %v7782 = vadd.f32 %v7769, %v7781
  %v7783 = vpop.f32.mrf.mxu0
  %7784 = vdwg.mxu0
  %7785 = vmatpush.bf16.msra.mxu0 %v6263
  %7786 = vmatpush.bf16.msra.mxu0 %v6259
  %7787 = vmatpush.bf16.msra.mxu0 %v6255
  %7788 = vmatpush.bf16.msra.mxu0 %v6251
  %7789 = vmatpush.bf16.msra.mxu0 %v6247
  %7790 = vmatpush.bf16.msra.mxu0 %v6243
  %7791 = vmatpush.bf16.msra.mxu0 %v6239
  %7792 = vmatpush.bf16.msra.mxu0 %v6235
  %7793 = vmatmul.bf16.gmra.mxu0 %v4003
  %v7794 = vpop.f32.mrf.mxu0
  %v7795 = vadd.f32 %v7782, %v7794
  %v7796 = vpop.f32.mrf.mxu0
  %7797 = vdwg.mxu0
  %7798 = vmatpush.bf16.msra.mxu0 %v6295
  %7799 = vmatpush.bf16.msra.mxu0 %v6291
  %7800 = vmatpush.bf16.msra.mxu0 %v6287
  %7801 = vmatpush.bf16.msra.mxu0 %v6283
  %7802 = vmatpush.bf16.msra.mxu0 %v6279
  %7803 = vmatpush.bf16.msra.mxu0 %v6275
  %7804 = vmatpush.bf16.msra.mxu0 %v6271
  %7805 = vmatpush.bf16.msra.mxu0 %v6267
  %7806 = vmatmul.bf16.gmra.mxu0 %v4004
  %v7807 = vpop.f32.mrf.mxu0
  %v7808 = vadd.f32 %v7795, %v7807
  %v7809 = vpop.f32.mrf.mxu0
  %7810 = vdwg.mxu0
  %7811 = vmatpush.bf16.msra.mxu0 %v6327
  %7812 = vmatpush.bf16.msra.mxu0 %v6323
  %7813 = vmatpush.bf16.msra.mxu0 %v6319
  %7814 = vmatpush.bf16.msra.mxu0 %v6315
  %7815 = vmatpush.bf16.msra.mxu0 %v6311
  %7816 = vmatpush.bf16.msra.mxu0 %v6307
  %7817 = vmatpush.bf16.msra.mxu0 %v6303
  %7818 = vmatpush.bf16.msra.mxu0 %v6299
  %7819 = vmatmul.bf16.gmra.mxu0 %v4005
  %v7820 = vpop.f32.mrf.mxu0
  %v7821 = vadd.f32 %v7808, %v7820
  %v7822 = vpop.f32.mrf.mxu0
  %7823 = vdwg.mxu0
  %7824 = vmatpush.bf16.msra.mxu0 %v6359
  %7825 = vmatpush.bf16.msra.mxu0 %v6355
  %7826 = vmatpush.bf16.msra.mxu0 %v6351
  %7827 = vmatpush.bf16.msra.mxu0 %v6347
  %7828 = vmatpush.bf16.msra.mxu0 %v6343
  %7829 = vmatpush.bf16.msra.mxu0 %v6339
  %7830 = vmatpush.bf16.msra.mxu0 %v6335
  %7831 = vmatpush.bf16.msra.mxu0 %v6331
  %7832 = vmatmul.bf16.gmra.mxu0 %v4006
  %v7833 = vpop.f32.mrf.mxu0
  %v7834 = vadd.f32 %v7821, %v7833
  %v7835 = vpop.f32.mrf.mxu0
  %7836 = vdwg.mxu0
  %7837 = vmatpush.bf16.msra.mxu0 %v6391
  %7838 = vmatpush.bf16.msra.mxu0 %v6387
  %7839 = vmatpush.bf16.msra.mxu0 %v6383
  %7840 = vmatpush.bf16.msra.mxu0 %v6379
  %7841 = vmatpush.bf16.msra.mxu0 %v6375
  %7842 = vmatpush.bf16.msra.mxu0 %v6371
  %7843 = vmatpush.bf16.msra.mxu0 %v6367
  %7844 = vmatpush.bf16.msra.mxu0 %v6363
  %7845 = vmatmul.bf16.gmra.mxu0 %v4007
  %v7846 = vpop.f32.mrf.mxu0
  %v7847 = vadd.f32 %v7834, %v7846
  %v7848 = vpop.f32.mrf.mxu0
  %7849 = vdwg.mxu0
  %7850 = vmatpush.bf16.msra.mxu0 %v6423
  %7851 = vmatpush.bf16.msra.mxu0 %v6419
  %7852 = vmatpush.bf16.msra.mxu0 %v6415
  %7853 = vmatpush.bf16.msra.mxu0 %v6411
  %7854 = vmatpush.bf16.msra.mxu0 %v6407
  %7855 = vmatpush.bf16.msra.mxu0 %v6403
  %7856 = vmatpush.bf16.msra.mxu0 %v6399
  %7857 = vmatpush.bf16.msra.mxu0 %v6395
  %7858 = vmatmul.bf16.gmra.mxu0 %v4008
  %v7859 = vpop.f32.mrf.mxu0
  %v7860 = vadd.f32 %v7847, %v7859
  %v7861 = vpop.f32.mrf.mxu0
  %7862 = vdwg.mxu0
  %7863 = vmatpush.bf16.msra.mxu0 %v6455
  %7864 = vmatpush.bf16.msra.mxu0 %v6451
  %7865 = vmatpush.bf16.msra.mxu0 %v6447
  %7866 = vmatpush.bf16.msra.mxu0 %v6443
  %7867 = vmatpush.bf16.msra.mxu0 %v6439
  %7868 = vmatpush.bf16.msra.mxu0 %v6435
  %7869 = vmatpush.bf16.msra.mxu0 %v6431
  %7870 = vmatpush.bf16.msra.mxu0 %v6427
  %7871 = vmatmul.bf16.gmra.mxu0 %v4009
  %v7872 = vpop.f32.mrf.mxu0
  %v7873 = vadd.f32 %v7860, %v7872
  %v7874 = vpop.f32.mrf.mxu0
  %7875 = vdwg.mxu0
  %7876 = vmatpush.bf16.msra.mxu0 %v6487
  %7877 = vmatpush.bf16.msra.mxu0 %v6483
  %7878 = vmatpush.bf16.msra.mxu0 %v6479
  %7879 = vmatpush.bf16.msra.mxu0 %v6475
  %7880 = vmatpush.bf16.msra.mxu0 %v6471
  %7881 = vmatpush.bf16.msra.mxu0 %v6467
  %7882 = vmatpush.bf16.msra.mxu0 %v6463
  %7883 = vmatpush.bf16.msra.mxu0 %v6459
  %7884 = vmatmul.bf16.gmra.mxu0 %v4010
  %v7885 = vpop.f32.mrf.mxu0
  %v7886 = vadd.f32 %v7873, %v7885
  %v7887 = vpop.f32.mrf.mxu0
  %7888 = vdwg.mxu0
  %7889 = vmatpush.bf16.msra.mxu0 %v6519
  %7890 = vmatpush.bf16.msra.mxu0 %v6515
  %7891 = vmatpush.bf16.msra.mxu0 %v6511
  %7892 = vmatpush.bf16.msra.mxu0 %v6507
  %7893 = vmatpush.bf16.msra.mxu0 %v6503
  %7894 = vmatpush.bf16.msra.mxu0 %v6499
  %7895 = vmatpush.bf16.msra.mxu0 %v6495
  %7896 = vmatpush.bf16.msra.mxu0 %v6491
  %7897 = vmatmul.bf16.gmra.mxu0 %v4011
  %v7898 = vpop.f32.mrf.mxu0
  %v7899 = vadd.f32 %v7886, %v7898
  %v7900 = vpop.f32.mrf.mxu0
  %7901 = vdwg.mxu0
  %7902 = vmatpush.bf16.msra.mxu0 %v6551
  %7903 = vmatpush.bf16.msra.mxu0 %v6547
  %7904 = vmatpush.bf16.msra.mxu0 %v6543
  %7905 = vmatpush.bf16.msra.mxu0 %v6539
  %7906 = vmatpush.bf16.msra.mxu0 %v6535
  %7907 = vmatpush.bf16.msra.mxu0 %v6531
  %7908 = vmatpush.bf16.msra.mxu0 %v6527
  %7909 = vmatpush.bf16.msra.mxu0 %v6523
  %7910 = vmatmul.bf16.gmra.mxu0 %v4012
  %v7911 = vpop.f32.mrf.mxu0
  %v7912 = vadd.f32 %v7899, %v7911
  %v7913 = vpop.f32.mrf.mxu0
  %7914 = vdwg.mxu0
  %7915 = vmatpush.bf16.msra.mxu0 %v6583
  %7916 = vmatpush.bf16.msra.mxu0 %v6579
  %7917 = vmatpush.bf16.msra.mxu0 %v6575
  %7918 = vmatpush.bf16.msra.mxu0 %v6571
  %7919 = vmatpush.bf16.msra.mxu0 %v6567
  %7920 = vmatpush.bf16.msra.mxu0 %v6563
  %7921 = vmatpush.bf16.msra.mxu0 %v6559
  %7922 = vmatpush.bf16.msra.mxu0 %v6555
  %7923 = vmatmul.bf16.gmra.mxu0 %v4013
  %v7924 = vpop.f32.mrf.mxu0
  %v7925 = vadd.f32 %v7912, %v7924
  %v7926 = vpop.f32.mrf.mxu0
  %7927 = vdwg.mxu0
  %v7928 = vunpack.c.l.bf16 %v26
  %v7929 = vunpack.c.h.bf16 %v26
  %v7930 = vunpack.c.l.bf16 %v27
  %v7931 = vunpack.c.h.bf16 %v27
  %v7932 = vadd.f32 %v7301, %v7928
  %v7933 = vadd.f32 %v7509, %v7929
  %v7934 = vadd.f32 %v7717, %v7930
  %v7935 = vadd.f32 %v7925, %v7931
  %v7936 = vld [vmem:[%s5] sm:$0xf]
  %v7937 = vld [vmem:[%s6] sm:$0xf]
  %v7938 = vadd.f32 %v7932, %v7933
  %v7939 = vadd.f32 %v7938, %v7934
  %v7940 = vadd.f32 %v7939, %v7935
  %7941 = vadd.xlane.f32.xlu0 %v7940
  %v7942 = vpop.xlane.xlu0 %7941
  %v7943 = vrcp.pop 512.0
  %v7944 = vmul.f32 512.0, %v7943
  %v7945 = vsub.f32 1.0, %v7944
  %v7946 = vmul.f32 %v7943, %v7945
  %v7947 = vadd.f32 %v7943, %v7946
  %vm7948 = vweird.f32 %v7943
  %v7949 = vsel %vm7948, %v7943, %v7947
  %v7950 = vmul.f32 %v7942, %v7949
  %v7951 = vsub.f32 %v7932, %v7950
  %v7952 = vsub.f32 %v7933, %v7950
  %v7953 = vsub.f32 %v7934, %v7950
  %v7954 = vsub.f32 %v7935, %v7950
  %v7955 = vmul.f32 %v7951, %v7951
  %v7956 = vmul.f32 %v7952, %v7952
  %v7957 = vmul.f32 %v7953, %v7953
  %v7958 = vmul.f32 %v7954, %v7954
  %v7959 = vadd.f32 %v7955, %v7956
  %v7960 = vadd.f32 %v7959, %v7957
  %v7961 = vadd.f32 %v7960, %v7958
  %7962 = vadd.xlane.f32.xlu0 %v7961
  %v7963 = vpop.xlane.xlu0 %7962
  %v7964 = vmul.f32 %v7963, %v7949
  %v7965 = vadd.f32 %v7964, 1e-05
  %v7966 = vrsqrt.pop %v7965
  %v7967 = vmul.f32 %v7966, %v7965
  %v7968 = vmul.f32 %v7967, %v7966
  %v7969 = vmul.f32 0.5, %v7968
  %v7970 = vsub.f32 1.5, %v7969
  %v7971 = vmul.f32 %v7966, %v7970
  %vm7972 = vweird.f32 %v7965
  %vm7973 = vweird.f32 %v7966
  %vm7974 = vmor %vm7972, %vm7973
  %v7975 = vsel %vm7974, %v7966, %v7971
  %v7976 = vmul.f32 %v7951, %v7975
  %v7977 = vmul.f32 %v7952, %v7975
  %v7978 = vmul.f32 %v7953, %v7975
  %v7979 = vmul.f32 %v7954, %v7975
  %v7981 = vperm.slane %v7936, 0
  %v7982 = vperm.slane %v7936, 1
  %v7983 = vperm.slane %v7936, 2
  %v7984 = vperm.slane %v7936, 3
  %v7989 = vmul.f32 %v7976, %v7981
  %v7990 = vmul.f32 %v7977, %v7982
  %v7991 = vmul.f32 %v7978, %v7983
  %v7992 = vmul.f32 %v7979, %v7984
  %v7994 = vperm.slane %v7937, 0
  %v7995 = vperm.slane %v7937, 1
  %v7996 = vperm.slane %v7937, 2
  %v7997 = vperm.slane %v7937, 3
  %v8002 = vadd.f32 %v7989, %v7994
  %v8003 = vadd.f32 %v7990, %v7995
  %v8004 = vadd.f32 %v7991, %v7996
  %v8005 = vadd.f32 %v7992, %v7997
  %v8006 = vpack.c.bf16 %v8003, %v8002
  %v8007 = vpack.c.bf16 %v8005, %v8004
  %8008 = vst [vmem:[%s7] sm:$0xff] %v8006
  %8009 = vst [vmem:[%s7 + $0x8] sm:$0xff] %v8007
  // Predicated region
  $region30: #{closed_call.20} parent=0 // pred_check
    _
  $region31: #{closed_call.20} parent=0 // pred_check_branch
    %8011 = sbr.rel (0) target = $region33
  $region32: #{closed_call.20} parent=0 // pred_region
    _
  $region33: #{closed_call.20} parent=0 // pred_fallthru
    _
  // Predicated region
  $region34: #{closed_call.20} parent=0 // pred_check
    _
  $region35: #{closed_call.20} parent=0 // pred_check_branch
    %8013 = sbr.rel (0) target = $region37
  $region36: #{closed_call.20} parent=0 // pred_region
    _
  $region37: #{closed_call.20} parent=0 // pred_fallthru
    _

</llo_original>
